<compile_context>
chip_gen: v7x
topology: tpu7x:2x2x1
jax: 0.10.0
libtpu: 0.0.40
codegen_flags: <defaults>
</compile_context>

<pallas_src>
import functools

import jax
import jax.numpy as jnp
from jax.experimental import pallas as pl
from jax.experimental.pallas import tpu as pltpu

_EPS = 1e-5


# ----------------------------- helpers -----------------------------

def _pick_tile_rows(m, max_rows):
    """Largest multiple-of-8 divisor of m that is <= max_rows (else m itself)."""
    for t in range(min(m, max_rows), 7, -1):
        if m % t == 0 and t % 8 == 0:
            return t
    return m


def _stats(y):
    """Per-channel [sum, sum-of-squares] of a (rows, C) tile -> (1, 2, C)."""
    s = jnp.sum(y, axis=0, keepdims=True)
    ss = jnp.sum(y * y, axis=0, keepdims=True)
    return jnp.concatenate([s, ss], axis=0)[None]


def _shift_rows(a, s):
    """b[r] = a[r + s] for rows where r + s is in range, 0 otherwise (s static)."""
    if s == 0:
        return a
    pad = jnp.zeros((abs(s), a.shape[1]), a.dtype)
    if s > 0:
        return jnp.concatenate([a[s:, :], pad], axis=0)
    return jnp.concatenate([pad, a[:s, :]], axis=0)


def _fold_bn(partial_stats, gamma, beta, count):
    """Reduce per-tile [sum, sumsq] stats -> per-channel (scale, shift) rows."""
    tot = jnp.sum(partial_stats, axis=0)                 # (2, C)
    mean = tot[0] / count
    var = tot[1] / count - mean * mean                   # biased variance (training BN)
    scale = gamma * jax.lax.rsqrt(var + _EPS)
    shift = beta - mean * scale
    f32 = jnp.float32
    return scale.reshape(1, -1).astype(f32), shift.reshape(1, -1).astype(f32)


# ----------------------------- kernels -----------------------------

def _conv1x1_stats_kernel(x_ref, w_ref, y_ref, st_ref):
    # Stage 1: conv1 (1x1) on the MXU + per-tile partial BN1 stats.
    y = jnp.dot(x_ref[...], w_ref[...], preferred_element_type=jnp.float32)
    y_ref[...] = y
    st_ref[...] = _stats(y)


def _bnrelu_conv3x3_stats_kernel(x_ref, sc_ref, sh_ref, w_ref, ml_ref, mr_ref,
                                 y_ref, st_ref, *, W):
    # Stage 2: BN1 (folded scale/shift) + ReLU, then 3x3 conv (pad=1) done as
    # 9 zero-filled row-shifted matmuls.  One image (H*W rows) per grid step.
    a = jnp.maximum(x_ref[...] * sc_ref[...] + sh_ref[...], 0.0)
    acc = None
    for dy in (-1, 0, 1):
        for dx in (-1, 0, 1):
            tap = _shift_rows(a, dy * W + dx)
            if dx == -1:
                tap = tap * ml_ref[...]        # zero where w == 0
            elif dx == 1:
                tap = tap * mr_ref[...]        # zero where w == W-1
            contrib = jnp.dot(tap, w_ref[(dy + 1) * 3 + (dx + 1)],
                              preferred_element_type=jnp.float32)
            acc = contrib if acc is None else acc + contrib
    y_ref[...] = acc
    st_ref[...] = _stats(acc)


def _bnrelu_conv1x1_stats_kernel(x_ref, sc_ref, sh_ref, w_ref, y_ref, st_ref):
    # Stage 3: BN2 (folded) + ReLU fused with conv3 (1x1) + partial BN3 stats.
    a = jnp.maximum(x_ref[...] * sc_ref[...] + sh_ref[...], 0.0)
    y = jnp.dot(a, w_ref[...], preferred_element_type=jnp.float32)
    y_ref[...] = y
    st_ref[...] = _stats(y)


def _bn_residual_relu_kernel(y_ref, id_ref, sc_ref, sh_ref, o_ref):
    # Stage 4: BN3 (folded) + residual add + ReLU, streamed tile-by-tile.
    o_ref[...] = jnp.maximum(y_ref[...] * sc_ref[...] + sh_ref[...] + id_ref[...], 0.0)


# ----------------------------- wrapper -----------------------------

def bottleneck_forward(x_nchw, p, *, max_tile_rows=512):
    N, C, H, W = x_nchw.shape
    HW = H * W
    M = N * HW
    f32 = jnp.float32

    x2d = jnp.transpose(x_nchw, (0, 2, 3, 1)).reshape(M, C).astype(f32)

    w1 = p["w1"].astype(f32)                    # (C, C)
    w2 = p["w2"].astype(f32).reshape(9, C, C)   # HWIO -> (ky*3+kx, C_in, C_out)
    w3 = p["w3"].astype(f32)                    # (C, C)

    TM = _pick_tile_rows(M, max_tile_rows)
    nmt = M // TM
    par = pltpu.CompilerParams(dimension_semantics=("parallel",))

    row_spec = pl.BlockSpec((TM, C), lambda i: (i, 0))
    chan_spec = pl.BlockSpec((1, C), lambda i: (0, 0))
    stat_spec = pl.BlockSpec((1, 2, C), lambda i: (i, 0, 0))
    mat_spec = pl.BlockSpec((C, C), lambda i: (0, 0))

    # ---- Stage 1: conv1 (1x1) + partial BN1 stats (conv bias cancels in BN).
    y1, st1 = pl.pallas_call(
        _conv1x1_stats_kernel,
        grid=(nmt,),
        in_specs=[row_spec, mat_spec],
        out_specs=[row_spec, stat_spec],
        out_shape=[jax.ShapeDtypeStruct((M, C), f32),
                   jax.ShapeDtypeStruct((nmt, 2, C), f32)],
        compiler_params=par,
    )(x2d, w1)
    sc1, sh1 = _fold_bn(st1, p["g1"], p["be1"], M)

    # ---- Stage 2: BN1+ReLU fused with in-kernel 3x3 conv (no im2col).
    col = jnp.arange(HW, dtype=jnp.int32) % W
    mask_l = (col > 0).astype(f32).reshape(HW, 1)       # valid taps for dx = -1
    mask_r = (col < W - 1).astype(f32).reshape(HW, 1)   # valid taps for dx = +1

    img_spec = pl.BlockSpec((HW, C), lambda n: (n, 0))
    img_chan = pl.BlockSpec((1, C), lambda n: (0, 0))
    img_stat = pl.BlockSpec((1, 2, C), lambda n: (n, 0, 0))
    w2_spec = pl.BlockSpec((9, C, C), lambda n: (0, 0, 0))
    msk_spec = pl.BlockSpec((HW, 1), lambda n: (0, 0))

    y2, st2 = pl.pallas_call(
        functools.partial(_bnrelu_conv3x3_stats_kernel, W=W),
        grid=(N,),
        in_specs=[img_spec, img_chan, img_chan, w2_spec, msk_spec, msk_spec],
        out_specs=[img_spec, img_stat],
        out_shape=[jax.ShapeDtypeStruct((M, C), f32),
                   jax.ShapeDtypeStruct((N, 2, C), f32)],
        compiler_params=par,
    )(y1, sc1, sh1, w2, mask_l, mask_r)
    sc2, sh2 = _fold_bn(st2, p["g2"], p["be2"], M)

    # ---- Stage 3: BN2+ReLU fused with conv3 (1x1) + partial BN3 stats.
    y3, st3 = pl.pallas_call(
        _bnrelu_conv1x1_stats_kernel,
        grid=(nmt,),
        in_specs=[row_spec, chan_spec, chan_spec, mat_spec],
        out_specs=[row_spec, stat_spec],
        out_shape=[jax.ShapeDtypeStruct((M, C), f32),
                   jax.ShapeDtypeStruct((nmt, 2, C), f32)],
        compiler_params=par,
    )(y2, sc2, sh2, w3)
    sc3, sh3 = _fold_bn(st3, p["g3"], p["be3"], M)

    # ---- Stage 4: BN3 + residual add + ReLU (identity streamed per tile).
    out2d = pl.pallas_call(
        _bn_residual_relu_kernel,
        grid=(nmt,),
        in_specs=[row_spec, row_spec, chan_spec, chan_spec],
        out_specs=row_spec,
        out_shape=jax.ShapeDtypeStruct((M, C), f32),
        compiler_params=par,
    )(y3, x2d, sc3, sh3)

    return jnp.transpose(out2d.reshape(N, H, W, C), (0, 3, 1, 2))


# ----------------- pure-JAX reference (verification) -----------------

def _ref_forward(x_nchw, p):
    hp = jax.lax.Precision.HIGHEST
    x = jnp.transpose(x_nchw, (0, 2, 3, 1))

    def bn(y, g, b):
        m = jnp.mean(y, axis=(0, 1, 2), keepdims=True)
        v = jnp.mean((y - m) ** 2, axis=(0, 1, 2), keepdims=True)
        return (y - m) / jnp.sqrt(v + _EPS) * g + b

    y = jnp.einsum("nhwc,cd->nhwd", x, p["w1"], precision=hp) + p["b1"]
    y = jax.nn.relu(bn(y, p["g1"], p["be1"]))
    y = jax.lax.conv_general_dilated(
        y, p["w2"], (1, 1), "SAME",
        dimension_numbers=("NHWC", "HWIO", "NHWC"), precision=hp) + p["b2"]
    y = jax.nn.relu(bn(y, p["g2"], p["be2"]))
    y = jnp.einsum("nhwc,cd->nhwd", y, p["w3"], precision=hp) + p["b3"]
    y = bn(y, p["g3"], p["be3"])
    return jnp.transpose(jax.nn.relu(y + x), (0, 3, 1, 2))


if __name__ == "__main__":
    # Small but lane-dense shapes (C multiple of 128, multi-tile M grid).
    N, C, H, W = 4, 128, 16, 16
    key = jax.random.PRNGKey(0)
    ks = jax.random.split(key, 13)
    f32 = jnp.float32
    params = dict(
        w1=(C ** -0.5) * jax.random.normal(ks[0], (C, C), f32),          # 1x1: (Cin, Cout)
        b1=0.1 * jax.random.normal(ks[1], (C,), f32),                    # cancels in BN
        g1=1.0 + 0.1 * jax.random.normal(ks[2], (C,), f32),
        be1=0.1 * jax.random.normal(ks[3], (C,), f32),
        w2=((9 * C) ** -0.5) * jax.random.normal(ks[4], (3, 3, C, C), f32),  # HWIO
        b2=0.1 * jax.random.normal(ks[5], (C,), f32),
        g2=1.0 + 0.1 * jax.random.normal(ks[6], (C,), f32),
        be2=0.1 * jax.random.normal(ks[7], (C,), f32),
        w3=(C ** -0.5) * jax.random.normal(ks[8], (C, C), f32),          # 1x1: (Cin, Cout)
        b3=0.1 * jax.random.normal(ks[9], (C,), f32),
        g3=1.0 + 0.1 * jax.random.normal(ks[10], (C,), f32),
        be3=0.1 * jax.random.normal(ks[11], (C,), f32),
    )
    x = jax.random.normal(ks[12], (N, C, H, W), f32)  # NCHW, like the PyTorch module

    fwd = jax.jit(bottleneck_forward)
    out = jax.block_until_ready(fwd(x, params))

    ref = _ref_forward(x, params)
    assert out.shape == x.shape
    max_diff = float(jnp.max(jnp.abs(out - ref)))
    if not bool(jnp.allclose(out, ref, atol=2e-3, rtol=2e-3)):
        raise AssertionError(
            f"Pallas output mismatch vs reference, max abs diff {max_diff:.3e}")
    print("KERNEL_OK")
</pallas_src>

<mosaic_0001>
module attributes {stable_mosaic.version = 11 : i64} {
  func.func @_conv1x1_stats_kernel(%arg0: i32, %arg1: memref<512x128xf32, #tpu.memory_space<vmem>>, %arg2: memref<128x128xf32, #tpu.memory_space<vmem>>, %arg3: memref<512x128xf32, #tpu.memory_space<vmem>>, %arg4: memref<1x2x128xf32, #tpu.memory_space<vmem>>) attributes {dimension_semantics = [#tpu.dimension_semantics<parallel>], iteration_bounds = array<i64: 2>, scalar_prefetch = 0 : i64, scratch_operands = 0 : i64, tpu.core_type = #tpu.core_type<tc>, window_params = [{transform_indices = @transform_0, window_bounds = array<i64: 512, 128>}, {pipeline_mode = #tpu.pipeline_mode<synchronous>, transform_indices = @transform_1, window_bounds = array<i64: 128, 128>}, {transform_indices = @transform_2, window_bounds = array<i64: 512, 128>}, {transform_indices = @transform_3, window_bounds = array<i64: 1, 2, 128>}]} {
    %c0 = arith.constant 0 : index
    %c0_0 = arith.constant 0 : index
    %0 = vector.load %arg1[%c0, %c0_0] : memref<512x128xf32, #tpu.memory_space<vmem>>, vector<512x128xf32>
    %c0_1 = arith.constant 0 : index
    %c0_2 = arith.constant 0 : index
    %1 = vector.load %arg2[%c0_1, %c0_2] : memref<128x128xf32, #tpu.memory_space<vmem>>, vector<128x128xf32>
    %cst = arith.constant dense<0.000000e+00> : vector<512x128xf32>
    %2 = tpu.matmul %0, %1, %cst {dimension_numbers = #tpu.dot_dimension_numbers<[1], [0], [0], [1], [0, 0, 1, 1], [], []>} : vector<512x128xf32>, vector<128x128xf32>, vector<512x128xf32> -> vector<512x128xf32>
    %c0_3 = arith.constant 0 : index
    %c0_4 = arith.constant 0 : index
    %3 = vector.load %arg3[%c0_3, %c0_4] : memref<512x128xf32, #tpu.memory_space<vmem>>, vector<512x128xf32>
    tpu.vector_store %arg3[%c0_3, %c0_4], %2 {strides = array<i32>} : memref<512x128xf32, #tpu.memory_space<vmem>>, vector<512x128xf32>,
    %cst_5 = arith.constant dense<0.000000e+00> : vector<128xf32>
    %4 = vector.multi_reduction <add>, %2, %cst_5 [0] : vector<512x128xf32> to vector<128xf32>
    %5 = vector.shape_cast %4 : vector<128xf32> to vector<1x128xf32>
    %6 = arith.mulf %2, %2 : vector<512x128xf32>
    %cst_6 = arith.constant dense<0.000000e+00> : vector<128xf32>
    %7 = vector.multi_reduction <add>, %6, %cst_6 [0] : vector<512x128xf32> to vector<128xf32>
    %8 = vector.shape_cast %7 : vector<128xf32> to vector<1x128xf32>
    %9 = tpu.concatenate %5, %8 in 0 : vector<1x128xf32>, vector<1x128xf32> -> vector<2x128xf32>
    %10 = vector.shape_cast %9 : vector<2x128xf32> to vector<1x2x128xf32>
    %c0_7 = arith.constant 0 : index
    %c0_8 = arith.constant 0 : index
    %c0_9 = arith.constant 0 : index
    %11 = vector.load %arg4[%c0_7, %c0_8, %c0_9] : memref<1x2x128xf32, #tpu.memory_space<vmem>>, vector<1x2x128xf32>
    tpu.vector_store %arg4[%c0_7, %c0_8, %c0_9], %10 {strides = array<i32>} : memref<1x2x128xf32, #tpu.memory_space<vmem>>, vector<1x2x128xf32>,
    return
  }
  func.func @transform_0(%arg0: i32) -> (i32, i32) {
    %c0_i32 = arith.constant 0 : i32
    %c0_i32_0 = arith.constant 0 : i32
    return %arg0, %c0_i32 : i32, i32
  }
  func.func @transform_1(%arg0: i32) -> (i32, i32) {
    %c0_i32 = arith.constant 0 : i32
    %c0_i32_0 = arith.constant 0 : i32
    %c0_i32_1 = arith.constant 0 : i32
    return %c0_i32, %c0_i32_0 : i32, i32
  }
  func.func @transform_2(%arg0: i32) -> (i32, i32) {
    %c0_i32 = arith.constant 0 : i32
    %c0_i32_0 = arith.constant 0 : i32
    return %arg0, %c0_i32 : i32, i32
  }
  func.func @transform_3(%arg0: i32) -> (i32, i32, i32) {
    %c0_i32 = arith.constant 0 : i32
    %c0_i32_0 = arith.constant 0 : i32
    %c0_i32_1 = arith.constant 0 : i32
    return %arg0, %c0_i32, %c0_i32_0 : i32, i32, i32
  }
}

module attributes {stable_mosaic.version = 11 : i64} {
  func.func @_bnrelu_conv1x1_stats_kernel(%arg0: i32, %arg1: memref<512x128xf32, #tpu.memory_space<vmem>>, %arg2: memref<1x128xf32, #tpu.memory_space<vmem>>, %arg3: memref<1x128xf32, #tpu.memory_space<vmem>>, %arg4: memref<128x128xf32, #tpu.memory_space<vmem>>, %arg5: memref<512x128xf32, #tpu.memory_space<vmem>>, %arg6: memref<1x2x128xf32, #tpu.memory_space<vmem>>) attributes {dimension_semantics = [#tpu.dimension_semantics<parallel>], iteration_bounds = array<i64: 2>, scalar_prefetch = 0 : i64, scratch_operands = 0 : i64, tpu.core_type = #tpu.core_type<tc>, window_params = [{transform_indices = @transform_0, window_bounds = array<i64: 512, 128>}, {pipeline_mode = #tpu.pipeline_mode<synchronous>, transform_indices = @transform_1, window_bounds = array<i64: 1, 128>}, {pipeline_mode = #tpu.pipeline_mode<synchronous>, transform_indices = @transform_2, window_bounds = array<i64: 1, 128>}, {pipeline_mode = #tpu.pipeline_mode<synchronous>, transform_indices = @transform_3, window_bounds = array<i64: 128, 128>}, {transform_indices = @transform_4, window_bounds = array<i64: 512, 128>}, {transform_indices = @transform_5, window_bounds = array<i64: 1, 2, 128>}]} {
    %c0 = arith.constant 0 : index
    %c0_0 = arith.constant 0 : index
    %0 = vector.load %arg1[%c0, %c0_0] : memref<512x128xf32, #tpu.memory_space<vmem>>, vector<512x128xf32>
    %c0_1 = arith.constant 0 : index
    %c0_2 = arith.constant 0 : index
    %1 = vector.load %arg2[%c0_1, %c0_2] : memref<1x128xf32, #tpu.memory_space<vmem>>, vector<1x128xf32>
    %2 = vector.broadcast %1 : vector<1x128xf32> to vector<512x128xf32>
    %3 = arith.mulf %0, %2 : vector<512x128xf32>
    %c0_3 = arith.constant 0 : index
    %c0_4 = arith.constant 0 : index
    %4 = vector.load %arg3[%c0_3, %c0_4] : memref<1x128xf32, #tpu.memory_space<vmem>>, vector<1x128xf32>
    %5 = vector.broadcast %4 : vector<1x128xf32> to vector<512x128xf32>
    %6 = arith.addf %3, %5 : vector<512x128xf32>
    %cst = arith.constant 0.000000e+00 : f32
    %7 = vector.broadcast %cst : f32 to vector<512x128xf32>
    %8 = arith.maximumf %6, %7 : vector<512x128xf32>
    %c0_5 = arith.constant 0 : index
    %c0_6 = arith.constant 0 : index
    %9 = vector.load %arg4[%c0_5, %c0_6] : memref<128x128xf32, #tpu.memory_space<vmem>>, vector<128x128xf32>
    %cst_7 = arith.constant dense<0.000000e+00> : vector<512x128xf32>
    %10 = tpu.matmul %8, %9, %cst_7 {dimension_numbers = #tpu.dot_dimension_numbers<[1], [0], [0], [1], [0, 0, 1, 1], [], []>} : vector<512x128xf32>, vector<128x128xf32>, vector<512x128xf32> -> vector<512x128xf32>
    %c0_8 = arith.constant 0 : index
    %c0_9 = arith.constant 0 : index
    %11 = vector.load %arg5[%c0_8, %c0_9] : memref<512x128xf32, #tpu.memory_space<vmem>>, vector<512x128xf32>
    tpu.vector_store %arg5[%c0_8, %c0_9], %10 {strides = array<i32>} : memref<512x128xf32, #tpu.memory_space<vmem>>, vector<512x128xf32>,
    %cst_10 = arith.constant dense<0.000000e+00> : vector<128xf32>
    %12 = vector.multi_reduction <add>, %10, %cst_10 [0] : vector<512x128xf32> to vector<128xf32>
    %13 = vector.shape_cast %12 : vector<128xf32> to vector<1x128xf32>
    %14 = arith.mulf %10, %10 : vector<512x128xf32>
    %cst_11 = arith.constant dense<0.000000e+00> : vector<128xf32>
    %15 = vector.multi_reduction <add>, %14, %cst_11 [0] : vector<512x128xf32> to vector<128xf32>
    %16 = vector.shape_cast %15 : vector<128xf32> to vector<1x128xf32>
    %17 = tpu.concatenate %13, %16 in 0 : vector<1x128xf32>, vector<1x128xf32> -> vector<2x128xf32>
    %18 = vector.shape_cast %17 : vector<2x128xf32> to vector<1x2x128xf32>
    %c0_12 = arith.constant 0 : index
    %c0_13 = arith.constant 0 : index
    %c0_14 = arith.constant 0 : index
    %19 = vector.load %arg6[%c0_12, %c0_13, %c0_14] : memref<1x2x128xf32, #tpu.memory_space<vmem>>, vector<1x2x128xf32>
    tpu.vector_store %arg6[%c0_12, %c0_13, %c0_14], %18 {strides = array<i32>} : memref<1x2x128xf32, #tpu.memory_space<vmem>>, vector<1x2x128xf32>,
    return
  }
  func.func @transform_0(%arg0: i32) -> (i32, i32) {
    %c0_i32 = arith.constant 0 : i32
    %c0_i32_0 = arith.constant 0 : i32
    return %arg0, %c0_i32 : i32, i32
  }
  func.func @transform_1(%arg0: i32) -> (i32, i32) {
    %c0_i32 = arith.constant 0 : i32
    %c0_i32_0 = arith.constant 0 : i32
    %c0_i32_1 = arith.constant 0 : i32
    return %c0_i32, %c0_i32_0 : i32, i32
  }
  func.func @transform_2(%arg0: i32) -> (i32, i32) {
    %c0_i32 = arith.constant 0 : i32
    %c0_i32_0 = arith.constant 0 : i32
    %c0_i32_1 = arith.constant 0 : i32
    return %c0_i32, %c0_i32_0 : i32, i32
  }
  func.func @transform_3(%arg0: i32) -> (i32, i32) {
    %c0_i32 = arith.constant 0 : i32
    %c0_i32_0 = arith.constant 0 : i32
    %c0_i32_1 = arith.constant 0 : i32
    return %c0_i32, %c0_i32_0 : i32, i32
  }
  func.func @transform_4(%arg0: i32) -> (i32, i32) {
    %c0_i32 = arith.constant 0 : i32
    %c0_i32_0 = arith.constant 0 : i32
    return %arg0, %c0_i32 : i32, i32
  }
  func.func @transform_5(%arg0: i32) -> (i32, i32, i32) {
    %c0_i32 = arith.constant 0 : i32
    %c0_i32_0 = arith.constant 0 : i32
    %c0_i32_1 = arith.constant 0 : i32
    return %arg0, %c0_i32, %c0_i32_0 : i32, i32, i32
  }
}

module attributes {stable_mosaic.version = 11 : i64} {
  func.func @_bn_residual_relu_kernel(%arg0: i32, %arg1: memref<512x128xf32, #tpu.memory_space<vmem>>, %arg2: memref<512x128xf32, #tpu.memory_space<vmem>>, %arg3: memref<1x128xf32, #tpu.memory_space<vmem>>, %arg4: memref<1x128xf32, #tpu.memory_space<vmem>>, %arg5: memref<512x128xf32, #tpu.memory_space<vmem>>) attributes {dimension_semantics = [#tpu.dimension_semantics<parallel>], iteration_bounds = array<i64: 2>, scalar_prefetch = 0 : i64, scratch_operands = 0 : i64, tpu.core_type = #tpu.core_type<tc>, window_params = [{transform_indices = @transform_0, window_bounds = array<i64: 512, 128>}, {transform_indices = @transform_1, window_bounds = array<i64: 512, 128>}, {pipeline_mode = #tpu.pipeline_mode<synchronous>, transform_indices = @transform_2, window_bounds = array<i64: 1, 128>}, {pipeline_mode = #tpu.pipeline_mode<synchronous>, transform_indices = @transform_3, window_bounds = array<i64: 1, 128>}, {transform_indices = @transform_4, window_bounds = array<i64: 512, 128>}]} {
    %c0 = arith.constant 0 : index
    %c0_0 = arith.constant 0 : index
    %0 = vector.load %arg1[%c0, %c0_0] : memref<512x128xf32, #tpu.memory_space<vmem>>, vector<512x128xf32>
    %c0_1 = arith.constant 0 : index
    %c0_2 = arith.constant 0 : index
    %1 = vector.load %arg3[%c0_1, %c0_2] : memref<1x128xf32, #tpu.memory_space<vmem>>, vector<1x128xf32>
    %2 = vector.broadcast %1 : vector<1x128xf32> to vector<512x128xf32>
    %3 = arith.mulf %0, %2 : vector<512x128xf32>
    %c0_3 = arith.constant 0 : index
    %c0_4 = arith.constant 0 : index
    %4 = vector.load %arg4[%c0_3, %c0_4] : memref<1x128xf32, #tpu.memory_space<vmem>>, vector<1x128xf32>
    %5 = vector.broadcast %4 : vector<1x128xf32> to vector<512x128xf32>
    %6 = arith.addf %3, %5 : vector<512x128xf32>
    %c0_5 = arith.constant 0 : index
    %c0_6 = arith.constant 0 : index
    %7 = vector.load %arg2[%c0_5, %c0_6] : memref<512x128xf32, #tpu.memory_space<vmem>>, vector<512x128xf32>
    %8 = arith.addf %6, %7 : vector<512x128xf32>
    %cst = arith.constant 0.000000e+00 : f32
    %9 = vector.broadcast %cst : f32 to vector<512x128xf32>
    %10 = arith.maximumf %8, %9 : vector<512x128xf32>
    %c0_7 = arith.constant 0 : index
    %c0_8 = arith.constant 0 : index
    %11 = vector.load %arg5[%c0_7, %c0_8] : memref<512x128xf32, #tpu.memory_space<vmem>>, vector<512x128xf32>
    tpu.vector_store %arg5[%c0_7, %c0_8], %10 {strides = array<i32>} : memref<512x128xf32, #tpu.memory_space<vmem>>, vector<512x128xf32>,
    return
  }
  func.func @transform_0(%arg0: i32) -> (i32, i32) {
    %c0_i32 = arith.constant 0 : i32
    %c0_i32_0 = arith.constant 0 : i32
    return %arg0, %c0_i32 : i32, i32
  }
  func.func @transform_1(%arg0: i32) -> (i32, i32) {
    %c0_i32 = arith.constant 0 : i32
    %c0_i32_0 = arith.constant 0 : i32
    return %arg0, %c0_i32 : i32, i32
  }
  func.func @transform_2(%arg0: i32) -> (i32, i32) {
    %c0_i32 = arith.constant 0 : i32
    %c0_i32_0 = arith.constant 0 : i32
    %c0_i32_1 = arith.constant 0 : i32
    return %c0_i32, %c0_i32_0 : i32, i32
  }
  func.func @transform_3(%arg0: i32) -> (i32, i32) {
    %c0_i32 = arith.constant 0 : i32
    %c0_i32_0 = arith.constant 0 : i32
    %c0_i32_1 = arith.constant 0 : i32
    return %c0_i32, %c0_i32_0 : i32, i32
  }
  func.func @transform_4(%arg0: i32) -> (i32, i32) {
    %c0_i32 = arith.constant 0 : i32
    %c0_i32_0 = arith.constant 0 : i32
    return %arg0, %c0_i32 : i32, i32
  }
}

module attributes {stable_mosaic.version = 11 : i64} {
  func.func @_bnrelu_conv3x3_stats_kernel(%arg0: i32, %arg1: memref<256x128xf32, #tpu.memory_space<vmem>>, %arg2: memref<1x128xf32, #tpu.memory_space<vmem>>, %arg3: memref<1x128xf32, #tpu.memory_space<vmem>>, %arg4: memref<9x128x128xf32, #tpu.memory_space<vmem>>, %arg5: memref<256x1xf32, #tpu.memory_space<vmem>>, %arg6: memref<256x1xf32, #tpu.memory_space<vmem>>, %arg7: memref<256x128xf32, #tpu.memory_space<vmem>>, %arg8: memref<1x2x128xf32, #tpu.memory_space<vmem>>) attributes {dimension_semantics = [#tpu.dimension_semantics<parallel>], iteration_bounds = array<i64: 4>, scalar_prefetch = 0 : i64, scratch_operands = 0 : i64, tpu.core_type = #tpu.core_type<tc>, window_params = [{transform_indices = @transform_0, window_bounds = array<i64: 256, 128>}, {pipeline_mode = #tpu.pipeline_mode<synchronous>, transform_indices = @transform_1, window_bounds = array<i64: 1, 128>}, {pipeline_mode = #tpu.pipeline_mode<synchronous>, transform_indices = @transform_2, window_bounds = array<i64: 1, 128>}, {pipeline_mode = #tpu.pipeline_mode<synchronous>, transform_indices = @transform_3, window_bounds = array<i64: 9, 128, 128>}, {pipeline_mode = #tpu.pipeline_mode<synchronous>, transform_indices = @transform_4, window_bounds = array<i64: 256, 1>}, {pipeline_mode = #tpu.pipeline_mode<synchronous>, transform_indices = @transform_5, window_bounds = array<i64: 256, 1>}, {transform_indices = @transform_6, window_bounds = array<i64: 256, 128>}, {transform_indices = @transform_7, window_bounds = array<i64: 1, 2, 128>}]} {
    %c0 = arith.constant 0 : index
    %c0_0 = arith.constant 0 : index
    %0 = vector.load %arg1[%c0, %c0_0] : memref<256x128xf32, #tpu.memory_space<vmem>>, vector<256x128xf32>
    %c0_1 = arith.constant 0 : index
    %c0_2 = arith.constant 0 : index
    %1 = vector.load %arg2[%c0_1, %c0_2] : memref<1x128xf32, #tpu.memory_space<vmem>>, vector<1x128xf32>
    %2 = vector.broadcast %1 : vector<1x128xf32> to vector<256x128xf32>
    %3 = arith.mulf %0, %2 : vector<256x128xf32>
    %c0_3 = arith.constant 0 : index
    %c0_4 = arith.constant 0 : index
    %4 = vector.load %arg3[%c0_3, %c0_4] : memref<1x128xf32, #tpu.memory_space<vmem>>, vector<1x128xf32>
    %5 = vector.broadcast %4 : vector<1x128xf32> to vector<256x128xf32>
    %6 = arith.addf %3, %5 : vector<256x128xf32>
    %cst = arith.constant 0.000000e+00 : f32
    %7 = vector.broadcast %cst : f32 to vector<256x128xf32>
    %8 = arith.maximumf %6, %7 : vector<256x128xf32>
    %cst_5 = arith.constant 0.000000e+00 : f32
    %9 = vector.broadcast %cst_5 : f32 to vector<17x128xf32>
    %10 = vector.extract_strided_slice %8 {offsets = [0, 0], sizes = [239, 128], strides = [1, 1]} : vector<256x128xf32> to vector<239x128xf32>
    %11 = tpu.concatenate %9, %10 in 0 : vector<17x128xf32>, vector<239x128xf32> -> vector<256x128xf32>
    %c0_6 = arith.constant 0 : index
    %c0_7 = arith.constant 0 : index
    %12 = vector.load %arg5[%c0_6, %c0_7] : memref<256x1xf32, #tpu.memory_space<vmem>>, vector<256x1xf32>
    %13 = vector.broadcast %12 : vector<256x1xf32> to vector<256x128xf32>
    %14 = arith.mulf %11, %13 : vector<256x128xf32>
    %c0_8 = arith.constant 0 : index
    %c0_9 = arith.constant 0 : index
    %c0_10 = arith.constant 0 : index
    %15 = vector.load %arg4[%c0_8, %c0_9, %c0_10] : memref<9x128x128xf32, #tpu.memory_space<vmem>>, vector<1x128x128xf32>
    %16 = vector.shape_cast %15 : vector<1x128x128xf32> to vector<128x128xf32>
    %cst_11 = arith.constant dense<0.000000e+00> : vector<256x128xf32>
    %17 = tpu.matmul %14, %16, %cst_11 {dimension_numbers = #tpu.dot_dimension_numbers<[1], [0], [0], [1], [0, 0, 1, 1], [], []>} : vector<256x128xf32>, vector<128x128xf32>, vector<256x128xf32> -> vector<256x128xf32>
    %cst_12 = arith.constant 0.000000e+00 : f32
    %18 = vector.broadcast %cst_12 : f32 to vector<16x128xf32>
    %19 = vector.extract_strided_slice %8 {offsets = [0, 0], sizes = [240, 128], strides = [1, 1]} : vector<256x128xf32> to vector<240x128xf32>
    %20 = tpu.concatenate %18, %19 in 0 : vector<16x128xf32>, vector<240x128xf32> -> vector<256x128xf32>
    %c1 = arith.constant 1 : index
    %c0_13 = arith.constant 0 : index
    %c0_14 = arith.constant 0 : index
    %21 = vector.load %arg4[%c1, %c0_13, %c0_14] : memref<9x128x128xf32, #tpu.memory_space<vmem>>, vector<1x128x128xf32>
    %22 = vector.shape_cast %21 : vector<1x128x128xf32> to vector<128x128xf32>
    %cst_15 = arith.constant dense<0.000000e+00> : vector<256x128xf32>
    %23 = tpu.matmul %20, %22, %cst_15 {dimension_numbers = #tpu.dot_dimension_numbers<[1], [0], [0], [1], [0, 0, 1, 1], [], []>} : vector<256x128xf32>, vector<128x128xf32>, vector<256x128xf32> -> vector<256x128xf32>
    %24 = arith.addf %17, %23 : vector<256x128xf32>
    %cst_16 = arith.constant 0.000000e+00 : f32
    %25 = vector.broadcast %cst_16 : f32 to vector<15x128xf32>
    %26 = vector.extract_strided_slice %8 {offsets = [0, 0], sizes = [241, 128], strides = [1, 1]} : vector<256x128xf32> to vector<241x128xf32>
    %27 = tpu.concatenate %25, %26 in 0 : vector<15x128xf32>, vector<241x128xf32> -> vector<256x128xf32>
    %c0_17 = arith.constant 0 : index
    %c0_18 = arith.constant 0 : index
    %28 = vector.load %arg6[%c0_17, %c0_18] : memref<256x1xf32, #tpu.memory_space<vmem>>, vector<256x1xf32>
    %29 = vector.broadcast %28 : vector<256x1xf32> to vector<256x128xf32>
    %30 = arith.mulf %27, %29 : vector<256x128xf32>
    %c2 = arith.constant 2 : index
    %c0_19 = arith.constant 0 : index
    %c0_20 = arith.constant 0 : index
    %31 = vector.load %arg4[%c2, %c0_19, %c0_20] : memref<9x128x128xf32, #tpu.memory_space<vmem>>, vector<1x128x128xf32>
    %32 = vector.shape_cast %31 : vector<1x128x128xf32> to vector<128x128xf32>
    %cst_21 = arith.constant dense<0.000000e+00> : vector<256x128xf32>
    %33 = tpu.matmul %30, %32, %cst_21 {dimension_numbers = #tpu.dot_dimension_numbers<[1], [0], [0], [1], [0, 0, 1, 1], [], []>} : vector<256x128xf32>, vector<128x128xf32>, vector<256x128xf32> -> vector<256x128xf32>
    %34 = arith.addf %24, %33 : vector<256x128xf32>
    %cst_22 = arith.constant 0.000000e+00 : f32
    %35 = vector.broadcast %cst_22 : f32 to vector<1x128xf32>
    %36 = vector.extract_strided_slice %8 {offsets = [0, 0], sizes = [255, 128], strides = [1, 1]} : vector<256x128xf32> to vector<255x128xf32>
    %37 = tpu.concatenate %35, %36 in 0 : vector<1x128xf32>, vector<255x128xf32> -> vector<256x128xf32>
    %c0_23 = arith.constant 0 : index
    %c0_24 = arith.constant 0 : index
    %38 = vector.load %arg5[%c0_23, %c0_24] : memref<256x1xf32, #tpu.memory_space<vmem>>, vector<256x1xf32>
    %39 = vector.broadcast %38 : vector<256x1xf32> to vector<256x128xf32>
    %40 = arith.mulf %37, %39 : vector<256x128xf32>
    %c3 = arith.constant 3 : index
    %c0_25 = arith.constant 0 : index
    %c0_26 = arith.constant 0 : index
    %41 = vector.load %arg4[%c3, %c0_25, %c0_26] : memref<9x128x128xf32, #tpu.memory_space<vmem>>, vector<1x128x128xf32>
    %42 = vector.shape_cast %41 : vector<1x128x128xf32> to vector<128x128xf32>
    %cst_27 = arith.constant dense<0.000000e+00> : vector<256x128xf32>
    %43 = tpu.matmul %40, %42, %cst_27 {dimension_numbers = #tpu.dot_dimension_numbers<[1], [0], [0], [1], [0, 0, 1, 1], [], []>} : vector<256x128xf32>, vector<128x128xf32>, vector<256x128xf32> -> vector<256x128xf32>
    %44 = arith.addf %34, %43 : vector<256x128xf32>
    %c4 = arith.constant 4 : index
    %c0_28 = arith.constant 0 : index
    %c0_29 = arith.constant 0 : index
    %45 = vector.load %arg4[%c4, %c0_28, %c0_29] : memref<9x128x128xf32, #tpu.memory_space<vmem>>, vector<1x128x128xf32>
    %46 = vector.shape_cast %45 : vector<1x128x128xf32> to vector<128x128xf32>
    %cst_30 = arith.constant dense<0.000000e+00> : vector<256x128xf32>
    %47 = tpu.matmul %8, %46, %cst_30 {dimension_numbers = #tpu.dot_dimension_numbers<[1], [0], [0], [1], [0, 0, 1, 1], [], []>} : vector<256x128xf32>, vector<128x128xf32>, vector<256x128xf32> -> vector<256x128xf32>
    %48 = arith.addf %44, %47 : vector<256x128xf32>
    %cst_31 = arith.constant 0.000000e+00 : f32
    %49 = vector.broadcast %cst_31 : f32 to vector<1x128xf32>
    %50 = vector.extract_strided_slice %8 {offsets = [1, 0], sizes = [255, 128], strides = [1, 1]} : vector<256x128xf32> to vector<255x128xf32>
    %51 = tpu.concatenate %50, %49 in 0 : vector<255x128xf32>, vector<1x128xf32> -> vector<256x128xf32>
    %c0_32 = arith.constant 0 : index
    %c0_33 = arith.constant 0 : index
    %52 = vector.load %arg6[%c0_32, %c0_33] : memref<256x1xf32, #tpu.memory_space<vmem>>, vector<256x1xf32>
    %53 = vector.broadcast %52 : vector<256x1xf32> to vector<256x128xf32>
    %54 = arith.mulf %51, %53 : vector<256x128xf32>
    %c5 = arith.constant 5 : index
    %c0_34 = arith.constant 0 : index
    %c0_35 = arith.constant 0 : index
    %55 = vector.load %arg4[%c5, %c0_34, %c0_35] : memref<9x128x128xf32, #tpu.memory_space<vmem>>, vector<1x128x128xf32>
    %56 = vector.shape_cast %55 : vector<1x128x128xf32> to vector<128x128xf32>
    %cst_36 = arith.constant dense<0.000000e+00> : vector<256x128xf32>
    %57 = tpu.matmul %54, %56, %cst_36 {dimension_numbers = #tpu.dot_dimension_numbers<[1], [0], [0], [1], [0, 0, 1, 1], [], []>} : vector<256x128xf32>, vector<128x128xf32>, vector<256x128xf32> -> vector<256x128xf32>
    %58 = arith.addf %48, %57 : vector<256x128xf32>
    %cst_37 = arith.constant 0.000000e+00 : f32
    %59 = vector.broadcast %cst_37 : f32 to vector<15x128xf32>
    %60 = vector.extract_strided_slice %8 {offsets = [15, 0], sizes = [241, 128], strides = [1, 1]} : vector<256x128xf32> to vector<241x128xf32>
    %61 = tpu.concatenate %60, %59 in 0 : vector<241x128xf32>, vector<15x128xf32> -> vector<256x128xf32>
    %c0_38 = arith.constant 0 : index
    %c0_39 = arith.constant 0 : index
    %62 = vector.load %arg5[%c0_38, %c0_39] : memref<256x1xf32, #tpu.memory_space<vmem>>, vector<256x1xf32>
    %63 = vector.broadcast %62 : vector<256x1xf32> to vector<256x128xf32>
    %64 = arith.mulf %61, %63 : vector<256x128xf32>
    %c6 = arith.constant 6 : index
    %c0_40 = arith.constant 0 : index
    %c0_41 = arith.constant 0 : index
    %65 = vector.load %arg4[%c6, %c0_40, %c0_41] : memref<9x128x128xf32, #tpu.memory_space<vmem>>, vector<1x128x128xf32>
    %66 = vector.shape_cast %65 : vector<1x128x128xf32> to vector<128x128xf32>
    %cst_42 = arith.constant dense<0.000000e+00> : vector<256x128xf32>
    %67 = tpu.matmul %64, %66, %cst_42 {dimension_numbers = #tpu.dot_dimension_numbers<[1], [0], [0], [1], [0, 0, 1, 1], [], []>} : vector<256x128xf32>, vector<128x128xf32>, vector<256x128xf32> -> vector<256x128xf32>
    %68 = arith.addf %58, %67 : vector<256x128xf32>
    %cst_43 = arith.constant 0.000000e+00 : f32
    %69 = vector.broadcast %cst_43 : f32 to vector<16x128xf32>
    %70 = vector.extract_strided_slice %8 {offsets = [16, 0], sizes = [240, 128], strides = [1, 1]} : vector<256x128xf32> to vector<240x128xf32>
    %71 = tpu.concatenate %70, %69 in 0 : vector<240x128xf32>, vector<16x128xf32> -> vector<256x128xf32>
    %c7 = arith.constant 7 : index
    %c0_44 = arith.constant 0 : index
    %c0_45 = arith.constant 0 : index
    %72 = vector.load %arg4[%c7, %c0_44, %c0_45] : memref<9x128x128xf32, #tpu.memory_space<vmem>>, vector<1x128x128xf32>
    %73 = vector.shape_cast %72 : vector<1x128x128xf32> to vector<128x128xf32>
    %cst_46 = arith.constant dense<0.000000e+00> : vector<256x128xf32>
    %74 = tpu.matmul %71, %73, %cst_46 {dimension_numbers = #tpu.dot_dimension_numbers<[1], [0], [0], [1], [0, 0, 1, 1], [], []>} : vector<256x128xf32>, vector<128x128xf32>, vector<256x128xf32> -> vector<256x128xf32>
    %75 = arith.addf %68, %74 : vector<256x128xf32>
    %cst_47 = arith.constant 0.000000e+00 : f32
    %76 = vector.broadcast %cst_47 : f32 to vector<17x128xf32>
    %77 = vector.extract_strided_slice %8 {offsets = [17, 0], sizes = [239, 128], strides = [1, 1]} : vector<256x128xf32> to vector<239x128xf32>
    %78 = tpu.concatenate %77, %76 in 0 : vector<239x128xf32>, vector<17x128xf32> -> vector<256x128xf32>
    %c0_48 = arith.constant 0 : index
    %c0_49 = arith.constant 0 : index
    %79 = vector.load %arg6[%c0_48, %c0_49] : memref<256x1xf32, #tpu.memory_space<vmem>>, vector<256x1xf32>
    %80 = vector.broadcast %79 : vector<256x1xf32> to vector<256x128xf32>
    %81 = arith.mulf %78, %80 : vector<256x128xf32>
    %c8 = arith.constant 8 : index
    %c0_50 = arith.constant 0 : index
    %c0_51 = arith.constant 0 : index
    %82 = vector.load %arg4[%c8, %c0_50, %c0_51] : memref<9x128x128xf32, #tpu.memory_space<vmem>>, vector<1x128x128xf32>
    %83 = vector.shape_cast %82 : vector<1x128x128xf32> to vector<128x128xf32>
    %cst_52 = arith.constant dense<0.000000e+00> : vector<256x128xf32>
    %84 = tpu.matmul %81, %83, %cst_52 {dimension_numbers = #tpu.dot_dimension_numbers<[1], [0], [0], [1], [0, 0, 1, 1], [], []>} : vector<256x128xf32>, vector<128x128xf32>, vector<256x128xf32> -> vector<256x128xf32>
    %85 = arith.addf %75, %84 : vector<256x128xf32>
    %c0_53 = arith.constant 0 : index
    %c0_54 = arith.constant 0 : index
    %86 = vector.load %arg7[%c0_53, %c0_54] : memref<256x128xf32, #tpu.memory_space<vmem>>, vector<256x128xf32>
    tpu.vector_store %arg7[%c0_53, %c0_54], %85 {strides = array<i32>} : memref<256x128xf32, #tpu.memory_space<vmem>>, vector<256x128xf32>,
    %cst_55 = arith.constant dense<0.000000e+00> : vector<128xf32>
    %87 = vector.multi_reduction <add>, %85, %cst_55 [0] : vector<256x128xf32> to vector<128xf32>
    %88 = vector.shape_cast %87 : vector<128xf32> to vector<1x128xf32>
    %89 = arith.mulf %85, %85 : vector<256x128xf32>
    %cst_56 = arith.constant dense<0.000000e+00> : vector<128xf32>
    %90 = vector.multi_reduction <add>, %89, %cst_56 [0] : vector<256x128xf32> to vector<128xf32>
    %91 = vector.shape_cast %90 : vector<128xf32> to vector<1x128xf32>
    %92 = tpu.concatenate %88, %91 in 0 : vector<1x128xf32>, vector<1x128xf32> -> vector<2x128xf32>
    %93 = vector.shape_cast %92 : vector<2x128xf32> to vector<1x2x128xf32>
    %c0_57 = arith.constant 0 : index
    %c0_58 = arith.constant 0 : index
    %c0_59 = arith.constant 0 : index
    %94 = vector.load %arg8[%c0_57, %c0_58, %c0_59] : memref<1x2x128xf32, #tpu.memory_space<vmem>>, vector<1x2x128xf32>
    tpu.vector_store %arg8[%c0_57, %c0_58, %c0_59], %93 {strides = array<i32>} : memref<1x2x128xf32, #tpu.memory_space<vmem>>, vector<1x2x128xf32>,
    return
  }
  func.func @transform_0(%arg0: i32) -> (i32, i32) {
    %c0_i32 = arith.constant 0 : i32
    %c0_i32_0 = arith.constant 0 : i32
    return %arg0, %c0_i32 : i32, i32
  }
  func.func @transform_1(%arg0: i32) -> (i32, i32) {
    %c0_i32 = arith.constant 0 : i32
    %c0_i32_0 = arith.constant 0 : i32
    %c0_i32_1 = arith.constant 0 : i32
    return %c0_i32, %c0_i32_0 : i32, i32
  }
  func.func @transform_2(%arg0: i32) -> (i32, i32) {
    %c0_i32 = arith.constant 0 : i32
    %c0_i32_0 = arith.constant 0 : i32
    %c0_i32_1 = arith.constant 0 : i32
    return %c0_i32, %c0_i32_0 : i32, i32
  }
  func.func @transform_3(%arg0: i32) -> (i32, i32, i32) {
    %c0_i32 = arith.constant 0 : i32
    %c0_i32_0 = arith.constant 0 : i32
    %c0_i32_1 = arith.constant 0 : i32
    %c0_i32_2 = arith.constant 0 : i32
    return %c0_i32, %c0_i32_0, %c0_i32_1 : i32, i32, i32
  }
  func.func @transform_4(%arg0: i32) -> (i32, i32) {
    %c0_i32 = arith.constant 0 : i32
    %c0_i32_0 = arith.constant 0 : i32
    %c0_i32_1 = arith.constant 0 : i32
    return %c0_i32, %c0_i32_0 : i32, i32
  }
  func.func @transform_5(%arg0: i32) -> (i32, i32) {
    %c0_i32 = arith.constant 0 : i32
    %c0_i32_0 = arith.constant 0 : i32
    %c0_i32_1 = arith.constant 0 : i32
    return %c0_i32, %c0_i32_0 : i32, i32
  }
  func.func @transform_6(%arg0: i32) -> (i32, i32) {
    %c0_i32 = arith.constant 0 : i32
    %c0_i32_0 = arith.constant 0 : i32
    return %arg0, %c0_i32 : i32, i32
  }
  func.func @transform_7(%arg0: i32) -> (i32, i32, i32) {
    %c0_i32 = arith.constant 0 : i32
    %c0_i32_0 = arith.constant 0 : i32
    %c0_i32_1 = arith.constant 0 : i32
    return %arg0, %c0_i32, %c0_i32_0 : i32, i32, i32
  }
}

</mosaic_0001>

<llo_original>
// kernel: bottleneck_forward.4
$region0: #{bottleneck_forward.4}
  #allocation0 [shape = 'u32[]', space=smem, size = 0x4, offset = 0x4, fixed_abs, tag = 'smem constant byte address 0x4 - core index']
  #allocation1 [shape = 'u32[144,128]{1,0:T(1,128)}', space=vmem, size = 0x12000, scoped, tag = 'internal scratch']
  %s0 = inlined_call_operand.hbm [shape: f32[1024,128], index: 0, kind: input, shape index: {}]
  %s1 = inlined_call_operand.hbm [shape: f32[128,128], index: 1, kind: input, shape index: {}]
  %s2 = inlined_call_operand.vmem [shape: f32[1024,128], index: 2, kind: output, shape index: {0}]
  %s3 = inlined_call_operand.vmem [shape: f32[2,2,128], index: 3, kind: output, shape index: {1}]
  %4 = xla_tuple %s2, %s3
  %s5 = sld [smem:[#allocation0]]
  $region57: #{bottleneck_forward.4} parent=0
    _
  %s7 = ssub.s32 1, %s5
  %s8 = scalar_select 0, %s7, %s5
  $region1: #{bottleneck_forward.4} parent=0
    #allocation2 [shape = 'u8[524288]{0}', space=vmem, size = 0x80000, scoped, tag = 'input window, operand 0']
    #allocation3 [shape = 's32[2]{0}', space=sflag, size = 0x8, scoped, tag = 'scoped memory for bottleneck_forward.4']
    #allocation4 [shape = 'u8[65536]{0}', space=vmem, size = 0x10000, scoped, tag = 'input window, operand 1, single buffered']
    #allocation5 [shape = 's32[1]{0}', space=sflag, size = 0x4, scoped, tag = 'scoped memory for bottleneck_forward.4']
    %9 = vsyncpa [#allocation3], 0
    %s10 = scalar_lea.sflag [#allocation3], 1
    %11 = vsyncpa %s10, 0
    %12 = vsyncpa [#allocation5], 0
    loop: start=0, step=1, limit=4
    $region2: #{bottleneck_forward.4} parent=1 // loop_pre_header
      _
    $region3: #{bottleneck_forward.4} parent=1 // loop_header
      %s14 = sphi 0, %s18
      %p15 = scmp.ge.s32.totalorder %s14, 4
      %s24 = sphi 0, %s26
      %s27 = sphi 0, %s24
      %s28 = sphi 0, %s27
      %s44 = sphi 0, %s28
      %s48 = sphi 0, %s48
      %s50 = sphi 0, %s48
      %s51 = sphi 0, %s50
      %s65 = sphi 0, %s51
      %s71 = sphi 0, %s73
      %s74 = sphi 0, %s71
      %s75 = sphi 0, %s74
      %s91 = sphi 0, %s75
      %s97 = sphi 0, %s99
      %s100 = sphi 0, %s97
      %s101 = sphi 0, %s100
      %s117 = sphi 0, %s101
    $region4: #{bottleneck_forward.4} parent=1 // loop_header_branch
      %17 = sbr.rel (%p15) target = $region8
    $region5: #{bottleneck_forward.4} parent=1 // loop_body
      %s19 = ssub.s32 %s14, 1
      %s20 = ssub.s32 %s14, 2
      %s21 = sadd.s32 %s14, 1
      %s22 = ssub.s32 %s14, %s21
      %p23 = scmp.eq.s32.totalorder %s22, 0
      %s25 = sadd.s32 %s24, 1
      %s26 = scalar_select %p23, %s24, %s25
      %p29 = pneg %p23
      %p30 = scmp.eq.s32.totalorder %s14, 1
      %p31 = por %p29, %p30
      %p32 = scmp.ne.s32.totalorder %s24, %s27
      %p33 = scmp.eq.s32.totalorder %s14, 0
      %p34 = por %p32, %p33
      %p35 = scmp.ne.s32.totalorder %s24, %s27
      %p36 = scmp.eq.s32.totalorder %s19, 1
      %p37 = por %p35, %p36
      %p38 = scmp.ne.s32.totalorder %s27, %s28
      %p39 = scmp.eq.s32.totalorder %s19, 0
      %p40 = por %p38, %p39
      %p41 = scmp.ne.s32.totalorder %s27, %s28
      %p42 = scmp.eq.s32.totalorder %s20, 1
      %p43 = por %p41, %p42
      %p45 = scmp.ne.s32.totalorder %s28, %s44
      %p46 = scmp.eq.s32.totalorder %s20, 0
      %p47 = por %p45, %p46
      %s49 = sadd.s32 %s48, 1
      %p52 = scmp.eq.s32.totalorder %s14, 1
      %p53 = scmp.ne.s32.totalorder %s48, %s50
      %p54 = scmp.eq.s32.totalorder %s14, 0
      %p55 = por %p53, %p54
      %p56 = scmp.ne.s32.totalorder %s48, %s50
      %p57 = scmp.eq.s32.totalorder %s19, 1
      %p58 = por %p56, %p57
      %p59 = scmp.ne.s32.totalorder %s50, %s51
      %p60 = scmp.eq.s32.totalorder %s19, 0
      %p61 = por %p59, %p60
      %p62 = scmp.ne.s32.totalorder %s50, %s51
      %p63 = scmp.eq.s32.totalorder %s20, 1
      %p64 = por %p62, %p63
      %p66 = scmp.ne.s32.totalorder %s51, %s65
      %p67 = scmp.eq.s32.totalorder %s20, 0
      %p68 = por %p66, %p67
      %s69 = ssub.s32 %s14, %s21
      %p70 = scmp.eq.s32.totalorder %s69, 0
      %s72 = sadd.s32 %s71, 1
      %s73 = scalar_select %p70, %s71, %s72
      %p76 = pneg %p70
      %p77 = scmp.eq.s32.totalorder %s14, 1
      %p78 = por %p76, %p77
      %p79 = scmp.ne.s32.totalorder %s71, %s74
      %p80 = scmp.eq.s32.totalorder %s14, 0
      %p81 = por %p79, %p80
      %p82 = scmp.ne.s32.totalorder %s71, %s74
      %p83 = scmp.eq.s32.totalorder %s19, 1
      %p84 = por %p82, %p83
      %p85 = scmp.ne.s32.totalorder %s74, %s75
      %p86 = scmp.eq.s32.totalorder %s19, 0
      %p87 = por %p85, %p86
      %p88 = scmp.ne.s32.totalorder %s74, %s75
      %p89 = scmp.eq.s32.totalorder %s20, 1
      %p90 = por %p88, %p89
      %p92 = scmp.ne.s32.totalorder %s75, %s91
      %p93 = scmp.eq.s32.totalorder %s20, 0
      %p94 = por %p92, %p93
      %s95 = ssub.s32 %s14, %s21
      %p96 = scmp.eq.s32.totalorder %s95, 0
      %s98 = sadd.s32 %s97, 1
      %s99 = scalar_select %p96, %s97, %s98
      %p102 = pneg %p96
      %p103 = scmp.eq.s32.totalorder %s14, 1
      %p104 = por %p102, %p103
      %p105 = scmp.ne.s32.totalorder %s97, %s100
      %p106 = scmp.eq.s32.totalorder %s14, 0
      %p107 = por %p105, %p106
      %p108 = scmp.ne.s32.totalorder %s97, %s100
      %p109 = scmp.eq.s32.totalorder %s19, 1
      %p110 = por %p108, %p109
      %p111 = scmp.ne.s32.totalorder %s100, %s101
      %p112 = scmp.eq.s32.totalorder %s19, 0
      %p113 = por %p111, %p112
      %p114 = scmp.ne.s32.totalorder %s100, %s101
      %p115 = scmp.eq.s32.totalorder %s20, 1
      %p116 = por %p114, %p115
      %p118 = scmp.ne.s32.totalorder %s101, %s117
      %p119 = scmp.eq.s32.totalorder %s20, 0
      %p120 = por %p118, %p119
      %p121 = scmp.le.s32.totalorder 1, %s14
      %p122 = scmp.lt.s32.totalorder %s14, 3
      %p123 = pnand %p121, %p122
      %p124 = pneg %p123
      // Predicated region
      $region9: #{bottleneck_forward.4} parent=5 // pred_check
        _
      $region10: #{bottleneck_forward.4} parent=5 // pred_check_branch
        %126 = sbr.rel (%p123) target = $region12
      $region11: #{bottleneck_forward.4} parent=5 // pred_region
        %s127 = ssub.s32 %s14, 1
        // Predicated region
        $region13: #{bottleneck_forward.4} parent=11 // pred_check
          %p128 = pneg %p61
        $region14: #{bottleneck_forward.4} parent=11 // pred_check_branch
          %130 = sbr.rel (%p128) target = $region16
        $region15: #{bottleneck_forward.4} parent=11 // pred_region
          %s132 = ssub.s32 2048, 2048
          %133 = vsyncadd [#allocation5], %s132
          %s134 = sshll.u32 [#allocation4], 4
          %s135 = int_to_ptr.vmem [resolvable:$true] %s134
          %140 = dma.hbm_to_vmem [thread:$0]  %s1, 2048, %s135, [#allocation5], 128, 128, 8
        $region16: #{bottleneck_forward.4} parent=11 // pred_fallthru
          _
      $region12: #{bottleneck_forward.4} parent=5 // pred_fallthru
        _
      %p141 = scmp.lt.s32.totalorder %s14, 2
      // Predicated region
      $region17: #{bottleneck_forward.4} parent=5 // pred_check
        %p142 = pneg %p141
      $region18: #{bottleneck_forward.4} parent=5 // pred_check_branch
        %144 = sbr.rel (%p142) target = $region20
      $region19: #{bottleneck_forward.4} parent=5 // pred_region
        // Predicated region
        $region21: #{bottleneck_forward.4} parent=19 // pred_check
          %p145 = pneg %p34
        $region22: #{bottleneck_forward.4} parent=19 // pred_check_branch
          %147 = sbr.rel (%p145) target = $region24
        $region23: #{bottleneck_forward.4} parent=19 // pred_region
          %s148 = sand.u32 %s24, 1
          %s149 = scalar_lea.sflag [#allocation3], %s148
          %s150 = sand.u32 %s24, 1
          %s151 = smul.addr %s150, 512
          %s152 = scalar_lea.vmem [#allocation2], %s151
          %s153 = smul.u32 64, %s14
          %s155 = ssub.s32 8192, 8192
          %156 = vsyncadd %s149, %s155
          %s157 = smul.addr %s153, 128
          %s158 = scalar_lea.hbm %s0, %s157
          %s159 = sshll.u32 %s152, 4
          %s160 = int_to_ptr.vmem [resolvable:$true] %s159
          %165 = dma.hbm_to_vmem [thread:$0]  %s158, 8192, %s160, %s149, 128, 128, 8
        $region24: #{bottleneck_forward.4} parent=19 // pred_fallthru
          _
      $region20: #{bottleneck_forward.4} parent=5 // pred_fallthru
        _
      %p166 = scmp.le.s32.totalorder 1, %s14
      %p167 = scmp.lt.s32.totalorder %s14, 3
      %p168 = pnand %p166, %p167
      %p169 = pneg %p168
      // Predicated region
      $region25: #{bottleneck_forward.4} parent=5 // pred_check
        _
      $region26: #{bottleneck_forward.4} parent=5 // pred_check_branch
        %171 = sbr.rel (%p168) target = $region28
      $region27: #{bottleneck_forward.4} parent=5 // pred_region
        %s172 = ssub.s32 %s14, 1
        %s173 = sand.u32 %s27, 1
        %s174 = scalar_lea.sflag [#allocation3], %s173
        %s175 = sand.u32 %s27, 1
        %s176 = smul.addr %s175, 512
        %s177 = scalar_lea.vmem [#allocation2], %s176
        // Predicated region
        $region29: #{bottleneck_forward.4} parent=27 // pred_check
          %p178 = pneg %p40
        $region30: #{bottleneck_forward.4} parent=27 // pred_check_branch
          %180 = sbr.rel (%p178) target = $region32
        $region31: #{bottleneck_forward.4} parent=27 // pred_region
          %181 = dma.done %s174, 8192
        $region32: #{bottleneck_forward.4} parent=27 // pred_fallthru
          _
        // Predicated region
        $region33: #{bottleneck_forward.4} parent=27 // pred_check
          %p182 = pneg %p61
        $region34: #{bottleneck_forward.4} parent=27 // pred_check_branch
          %184 = sbr.rel (%p182) target = $region36
        $region35: #{bottleneck_forward.4} parent=27 // pred_region
          %185 = dma.done [#allocation5], 2048
        $region36: #{bottleneck_forward.4} parent=27 // pred_fallthru
          _
        %s186 = sand.u32 %s27, 1
        %s187 = scalar_lea.sflag [#allocation3], %s186
        %s188 = sand.u32 %s27, 1
        %s189 = smul.addr %s188, 512
        %s190 = scalar_lea.vmem [#allocation2], %s189
        %p191 = pneg %p40
        %p192 = pneg %p37
        %p193 = pneg %p61
        %p194 = pneg %p58
        %p195 = pneg %p87
        %p196 = pneg %p84
        %s197 = smul.u32 64, %s19
        %p198 = scmp.lt.s32.totalorder %s197, 127
        %s199 = scalar_select %p198, %s197, 127
        %s200 = smul.addr %s199, 8
        %s201 = scalar_lea.vmem %s2, %s200
        %p202 = pneg %p113
        %p203 = pneg %p110
        %p204 = scmp.lt.s32.totalorder %s19, 1
        %s205 = scalar_select %p204, %s19, 1
        %s206 = smul.addr %s205, 2
        %s207 = scalar_lea.vmem %s3, %s206
        %s208 = smul.u32 64, %s19
        %s209 = smul.u32 64, %s19
        %p210 = scmp.lt.s32.totalorder %s209, 127
        %s211 = scalar_select %p210, %s209, 127
        %s212 = smul.addr %s211, 8
        %s213 = scalar_lea.vmem %s2, %s212
        %s214 = smul.u32 64, %s19
        %p215 = scmp.lt.s32.totalorder %s19, 1
        %s216 = scalar_select %p215, %s19, 1
        %s217 = smul.addr %s216, 2
        %s218 = scalar_lea.vmem %s3, %s217
        %v219 = vld [vmem:[%s177] sm:$0xff]
        %v220 = vld [vmem:[%s177 + $0x8] sm:$0xff]
        %v221 = vld [vmem:[%s177 + $0x10] sm:$0xff]
        %v222 = vld [vmem:[%s177 + $0x18] sm:$0xff]
        %v223 = vld [vmem:[%s177 + $0x20] sm:$0xff]
        %v224 = vld [vmem:[%s177 + $0x28] sm:$0xff]
        %v225 = vld [vmem:[%s177 + $0x30] sm:$0xff]
        %v226 = vld [vmem:[%s177 + $0x38] sm:$0xff]
        %v227 = vld [vmem:[%s177 + $0x40] sm:$0xff]
        %v228 = vld [vmem:[%s177 + $0x48] sm:$0xff]
        %v229 = vld [vmem:[%s177 + $0x50] sm:$0xff]
        %v230 = vld [vmem:[%s177 + $0x58] sm:$0xff]
        %v231 = vld [vmem:[%s177 + $0x60] sm:$0xff]
        %v232 = vld [vmem:[%s177 + $0x68] sm:$0xff]
        %v233 = vld [vmem:[%s177 + $0x70] sm:$0xff]
        %v234 = vld [vmem:[%s177 + $0x78] sm:$0xff]
        %v235 = vld [vmem:[%s177 + $0x80] sm:$0xff]
        %v236 = vld [vmem:[%s177 + $0x88] sm:$0xff]
        %v237 = vld [vmem:[%s177 + $0x90] sm:$0xff]
        %v238 = vld [vmem:[%s177 + $0x98] sm:$0xff]
        %v239 = vld [vmem:[%s177 + $0xa0] sm:$0xff]
        %v240 = vld [vmem:[%s177 + $0xa8] sm:$0xff]
        %v241 = vld [vmem:[%s177 + $0xb0] sm:$0xff]
        %v242 = vld [vmem:[%s177 + $0xb8] sm:$0xff]
        %v243 = vld [vmem:[%s177 + $0xc0] sm:$0xff]
        %v244 = vld [vmem:[%s177 + $0xc8] sm:$0xff]
        %v245 = vld [vmem:[%s177 + $0xd0] sm:$0xff]
        %v246 = vld [vmem:[%s177 + $0xd8] sm:$0xff]
        %v247 = vld [vmem:[%s177 + $0xe0] sm:$0xff]
        %v248 = vld [vmem:[%s177 + $0xe8] sm:$0xff]
        %v249 = vld [vmem:[%s177 + $0xf0] sm:$0xff]
        %v250 = vld [vmem:[%s177 + $0xf8] sm:$0xff]
        %v251 = vld [vmem:[%s177 + $0x100] sm:$0xff]
        %v252 = vld [vmem:[%s177 + $0x108] sm:$0xff]
        %v253 = vld [vmem:[%s177 + $0x110] sm:$0xff]
        %v254 = vld [vmem:[%s177 + $0x118] sm:$0xff]
        %v255 = vld [vmem:[%s177 + $0x120] sm:$0xff]
        %v256 = vld [vmem:[%s177 + $0x128] sm:$0xff]
        %v257 = vld [vmem:[%s177 + $0x130] sm:$0xff]
        %v258 = vld [vmem:[%s177 + $0x138] sm:$0xff]
        %v259 = vld [vmem:[%s177 + $0x140] sm:$0xff]
        %v260 = vld [vmem:[%s177 + $0x148] sm:$0xff]
        %v261 = vld [vmem:[%s177 + $0x150] sm:$0xff]
        %v262 = vld [vmem:[%s177 + $0x158] sm:$0xff]
        %v263 = vld [vmem:[%s177 + $0x160] sm:$0xff]
        %v264 = vld [vmem:[%s177 + $0x168] sm:$0xff]
        %v265 = vld [vmem:[%s177 + $0x170] sm:$0xff]
        %v266 = vld [vmem:[%s177 + $0x178] sm:$0xff]
        %v267 = vld [vmem:[%s177 + $0x180] sm:$0xff]
        %v268 = vld [vmem:[%s177 + $0x188] sm:$0xff]
        %v269 = vld [vmem:[%s177 + $0x190] sm:$0xff]
        %v270 = vld [vmem:[%s177 + $0x198] sm:$0xff]
        %v271 = vld [vmem:[%s177 + $0x1a0] sm:$0xff]
        %v272 = vld [vmem:[%s177 + $0x1a8] sm:$0xff]
        %v273 = vld [vmem:[%s177 + $0x1b0] sm:$0xff]
        %v274 = vld [vmem:[%s177 + $0x1b8] sm:$0xff]
        %v275 = vld [vmem:[%s177 + $0x1c0] sm:$0xff]
        %v276 = vld [vmem:[%s177 + $0x1c8] sm:$0xff]
        %v277 = vld [vmem:[%s177 + $0x1d0] sm:$0xff]
        %v278 = vld [vmem:[%s177 + $0x1d8] sm:$0xff]
        %v279 = vld [vmem:[%s177 + $0x1e0] sm:$0xff]
        %v280 = vld [vmem:[%s177 + $0x1e8] sm:$0xff]
        %v281 = vld [vmem:[%s177 + $0x1f0] sm:$0xff]
        %v282 = vld [vmem:[%s177 + $0x1f8] sm:$0xff]
        %v283 = vld [vmem:[#allocation4] sm:$0xff]
        %v284 = vld [vmem:[#allocation4 + $0x8] sm:$0xff]
        %v285 = vld [vmem:[#allocation4 + $0x10] sm:$0xff]
        %v286 = vld [vmem:[#allocation4 + $0x18] sm:$0xff]
        %v287 = vld [vmem:[#allocation4 + $0x20] sm:$0xff]
        %v288 = vld [vmem:[#allocation4 + $0x28] sm:$0xff]
        %v289 = vld [vmem:[#allocation4 + $0x30] sm:$0xff]
        %v290 = vld [vmem:[#allocation4 + $0x38] sm:$0xff]
        %v291 = vld [vmem:[#allocation4 + $0x40] sm:$0xff]
        %v292 = vld [vmem:[#allocation4 + $0x48] sm:$0xff]
        %v293 = vld [vmem:[#allocation4 + $0x50] sm:$0xff]
        %v294 = vld [vmem:[#allocation4 + $0x58] sm:$0xff]
        %v295 = vld [vmem:[#allocation4 + $0x60] sm:$0xff]
        %v296 = vld [vmem:[#allocation4 + $0x68] sm:$0xff]
        %v297 = vld [vmem:[#allocation4 + $0x70] sm:$0xff]
        %v298 = vld [vmem:[#allocation4 + $0x78] sm:$0xff]
        %299 = vmatprep.subr.mxu0 0.0
        %300 = vmatpush1.msra.mxu0 %v283
        %301 = vmatprep.subr.mxu0 0.0
        %302 = vmatpush1.msra.mxu0 %v284
        %303 = vmatprep.subr.mxu0 0.0
        %304 = vmatpush1.msra.mxu0 %v285
        %305 = vmatprep.subr.mxu0 0.0
        %306 = vmatpush1.msra.mxu0 %v286
        %307 = vmatprep.subr.mxu0 0.0
        %308 = vmatpush1.msra.mxu0 %v287
        %309 = vmatprep.subr.mxu0 0.0
        %310 = vmatpush1.msra.mxu0 %v288
        %311 = vmatprep.subr.mxu0 0.0
        %312 = vmatpush1.msra.mxu0 %v289
        %313 = vmatprep.subr.mxu0 0.0
        %314 = vmatpush1.msra.mxu0 %v290
        %315 = vmatprep.subr.mxu0 0.0
        %316 = vmatpush1.msra.mxu0 %v291
        %317 = vmatprep.subr.mxu0 0.0
        %318 = vmatpush1.msra.mxu0 %v292
        %319 = vmatprep.subr.mxu0 0.0
        %320 = vmatpush1.msra.mxu0 %v293
        %321 = vmatprep.subr.mxu0 0.0
        %322 = vmatpush1.msra.mxu0 %v294
        %323 = vmatprep.subr.mxu0 0.0
        %324 = vmatpush1.msra.mxu0 %v295
        %325 = vmatprep.subr.mxu0 0.0
        %326 = vmatpush1.msra.mxu0 %v296
        %327 = vmatprep.subr.mxu0 0.0
        %328 = vmatpush1.msra.mxu0 %v297
        %329 = vmatprep.subr.mxu0 0.0
        %330 = vmatpush1.msra.mxu0 %v298
        %331 = vmatprep.subr.mxu0 0.0
        %332 = vmatpush1.msra.mxu0 0.0
        %333 = vmatprep.subr.mxu0 0.0
        %334 = vmatpush1.msra.mxu0 0.0
        %335 = vmatprep.subr.mxu0 0.0
        %336 = vmatpush1.msra.mxu0 0.0
        %337 = vmatprep.subr.mxu0 0.0
        %338 = vmatpush1.msra.mxu0 0.0
        %339 = vmatprep.subr.mxu0 0.0
        %340 = vmatpush1.msra.mxu0 0.0
        %341 = vmatprep.subr.mxu0 0.0
        %342 = vmatpush1.msra.mxu0 0.0
        %343 = vmatprep.subr.mxu0 0.0
        %344 = vmatpush1.msra.mxu0 0.0
        %345 = vmatprep.subr.mxu0 0.0
        %346 = vmatpush1.msra.mxu0 0.0
        %347 = vmatprep.subr.mxu0 0.0
        %348 = vmatpush1.msra.mxu0 0.0
        %349 = vmatprep.subr.mxu0 0.0
        %350 = vmatpush1.msra.mxu0 0.0
        %351 = vmatprep.subr.mxu0 0.0
        %352 = vmatpush1.msra.mxu0 0.0
        %353 = vmatprep.subr.mxu0 0.0
        %354 = vmatpush1.msra.mxu0 0.0
        %355 = vmatprep.subr.mxu0 0.0
        %356 = vmatpush1.msra.mxu0 0.0
        %357 = vmatprep.subr.mxu0 0.0
        %358 = vmatpush1.msra.mxu0 0.0
        %359 = vmatprep.subr.mxu0 0.0
        %360 = vmatpush1.msra.mxu0 0.0
        %361 = vmatprep.subr.mxu0 0.0
        %362 = vmatpush1.msra.mxu0 0.0
        %363 = vmatprep.mubr.f32.mxu0 0.0
        %364 = vmatmul.mubr.f32.gmra.mrb[0].mxu0 %v219
        %v365 = vpop.f32.mrb[0].mxu0
        %v366 = vadd.f32 0.0, %v365
        %v367 = vpop.f32.mrb[0].mxu0
        %368 = vmatprep.mubr.f32.mxu0 0.0
        %369 = vmatmul.mubr.f32.gmra.mrb[0].mxu0 %v220
        %v370 = vpop.f32.mrb[0].mxu0
        %v371 = vadd.f32 0.0, %v370
        %v372 = vpop.f32.mrb[0].mxu0
        %373 = vmatprep.mubr.f32.mxu0 0.0
        %374 = vmatmul.mubr.f32.gmra.mrb[0].mxu0 %v221
        %v375 = vpop.f32.mrb[0].mxu0
        %v376 = vadd.f32 0.0, %v375
        %v377 = vpop.f32.mrb[0].mxu0
        %378 = vmatprep.mubr.f32.mxu0 0.0
        %379 = vmatmul.mubr.f32.gmra.mrb[0].mxu0 %v222
        %v380 = vpop.f32.mrb[0].mxu0
        %v381 = vadd.f32 0.0, %v380
        %v382 = vpop.f32.mrb[0].mxu0
        %383 = vmatprep.mubr.f32.mxu0 0.0
        %384 = vmatmul.mubr.f32.gmra.mrb[0].mxu0 %v223
        %v385 = vpop.f32.mrb[0].mxu0
        %v386 = vadd.f32 0.0, %v385
        %v387 = vpop.f32.mrb[0].mxu0
        %388 = vmatprep.mubr.f32.mxu0 0.0
        %389 = vmatmul.mubr.f32.gmra.mrb[0].mxu0 %v224
        %v390 = vpop.f32.mrb[0].mxu0
        %v391 = vadd.f32 0.0, %v390
        %v392 = vpop.f32.mrb[0].mxu0
        %393 = vmatprep.mubr.f32.mxu0 0.0
        %394 = vmatmul.mubr.f32.gmra.mrb[0].mxu0 %v225
        %v395 = vpop.f32.mrb[0].mxu0
        %v396 = vadd.f32 0.0, %v395
        %v397 = vpop.f32.mrb[0].mxu0
        %398 = vmatprep.mubr.f32.mxu0 0.0
        %399 = vmatmul.mubr.f32.gmra.mrb[0].mxu0 %v226
        %v400 = vpop.f32.mrb[0].mxu0
        %v401 = vadd.f32 0.0, %v400
        %v402 = vpop.f32.mrb[0].mxu0
        %403 = vmatprep.mubr.f32.mxu0 0.0
        %404 = vmatmul.mubr.f32.gmra.mrb[0].mxu0 %v227
        %v405 = vpop.f32.mrb[0].mxu0
        %v406 = vadd.f32 0.0, %v405
        %v407 = vpop.f32.mrb[0].mxu0
        %408 = vmatprep.mubr.f32.mxu0 0.0
        %409 = vmatmul.mubr.f32.gmra.mrb[0].mxu0 %v228
        %v410 = vpop.f32.mrb[0].mxu0
        %v411 = vadd.f32 0.0, %v410
        %v412 = vpop.f32.mrb[0].mxu0
        %413 = vmatprep.mubr.f32.mxu0 0.0
        %414 = vmatmul.mubr.f32.gmra.mrb[0].mxu0 %v229
        %v415 = vpop.f32.mrb[0].mxu0
        %v416 = vadd.f32 0.0, %v415
        %v417 = vpop.f32.mrb[0].mxu0
        %418 = vmatprep.mubr.f32.mxu0 0.0
        %419 = vmatmul.mubr.f32.gmra.mrb[0].mxu0 %v230
        %v420 = vpop.f32.mrb[0].mxu0
        %v421 = vadd.f32 0.0, %v420
        %v422 = vpop.f32.mrb[0].mxu0
        %423 = vmatprep.mubr.f32.mxu0 0.0
        %424 = vmatmul.mubr.f32.gmra.mrb[0].mxu0 %v231
        %v425 = vpop.f32.mrb[0].mxu0
        %v426 = vadd.f32 0.0, %v425
        %v427 = vpop.f32.mrb[0].mxu0
        %428 = vmatprep.mubr.f32.mxu0 0.0
        %429 = vmatmul.mubr.f32.gmra.mrb[0].mxu0 %v232
        %v430 = vpop.f32.mrb[0].mxu0
        %v431 = vadd.f32 0.0, %v430
        %v432 = vpop.f32.mrb[0].mxu0
        %433 = vmatprep.mubr.f32.mxu0 0.0
        %434 = vmatmul.mubr.f32.gmra.mrb[0].mxu0 %v233
        %v435 = vpop.f32.mrb[0].mxu0
        %v436 = vadd.f32 0.0, %v435
        %v437 = vpop.f32.mrb[0].mxu0
        %438 = vmatprep.mubr.f32.mxu0 0.0
        %439 = vmatmul.mubr.f32.gmra.mrb[0].mxu0 %v234
        %v440 = vpop.f32.mrb[0].mxu0
        %v441 = vadd.f32 0.0, %v440
        %v442 = vpop.f32.mrb[0].mxu0
        %443 = vmatprep.mubr.f32.mxu0 0.0
        %444 = vmatmul.mubr.f32.gmra.mrb[0].mxu0 %v235
        %v445 = vpop.f32.mrb[0].mxu0
        %v446 = vadd.f32 0.0, %v445
        %v447 = vpop.f32.mrb[0].mxu0
        %448 = vmatprep.mubr.f32.mxu0 0.0
        %449 = vmatmul.mubr.f32.gmra.mrb[0].mxu0 %v236
        %v450 = vpop.f32.mrb[0].mxu0
        %v451 = vadd.f32 0.0, %v450
        %v452 = vpop.f32.mrb[0].mxu0
        %453 = vmatprep.mubr.f32.mxu0 0.0
        %454 = vmatmul.mubr.f32.gmra.mrb[0].mxu0 %v237
        %v455 = vpop.f32.mrb[0].mxu0
        %v456 = vadd.f32 0.0, %v455
        %v457 = vpop.f32.mrb[0].mxu0
        %458 = vmatprep.mubr.f32.mxu0 0.0
        %459 = vmatmul.mubr.f32.gmra.mrb[0].mxu0 %v238
        %v460 = vpop.f32.mrb[0].mxu0
        %v461 = vadd.f32 0.0, %v460
        %v462 = vpop.f32.mrb[0].mxu0
        %463 = vmatprep.mubr.f32.mxu0 0.0
        %464 = vmatmul.mubr.f32.gmra.mrb[0].mxu0 %v239
        %v465 = vpop.f32.mrb[0].mxu0
        %v466 = vadd.f32 0.0, %v465
        %v467 = vpop.f32.mrb[0].mxu0
        %468 = vmatprep.mubr.f32.mxu0 0.0
        %469 = vmatmul.mubr.f32.gmra.mrb[0].mxu0 %v240
        %v470 = vpop.f32.mrb[0].mxu0
        %v471 = vadd.f32 0.0, %v470
        %v472 = vpop.f32.mrb[0].mxu0
        %473 = vmatprep.mubr.f32.mxu0 0.0
        %474 = vmatmul.mubr.f32.gmra.mrb[0].mxu0 %v241
        %v475 = vpop.f32.mrb[0].mxu0
        %v476 = vadd.f32 0.0, %v475
        %v477 = vpop.f32.mrb[0].mxu0
        %478 = vmatprep.mubr.f32.mxu0 0.0
        %479 = vmatmul.mubr.f32.gmra.mrb[0].mxu0 %v242
        %v480 = vpop.f32.mrb[0].mxu0
        %v481 = vadd.f32 0.0, %v480
        %v482 = vpop.f32.mrb[0].mxu0
        %483 = vmatprep.mubr.f32.mxu0 0.0
        %484 = vmatmul.mubr.f32.gmra.mrb[0].mxu0 %v243
        %v485 = vpop.f32.mrb[0].mxu0
        %v486 = vadd.f32 0.0, %v485
        %v487 = vpop.f32.mrb[0].mxu0
        %488 = vmatprep.mubr.f32.mxu0 0.0
        %489 = vmatmul.mubr.f32.gmra.mrb[0].mxu0 %v244
        %v490 = vpop.f32.mrb[0].mxu0
        %v491 = vadd.f32 0.0, %v490
        %v492 = vpop.f32.mrb[0].mxu0
        %493 = vmatprep.mubr.f32.mxu0 0.0
        %494 = vmatmul.mubr.f32.gmra.mrb[0].mxu0 %v245
        %v495 = vpop.f32.mrb[0].mxu0
        %v496 = vadd.f32 0.0, %v495
        %v497 = vpop.f32.mrb[0].mxu0
        %498 = vmatprep.mubr.f32.mxu0 0.0
        %499 = vmatmul.mubr.f32.gmra.mrb[0].mxu0 %v246
        %v500 = vpop.f32.mrb[0].mxu0
        %v501 = vadd.f32 0.0, %v500
        %v502 = vpop.f32.mrb[0].mxu0
        %503 = vmatprep.mubr.f32.mxu0 0.0
        %504 = vmatmul.mubr.f32.gmra.mrb[0].mxu0 %v247
        %v505 = vpop.f32.mrb[0].mxu0
        %v506 = vadd.f32 0.0, %v505
        %v507 = vpop.f32.mrb[0].mxu0
        %508 = vmatprep.mubr.f32.mxu0 0.0
        %509 = vmatmul.mubr.f32.gmra.mrb[0].mxu0 %v248
        %v510 = vpop.f32.mrb[0].mxu0
        %v511 = vadd.f32 0.0, %v510
        %v512 = vpop.f32.mrb[0].mxu0
        %513 = vmatprep.mubr.f32.mxu0 0.0
        %514 = vmatmul.mubr.f32.gmra.mrb[0].mxu0 %v249
        %v515 = vpop.f32.mrb[0].mxu0
        %v516 = vadd.f32 0.0, %v515
        %v517 = vpop.f32.mrb[0].mxu0
        %518 = vmatprep.mubr.f32.mxu0 0.0
        %519 = vmatmul.mubr.f32.gmra.mrb[0].mxu0 %v250
        %v520 = vpop.f32.mrb[0].mxu0
        %v521 = vadd.f32 0.0, %v520
        %v522 = vpop.f32.mrb[0].mxu0
        %523 = vmatprep.mubr.f32.mxu0 0.0
        %524 = vmatmul.mubr.f32.gmra.mrb[0].mxu0 %v251
        %v525 = vpop.f32.mrb[0].mxu0
        %v526 = vadd.f32 0.0, %v525
        %v527 = vpop.f32.mrb[0].mxu0
        %528 = vmatprep.mubr.f32.mxu0 0.0
        %529 = vmatmul.mubr.f32.gmra.mrb[0].mxu0 %v252
        %v530 = vpop.f32.mrb[0].mxu0
        %v531 = vadd.f32 0.0, %v530
        %v532 = vpop.f32.mrb[0].mxu0
        %533 = vmatprep.mubr.f32.mxu0 0.0
        %534 = vmatmul.mubr.f32.gmra.mrb[0].mxu0 %v253
        %v535 = vpop.f32.mrb[0].mxu0
        %v536 = vadd.f32 0.0, %v535
        %v537 = vpop.f32.mrb[0].mxu0
        %538 = vmatprep.mubr.f32.mxu0 0.0
        %539 = vmatmul.mubr.f32.gmra.mrb[0].mxu0 %v254
        %v540 = vpop.f32.mrb[0].mxu0
        %v541 = vadd.f32 0.0, %v540
        %v542 = vpop.f32.mrb[0].mxu0
        %543 = vmatprep.mubr.f32.mxu0 0.0
        %544 = vmatmul.mubr.f32.gmra.mrb[0].mxu0 %v255
        %v545 = vpop.f32.mrb[0].mxu0
        %v546 = vadd.f32 0.0, %v545
        %v547 = vpop.f32.mrb[0].mxu0
        %548 = vmatprep.mubr.f32.mxu0 0.0
        %549 = vmatmul.mubr.f32.gmra.mrb[0].mxu0 %v256
        %v550 = vpop.f32.mrb[0].mxu0
        %v551 = vadd.f32 0.0, %v550
        %v552 = vpop.f32.mrb[0].mxu0
        %553 = vmatprep.mubr.f32.mxu0 0.0
        %554 = vmatmul.mubr.f32.gmra.mrb[0].mxu0 %v257
        %v555 = vpop.f32.mrb[0].mxu0
        %v556 = vadd.f32 0.0, %v555
        %v557 = vpop.f32.mrb[0].mxu0
        %558 = vmatprep.mubr.f32.mxu0 0.0
        %559 = vmatmul.mubr.f32.gmra.mrb[0].mxu0 %v258
        %v560 = vpop.f32.mrb[0].mxu0
        %v561 = vadd.f32 0.0, %v560
        %v562 = vpop.f32.mrb[0].mxu0
        %563 = vmatprep.mubr.f32.mxu0 0.0
        %564 = vmatmul.mubr.f32.gmra.mrb[0].mxu0 %v259
        %v565 = vpop.f32.mrb[0].mxu0
        %v566 = vadd.f32 0.0, %v565
        %v567 = vpop.f32.mrb[0].mxu0
        %568 = vmatprep.mubr.f32.mxu0 0.0
        %569 = vmatmul.mubr.f32.gmra.mrb[0].mxu0 %v260
        %v570 = vpop.f32.mrb[0].mxu0
        %v571 = vadd.f32 0.0, %v570
        %v572 = vpop.f32.mrb[0].mxu0
        %573 = vmatprep.mubr.f32.mxu0 0.0
        %574 = vmatmul.mubr.f32.gmra.mrb[0].mxu0 %v261
        %v575 = vpop.f32.mrb[0].mxu0
        %v576 = vadd.f32 0.0, %v575
        %v577 = vpop.f32.mrb[0].mxu0
        %578 = vmatprep.mubr.f32.mxu0 0.0
        %579 = vmatmul.mubr.f32.gmra.mrb[0].mxu0 %v262
        %v580 = vpop.f32.mrb[0].mxu0
        %v581 = vadd.f32 0.0, %v580
        %v582 = vpop.f32.mrb[0].mxu0
        %583 = vmatprep.mubr.f32.mxu0 0.0
        %584 = vmatmul.mubr.f32.gmra.mrb[0].mxu0 %v263
        %v585 = vpop.f32.mrb[0].mxu0
        %v586 = vadd.f32 0.0, %v585
        %v587 = vpop.f32.mrb[0].mxu0
        %588 = vmatprep.mubr.f32.mxu0 0.0
        %589 = vmatmul.mubr.f32.gmra.mrb[0].mxu0 %v264
        %v590 = vpop.f32.mrb[0].mxu0
        %v591 = vadd.f32 0.0, %v590
        %v592 = vpop.f32.mrb[0].mxu0
        %593 = vmatprep.mubr.f32.mxu0 0.0
        %594 = vmatmul.mubr.f32.gmra.mrb[0].mxu0 %v265
        %v595 = vpop.f32.mrb[0].mxu0
        %v596 = vadd.f32 0.0, %v595
        %v597 = vpop.f32.mrb[0].mxu0
        %598 = vmatprep.mubr.f32.mxu0 0.0
        %599 = vmatmul.mubr.f32.gmra.mrb[0].mxu0 %v266
        %v600 = vpop.f32.mrb[0].mxu0
        %v601 = vadd.f32 0.0, %v600
        %v602 = vpop.f32.mrb[0].mxu0
        %603 = vmatprep.mubr.f32.mxu0 0.0
        %604 = vmatmul.mubr.f32.gmra.mrb[0].mxu0 %v267
        %v605 = vpop.f32.mrb[0].mxu0
        %v606 = vadd.f32 0.0, %v605
        %v607 = vpop.f32.mrb[0].mxu0
        %608 = vmatprep.mubr.f32.mxu0 0.0
        %609 = vmatmul.mubr.f32.gmra.mrb[0].mxu0 %v268
        %v610 = vpop.f32.mrb[0].mxu0
        %v611 = vadd.f32 0.0, %v610
        %v612 = vpop.f32.mrb[0].mxu0
        %613 = vmatprep.mubr.f32.mxu0 0.0
        %614 = vmatmul.mubr.f32.gmra.mrb[0].mxu0 %v269
        %v615 = vpop.f32.mrb[0].mxu0
        %v616 = vadd.f32 0.0, %v615
        %v617 = vpop.f32.mrb[0].mxu0
        %618 = vmatprep.mubr.f32.mxu0 0.0
        %619 = vmatmul.mubr.f32.gmra.mrb[0].mxu0 %v270
        %v620 = vpop.f32.mrb[0].mxu0
        %v621 = vadd.f32 0.0, %v620
        %v622 = vpop.f32.mrb[0].mxu0
        %623 = vmatprep.mubr.f32.mxu0 0.0
        %624 = vmatmul.mubr.f32.gmra.mrb[0].mxu0 %v271
        %v625 = vpop.f32.mrb[0].mxu0
        %v626 = vadd.f32 0.0, %v625
        %v627 = vpop.f32.mrb[0].mxu0
        %628 = vmatprep.mubr.f32.mxu0 0.0
        %629 = vmatmul.mubr.f32.gmra.mrb[0].mxu0 %v272
        %v630 = vpop.f32.mrb[0].mxu0
        %v631 = vadd.f32 0.0, %v630
        %v632 = vpop.f32.mrb[0].mxu0
        %633 = vmatprep.mubr.f32.mxu0 0.0
        %634 = vmatmul.mubr.f32.gmra.mrb[0].mxu0 %v273
        %v635 = vpop.f32.mrb[0].mxu0
        %v636 = vadd.f32 0.0, %v635
        %v637 = vpop.f32.mrb[0].mxu0
        %638 = vmatprep.mubr.f32.mxu0 0.0
        %639 = vmatmul.mubr.f32.gmra.mrb[0].mxu0 %v274
        %v640 = vpop.f32.mrb[0].mxu0
        %v641 = vadd.f32 0.0, %v640
        %v642 = vpop.f32.mrb[0].mxu0
        %643 = vmatprep.mubr.f32.mxu0 0.0
        %644 = vmatmul.mubr.f32.gmra.mrb[0].mxu0 %v275
        %v645 = vpop.f32.mrb[0].mxu0
        %v646 = vadd.f32 0.0, %v645
        %v647 = vpop.f32.mrb[0].mxu0
        %648 = vmatprep.mubr.f32.mxu0 0.0
        %649 = vmatmul.mubr.f32.gmra.mrb[0].mxu0 %v276
        %v650 = vpop.f32.mrb[0].mxu0
        %v651 = vadd.f32 0.0, %v650
        %v652 = vpop.f32.mrb[0].mxu0
        %653 = vmatprep.mubr.f32.mxu0 0.0
        %654 = vmatmul.mubr.f32.gmra.mrb[0].mxu0 %v277
        %v655 = vpop.f32.mrb[0].mxu0
        %v656 = vadd.f32 0.0, %v655
        %v657 = vpop.f32.mrb[0].mxu0
        %658 = vmatprep.mubr.f32.mxu0 0.0
        %659 = vmatmul.mubr.f32.gmra.mrb[0].mxu0 %v278
        %v660 = vpop.f32.mrb[0].mxu0
        %v661 = vadd.f32 0.0, %v660
        %v662 = vpop.f32.mrb[0].mxu0
        %663 = vmatprep.mubr.f32.mxu0 0.0
        %664 = vmatmul.mubr.f32.gmra.mrb[0].mxu0 %v279
        %v665 = vpop.f32.mrb[0].mxu0
        %v666 = vadd.f32 0.0, %v665
        %v667 = vpop.f32.mrb[0].mxu0
        %668 = vmatprep.mubr.f32.mxu0 0.0
        %669 = vmatmul.mubr.f32.gmra.mrb[0].mxu0 %v280
        %v670 = vpop.f32.mrb[0].mxu0
        %v671 = vadd.f32 0.0, %v670
        %v672 = vpop.f32.mrb[0].mxu0
        %673 = vmatprep.mubr.f32.mxu0 0.0
        %674 = vmatmul.mubr.f32.gmra.mrb[0].mxu0 %v281
        %v675 = vpop.f32.mrb[0].mxu0
        %v676 = vadd.f32 0.0, %v675
        %v677 = vpop.f32.mrb[0].mxu0
        %678 = vmatprep.mubr.f32.mxu0 0.0
        %679 = vmatmul.mubr.f32.gmra.mrb[0].mxu0 %v282
        %v680 = vpop.f32.mrb[0].mxu0
        %v681 = vadd.f32 0.0, %v680
        %v682 = vpop.f32.mrb[0].mxu0
        %683 = vdwg.mxu0
        %684 = vst [vmem:[%s213] sm:$0xff] %v366
        %685 = vst [vmem:[%s213 + $0x8] sm:$0xff] %v371
        %686 = vst [vmem:[%s213 + $0x10] sm:$0xff] %v376
        %687 = vst [vmem:[%s213 + $0x18] sm:$0xff] %v381
        %688 = vst [vmem:[%s213 + $0x20] sm:$0xff] %v386
        %689 = vst [vmem:[%s213 + $0x28] sm:$0xff] %v391
        %690 = vst [vmem:[%s213 + $0x30] sm:$0xff] %v396
        %691 = vst [vmem:[%s213 + $0x38] sm:$0xff] %v401
        %692 = vst [vmem:[%s213 + $0x40] sm:$0xff] %v406
        %693 = vst [vmem:[%s213 + $0x48] sm:$0xff] %v411
        %694 = vst [vmem:[%s213 + $0x50] sm:$0xff] %v416
        %695 = vst [vmem:[%s213 + $0x58] sm:$0xff] %v421
        %696 = vst [vmem:[%s213 + $0x60] sm:$0xff] %v426
        %697 = vst [vmem:[%s213 + $0x68] sm:$0xff] %v431
        %698 = vst [vmem:[%s213 + $0x70] sm:$0xff] %v436
        %699 = vst [vmem:[%s213 + $0x78] sm:$0xff] %v441
        %700 = vst [vmem:[%s213 + $0x80] sm:$0xff] %v446
        %701 = vst [vmem:[%s213 + $0x88] sm:$0xff] %v451
        %702 = vst [vmem:[%s213 + $0x90] sm:$0xff] %v456
        %703 = vst [vmem:[%s213 + $0x98] sm:$0xff] %v461
        %704 = vst [vmem:[%s213 + $0xa0] sm:$0xff] %v466
        %705 = vst [vmem:[%s213 + $0xa8] sm:$0xff] %v471
        %706 = vst [vmem:[%s213 + $0xb0] sm:$0xff] %v476
        %707 = vst [vmem:[%s213 + $0xb8] sm:$0xff] %v481
        %708 = vst [vmem:[%s213 + $0xc0] sm:$0xff] %v486
        %709 = vst [vmem:[%s213 + $0xc8] sm:$0xff] %v491
        %710 = vst [vmem:[%s213 + $0xd0] sm:$0xff] %v496
        %711 = vst [vmem:[%s213 + $0xd8] sm:$0xff] %v501
        %712 = vst [vmem:[%s213 + $0xe0] sm:$0xff] %v506
        %713 = vst [vmem:[%s213 + $0xe8] sm:$0xff] %v511
        %714 = vst [vmem:[%s213 + $0xf0] sm:$0xff] %v516
        %715 = vst [vmem:[%s213 + $0xf8] sm:$0xff] %v521
        %716 = vst [vmem:[%s213 + $0x100] sm:$0xff] %v526
        %717 = vst [vmem:[%s213 + $0x108] sm:$0xff] %v531
        %718 = vst [vmem:[%s213 + $0x110] sm:$0xff] %v536
        %719 = vst [vmem:[%s213 + $0x118] sm:$0xff] %v541
        %720 = vst [vmem:[%s213 + $0x120] sm:$0xff] %v546
        %721 = vst [vmem:[%s213 + $0x128] sm:$0xff] %v551
        %722 = vst [vmem:[%s213 + $0x130] sm:$0xff] %v556
        %723 = vst [vmem:[%s213 + $0x138] sm:$0xff] %v561
        %724 = vst [vmem:[%s213 + $0x140] sm:$0xff] %v566
        %725 = vst [vmem:[%s213 + $0x148] sm:$0xff] %v571
        %726 = vst [vmem:[%s213 + $0x150] sm:$0xff] %v576
        %727 = vst [vmem:[%s213 + $0x158] sm:$0xff] %v581
        %728 = vst [vmem:[%s213 + $0x160] sm:$0xff] %v586
        %729 = vst [vmem:[%s213 + $0x168] sm:$0xff] %v591
        %730 = vst [vmem:[%s213 + $0x170] sm:$0xff] %v596
        %731 = vst [vmem:[%s213 + $0x178] sm:$0xff] %v601
        %732 = vst [vmem:[%s213 + $0x180] sm:$0xff] %v606
        %733 = vst [vmem:[%s213 + $0x188] sm:$0xff] %v611
        %734 = vst [vmem:[%s213 + $0x190] sm:$0xff] %v616
        %735 = vst [vmem:[%s213 + $0x198] sm:$0xff] %v621
        %736 = vst [vmem:[%s213 + $0x1a0] sm:$0xff] %v626
        %737 = vst [vmem:[%s213 + $0x1a8] sm:$0xff] %v631
        %738 = vst [vmem:[%s213 + $0x1b0] sm:$0xff] %v636
        %739 = vst [vmem:[%s213 + $0x1b8] sm:$0xff] %v641
        %740 = vst [vmem:[%s213 + $0x1c0] sm:$0xff] %v646
        %741 = vst [vmem:[%s213 + $0x1c8] sm:$0xff] %v651
        %742 = vst [vmem:[%s213 + $0x1d0] sm:$0xff] %v656
        %743 = vst [vmem:[%s213 + $0x1d8] sm:$0xff] %v661
        %744 = vst [vmem:[%s213 + $0x1e0] sm:$0xff] %v666
        %745 = vst [vmem:[%s213 + $0x1e8] sm:$0xff] %v671
        %746 = vst [vmem:[%s213 + $0x1f0] sm:$0xff] %v676
        %747 = vst [vmem:[%s213 + $0x1f8] sm:$0xff] %v681
        %v748 = vadd.f32 %v366, %v371
        %v749 = vadd.f32 %v748, %v376
        %v750 = vadd.f32 %v749, %v381
        %v751 = vadd.f32 %v750, %v386
        %v752 = vadd.f32 %v751, %v391
        %v753 = vadd.f32 %v752, %v396
        %v754 = vadd.f32 %v753, %v401
        %v755 = vadd.f32 %v754, %v406
        %v756 = vadd.f32 %v755, %v411
        %v757 = vadd.f32 %v756, %v416
        %v758 = vadd.f32 %v757, %v421
        %v759 = vadd.f32 %v758, %v426
        %v760 = vadd.f32 %v759, %v431
        %v761 = vadd.f32 %v760, %v436
        %v762 = vadd.f32 %v761, %v441
        %v763 = vadd.f32 %v762, %v446
        %v764 = vadd.f32 %v763, %v451
        %v765 = vadd.f32 %v764, %v456
        %v766 = vadd.f32 %v765, %v461
        %v767 = vadd.f32 %v766, %v466
        %v768 = vadd.f32 %v767, %v471
        %v769 = vadd.f32 %v768, %v476
        %v770 = vadd.f32 %v769, %v481
        %v771 = vadd.f32 %v770, %v486
        %v772 = vadd.f32 %v771, %v491
        %v773 = vadd.f32 %v772, %v496
        %v774 = vadd.f32 %v773, %v501
        %v775 = vadd.f32 %v774, %v506
        %v776 = vadd.f32 %v775, %v511
        %v777 = vadd.f32 %v776, %v516
        %v778 = vadd.f32 %v777, %v521
        %v779 = vadd.f32 %v778, %v526
        %v780 = vadd.f32 %v779, %v531
        %v781 = vadd.f32 %v780, %v536
        %v782 = vadd.f32 %v781, %v541
        %v783 = vadd.f32 %v782, %v546
        %v784 = vadd.f32 %v783, %v551
        %v785 = vadd.f32 %v784, %v556
        %v786 = vadd.f32 %v785, %v561
        %v787 = vadd.f32 %v786, %v566
        %v788 = vadd.f32 %v787, %v571
        %v789 = vadd.f32 %v788, %v576
        %v790 = vadd.f32 %v789, %v581
        %v791 = vadd.f32 %v790, %v586
        %v792 = vadd.f32 %v791, %v591
        %v793 = vadd.f32 %v792, %v596
        %v794 = vadd.f32 %v793, %v601
        %v795 = vadd.f32 %v794, %v606
        %v796 = vadd.f32 %v795, %v611
        %v797 = vadd.f32 %v796, %v616
        %v798 = vadd.f32 %v797, %v621
        %v799 = vadd.f32 %v798, %v626
        %v800 = vadd.f32 %v799, %v631
        %v801 = vadd.f32 %v800, %v636
        %v802 = vadd.f32 %v801, %v641
        %v803 = vadd.f32 %v802, %v646
        %v804 = vadd.f32 %v803, %v651
        %v805 = vadd.f32 %v804, %v656
        %v806 = vadd.f32 %v805, %v661
        %v807 = vadd.f32 %v806, %v666
        %v808 = vadd.f32 %v807, %v671
        %v809 = vadd.f32 %v808, %v676
        %v810 = vadd.f32 %v809, %v681
        %v811 = vrot.slane %v810, 4
        %v812 = vadd.f32 %v810, %v811
        %v813 = vrot.slane %v812, 2
        %v814 = vadd.f32 %v812, %v813
        %v815 = vrot.slane %v814, 1
        %v816 = vadd.f32 %v814, %v815
        %v817 = vmul.f32 %v366, %v366
        %v818 = vmul.f32 %v371, %v371
        %v819 = vmul.f32 %v376, %v376
        %v820 = vmul.f32 %v381, %v381
        %v821 = vmul.f32 %v386, %v386
        %v822 = vmul.f32 %v391, %v391
        %v823 = vmul.f32 %v396, %v396
        %v824 = vmul.f32 %v401, %v401
        %v825 = vmul.f32 %v406, %v406
        %v826 = vmul.f32 %v411, %v411
        %v827 = vmul.f32 %v416, %v416
        %v828 = vmul.f32 %v421, %v421
        %v829 = vmul.f32 %v426, %v426
        %v830 = vmul.f32 %v431, %v431
        %v831 = vmul.f32 %v436, %v436
        %v832 = vmul.f32 %v441, %v441
        %v833 = vmul.f32 %v446, %v446
        %v834 = vmul.f32 %v451, %v451
        %v835 = vmul.f32 %v456, %v456
        %v836 = vmul.f32 %v461, %v461
        %v837 = vmul.f32 %v466, %v466
        %v838 = vmul.f32 %v471, %v471
        %v839 = vmul.f32 %v476, %v476
        %v840 = vmul.f32 %v481, %v481
        %v841 = vmul.f32 %v486, %v486
        %v842 = vmul.f32 %v491, %v491
        %v843 = vmul.f32 %v496, %v496
        %v844 = vmul.f32 %v501, %v501
        %v845 = vmul.f32 %v506, %v506
        %v846 = vmul.f32 %v511, %v511
        %v847 = vmul.f32 %v516, %v516
        %v848 = vmul.f32 %v521, %v521
        %v849 = vmul.f32 %v526, %v526
        %v850 = vmul.f32 %v531, %v531
        %v851 = vmul.f32 %v536, %v536
        %v852 = vmul.f32 %v541, %v541
        %v853 = vmul.f32 %v546, %v546
        %v854 = vmul.f32 %v551, %v551
        %v855 = vmul.f32 %v556, %v556
        %v856 = vmul.f32 %v561, %v561
        %v857 = vmul.f32 %v566, %v566
        %v858 = vmul.f32 %v571, %v571
        %v859 = vmul.f32 %v576, %v576
        %v860 = vmul.f32 %v581, %v581
        %v861 = vmul.f32 %v586, %v586
        %v862 = vmul.f32 %v591, %v591
        %v863 = vmul.f32 %v596, %v596
        %v864 = vmul.f32 %v601, %v601
        %v865 = vmul.f32 %v606, %v606
        %v866 = vmul.f32 %v611, %v611
        %v867 = vmul.f32 %v616, %v616
        %v868 = vmul.f32 %v621, %v621
        %v869 = vmul.f32 %v626, %v626
        %v870 = vmul.f32 %v631, %v631
        %v871 = vmul.f32 %v636, %v636
        %v872 = vmul.f32 %v641, %v641
        %v873 = vmul.f32 %v646, %v646
        %v874 = vmul.f32 %v651, %v651
        %v875 = vmul.f32 %v656, %v656
        %v876 = vmul.f32 %v661, %v661
        %v877 = vmul.f32 %v666, %v666
        %v878 = vmul.f32 %v671, %v671
        %v879 = vmul.f32 %v676, %v676
        %v880 = vmul.f32 %v681, %v681
        %v881 = vadd.f32 %v817, %v818
        %v882 = vadd.f32 %v881, %v819
        %v883 = vadd.f32 %v882, %v820
        %v884 = vadd.f32 %v883, %v821
        %v885 = vadd.f32 %v884, %v822
        %v886 = vadd.f32 %v885, %v823
        %v887 = vadd.f32 %v886, %v824
        %v888 = vadd.f32 %v887, %v825
        %v889 = vadd.f32 %v888, %v826
        %v890 = vadd.f32 %v889, %v827
        %v891 = vadd.f32 %v890, %v828
        %v892 = vadd.f32 %v891, %v829
        %v893 = vadd.f32 %v892, %v830
        %v894 = vadd.f32 %v893, %v831
        %v895 = vadd.f32 %v894, %v832
        %v896 = vadd.f32 %v895, %v833
        %v897 = vadd.f32 %v896, %v834
        %v898 = vadd.f32 %v897, %v835
        %v899 = vadd.f32 %v898, %v836
        %v900 = vadd.f32 %v899, %v837
        %v901 = vadd.f32 %v900, %v838
        %v902 = vadd.f32 %v901, %v839
        %v903 = vadd.f32 %v902, %v840
        %v904 = vadd.f32 %v903, %v841
        %v905 = vadd.f32 %v904, %v842
        %v906 = vadd.f32 %v905, %v843
        %v907 = vadd.f32 %v906, %v844
        %v908 = vadd.f32 %v907, %v845
        %v909 = vadd.f32 %v908, %v846
        %v910 = vadd.f32 %v909, %v847
        %v911 = vadd.f32 %v910, %v848
        %v912 = vadd.f32 %v911, %v849
        %v913 = vadd.f32 %v912, %v850
        %v914 = vadd.f32 %v913, %v851
        %v915 = vadd.f32 %v914, %v852
        %v916 = vadd.f32 %v915, %v853
        %v917 = vadd.f32 %v916, %v854
        %v918 = vadd.f32 %v917, %v855
        %v919 = vadd.f32 %v918, %v856
        %v920 = vadd.f32 %v919, %v857
        %v921 = vadd.f32 %v920, %v858
        %v922 = vadd.f32 %v921, %v859
        %v923 = vadd.f32 %v922, %v860
        %v924 = vadd.f32 %v923, %v861
        %v925 = vadd.f32 %v924, %v862
        %v926 = vadd.f32 %v925, %v863
        %v927 = vadd.f32 %v926, %v864
        %v928 = vadd.f32 %v927, %v865
        %v929 = vadd.f32 %v928, %v866
        %v930 = vadd.f32 %v929, %v867
        %v931 = vadd.f32 %v930, %v868
        %v932 = vadd.f32 %v931, %v869
        %v933 = vadd.f32 %v932, %v870
        %v934 = vadd.f32 %v933, %v871
        %v935 = vadd.f32 %v934, %v872
        %v936 = vadd.f32 %v935, %v873
        %v937 = vadd.f32 %v936, %v874
        %v938 = vadd.f32 %v937, %v875
        %v939 = vadd.f32 %v938, %v876
        %v940 = vadd.f32 %v939, %v877
        %v941 = vadd.f32 %v940, %v878
        %v942 = vadd.f32 %v941, %v879
        %v943 = vadd.f32 %v942, %v880
        %v944 = vrot.slane %v943, 4
        %v945 = vadd.f32 %v943, %v944
        %v946 = vrot.slane %v945, 2
        %v947 = vadd.f32 %v945, %v946
        %v948 = vrot.slane %v947, 1
        %v949 = vadd.f32 %v947, %v948
        %vm950 = vcmask 1040384
        %v951 = vsel %vm950, %v816, %v949
        %952 = vst [vmem:[%s218] sm:$0x3] %v951
        %s953 = smul.u32 64, %s19
        %p954 = scmp.lt.s32.totalorder %s953, 127
        %s955 = scalar_select %p954, %s953, 127
        %s956 = smul.addr %s955, 8
        %s957 = scalar_lea.vmem %s2, %s956
        %p958 = scmp.lt.s32.totalorder %s19, 1
        %s959 = scalar_select %p958, %s19, 1
        %s960 = smul.addr %s959, 2
        %s961 = scalar_lea.vmem %s3, %s960
        // Predicated region
        $region37: #{bottleneck_forward.4} parent=27 // pred_check
          %p962 = pneg %p84
        $region38: #{bottleneck_forward.4} parent=27 // pred_check_branch
          %964 = sbr.rel (%p962) target = $region40
        $region39: #{bottleneck_forward.4} parent=27 // pred_region
          %s965 = smul.u32 64, %s19
        $region40: #{bottleneck_forward.4} parent=27 // pred_fallthru
          _
        // Predicated region
        $region41: #{bottleneck_forward.4} parent=27 // pred_check
          %p966 = pneg %p110
        $region42: #{bottleneck_forward.4} parent=27 // pred_check_branch
          %968 = sbr.rel (%p966) target = $region44
        $region43: #{bottleneck_forward.4} parent=27 // pred_region
          _
        $region44: #{bottleneck_forward.4} parent=27 // pred_fallthru
          _
      $region28: #{bottleneck_forward.4} parent=5 // pred_fallthru
        _
      %p969 = scmp.le.s32.totalorder 2, %s14
      // Predicated region
      $region45: #{bottleneck_forward.4} parent=5 // pred_check
        %p970 = pneg %p969
      $region46: #{bottleneck_forward.4} parent=5 // pred_check_branch
        %972 = sbr.rel (%p970) target = $region48
      $region47: #{bottleneck_forward.4} parent=5 // pred_region
        %s973 = ssub.s32 %s14, 2
        // Predicated region
        $region49: #{bottleneck_forward.4} parent=47 // pred_check
          %p974 = pneg %p90
        $region50: #{bottleneck_forward.4} parent=47 // pred_check_branch
          %976 = sbr.rel (%p974) target = $region52
        $region51: #{bottleneck_forward.4} parent=47 // pred_region
          %s977 = smul.u32 64, %s20
          %p978 = scmp.lt.s32.totalorder %s977, 127
          %s979 = scalar_select %p978, %s977, 127
          %s980 = smul.addr %s979, 8
          %s981 = scalar_lea.vmem %s2, %s980
        $region52: #{bottleneck_forward.4} parent=47 // pred_fallthru
          _
        // Predicated region
        $region53: #{bottleneck_forward.4} parent=47 // pred_check
          %p982 = pneg %p116
        $region54: #{bottleneck_forward.4} parent=47 // pred_check_branch
          %984 = sbr.rel (%p982) target = $region56
        $region55: #{bottleneck_forward.4} parent=47 // pred_region
          %p985 = scmp.lt.s32.totalorder %s20, 1
          %s986 = scalar_select %p985, %s20, 1
          %s987 = smul.addr %s986, 2
          %s988 = scalar_lea.vmem %s3, %s987
        $region56: #{bottleneck_forward.4} parent=47 // pred_fallthru
          _
      $region48: #{bottleneck_forward.4} parent=5 // pred_fallthru
        _
    $region6: #{bottleneck_forward.4} parent=1 // loop_footer
      %s18 = sadd.s32 1, %s14
    $region7: #{bottleneck_forward.4} parent=1 // loop_footer_branch
      %13 = sbr.rel target = $region3
    $region8: #{bottleneck_forward.4} parent=1 // loop_exit
      _
    %989 = vsyncpa [#allocation3], 1
    %s990 = scalar_lea.sflag [#allocation3], 1
    %991 = vsyncpa %s990, 1
    %992 = vsyncpa [#allocation5], 1

// kernel: bottleneck_forward.7
$region0: #{bottleneck_forward.7}
  #allocation0 [shape = 'u32[]', space=smem, size = 0x4, offset = 0x4, fixed_abs, tag = 'smem constant byte address 0x4 - core index']
  #allocation1 [shape = 'u32[144,128]{1,0:T(1,128)}', space=vmem, size = 0x12000, scoped, tag = 'internal scratch']
  %s0 = inlined_call_operand.vmem [shape: f32[1024,128], index: 0, kind: input, shape index: {}]
  %s1 = inlined_call_operand.vmem [shape: f32[1024,128], index: 1, kind: input, shape index: {}]
  %s2 = inlined_call_operand.vmem [shape: f32[1,128], index: 2, kind: input, shape index: {}]
  %s3 = inlined_call_operand.vmem [shape: f32[1,128], index: 3, kind: input, shape index: {}]
  %s4 = inlined_call_operand.hbm [shape: f32[1024,128], index: 4, kind: output, shape index: {}]
  %s5 = sld [smem:[#allocation0]]
  $region49: #{bottleneck_forward.7} parent=0
    _
  %s7 = ssub.s32 1, %s5
  %s8 = scalar_select 0, %s7, %s5
  $region1: #{bottleneck_forward.7} parent=0
    #allocation2 [shape = 'u8[524288]{0}', space=vmem, size = 0x80000, scoped, tag = 'output window, operand 0']
    #allocation3 [shape = 's32[2]{0}', space=sflag, size = 0x8, scoped, tag = 'scoped memory for bottleneck_forward.7']
    %9 = vsyncpa [#allocation3], 0
    %s10 = scalar_lea.sflag [#allocation3], 1
    %11 = vsyncpa %s10, 0
    loop: start=0, step=1, limit=4
    $region2: #{bottleneck_forward.7} parent=1 // loop_pre_header
      _
    $region3: #{bottleneck_forward.7} parent=1 // loop_header
      %s13 = sphi 0, %s17
      %p14 = scmp.ge.s32.totalorder %s13, 4
      %s23 = sphi 0, %s25
      %s26 = sphi 0, %s23
      %s27 = sphi 0, %s26
      %s43 = sphi 0, %s27
      %s49 = sphi 0, %s51
      %s52 = sphi 0, %s49
      %s53 = sphi 0, %s52
      %s69 = sphi 0, %s53
      %s73 = sphi 0, %s73
      %s75 = sphi 0, %s73
      %s76 = sphi 0, %s75
      %s90 = sphi 0, %s76
      %s94 = sphi 0, %s94
      %s96 = sphi 0, %s94
      %s97 = sphi 0, %s96
      %s111 = sphi 0, %s97
      %s117 = sphi 0, %s119
      %s120 = sphi 0, %s117
      %s121 = sphi 0, %s120
      %s137 = sphi 0, %s121
    $region4: #{bottleneck_forward.7} parent=1 // loop_header_branch
      %16 = sbr.rel (%p14) target = $region8
    $region5: #{bottleneck_forward.7} parent=1 // loop_body
      %s18 = ssub.s32 %s13, 1
      %s19 = ssub.s32 %s13, 2
      %s20 = sadd.s32 %s13, 1
      %s21 = ssub.s32 %s13, %s20
      %p22 = scmp.eq.s32.totalorder %s21, 0
      %s24 = sadd.s32 %s23, 1
      %s25 = scalar_select %p22, %s23, %s24
      %p28 = pneg %p22
      %p29 = scmp.eq.s32.totalorder %s13, 1
      %p30 = por %p28, %p29
      %p31 = scmp.ne.s32.totalorder %s23, %s26
      %p32 = scmp.eq.s32.totalorder %s13, 0
      %p33 = por %p31, %p32
      %p34 = scmp.ne.s32.totalorder %s23, %s26
      %p35 = scmp.eq.s32.totalorder %s18, 1
      %p36 = por %p34, %p35
      %p37 = scmp.ne.s32.totalorder %s26, %s27
      %p38 = scmp.eq.s32.totalorder %s18, 0
      %p39 = por %p37, %p38
      %p40 = scmp.ne.s32.totalorder %s26, %s27
      %p41 = scmp.eq.s32.totalorder %s19, 1
      %p42 = por %p40, %p41
      %p44 = scmp.ne.s32.totalorder %s27, %s43
      %p45 = scmp.eq.s32.totalorder %s19, 0
      %p46 = por %p44, %p45
      %s47 = ssub.s32 %s13, %s20
      %p48 = scmp.eq.s32.totalorder %s47, 0
      %s50 = sadd.s32 %s49, 1
      %s51 = scalar_select %p48, %s49, %s50
      %p54 = pneg %p48
      %p55 = scmp.eq.s32.totalorder %s13, 1
      %p56 = por %p54, %p55
      %p57 = scmp.ne.s32.totalorder %s49, %s52
      %p58 = scmp.eq.s32.totalorder %s13, 0
      %p59 = por %p57, %p58
      %p60 = scmp.ne.s32.totalorder %s49, %s52
      %p61 = scmp.eq.s32.totalorder %s18, 1
      %p62 = por %p60, %p61
      %p63 = scmp.ne.s32.totalorder %s52, %s53
      %p64 = scmp.eq.s32.totalorder %s18, 0
      %p65 = por %p63, %p64
      %p66 = scmp.ne.s32.totalorder %s52, %s53
      %p67 = scmp.eq.s32.totalorder %s19, 1
      %p68 = por %p66, %p67
      %p70 = scmp.ne.s32.totalorder %s53, %s69
      %p71 = scmp.eq.s32.totalorder %s19, 0
      %p72 = por %p70, %p71
      %s74 = sadd.s32 %s73, 1
      %p77 = scmp.eq.s32.totalorder %s13, 1
      %p78 = scmp.ne.s32.totalorder %s73, %s75
      %p79 = scmp.eq.s32.totalorder %s13, 0
      %p80 = por %p78, %p79
      %p81 = scmp.ne.s32.totalorder %s73, %s75
      %p82 = scmp.eq.s32.totalorder %s18, 1
      %p83 = por %p81, %p82
      %p84 = scmp.ne.s32.totalorder %s75, %s76
      %p85 = scmp.eq.s32.totalorder %s18, 0
      %p86 = por %p84, %p85
      %p87 = scmp.ne.s32.totalorder %s75, %s76
      %p88 = scmp.eq.s32.totalorder %s19, 1
      %p89 = por %p87, %p88
      %p91 = scmp.ne.s32.totalorder %s76, %s90
      %p92 = scmp.eq.s32.totalorder %s19, 0
      %p93 = por %p91, %p92
      %s95 = sadd.s32 %s94, 1
      %p98 = scmp.eq.s32.totalorder %s13, 1
      %p99 = scmp.ne.s32.totalorder %s94, %s96
      %p100 = scmp.eq.s32.totalorder %s13, 0
      %p101 = por %p99, %p100
      %p102 = scmp.ne.s32.totalorder %s94, %s96
      %p103 = scmp.eq.s32.totalorder %s18, 1
      %p104 = por %p102, %p103
      %p105 = scmp.ne.s32.totalorder %s96, %s97
      %p106 = scmp.eq.s32.totalorder %s18, 0
      %p107 = por %p105, %p106
      %p108 = scmp.ne.s32.totalorder %s96, %s97
      %p109 = scmp.eq.s32.totalorder %s19, 1
      %p110 = por %p108, %p109
      %p112 = scmp.ne.s32.totalorder %s97, %s111
      %p113 = scmp.eq.s32.totalorder %s19, 0
      %p114 = por %p112, %p113
      %s115 = ssub.s32 %s13, %s20
      %p116 = scmp.eq.s32.totalorder %s115, 0
      %s118 = sadd.s32 %s117, 1
      %s119 = scalar_select %p116, %s117, %s118
      %p122 = pneg %p116
      %p123 = scmp.eq.s32.totalorder %s13, 1
      %p124 = por %p122, %p123
      %p125 = scmp.ne.s32.totalorder %s117, %s120
      %p126 = scmp.eq.s32.totalorder %s13, 0
      %p127 = por %p125, %p126
      %p128 = scmp.ne.s32.totalorder %s117, %s120
      %p129 = scmp.eq.s32.totalorder %s18, 1
      %p130 = por %p128, %p129
      %p131 = scmp.ne.s32.totalorder %s120, %s121
      %p132 = scmp.eq.s32.totalorder %s18, 0
      %p133 = por %p131, %p132
      %p134 = scmp.ne.s32.totalorder %s120, %s121
      %p135 = scmp.eq.s32.totalorder %s19, 1
      %p136 = por %p134, %p135
      %p138 = scmp.ne.s32.totalorder %s121, %s137
      %p139 = scmp.eq.s32.totalorder %s19, 0
      %p140 = por %p138, %p139
      %p141 = scmp.le.s32.totalorder 1, %s13
      %p142 = scmp.lt.s32.totalorder %s13, 3
      %p143 = pnand %p141, %p142
      %p144 = pneg %p143
      // Predicated region
      $region9: #{bottleneck_forward.7} parent=5 // pred_check
        _
      $region10: #{bottleneck_forward.7} parent=5 // pred_check_branch
        %146 = sbr.rel (%p143) target = $region12
      $region11: #{bottleneck_forward.7} parent=5 // pred_region
        %s147 = ssub.s32 %s13, 1
        // Predicated region
        $region13: #{bottleneck_forward.7} parent=11 // pred_check
          %p148 = pneg %p86
        $region14: #{bottleneck_forward.7} parent=11 // pred_check_branch
          %150 = sbr.rel (%p148) target = $region16
        $region15: #{bottleneck_forward.7} parent=11 // pred_region
          _
        $region16: #{bottleneck_forward.7} parent=11 // pred_fallthru
          _
        // Predicated region
        $region17: #{bottleneck_forward.7} parent=11 // pred_check
          %p151 = pneg %p107
        $region18: #{bottleneck_forward.7} parent=11 // pred_check_branch
          %153 = sbr.rel (%p151) target = $region20
        $region19: #{bottleneck_forward.7} parent=11 // pred_region
          _
        $region20: #{bottleneck_forward.7} parent=11 // pred_fallthru
          _
      $region12: #{bottleneck_forward.7} parent=5 // pred_fallthru
        _
      %p154 = scmp.lt.s32.totalorder %s13, 2
      // Predicated region
      $region21: #{bottleneck_forward.7} parent=5 // pred_check
        %p155 = pneg %p154
      $region22: #{bottleneck_forward.7} parent=5 // pred_check_branch
        %157 = sbr.rel (%p155) target = $region24
      $region23: #{bottleneck_forward.7} parent=5 // pred_region
        // Predicated region
        $region25: #{bottleneck_forward.7} parent=23 // pred_check
          %p158 = pneg %p33
        $region26: #{bottleneck_forward.7} parent=23 // pred_check_branch
          %160 = sbr.rel (%p158) target = $region28
        $region27: #{bottleneck_forward.7} parent=23 // pred_region
          %s161 = smul.u32 64, %s13
          %p162 = scmp.lt.s32.totalorder %s161, 127
          %s163 = scalar_select %p162, %s161, 127
          %s164 = smul.addr %s163, 8
          %s165 = scalar_lea.vmem %s0, %s164
          %s166 = smul.u32 64, %s13
        $region28: #{bottleneck_forward.7} parent=23 // pred_fallthru
          _
        // Predicated region
        $region29: #{bottleneck_forward.7} parent=23 // pred_check
          %p167 = pneg %p59
        $region30: #{bottleneck_forward.7} parent=23 // pred_check_branch
          %169 = sbr.rel (%p167) target = $region32
        $region31: #{bottleneck_forward.7} parent=23 // pred_region
          %s170 = smul.u32 64, %s13
          %p171 = scmp.lt.s32.totalorder %s170, 127
          %s172 = scalar_select %p171, %s170, 127
          %s173 = smul.addr %s172, 8
          %s174 = scalar_lea.vmem %s1, %s173
          %s175 = smul.u32 64, %s13
        $region32: #{bottleneck_forward.7} parent=23 // pred_fallthru
          _
      $region24: #{bottleneck_forward.7} parent=5 // pred_fallthru
        _
      %p176 = scmp.le.s32.totalorder 1, %s13
      %p177 = scmp.lt.s32.totalorder %s13, 3
      %p178 = pnand %p176, %p177
      %p179 = pneg %p178
      // Predicated region
      $region33: #{bottleneck_forward.7} parent=5 // pred_check
        _
      $region34: #{bottleneck_forward.7} parent=5 // pred_check_branch
        %181 = sbr.rel (%p178) target = $region36
      $region35: #{bottleneck_forward.7} parent=5 // pred_region
        %s182 = ssub.s32 %s13, 1
        %s183 = smul.u32 64, %s18
        %p184 = scmp.lt.s32.totalorder %s183, 127
        %s185 = scalar_select %p184, %s183, 127
        %s186 = smul.addr %s185, 8
        %s187 = scalar_lea.vmem %s0, %s186
        %p188 = pneg %p39
        %p189 = pneg %p36
        %s190 = smul.u32 64, %s18
        %p191 = scmp.lt.s32.totalorder %s190, 127
        %s192 = scalar_select %p191, %s190, 127
        %s193 = smul.addr %s192, 8
        %s194 = scalar_lea.vmem %s1, %s193
        %p195 = pneg %p65
        %p196 = pneg %p62
        %p197 = pneg %p86
        %p198 = pneg %p83
        %p199 = pneg %p107
        %p200 = pneg %p104
        %p201 = pneg %p133
        %p202 = pneg %p130
        %s203 = sand.u32 %s120, 1
        %s204 = scalar_lea.sflag [#allocation3], %s203
        %s205 = sand.u32 %s120, 1
        %s206 = smul.addr %s205, 512
        %s207 = scalar_lea.vmem [#allocation2], %s206
        %s208 = smul.u32 64, %s18
        %p209 = scmp.lt.s32.totalorder %s208, 127
        %s210 = scalar_select %p209, %s208, 127
        %s211 = smul.addr %s210, 8
        %s212 = scalar_lea.vmem %s0, %s211
        %s213 = smul.u32 64, %s18
        %s214 = smul.u32 64, %s18
        %p215 = scmp.lt.s32.totalorder %s214, 127
        %s216 = scalar_select %p215, %s214, 127
        %s217 = smul.addr %s216, 8
        %s218 = scalar_lea.vmem %s1, %s217
        %s219 = smul.u32 64, %s18
        %s220 = smul.u32 64, %s18
        %v221 = vld [vmem:[%s212] sm:$0xff]
        %v222 = vld [vmem:[%s212 + $0x8] sm:$0xff]
        %v223 = vld [vmem:[%s212 + $0x10] sm:$0xff]
        %v224 = vld [vmem:[%s212 + $0x18] sm:$0xff]
        %v225 = vld [vmem:[%s212 + $0x20] sm:$0xff]
        %v226 = vld [vmem:[%s212 + $0x28] sm:$0xff]
        %v227 = vld [vmem:[%s212 + $0x30] sm:$0xff]
        %v228 = vld [vmem:[%s212 + $0x38] sm:$0xff]
        %v229 = vld [vmem:[%s212 + $0x40] sm:$0xff]
        %v230 = vld [vmem:[%s212 + $0x48] sm:$0xff]
        %v231 = vld [vmem:[%s212 + $0x50] sm:$0xff]
        %v232 = vld [vmem:[%s212 + $0x58] sm:$0xff]
        %v233 = vld [vmem:[%s212 + $0x60] sm:$0xff]
        %v234 = vld [vmem:[%s212 + $0x68] sm:$0xff]
        %v235 = vld [vmem:[%s212 + $0x70] sm:$0xff]
        %v236 = vld [vmem:[%s212 + $0x78] sm:$0xff]
        %v237 = vld [vmem:[%s212 + $0x80] sm:$0xff]
        %v238 = vld [vmem:[%s212 + $0x88] sm:$0xff]
        %v239 = vld [vmem:[%s212 + $0x90] sm:$0xff]
        %v240 = vld [vmem:[%s212 + $0x98] sm:$0xff]
        %v241 = vld [vmem:[%s212 + $0xa0] sm:$0xff]
        %v242 = vld [vmem:[%s212 + $0xa8] sm:$0xff]
        %v243 = vld [vmem:[%s212 + $0xb0] sm:$0xff]
        %v244 = vld [vmem:[%s212 + $0xb8] sm:$0xff]
        %v245 = vld [vmem:[%s212 + $0xc0] sm:$0xff]
        %v246 = vld [vmem:[%s212 + $0xc8] sm:$0xff]
        %v247 = vld [vmem:[%s212 + $0xd0] sm:$0xff]
        %v248 = vld [vmem:[%s212 + $0xd8] sm:$0xff]
        %v249 = vld [vmem:[%s212 + $0xe0] sm:$0xff]
        %v250 = vld [vmem:[%s212 + $0xe8] sm:$0xff]
        %v251 = vld [vmem:[%s212 + $0xf0] sm:$0xff]
        %v252 = vld [vmem:[%s212 + $0xf8] sm:$0xff]
        %v253 = vld [vmem:[%s212 + $0x100] sm:$0xff]
        %v254 = vld [vmem:[%s212 + $0x108] sm:$0xff]
        %v255 = vld [vmem:[%s212 + $0x110] sm:$0xff]
        %v256 = vld [vmem:[%s212 + $0x118] sm:$0xff]
        %v257 = vld [vmem:[%s212 + $0x120] sm:$0xff]
        %v258 = vld [vmem:[%s212 + $0x128] sm:$0xff]
        %v259 = vld [vmem:[%s212 + $0x130] sm:$0xff]
        %v260 = vld [vmem:[%s212 + $0x138] sm:$0xff]
        %v261 = vld [vmem:[%s212 + $0x140] sm:$0xff]
        %v262 = vld [vmem:[%s212 + $0x148] sm:$0xff]
        %v263 = vld [vmem:[%s212 + $0x150] sm:$0xff]
        %v264 = vld [vmem:[%s212 + $0x158] sm:$0xff]
        %v265 = vld [vmem:[%s212 + $0x160] sm:$0xff]
        %v266 = vld [vmem:[%s212 + $0x168] sm:$0xff]
        %v267 = vld [vmem:[%s212 + $0x170] sm:$0xff]
        %v268 = vld [vmem:[%s212 + $0x178] sm:$0xff]
        %v269 = vld [vmem:[%s212 + $0x180] sm:$0xff]
        %v270 = vld [vmem:[%s212 + $0x188] sm:$0xff]
        %v271 = vld [vmem:[%s212 + $0x190] sm:$0xff]
        %v272 = vld [vmem:[%s212 + $0x198] sm:$0xff]
        %v273 = vld [vmem:[%s212 + $0x1a0] sm:$0xff]
        %v274 = vld [vmem:[%s212 + $0x1a8] sm:$0xff]
        %v275 = vld [vmem:[%s212 + $0x1b0] sm:$0xff]
        %v276 = vld [vmem:[%s212 + $0x1b8] sm:$0xff]
        %v277 = vld [vmem:[%s212 + $0x1c0] sm:$0xff]
        %v278 = vld [vmem:[%s212 + $0x1c8] sm:$0xff]
        %v279 = vld [vmem:[%s212 + $0x1d0] sm:$0xff]
        %v280 = vld [vmem:[%s212 + $0x1d8] sm:$0xff]
        %v281 = vld [vmem:[%s212 + $0x1e0] sm:$0xff]
        %v282 = vld [vmem:[%s212 + $0x1e8] sm:$0xff]
        %v283 = vld [vmem:[%s212 + $0x1f0] sm:$0xff]
        %v284 = vld [vmem:[%s212 + $0x1f8] sm:$0xff]
        %v285 = vld [vmem:[%s2] sm:$0x1]
        %v287 = vlaneseq
        %v288 = vshrl.u32 %v287, 7
        %v289 = vsub.s32 0, %v288
        %v290 = vrot.slane %v285, %v289
        %v292 = vmul.f32 %v221, %v290
        %v293 = vmul.f32 %v222, %v290
        %v294 = vmul.f32 %v223, %v290
        %v295 = vmul.f32 %v224, %v290
        %v296 = vmul.f32 %v225, %v290
        %v297 = vmul.f32 %v226, %v290
        %v298 = vmul.f32 %v227, %v290
        %v299 = vmul.f32 %v228, %v290
        %v300 = vmul.f32 %v229, %v290
        %v301 = vmul.f32 %v230, %v290
        %v302 = vmul.f32 %v231, %v290
        %v303 = vmul.f32 %v232, %v290
        %v304 = vmul.f32 %v233, %v290
        %v305 = vmul.f32 %v234, %v290
        %v306 = vmul.f32 %v235, %v290
        %v307 = vmul.f32 %v236, %v290
        %v308 = vmul.f32 %v237, %v290
        %v309 = vmul.f32 %v238, %v290
        %v310 = vmul.f32 %v239, %v290
        %v311 = vmul.f32 %v240, %v290
        %v312 = vmul.f32 %v241, %v290
        %v313 = vmul.f32 %v242, %v290
        %v314 = vmul.f32 %v243, %v290
        %v315 = vmul.f32 %v244, %v290
        %v316 = vmul.f32 %v245, %v290
        %v317 = vmul.f32 %v246, %v290
        %v318 = vmul.f32 %v247, %v290
        %v319 = vmul.f32 %v248, %v290
        %v320 = vmul.f32 %v249, %v290
        %v321 = vmul.f32 %v250, %v290
        %v322 = vmul.f32 %v251, %v290
        %v323 = vmul.f32 %v252, %v290
        %v324 = vmul.f32 %v253, %v290
        %v325 = vmul.f32 %v254, %v290
        %v326 = vmul.f32 %v255, %v290
        %v327 = vmul.f32 %v256, %v290
        %v328 = vmul.f32 %v257, %v290
        %v329 = vmul.f32 %v258, %v290
        %v330 = vmul.f32 %v259, %v290
        %v331 = vmul.f32 %v260, %v290
        %v332 = vmul.f32 %v261, %v290
        %v333 = vmul.f32 %v262, %v290
        %v334 = vmul.f32 %v263, %v290
        %v335 = vmul.f32 %v264, %v290
        %v336 = vmul.f32 %v265, %v290
        %v337 = vmul.f32 %v266, %v290
        %v338 = vmul.f32 %v267, %v290
        %v339 = vmul.f32 %v268, %v290
        %v340 = vmul.f32 %v269, %v290
        %v341 = vmul.f32 %v270, %v290
        %v342 = vmul.f32 %v271, %v290
        %v343 = vmul.f32 %v272, %v290
        %v344 = vmul.f32 %v273, %v290
        %v345 = vmul.f32 %v274, %v290
        %v346 = vmul.f32 %v275, %v290
        %v347 = vmul.f32 %v276, %v290
        %v348 = vmul.f32 %v277, %v290
        %v349 = vmul.f32 %v278, %v290
        %v350 = vmul.f32 %v279, %v290
        %v351 = vmul.f32 %v280, %v290
        %v352 = vmul.f32 %v281, %v290
        %v353 = vmul.f32 %v282, %v290
        %v354 = vmul.f32 %v283, %v290
        %v355 = vmul.f32 %v284, %v290
        %v356 = vld [vmem:[%s3] sm:$0x1]
        %v358 = vlaneseq
        %v359 = vshrl.u32 %v358, 7
        %v360 = vsub.s32 0, %v359
        %v361 = vrot.slane %v356, %v360
        %v363 = vadd.f32 %v292, %v361
        %v364 = vadd.f32 %v293, %v361
        %v365 = vadd.f32 %v294, %v361
        %v366 = vadd.f32 %v295, %v361
        %v367 = vadd.f32 %v296, %v361
        %v368 = vadd.f32 %v297, %v361
        %v369 = vadd.f32 %v298, %v361
        %v370 = vadd.f32 %v299, %v361
        %v371 = vadd.f32 %v300, %v361
        %v372 = vadd.f32 %v301, %v361
        %v373 = vadd.f32 %v302, %v361
        %v374 = vadd.f32 %v303, %v361
        %v375 = vadd.f32 %v304, %v361
        %v376 = vadd.f32 %v305, %v361
        %v377 = vadd.f32 %v306, %v361
        %v378 = vadd.f32 %v307, %v361
        %v379 = vadd.f32 %v308, %v361
        %v380 = vadd.f32 %v309, %v361
        %v381 = vadd.f32 %v310, %v361
        %v382 = vadd.f32 %v311, %v361
        %v383 = vadd.f32 %v312, %v361
        %v384 = vadd.f32 %v313, %v361
        %v385 = vadd.f32 %v314, %v361
        %v386 = vadd.f32 %v315, %v361
        %v387 = vadd.f32 %v316, %v361
        %v388 = vadd.f32 %v317, %v361
        %v389 = vadd.f32 %v318, %v361
        %v390 = vadd.f32 %v319, %v361
        %v391 = vadd.f32 %v320, %v361
        %v392 = vadd.f32 %v321, %v361
        %v393 = vadd.f32 %v322, %v361
        %v394 = vadd.f32 %v323, %v361
        %v395 = vadd.f32 %v324, %v361
        %v396 = vadd.f32 %v325, %v361
        %v397 = vadd.f32 %v326, %v361
        %v398 = vadd.f32 %v327, %v361
        %v399 = vadd.f32 %v328, %v361
        %v400 = vadd.f32 %v329, %v361
        %v401 = vadd.f32 %v330, %v361
        %v402 = vadd.f32 %v331, %v361
        %v403 = vadd.f32 %v332, %v361
        %v404 = vadd.f32 %v333, %v361
        %v405 = vadd.f32 %v334, %v361
        %v406 = vadd.f32 %v335, %v361
        %v407 = vadd.f32 %v336, %v361
        %v408 = vadd.f32 %v337, %v361
        %v409 = vadd.f32 %v338, %v361
        %v410 = vadd.f32 %v339, %v361
        %v411 = vadd.f32 %v340, %v361
        %v412 = vadd.f32 %v341, %v361
        %v413 = vadd.f32 %v342, %v361
        %v414 = vadd.f32 %v343, %v361
        %v415 = vadd.f32 %v344, %v361
        %v416 = vadd.f32 %v345, %v361
        %v417 = vadd.f32 %v346, %v361
        %v418 = vadd.f32 %v347, %v361
        %v419 = vadd.f32 %v348, %v361
        %v420 = vadd.f32 %v349, %v361
        %v421 = vadd.f32 %v350, %v361
        %v422 = vadd.f32 %v351, %v361
        %v423 = vadd.f32 %v352, %v361
        %v424 = vadd.f32 %v353, %v361
        %v425 = vadd.f32 %v354, %v361
        %v426 = vadd.f32 %v355, %v361
        %v427 = vld [vmem:[%s218] sm:$0xff]
        %v428 = vld [vmem:[%s218 + $0x8] sm:$0xff]
        %v429 = vld [vmem:[%s218 + $0x10] sm:$0xff]
        %v430 = vld [vmem:[%s218 + $0x18] sm:$0xff]
        %v431 = vld [vmem:[%s218 + $0x20] sm:$0xff]
        %v432 = vld [vmem:[%s218 + $0x28] sm:$0xff]
        %v433 = vld [vmem:[%s218 + $0x30] sm:$0xff]
        %v434 = vld [vmem:[%s218 + $0x38] sm:$0xff]
        %v435 = vld [vmem:[%s218 + $0x40] sm:$0xff]
        %v436 = vld [vmem:[%s218 + $0x48] sm:$0xff]
        %v437 = vld [vmem:[%s218 + $0x50] sm:$0xff]
        %v438 = vld [vmem:[%s218 + $0x58] sm:$0xff]
        %v439 = vld [vmem:[%s218 + $0x60] sm:$0xff]
        %v440 = vld [vmem:[%s218 + $0x68] sm:$0xff]
        %v441 = vld [vmem:[%s218 + $0x70] sm:$0xff]
        %v442 = vld [vmem:[%s218 + $0x78] sm:$0xff]
        %v443 = vld [vmem:[%s218 + $0x80] sm:$0xff]
        %v444 = vld [vmem:[%s218 + $0x88] sm:$0xff]
        %v445 = vld [vmem:[%s218 + $0x90] sm:$0xff]
        %v446 = vld [vmem:[%s218 + $0x98] sm:$0xff]
        %v447 = vld [vmem:[%s218 + $0xa0] sm:$0xff]
        %v448 = vld [vmem:[%s218 + $0xa8] sm:$0xff]
        %v449 = vld [vmem:[%s218 + $0xb0] sm:$0xff]
        %v450 = vld [vmem:[%s218 + $0xb8] sm:$0xff]
        %v451 = vld [vmem:[%s218 + $0xc0] sm:$0xff]
        %v452 = vld [vmem:[%s218 + $0xc8] sm:$0xff]
        %v453 = vld [vmem:[%s218 + $0xd0] sm:$0xff]
        %v454 = vld [vmem:[%s218 + $0xd8] sm:$0xff]
        %v455 = vld [vmem:[%s218 + $0xe0] sm:$0xff]
        %v456 = vld [vmem:[%s218 + $0xe8] sm:$0xff]
        %v457 = vld [vmem:[%s218 + $0xf0] sm:$0xff]
        %v458 = vld [vmem:[%s218 + $0xf8] sm:$0xff]
        %v459 = vld [vmem:[%s218 + $0x100] sm:$0xff]
        %v460 = vld [vmem:[%s218 + $0x108] sm:$0xff]
        %v461 = vld [vmem:[%s218 + $0x110] sm:$0xff]
        %v462 = vld [vmem:[%s218 + $0x118] sm:$0xff]
        %v463 = vld [vmem:[%s218 + $0x120] sm:$0xff]
        %v464 = vld [vmem:[%s218 + $0x128] sm:$0xff]
        %v465 = vld [vmem:[%s218 + $0x130] sm:$0xff]
        %v466 = vld [vmem:[%s218 + $0x138] sm:$0xff]
        %v467 = vld [vmem:[%s218 + $0x140] sm:$0xff]
        %v468 = vld [vmem:[%s218 + $0x148] sm:$0xff]
        %v469 = vld [vmem:[%s218 + $0x150] sm:$0xff]
        %v470 = vld [vmem:[%s218 + $0x158] sm:$0xff]
        %v471 = vld [vmem:[%s218 + $0x160] sm:$0xff]
        %v472 = vld [vmem:[%s218 + $0x168] sm:$0xff]
        %v473 = vld [vmem:[%s218 + $0x170] sm:$0xff]
        %v474 = vld [vmem:[%s218 + $0x178] sm:$0xff]
        %v475 = vld [vmem:[%s218 + $0x180] sm:$0xff]
        %v476 = vld [vmem:[%s218 + $0x188] sm:$0xff]
        %v477 = vld [vmem:[%s218 + $0x190] sm:$0xff]
        %v478 = vld [vmem:[%s218 + $0x198] sm:$0xff]
        %v479 = vld [vmem:[%s218 + $0x1a0] sm:$0xff]
        %v480 = vld [vmem:[%s218 + $0x1a8] sm:$0xff]
        %v481 = vld [vmem:[%s218 + $0x1b0] sm:$0xff]
        %v482 = vld [vmem:[%s218 + $0x1b8] sm:$0xff]
        %v483 = vld [vmem:[%s218 + $0x1c0] sm:$0xff]
        %v484 = vld [vmem:[%s218 + $0x1c8] sm:$0xff]
        %v485 = vld [vmem:[%s218 + $0x1d0] sm:$0xff]
        %v486 = vld [vmem:[%s218 + $0x1d8] sm:$0xff]
        %v487 = vld [vmem:[%s218 + $0x1e0] sm:$0xff]
        %v488 = vld [vmem:[%s218 + $0x1e8] sm:$0xff]
        %v489 = vld [vmem:[%s218 + $0x1f0] sm:$0xff]
        %v490 = vld [vmem:[%s218 + $0x1f8] sm:$0xff]
        %v491 = vadd.f32 %v363, %v427
        %v492 = vadd.f32 %v364, %v428
        %v493 = vadd.f32 %v365, %v429
        %v494 = vadd.f32 %v366, %v430
        %v495 = vadd.f32 %v367, %v431
        %v496 = vadd.f32 %v368, %v432
        %v497 = vadd.f32 %v369, %v433
        %v498 = vadd.f32 %v370, %v434
        %v499 = vadd.f32 %v371, %v435
        %v500 = vadd.f32 %v372, %v436
        %v501 = vadd.f32 %v373, %v437
        %v502 = vadd.f32 %v374, %v438
        %v503 = vadd.f32 %v375, %v439
        %v504 = vadd.f32 %v376, %v440
        %v505 = vadd.f32 %v377, %v441
        %v506 = vadd.f32 %v378, %v442
        %v507 = vadd.f32 %v379, %v443
        %v508 = vadd.f32 %v380, %v444
        %v509 = vadd.f32 %v381, %v445
        %v510 = vadd.f32 %v382, %v446
        %v511 = vadd.f32 %v383, %v447
        %v512 = vadd.f32 %v384, %v448
        %v513 = vadd.f32 %v385, %v449
        %v514 = vadd.f32 %v386, %v450
        %v515 = vadd.f32 %v387, %v451
        %v516 = vadd.f32 %v388, %v452
        %v517 = vadd.f32 %v389, %v453
        %v518 = vadd.f32 %v390, %v454
        %v519 = vadd.f32 %v391, %v455
        %v520 = vadd.f32 %v392, %v456
        %v521 = vadd.f32 %v393, %v457
        %v522 = vadd.f32 %v394, %v458
        %v523 = vadd.f32 %v395, %v459
        %v524 = vadd.f32 %v396, %v460
        %v525 = vadd.f32 %v397, %v461
        %v526 = vadd.f32 %v398, %v462
        %v527 = vadd.f32 %v399, %v463
        %v528 = vadd.f32 %v400, %v464
        %v529 = vadd.f32 %v401, %v465
        %v530 = vadd.f32 %v402, %v466
        %v531 = vadd.f32 %v403, %v467
        %v532 = vadd.f32 %v404, %v468
        %v533 = vadd.f32 %v405, %v469
        %v534 = vadd.f32 %v406, %v470
        %v535 = vadd.f32 %v407, %v471
        %v536 = vadd.f32 %v408, %v472
        %v537 = vadd.f32 %v409, %v473
        %v538 = vadd.f32 %v410, %v474
        %v539 = vadd.f32 %v411, %v475
        %v540 = vadd.f32 %v412, %v476
        %v541 = vadd.f32 %v413, %v477
        %v542 = vadd.f32 %v414, %v478
        %v543 = vadd.f32 %v415, %v479
        %v544 = vadd.f32 %v416, %v480
        %v545 = vadd.f32 %v417, %v481
        %v546 = vadd.f32 %v418, %v482
        %v547 = vadd.f32 %v419, %v483
        %v548 = vadd.f32 %v420, %v484
        %v549 = vadd.f32 %v421, %v485
        %v550 = vadd.f32 %v422, %v486
        %v551 = vadd.f32 %v423, %v487
        %v552 = vadd.f32 %v424, %v488
        %v553 = vadd.f32 %v425, %v489
        %v554 = vadd.f32 %v426, %v490
        %v555 = vmax.f32 %v491, 0.0
        %v556 = vmax.f32 %v492, 0.0
        %v557 = vmax.f32 %v493, 0.0
        %v558 = vmax.f32 %v494, 0.0
        %v559 = vmax.f32 %v495, 0.0
        %v560 = vmax.f32 %v496, 0.0
        %v561 = vmax.f32 %v497, 0.0
        %v562 = vmax.f32 %v498, 0.0
        %v563 = vmax.f32 %v499, 0.0
        %v564 = vmax.f32 %v500, 0.0
        %v565 = vmax.f32 %v501, 0.0
        %v566 = vmax.f32 %v502, 0.0
        %v567 = vmax.f32 %v503, 0.0
        %v568 = vmax.f32 %v504, 0.0
        %v569 = vmax.f32 %v505, 0.0
        %v570 = vmax.f32 %v506, 0.0
        %v571 = vmax.f32 %v507, 0.0
        %v572 = vmax.f32 %v508, 0.0
        %v573 = vmax.f32 %v509, 0.0
        %v574 = vmax.f32 %v510, 0.0
        %v575 = vmax.f32 %v511, 0.0
        %v576 = vmax.f32 %v512, 0.0
        %v577 = vmax.f32 %v513, 0.0
        %v578 = vmax.f32 %v514, 0.0
        %v579 = vmax.f32 %v515, 0.0
        %v580 = vmax.f32 %v516, 0.0
        %v581 = vmax.f32 %v517, 0.0
        %v582 = vmax.f32 %v518, 0.0
        %v583 = vmax.f32 %v519, 0.0
        %v584 = vmax.f32 %v520, 0.0
        %v585 = vmax.f32 %v521, 0.0
        %v586 = vmax.f32 %v522, 0.0
        %v587 = vmax.f32 %v523, 0.0
        %v588 = vmax.f32 %v524, 0.0
        %v589 = vmax.f32 %v525, 0.0
        %v590 = vmax.f32 %v526, 0.0
        %v591 = vmax.f32 %v527, 0.0
        %v592 = vmax.f32 %v528, 0.0
        %v593 = vmax.f32 %v529, 0.0
        %v594 = vmax.f32 %v530, 0.0
        %v595 = vmax.f32 %v531, 0.0
        %v596 = vmax.f32 %v532, 0.0
        %v597 = vmax.f32 %v533, 0.0
        %v598 = vmax.f32 %v534, 0.0
        %v599 = vmax.f32 %v535, 0.0
        %v600 = vmax.f32 %v536, 0.0
        %v601 = vmax.f32 %v537, 0.0
        %v602 = vmax.f32 %v538, 0.0
        %v603 = vmax.f32 %v539, 0.0
        %v604 = vmax.f32 %v540, 0.0
        %v605 = vmax.f32 %v541, 0.0
        %v606 = vmax.f32 %v542, 0.0
        %v607 = vmax.f32 %v543, 0.0
        %v608 = vmax.f32 %v544, 0.0
        %v609 = vmax.f32 %v545, 0.0
        %v610 = vmax.f32 %v546, 0.0
        %v611 = vmax.f32 %v547, 0.0
        %v612 = vmax.f32 %v548, 0.0
        %v613 = vmax.f32 %v549, 0.0
        %v614 = vmax.f32 %v550, 0.0
        %v615 = vmax.f32 %v551, 0.0
        %v616 = vmax.f32 %v552, 0.0
        %v617 = vmax.f32 %v553, 0.0
        %v618 = vmax.f32 %v554, 0.0
        %619 = vst [vmem:[%s207] sm:$0xff] %v555
        %620 = vst [vmem:[%s207 + $0x8] sm:$0xff] %v556
        %621 = vst [vmem:[%s207 + $0x10] sm:$0xff] %v557
        %622 = vst [vmem:[%s207 + $0x18] sm:$0xff] %v558
        %623 = vst [vmem:[%s207 + $0x20] sm:$0xff] %v559
        %624 = vst [vmem:[%s207 + $0x28] sm:$0xff] %v560
        %625 = vst [vmem:[%s207 + $0x30] sm:$0xff] %v561
        %626 = vst [vmem:[%s207 + $0x38] sm:$0xff] %v562
        %627 = vst [vmem:[%s207 + $0x40] sm:$0xff] %v563
        %628 = vst [vmem:[%s207 + $0x48] sm:$0xff] %v564
        %629 = vst [vmem:[%s207 + $0x50] sm:$0xff] %v565
        %630 = vst [vmem:[%s207 + $0x58] sm:$0xff] %v566
        %631 = vst [vmem:[%s207 + $0x60] sm:$0xff] %v567
        %632 = vst [vmem:[%s207 + $0x68] sm:$0xff] %v568
        %633 = vst [vmem:[%s207 + $0x70] sm:$0xff] %v569
        %634 = vst [vmem:[%s207 + $0x78] sm:$0xff] %v570
        %635 = vst [vmem:[%s207 + $0x80] sm:$0xff] %v571
        %636 = vst [vmem:[%s207 + $0x88] sm:$0xff] %v572
        %637 = vst [vmem:[%s207 + $0x90] sm:$0xff] %v573
        %638 = vst [vmem:[%s207 + $0x98] sm:$0xff] %v574
        %639 = vst [vmem:[%s207 + $0xa0] sm:$0xff] %v575
        %640 = vst [vmem:[%s207 + $0xa8] sm:$0xff] %v576
        %641 = vst [vmem:[%s207 + $0xb0] sm:$0xff] %v577
        %642 = vst [vmem:[%s207 + $0xb8] sm:$0xff] %v578
        %643 = vst [vmem:[%s207 + $0xc0] sm:$0xff] %v579
        %644 = vst [vmem:[%s207 + $0xc8] sm:$0xff] %v580
        %645 = vst [vmem:[%s207 + $0xd0] sm:$0xff] %v581
        %646 = vst [vmem:[%s207 + $0xd8] sm:$0xff] %v582
        %647 = vst [vmem:[%s207 + $0xe0] sm:$0xff] %v583
        %648 = vst [vmem:[%s207 + $0xe8] sm:$0xff] %v584
        %649 = vst [vmem:[%s207 + $0xf0] sm:$0xff] %v585
        %650 = vst [vmem:[%s207 + $0xf8] sm:$0xff] %v586
        %651 = vst [vmem:[%s207 + $0x100] sm:$0xff] %v587
        %652 = vst [vmem:[%s207 + $0x108] sm:$0xff] %v588
        %653 = vst [vmem:[%s207 + $0x110] sm:$0xff] %v589
        %654 = vst [vmem:[%s207 + $0x118] sm:$0xff] %v590
        %655 = vst [vmem:[%s207 + $0x120] sm:$0xff] %v591
        %656 = vst [vmem:[%s207 + $0x128] sm:$0xff] %v592
        %657 = vst [vmem:[%s207 + $0x130] sm:$0xff] %v593
        %658 = vst [vmem:[%s207 + $0x138] sm:$0xff] %v594
        %659 = vst [vmem:[%s207 + $0x140] sm:$0xff] %v595
        %660 = vst [vmem:[%s207 + $0x148] sm:$0xff] %v596
        %661 = vst [vmem:[%s207 + $0x150] sm:$0xff] %v597
        %662 = vst [vmem:[%s207 + $0x158] sm:$0xff] %v598
        %663 = vst [vmem:[%s207 + $0x160] sm:$0xff] %v599
        %664 = vst [vmem:[%s207 + $0x168] sm:$0xff] %v600
        %665 = vst [vmem:[%s207 + $0x170] sm:$0xff] %v601
        %666 = vst [vmem:[%s207 + $0x178] sm:$0xff] %v602
        %667 = vst [vmem:[%s207 + $0x180] sm:$0xff] %v603
        %668 = vst [vmem:[%s207 + $0x188] sm:$0xff] %v604
        %669 = vst [vmem:[%s207 + $0x190] sm:$0xff] %v605
        %670 = vst [vmem:[%s207 + $0x198] sm:$0xff] %v606
        %671 = vst [vmem:[%s207 + $0x1a0] sm:$0xff] %v607
        %672 = vst [vmem:[%s207 + $0x1a8] sm:$0xff] %v608
        %673 = vst [vmem:[%s207 + $0x1b0] sm:$0xff] %v609
        %674 = vst [vmem:[%s207 + $0x1b8] sm:$0xff] %v610
        %675 = vst [vmem:[%s207 + $0x1c0] sm:$0xff] %v611
        %676 = vst [vmem:[%s207 + $0x1c8] sm:$0xff] %v612
        %677 = vst [vmem:[%s207 + $0x1d0] sm:$0xff] %v613
        %678 = vst [vmem:[%s207 + $0x1d8] sm:$0xff] %v614
        %679 = vst [vmem:[%s207 + $0x1e0] sm:$0xff] %v615
        %680 = vst [vmem:[%s207 + $0x1e8] sm:$0xff] %v616
        %681 = vst [vmem:[%s207 + $0x1f0] sm:$0xff] %v617
        %682 = vst [vmem:[%s207 + $0x1f8] sm:$0xff] %v618
        %s683 = sand.u32 %s120, 1
        %s684 = scalar_lea.sflag [#allocation3], %s683
        %s685 = sand.u32 %s120, 1
        %s686 = smul.addr %s685, 512
        %s687 = scalar_lea.vmem [#allocation2], %s686
        // Predicated region
        $region37: #{bottleneck_forward.7} parent=35 // pred_check
          %p688 = pneg %p130
        $region38: #{bottleneck_forward.7} parent=35 // pred_check_branch
          %690 = sbr.rel (%p688) target = $region40
        $region39: #{bottleneck_forward.7} parent=35 // pred_region
          %s691 = smul.u32 64, %s18
          %s693 = ssub.s32 8192, 8192
          %694 = vsyncadd %s684, %s693
          %s695 = smul.addr %s691, 128
          %s696 = scalar_lea.hbm %s4, %s695
          %s697 = sshll.u32 %s687, 4
          %s698 = int_to_ptr.vmem [resolvable:$true] %s697
          %703 = dma.vmem_to_hbm [thread:$0]  %s698, 8192, %s696, %s684, 128, 128, 8
        $region40: #{bottleneck_forward.7} parent=35 // pred_fallthru
          _
      $region36: #{bottleneck_forward.7} parent=5 // pred_fallthru
        _
      %p704 = scmp.le.s32.totalorder 2, %s13
      // Predicated region
      $region41: #{bottleneck_forward.7} parent=5 // pred_check
        %p705 = pneg %p704
      $region42: #{bottleneck_forward.7} parent=5 // pred_check_branch
        %707 = sbr.rel (%p705) target = $region44
      $region43: #{bottleneck_forward.7} parent=5 // pred_region
        %s708 = ssub.s32 %s13, 2
        // Predicated region
        $region45: #{bottleneck_forward.7} parent=43 // pred_check
          %p709 = pneg %p136
        $region46: #{bottleneck_forward.7} parent=43 // pred_check_branch
          %711 = sbr.rel (%p709) target = $region48
        $region47: #{bottleneck_forward.7} parent=43 // pred_region
          %s712 = sand.u32 %s121, 1
          %s713 = scalar_lea.sflag [#allocation3], %s712
          %s714 = sand.u32 %s121, 1
          %s715 = smul.addr %s714, 512
          %s716 = scalar_lea.vmem [#allocation2], %s715
          %717 = dma.done %s713, 8192
        $region48: #{bottleneck_forward.7} parent=43 // pred_fallthru
          _
      $region44: #{bottleneck_forward.7} parent=5 // pred_fallthru
        _
    $region6: #{bottleneck_forward.7} parent=1 // loop_footer
      %s17 = sadd.s32 1, %s13
    $region7: #{bottleneck_forward.7} parent=1 // loop_footer_branch
      %12 = sbr.rel target = $region3
    $region8: #{bottleneck_forward.7} parent=1 // loop_exit
      _
    %718 = vsyncpa [#allocation3], 1
    %s719 = scalar_lea.sflag [#allocation3], 1
    %720 = vsyncpa %s719, 1

// kernel: bottleneck_forward.6
$region0: #{bottleneck_forward.6}
  #allocation0 [shape = 'u32[]', space=smem, size = 0x4, offset = 0x4, fixed_abs, tag = 'smem constant byte address 0x4 - core index']
  #allocation1 [shape = 'u32[144,128]{1,0:T(1,128)}', space=vmem, size = 0x12000, scoped, tag = 'internal scratch']
  %s0 = inlined_call_operand.vmem [shape: f32[1024,128], index: 0, kind: input, shape index: {}]
  %s1 = inlined_call_operand.vmem [shape: f32[1,128], index: 1, kind: input, shape index: {}]
  %s2 = inlined_call_operand.vmem [shape: f32[1,128], index: 2, kind: input, shape index: {}]
  %s3 = inlined_call_operand.vmem [shape: f32[128,128], index: 3, kind: input, shape index: {}]
  %s4 = inlined_call_operand.vmem [shape: f32[1024,128], index: 4, kind: output, shape index: {0}]
  %s5 = inlined_call_operand.vmem [shape: f32[2,2,128], index: 5, kind: output, shape index: {1}]
  %6 = xla_tuple %s4, %s5
  %s7 = sld [smem:[#allocation0]]
  $region57: #{bottleneck_forward.6} parent=0
    _
  %s9 = ssub.s32 1, %s7
  %s10 = scalar_select 0, %s9, %s7
  loop: start=0, step=1, limit=4
  $region2: #{bottleneck_forward.6} parent=0 // loop_pre_header
    _
  $region3: #{bottleneck_forward.6} parent=0 // loop_header
    %s12 = sphi 0, %s16
    %p13 = scmp.ge.s32.totalorder %s12, 4
    %s22 = sphi 0, %s24
    %s25 = sphi 0, %s22
    %s26 = sphi 0, %s25
    %s42 = sphi 0, %s26
    %s46 = sphi 0, %s46
    %s48 = sphi 0, %s46
    %s49 = sphi 0, %s48
    %s63 = sphi 0, %s49
    %s67 = sphi 0, %s67
    %s69 = sphi 0, %s67
    %s70 = sphi 0, %s69
    %s84 = sphi 0, %s70
    %s88 = sphi 0, %s88
    %s90 = sphi 0, %s88
    %s91 = sphi 0, %s90
    %s105 = sphi 0, %s91
    %s111 = sphi 0, %s113
    %s114 = sphi 0, %s111
    %s115 = sphi 0, %s114
    %s131 = sphi 0, %s115
    %s137 = sphi 0, %s139
    %s140 = sphi 0, %s137
    %s141 = sphi 0, %s140
    %s157 = sphi 0, %s141
  $region4: #{bottleneck_forward.6} parent=0 // loop_header_branch
    %15 = sbr.rel (%p13) target = $region8
  $region5: #{bottleneck_forward.6} parent=0 // loop_body
    %s17 = ssub.s32 %s12, 1
    %s18 = ssub.s32 %s12, 2
    %s19 = sadd.s32 %s12, 1
    %s20 = ssub.s32 %s12, %s19
    %p21 = scmp.eq.s32.totalorder %s20, 0
    %s23 = sadd.s32 %s22, 1
    %s24 = scalar_select %p21, %s22, %s23
    %p27 = pneg %p21
    %p28 = scmp.eq.s32.totalorder %s12, 1
    %p29 = por %p27, %p28
    %p30 = scmp.ne.s32.totalorder %s22, %s25
    %p31 = scmp.eq.s32.totalorder %s12, 0
    %p32 = por %p30, %p31
    %p33 = scmp.ne.s32.totalorder %s22, %s25
    %p34 = scmp.eq.s32.totalorder %s17, 1
    %p35 = por %p33, %p34
    %p36 = scmp.ne.s32.totalorder %s25, %s26
    %p37 = scmp.eq.s32.totalorder %s17, 0
    %p38 = por %p36, %p37
    %p39 = scmp.ne.s32.totalorder %s25, %s26
    %p40 = scmp.eq.s32.totalorder %s18, 1
    %p41 = por %p39, %p40
    %p43 = scmp.ne.s32.totalorder %s26, %s42
    %p44 = scmp.eq.s32.totalorder %s18, 0
    %p45 = por %p43, %p44
    %s47 = sadd.s32 %s46, 1
    %p50 = scmp.eq.s32.totalorder %s12, 1
    %p51 = scmp.ne.s32.totalorder %s46, %s48
    %p52 = scmp.eq.s32.totalorder %s12, 0
    %p53 = por %p51, %p52
    %p54 = scmp.ne.s32.totalorder %s46, %s48
    %p55 = scmp.eq.s32.totalorder %s17, 1
    %p56 = por %p54, %p55
    %p57 = scmp.ne.s32.totalorder %s48, %s49
    %p58 = scmp.eq.s32.totalorder %s17, 0
    %p59 = por %p57, %p58
    %p60 = scmp.ne.s32.totalorder %s48, %s49
    %p61 = scmp.eq.s32.totalorder %s18, 1
    %p62 = por %p60, %p61
    %p64 = scmp.ne.s32.totalorder %s49, %s63
    %p65 = scmp.eq.s32.totalorder %s18, 0
    %p66 = por %p64, %p65
    %s68 = sadd.s32 %s67, 1
    %p71 = scmp.eq.s32.totalorder %s12, 1
    %p72 = scmp.ne.s32.totalorder %s67, %s69
    %p73 = scmp.eq.s32.totalorder %s12, 0
    %p74 = por %p72, %p73
    %p75 = scmp.ne.s32.totalorder %s67, %s69
    %p76 = scmp.eq.s32.totalorder %s17, 1
    %p77 = por %p75, %p76
    %p78 = scmp.ne.s32.totalorder %s69, %s70
    %p79 = scmp.eq.s32.totalorder %s17, 0
    %p80 = por %p78, %p79
    %p81 = scmp.ne.s32.totalorder %s69, %s70
    %p82 = scmp.eq.s32.totalorder %s18, 1
    %p83 = por %p81, %p82
    %p85 = scmp.ne.s32.totalorder %s70, %s84
    %p86 = scmp.eq.s32.totalorder %s18, 0
    %p87 = por %p85, %p86
    %s89 = sadd.s32 %s88, 1
    %p92 = scmp.eq.s32.totalorder %s12, 1
    %p93 = scmp.ne.s32.totalorder %s88, %s90
    %p94 = scmp.eq.s32.totalorder %s12, 0
    %p95 = por %p93, %p94
    %p96 = scmp.ne.s32.totalorder %s88, %s90
    %p97 = scmp.eq.s32.totalorder %s17, 1
    %p98 = por %p96, %p97
    %p99 = scmp.ne.s32.totalorder %s90, %s91
    %p100 = scmp.eq.s32.totalorder %s17, 0
    %p101 = por %p99, %p100
    %p102 = scmp.ne.s32.totalorder %s90, %s91
    %p103 = scmp.eq.s32.totalorder %s18, 1
    %p104 = por %p102, %p103
    %p106 = scmp.ne.s32.totalorder %s91, %s105
    %p107 = scmp.eq.s32.totalorder %s18, 0
    %p108 = por %p106, %p107
    %s109 = ssub.s32 %s12, %s19
    %p110 = scmp.eq.s32.totalorder %s109, 0
    %s112 = sadd.s32 %s111, 1
    %s113 = scalar_select %p110, %s111, %s112
    %p116 = pneg %p110
    %p117 = scmp.eq.s32.totalorder %s12, 1
    %p118 = por %p116, %p117
    %p119 = scmp.ne.s32.totalorder %s111, %s114
    %p120 = scmp.eq.s32.totalorder %s12, 0
    %p121 = por %p119, %p120
    %p122 = scmp.ne.s32.totalorder %s111, %s114
    %p123 = scmp.eq.s32.totalorder %s17, 1
    %p124 = por %p122, %p123
    %p125 = scmp.ne.s32.totalorder %s114, %s115
    %p126 = scmp.eq.s32.totalorder %s17, 0
    %p127 = por %p125, %p126
    %p128 = scmp.ne.s32.totalorder %s114, %s115
    %p129 = scmp.eq.s32.totalorder %s18, 1
    %p130 = por %p128, %p129
    %p132 = scmp.ne.s32.totalorder %s115, %s131
    %p133 = scmp.eq.s32.totalorder %s18, 0
    %p134 = por %p132, %p133
    %s135 = ssub.s32 %s12, %s19
    %p136 = scmp.eq.s32.totalorder %s135, 0
    %s138 = sadd.s32 %s137, 1
    %s139 = scalar_select %p136, %s137, %s138
    %p142 = pneg %p136
    %p143 = scmp.eq.s32.totalorder %s12, 1
    %p144 = por %p142, %p143
    %p145 = scmp.ne.s32.totalorder %s137, %s140
    %p146 = scmp.eq.s32.totalorder %s12, 0
    %p147 = por %p145, %p146
    %p148 = scmp.ne.s32.totalorder %s137, %s140
    %p149 = scmp.eq.s32.totalorder %s17, 1
    %p150 = por %p148, %p149
    %p151 = scmp.ne.s32.totalorder %s140, %s141
    %p152 = scmp.eq.s32.totalorder %s17, 0
    %p153 = por %p151, %p152
    %p154 = scmp.ne.s32.totalorder %s140, %s141
    %p155 = scmp.eq.s32.totalorder %s18, 1
    %p156 = por %p154, %p155
    %p158 = scmp.ne.s32.totalorder %s141, %s157
    %p159 = scmp.eq.s32.totalorder %s18, 0
    %p160 = por %p158, %p159
    %p161 = scmp.le.s32.totalorder 1, %s12
    %p162 = scmp.lt.s32.totalorder %s12, 3
    %p163 = pnand %p161, %p162
    %p164 = pneg %p163
    // Predicated region
    $region9: #{bottleneck_forward.6} parent=5 // pred_check
      _
    $region10: #{bottleneck_forward.6} parent=5 // pred_check_branch
      %166 = sbr.rel (%p163) target = $region12
    $region11: #{bottleneck_forward.6} parent=5 // pred_region
      %s167 = ssub.s32 %s12, 1
      // Predicated region
      $region13: #{bottleneck_forward.6} parent=11 // pred_check
        %p168 = pneg %p59
      $region14: #{bottleneck_forward.6} parent=11 // pred_check_branch
        %170 = sbr.rel (%p168) target = $region16
      $region15: #{bottleneck_forward.6} parent=11 // pred_region
        _
      $region16: #{bottleneck_forward.6} parent=11 // pred_fallthru
        _
      // Predicated region
      $region17: #{bottleneck_forward.6} parent=11 // pred_check
        %p171 = pneg %p80
      $region18: #{bottleneck_forward.6} parent=11 // pred_check_branch
        %173 = sbr.rel (%p171) target = $region20
      $region19: #{bottleneck_forward.6} parent=11 // pred_region
        _
      $region20: #{bottleneck_forward.6} parent=11 // pred_fallthru
        _
      // Predicated region
      $region21: #{bottleneck_forward.6} parent=11 // pred_check
        %p174 = pneg %p101
      $region22: #{bottleneck_forward.6} parent=11 // pred_check_branch
        %176 = sbr.rel (%p174) target = $region24
      $region23: #{bottleneck_forward.6} parent=11 // pred_region
        _
      $region24: #{bottleneck_forward.6} parent=11 // pred_fallthru
        _
    $region12: #{bottleneck_forward.6} parent=5 // pred_fallthru
      _
    %p177 = scmp.lt.s32.totalorder %s12, 2
    // Predicated region
    $region25: #{bottleneck_forward.6} parent=5 // pred_check
      %p178 = pneg %p177
    $region26: #{bottleneck_forward.6} parent=5 // pred_check_branch
      %180 = sbr.rel (%p178) target = $region28
    $region27: #{bottleneck_forward.6} parent=5 // pred_region
      // Predicated region
      $region29: #{bottleneck_forward.6} parent=27 // pred_check
        %p181 = pneg %p32
      $region30: #{bottleneck_forward.6} parent=27 // pred_check_branch
        %183 = sbr.rel (%p181) target = $region32
      $region31: #{bottleneck_forward.6} parent=27 // pred_region
        %s184 = smul.u32 64, %s12
        %p185 = scmp.lt.s32.totalorder %s184, 127
        %s186 = scalar_select %p185, %s184, 127
        %s187 = smul.addr %s186, 8
        %s188 = scalar_lea.vmem %s0, %s187
        %s189 = smul.u32 64, %s12
      $region32: #{bottleneck_forward.6} parent=27 // pred_fallthru
        _
    $region28: #{bottleneck_forward.6} parent=5 // pred_fallthru
      _
    %p190 = scmp.le.s32.totalorder 1, %s12
    %p191 = scmp.lt.s32.totalorder %s12, 3
    %p192 = pnand %p190, %p191
    %p193 = pneg %p192
    // Predicated region
    $region33: #{bottleneck_forward.6} parent=5 // pred_check
      _
    $region34: #{bottleneck_forward.6} parent=5 // pred_check_branch
      %195 = sbr.rel (%p192) target = $region36
    $region35: #{bottleneck_forward.6} parent=5 // pred_region
      %s196 = ssub.s32 %s12, 1
      %s197 = smul.u32 64, %s17
      %p198 = scmp.lt.s32.totalorder %s197, 127
      %s199 = scalar_select %p198, %s197, 127
      %s200 = smul.addr %s199, 8
      %s201 = scalar_lea.vmem %s0, %s200
      %p202 = pneg %p38
      %p203 = pneg %p35
      %p204 = pneg %p59
      %p205 = pneg %p56
      %p206 = pneg %p80
      %p207 = pneg %p77
      %p208 = pneg %p101
      %p209 = pneg %p98
      %p210 = pneg %p127
      %p211 = pneg %p124
      %s212 = smul.u32 64, %s17
      %p213 = scmp.lt.s32.totalorder %s212, 127
      %s214 = scalar_select %p213, %s212, 127
      %s215 = smul.addr %s214, 8
      %s216 = scalar_lea.vmem %s4, %s215
      %p217 = pneg %p153
      %p218 = pneg %p150
      %p219 = scmp.lt.s32.totalorder %s17, 1
      %s220 = scalar_select %p219, %s17, 1
      %s221 = smul.addr %s220, 2
      %s222 = scalar_lea.vmem %s5, %s221
      %s223 = smul.u32 64, %s17
      %p224 = scmp.lt.s32.totalorder %s223, 127
      %s225 = scalar_select %p224, %s223, 127
      %s226 = smul.addr %s225, 8
      %s227 = scalar_lea.vmem %s0, %s226
      %s228 = smul.u32 64, %s17
      %s229 = smul.u32 64, %s17
      %p230 = scmp.lt.s32.totalorder %s229, 127
      %s231 = scalar_select %p230, %s229, 127
      %s232 = smul.addr %s231, 8
      %s233 = scalar_lea.vmem %s4, %s232
      %s234 = smul.u32 64, %s17
      %p235 = scmp.lt.s32.totalorder %s17, 1
      %s236 = scalar_select %p235, %s17, 1
      %s237 = smul.addr %s236, 2
      %s238 = scalar_lea.vmem %s5, %s237
      %v239 = vld [vmem:[%s227] sm:$0xff]
      %v240 = vld [vmem:[%s227 + $0x8] sm:$0xff]
      %v241 = vld [vmem:[%s227 + $0x10] sm:$0xff]
      %v242 = vld [vmem:[%s227 + $0x18] sm:$0xff]
      %v243 = vld [vmem:[%s227 + $0x20] sm:$0xff]
      %v244 = vld [vmem:[%s227 + $0x28] sm:$0xff]
      %v245 = vld [vmem:[%s227 + $0x30] sm:$0xff]
      %v246 = vld [vmem:[%s227 + $0x38] sm:$0xff]
      %v247 = vld [vmem:[%s227 + $0x40] sm:$0xff]
      %v248 = vld [vmem:[%s227 + $0x48] sm:$0xff]
      %v249 = vld [vmem:[%s227 + $0x50] sm:$0xff]
      %v250 = vld [vmem:[%s227 + $0x58] sm:$0xff]
      %v251 = vld [vmem:[%s227 + $0x60] sm:$0xff]
      %v252 = vld [vmem:[%s227 + $0x68] sm:$0xff]
      %v253 = vld [vmem:[%s227 + $0x70] sm:$0xff]
      %v254 = vld [vmem:[%s227 + $0x78] sm:$0xff]
      %v255 = vld [vmem:[%s227 + $0x80] sm:$0xff]
      %v256 = vld [vmem:[%s227 + $0x88] sm:$0xff]
      %v257 = vld [vmem:[%s227 + $0x90] sm:$0xff]
      %v258 = vld [vmem:[%s227 + $0x98] sm:$0xff]
      %v259 = vld [vmem:[%s227 + $0xa0] sm:$0xff]
      %v260 = vld [vmem:[%s227 + $0xa8] sm:$0xff]
      %v261 = vld [vmem:[%s227 + $0xb0] sm:$0xff]
      %v262 = vld [vmem:[%s227 + $0xb8] sm:$0xff]
      %v263 = vld [vmem:[%s227 + $0xc0] sm:$0xff]
      %v264 = vld [vmem:[%s227 + $0xc8] sm:$0xff]
      %v265 = vld [vmem:[%s227 + $0xd0] sm:$0xff]
      %v266 = vld [vmem:[%s227 + $0xd8] sm:$0xff]
      %v267 = vld [vmem:[%s227 + $0xe0] sm:$0xff]
      %v268 = vld [vmem:[%s227 + $0xe8] sm:$0xff]
      %v269 = vld [vmem:[%s227 + $0xf0] sm:$0xff]
      %v270 = vld [vmem:[%s227 + $0xf8] sm:$0xff]
      %v271 = vld [vmem:[%s227 + $0x100] sm:$0xff]
      %v272 = vld [vmem:[%s227 + $0x108] sm:$0xff]
      %v273 = vld [vmem:[%s227 + $0x110] sm:$0xff]
      %v274 = vld [vmem:[%s227 + $0x118] sm:$0xff]
      %v275 = vld [vmem:[%s227 + $0x120] sm:$0xff]
      %v276 = vld [vmem:[%s227 + $0x128] sm:$0xff]
      %v277 = vld [vmem:[%s227 + $0x130] sm:$0xff]
      %v278 = vld [vmem:[%s227 + $0x138] sm:$0xff]
      %v279 = vld [vmem:[%s227 + $0x140] sm:$0xff]
      %v280 = vld [vmem:[%s227 + $0x148] sm:$0xff]
      %v281 = vld [vmem:[%s227 + $0x150] sm:$0xff]
      %v282 = vld [vmem:[%s227 + $0x158] sm:$0xff]
      %v283 = vld [vmem:[%s227 + $0x160] sm:$0xff]
      %v284 = vld [vmem:[%s227 + $0x168] sm:$0xff]
      %v285 = vld [vmem:[%s227 + $0x170] sm:$0xff]
      %v286 = vld [vmem:[%s227 + $0x178] sm:$0xff]
      %v287 = vld [vmem:[%s227 + $0x180] sm:$0xff]
      %v288 = vld [vmem:[%s227 + $0x188] sm:$0xff]
      %v289 = vld [vmem:[%s227 + $0x190] sm:$0xff]
      %v290 = vld [vmem:[%s227 + $0x198] sm:$0xff]
      %v291 = vld [vmem:[%s227 + $0x1a0] sm:$0xff]
      %v292 = vld [vmem:[%s227 + $0x1a8] sm:$0xff]
      %v293 = vld [vmem:[%s227 + $0x1b0] sm:$0xff]
      %v294 = vld [vmem:[%s227 + $0x1b8] sm:$0xff]
      %v295 = vld [vmem:[%s227 + $0x1c0] sm:$0xff]
      %v296 = vld [vmem:[%s227 + $0x1c8] sm:$0xff]
      %v297 = vld [vmem:[%s227 + $0x1d0] sm:$0xff]
      %v298 = vld [vmem:[%s227 + $0x1d8] sm:$0xff]
      %v299 = vld [vmem:[%s227 + $0x1e0] sm:$0xff]
      %v300 = vld [vmem:[%s227 + $0x1e8] sm:$0xff]
      %v301 = vld [vmem:[%s227 + $0x1f0] sm:$0xff]
      %v302 = vld [vmem:[%s227 + $0x1f8] sm:$0xff]
      %v303 = vld [vmem:[%s1] sm:$0x1]
      %v305 = vlaneseq
      %v306 = vshrl.u32 %v305, 7
      %v307 = vsub.s32 0, %v306
      %v308 = vrot.slane %v303, %v307
      %v310 = vmul.f32 %v239, %v308
      %v311 = vmul.f32 %v240, %v308
      %v312 = vmul.f32 %v241, %v308
      %v313 = vmul.f32 %v242, %v308
      %v314 = vmul.f32 %v243, %v308
      %v315 = vmul.f32 %v244, %v308
      %v316 = vmul.f32 %v245, %v308
      %v317 = vmul.f32 %v246, %v308
      %v318 = vmul.f32 %v247, %v308
      %v319 = vmul.f32 %v248, %v308
      %v320 = vmul.f32 %v249, %v308
      %v321 = vmul.f32 %v250, %v308
      %v322 = vmul.f32 %v251, %v308
      %v323 = vmul.f32 %v252, %v308
      %v324 = vmul.f32 %v253, %v308
      %v325 = vmul.f32 %v254, %v308
      %v326 = vmul.f32 %v255, %v308
      %v327 = vmul.f32 %v256, %v308
      %v328 = vmul.f32 %v257, %v308
      %v329 = vmul.f32 %v258, %v308
      %v330 = vmul.f32 %v259, %v308
      %v331 = vmul.f32 %v260, %v308
      %v332 = vmul.f32 %v261, %v308
      %v333 = vmul.f32 %v262, %v308
      %v334 = vmul.f32 %v263, %v308
      %v335 = vmul.f32 %v264, %v308
      %v336 = vmul.f32 %v265, %v308
      %v337 = vmul.f32 %v266, %v308
      %v338 = vmul.f32 %v267, %v308
      %v339 = vmul.f32 %v268, %v308
      %v340 = vmul.f32 %v269, %v308
      %v341 = vmul.f32 %v270, %v308
      %v342 = vmul.f32 %v271, %v308
      %v343 = vmul.f32 %v272, %v308
      %v344 = vmul.f32 %v273, %v308
      %v345 = vmul.f32 %v274, %v308
      %v346 = vmul.f32 %v275, %v308
      %v347 = vmul.f32 %v276, %v308
      %v348 = vmul.f32 %v277, %v308
      %v349 = vmul.f32 %v278, %v308
      %v350 = vmul.f32 %v279, %v308
      %v351 = vmul.f32 %v280, %v308
      %v352 = vmul.f32 %v281, %v308
      %v353 = vmul.f32 %v282, %v308
      %v354 = vmul.f32 %v283, %v308
      %v355 = vmul.f32 %v284, %v308
      %v356 = vmul.f32 %v285, %v308
      %v357 = vmul.f32 %v286, %v308
      %v358 = vmul.f32 %v287, %v308
      %v359 = vmul.f32 %v288, %v308
      %v360 = vmul.f32 %v289, %v308
      %v361 = vmul.f32 %v290, %v308
      %v362 = vmul.f32 %v291, %v308
      %v363 = vmul.f32 %v292, %v308
      %v364 = vmul.f32 %v293, %v308
      %v365 = vmul.f32 %v294, %v308
      %v366 = vmul.f32 %v295, %v308
      %v367 = vmul.f32 %v296, %v308
      %v368 = vmul.f32 %v297, %v308
      %v369 = vmul.f32 %v298, %v308
      %v370 = vmul.f32 %v299, %v308
      %v371 = vmul.f32 %v300, %v308
      %v372 = vmul.f32 %v301, %v308
      %v373 = vmul.f32 %v302, %v308
      %v374 = vld [vmem:[%s2] sm:$0x1]
      %v376 = vlaneseq
      %v377 = vshrl.u32 %v376, 7
      %v378 = vsub.s32 0, %v377
      %v379 = vrot.slane %v374, %v378
      %v381 = vadd.f32 %v310, %v379
      %v382 = vadd.f32 %v311, %v379
      %v383 = vadd.f32 %v312, %v379
      %v384 = vadd.f32 %v313, %v379
      %v385 = vadd.f32 %v314, %v379
      %v386 = vadd.f32 %v315, %v379
      %v387 = vadd.f32 %v316, %v379
      %v388 = vadd.f32 %v317, %v379
      %v389 = vadd.f32 %v318, %v379
      %v390 = vadd.f32 %v319, %v379
      %v391 = vadd.f32 %v320, %v379
      %v392 = vadd.f32 %v321, %v379
      %v393 = vadd.f32 %v322, %v379
      %v394 = vadd.f32 %v323, %v379
      %v395 = vadd.f32 %v324, %v379
      %v396 = vadd.f32 %v325, %v379
      %v397 = vadd.f32 %v326, %v379
      %v398 = vadd.f32 %v327, %v379
      %v399 = vadd.f32 %v328, %v379
      %v400 = vadd.f32 %v329, %v379
      %v401 = vadd.f32 %v330, %v379
      %v402 = vadd.f32 %v331, %v379
      %v403 = vadd.f32 %v332, %v379
      %v404 = vadd.f32 %v333, %v379
      %v405 = vadd.f32 %v334, %v379
      %v406 = vadd.f32 %v335, %v379
      %v407 = vadd.f32 %v336, %v379
      %v408 = vadd.f32 %v337, %v379
      %v409 = vadd.f32 %v338, %v379
      %v410 = vadd.f32 %v339, %v379
      %v411 = vadd.f32 %v340, %v379
      %v412 = vadd.f32 %v341, %v379
      %v413 = vadd.f32 %v342, %v379
      %v414 = vadd.f32 %v343, %v379
      %v415 = vadd.f32 %v344, %v379
      %v416 = vadd.f32 %v345, %v379
      %v417 = vadd.f32 %v346, %v379
      %v418 = vadd.f32 %v347, %v379
      %v419 = vadd.f32 %v348, %v379
      %v420 = vadd.f32 %v349, %v379
      %v421 = vadd.f32 %v350, %v379
      %v422 = vadd.f32 %v351, %v379
      %v423 = vadd.f32 %v352, %v379
      %v424 = vadd.f32 %v353, %v379
      %v425 = vadd.f32 %v354, %v379
      %v426 = vadd.f32 %v355, %v379
      %v427 = vadd.f32 %v356, %v379
      %v428 = vadd.f32 %v357, %v379
      %v429 = vadd.f32 %v358, %v379
      %v430 = vadd.f32 %v359, %v379
      %v431 = vadd.f32 %v360, %v379
      %v432 = vadd.f32 %v361, %v379
      %v433 = vadd.f32 %v362, %v379
      %v434 = vadd.f32 %v363, %v379
      %v435 = vadd.f32 %v364, %v379
      %v436 = vadd.f32 %v365, %v379
      %v437 = vadd.f32 %v366, %v379
      %v438 = vadd.f32 %v367, %v379
      %v439 = vadd.f32 %v368, %v379
      %v440 = vadd.f32 %v369, %v379
      %v441 = vadd.f32 %v370, %v379
      %v442 = vadd.f32 %v371, %v379
      %v443 = vadd.f32 %v372, %v379
      %v444 = vadd.f32 %v373, %v379
      %v445 = vmax.f32 %v381, 0.0
      %v446 = vmax.f32 %v382, 0.0
      %v447 = vmax.f32 %v383, 0.0
      %v448 = vmax.f32 %v384, 0.0
      %v449 = vmax.f32 %v385, 0.0
      %v450 = vmax.f32 %v386, 0.0
      %v451 = vmax.f32 %v387, 0.0
      %v452 = vmax.f32 %v388, 0.0
      %v453 = vmax.f32 %v389, 0.0
      %v454 = vmax.f32 %v390, 0.0
      %v455 = vmax.f32 %v391, 0.0
      %v456 = vmax.f32 %v392, 0.0
      %v457 = vmax.f32 %v393, 0.0
      %v458 = vmax.f32 %v394, 0.0
      %v459 = vmax.f32 %v395, 0.0
      %v460 = vmax.f32 %v396, 0.0
      %v461 = vmax.f32 %v397, 0.0
      %v462 = vmax.f32 %v398, 0.0
      %v463 = vmax.f32 %v399, 0.0
      %v464 = vmax.f32 %v400, 0.0
      %v465 = vmax.f32 %v401, 0.0
      %v466 = vmax.f32 %v402, 0.0
      %v467 = vmax.f32 %v403, 0.0
      %v468 = vmax.f32 %v404, 0.0
      %v469 = vmax.f32 %v405, 0.0
      %v470 = vmax.f32 %v406, 0.0
      %v471 = vmax.f32 %v407, 0.0
      %v472 = vmax.f32 %v408, 0.0
      %v473 = vmax.f32 %v409, 0.0
      %v474 = vmax.f32 %v410, 0.0
      %v475 = vmax.f32 %v411, 0.0
      %v476 = vmax.f32 %v412, 0.0
      %v477 = vmax.f32 %v413, 0.0
      %v478 = vmax.f32 %v414, 0.0
      %v479 = vmax.f32 %v415, 0.0
      %v480 = vmax.f32 %v416, 0.0
      %v481 = vmax.f32 %v417, 0.0
      %v482 = vmax.f32 %v418, 0.0
      %v483 = vmax.f32 %v419, 0.0
      %v484 = vmax.f32 %v420, 0.0
      %v485 = vmax.f32 %v421, 0.0
      %v486 = vmax.f32 %v422, 0.0
      %v487 = vmax.f32 %v423, 0.0
      %v488 = vmax.f32 %v424, 0.0
      %v489 = vmax.f32 %v425, 0.0
      %v490 = vmax.f32 %v426, 0.0
      %v491 = vmax.f32 %v427, 0.0
      %v492 = vmax.f32 %v428, 0.0
      %v493 = vmax.f32 %v429, 0.0
      %v494 = vmax.f32 %v430, 0.0
      %v495 = vmax.f32 %v431, 0.0
      %v496 = vmax.f32 %v432, 0.0
      %v497 = vmax.f32 %v433, 0.0
      %v498 = vmax.f32 %v434, 0.0
      %v499 = vmax.f32 %v435, 0.0
      %v500 = vmax.f32 %v436, 0.0
      %v501 = vmax.f32 %v437, 0.0
      %v502 = vmax.f32 %v438, 0.0
      %v503 = vmax.f32 %v439, 0.0
      %v504 = vmax.f32 %v440, 0.0
      %v505 = vmax.f32 %v441, 0.0
      %v506 = vmax.f32 %v442, 0.0
      %v507 = vmax.f32 %v443, 0.0
      %v508 = vmax.f32 %v444, 0.0
      %v509 = vld [vmem:[%s3] sm:$0xff]
      %v510 = vld [vmem:[%s3 + $0x8] sm:$0xff]
      %v511 = vld [vmem:[%s3 + $0x10] sm:$0xff]
      %v512 = vld [vmem:[%s3 + $0x18] sm:$0xff]
      %v513 = vld [vmem:[%s3 + $0x20] sm:$0xff]
      %v514 = vld [vmem:[%s3 + $0x28] sm:$0xff]
      %v515 = vld [vmem:[%s3 + $0x30] sm:$0xff]
      %v516 = vld [vmem:[%s3 + $0x38] sm:$0xff]
      %v517 = vld [vmem:[%s3 + $0x40] sm:$0xff]
      %v518 = vld [vmem:[%s3 + $0x48] sm:$0xff]
      %v519 = vld [vmem:[%s3 + $0x50] sm:$0xff]
      %v520 = vld [vmem:[%s3 + $0x58] sm:$0xff]
      %v521 = vld [vmem:[%s3 + $0x60] sm:$0xff]
      %v522 = vld [vmem:[%s3 + $0x68] sm:$0xff]
      %v523 = vld [vmem:[%s3 + $0x70] sm:$0xff]
      %v524 = vld [vmem:[%s3 + $0x78] sm:$0xff]
      %525 = vmatprep.subr.mxu0 0.0
      %526 = vmatpush1.msra.mxu0 %v509
      %527 = vmatprep.subr.mxu0 0.0
      %528 = vmatpush1.msra.mxu0 %v510
      %529 = vmatprep.subr.mxu0 0.0
      %530 = vmatpush1.msra.mxu0 %v511
      %531 = vmatprep.subr.mxu0 0.0
      %532 = vmatpush1.msra.mxu0 %v512
      %533 = vmatprep.subr.mxu0 0.0
      %534 = vmatpush1.msra.mxu0 %v513
      %535 = vmatprep.subr.mxu0 0.0
      %536 = vmatpush1.msra.mxu0 %v514
      %537 = vmatprep.subr.mxu0 0.0
      %538 = vmatpush1.msra.mxu0 %v515
      %539 = vmatprep.subr.mxu0 0.0
      %540 = vmatpush1.msra.mxu0 %v516
      %541 = vmatprep.subr.mxu0 0.0
      %542 = vmatpush1.msra.mxu0 %v517
      %543 = vmatprep.subr.mxu0 0.0
      %544 = vmatpush1.msra.mxu0 %v518
      %545 = vmatprep.subr.mxu0 0.0
      %546 = vmatpush1.msra.mxu0 %v519
      %547 = vmatprep.subr.mxu0 0.0
      %548 = vmatpush1.msra.mxu0 %v520
      %549 = vmatprep.subr.mxu0 0.0
      %550 = vmatpush1.msra.mxu0 %v521
      %551 = vmatprep.subr.mxu0 0.0
      %552 = vmatpush1.msra.mxu0 %v522
      %553 = vmatprep.subr.mxu0 0.0
      %554 = vmatpush1.msra.mxu0 %v523
      %555 = vmatprep.subr.mxu0 0.0
      %556 = vmatpush1.msra.mxu0 %v524
      %557 = vmatprep.subr.mxu0 0.0
      %558 = vmatpush1.msra.mxu0 0.0
      %559 = vmatprep.subr.mxu0 0.0
      %560 = vmatpush1.msra.mxu0 0.0
      %561 = vmatprep.subr.mxu0 0.0
      %562 = vmatpush1.msra.mxu0 0.0
      %563 = vmatprep.subr.mxu0 0.0
      %564 = vmatpush1.msra.mxu0 0.0
      %565 = vmatprep.subr.mxu0 0.0
      %566 = vmatpush1.msra.mxu0 0.0
      %567 = vmatprep.subr.mxu0 0.0
      %568 = vmatpush1.msra.mxu0 0.0
      %569 = vmatprep.subr.mxu0 0.0
      %570 = vmatpush1.msra.mxu0 0.0
      %571 = vmatprep.subr.mxu0 0.0
      %572 = vmatpush1.msra.mxu0 0.0
      %573 = vmatprep.subr.mxu0 0.0
      %574 = vmatpush1.msra.mxu0 0.0
      %575 = vmatprep.subr.mxu0 0.0
      %576 = vmatpush1.msra.mxu0 0.0
      %577 = vmatprep.subr.mxu0 0.0
      %578 = vmatpush1.msra.mxu0 0.0
      %579 = vmatprep.subr.mxu0 0.0
      %580 = vmatpush1.msra.mxu0 0.0
      %581 = vmatprep.subr.mxu0 0.0
      %582 = vmatpush1.msra.mxu0 0.0
      %583 = vmatprep.subr.mxu0 0.0
      %584 = vmatpush1.msra.mxu0 0.0
      %585 = vmatprep.subr.mxu0 0.0
      %586 = vmatpush1.msra.mxu0 0.0
      %587 = vmatprep.subr.mxu0 0.0
      %588 = vmatpush1.msra.mxu0 0.0
      %589 = vmatprep.mubr.f32.mxu0 0.0
      %590 = vmatmul.mubr.f32.gmra.mrb[0].mxu0 %v445
      %v591 = vpop.f32.mrb[0].mxu0
      %v592 = vadd.f32 0.0, %v591
      %v593 = vpop.f32.mrb[0].mxu0
      %594 = vmatprep.mubr.f32.mxu0 0.0
      %595 = vmatmul.mubr.f32.gmra.mrb[0].mxu0 %v446
      %v596 = vpop.f32.mrb[0].mxu0
      %v597 = vadd.f32 0.0, %v596
      %v598 = vpop.f32.mrb[0].mxu0
      %599 = vmatprep.mubr.f32.mxu0 0.0
      %600 = vmatmul.mubr.f32.gmra.mrb[0].mxu0 %v447
      %v601 = vpop.f32.mrb[0].mxu0
      %v602 = vadd.f32 0.0, %v601
      %v603 = vpop.f32.mrb[0].mxu0
      %604 = vmatprep.mubr.f32.mxu0 0.0
      %605 = vmatmul.mubr.f32.gmra.mrb[0].mxu0 %v448
      %v606 = vpop.f32.mrb[0].mxu0
      %v607 = vadd.f32 0.0, %v606
      %v608 = vpop.f32.mrb[0].mxu0
      %609 = vmatprep.mubr.f32.mxu0 0.0
      %610 = vmatmul.mubr.f32.gmra.mrb[0].mxu0 %v449
      %v611 = vpop.f32.mrb[0].mxu0
      %v612 = vadd.f32 0.0, %v611
      %v613 = vpop.f32.mrb[0].mxu0
      %614 = vmatprep.mubr.f32.mxu0 0.0
      %615 = vmatmul.mubr.f32.gmra.mrb[0].mxu0 %v450
      %v616 = vpop.f32.mrb[0].mxu0
      %v617 = vadd.f32 0.0, %v616
      %v618 = vpop.f32.mrb[0].mxu0
      %619 = vmatprep.mubr.f32.mxu0 0.0
      %620 = vmatmul.mubr.f32.gmra.mrb[0].mxu0 %v451
      %v621 = vpop.f32.mrb[0].mxu0
      %v622 = vadd.f32 0.0, %v621
      %v623 = vpop.f32.mrb[0].mxu0
      %624 = vmatprep.mubr.f32.mxu0 0.0
      %625 = vmatmul.mubr.f32.gmra.mrb[0].mxu0 %v452
      %v626 = vpop.f32.mrb[0].mxu0
      %v627 = vadd.f32 0.0, %v626
      %v628 = vpop.f32.mrb[0].mxu0
      %629 = vmatprep.mubr.f32.mxu0 0.0
      %630 = vmatmul.mubr.f32.gmra.mrb[0].mxu0 %v453
      %v631 = vpop.f32.mrb[0].mxu0
      %v632 = vadd.f32 0.0, %v631
      %v633 = vpop.f32.mrb[0].mxu0
      %634 = vmatprep.mubr.f32.mxu0 0.0
      %635 = vmatmul.mubr.f32.gmra.mrb[0].mxu0 %v454
      %v636 = vpop.f32.mrb[0].mxu0
      %v637 = vadd.f32 0.0, %v636
      %v638 = vpop.f32.mrb[0].mxu0
      %639 = vmatprep.mubr.f32.mxu0 0.0
      %640 = vmatmul.mubr.f32.gmra.mrb[0].mxu0 %v455
      %v641 = vpop.f32.mrb[0].mxu0
      %v642 = vadd.f32 0.0, %v641
      %v643 = vpop.f32.mrb[0].mxu0
      %644 = vmatprep.mubr.f32.mxu0 0.0
      %645 = vmatmul.mubr.f32.gmra.mrb[0].mxu0 %v456
      %v646 = vpop.f32.mrb[0].mxu0
      %v647 = vadd.f32 0.0, %v646
      %v648 = vpop.f32.mrb[0].mxu0
      %649 = vmatprep.mubr.f32.mxu0 0.0
      %650 = vmatmul.mubr.f32.gmra.mrb[0].mxu0 %v457
      %v651 = vpop.f32.mrb[0].mxu0
      %v652 = vadd.f32 0.0, %v651
      %v653 = vpop.f32.mrb[0].mxu0
      %654 = vmatprep.mubr.f32.mxu0 0.0
      %655 = vmatmul.mubr.f32.gmra.mrb[0].mxu0 %v458
      %v656 = vpop.f32.mrb[0].mxu0
      %v657 = vadd.f32 0.0, %v656
      %v658 = vpop.f32.mrb[0].mxu0
      %659 = vmatprep.mubr.f32.mxu0 0.0
      %660 = vmatmul.mubr.f32.gmra.mrb[0].mxu0 %v459
      %v661 = vpop.f32.mrb[0].mxu0
      %v662 = vadd.f32 0.0, %v661
      %v663 = vpop.f32.mrb[0].mxu0
      %664 = vmatprep.mubr.f32.mxu0 0.0
      %665 = vmatmul.mubr.f32.gmra.mrb[0].mxu0 %v460
      %v666 = vpop.f32.mrb[0].mxu0
      %v667 = vadd.f32 0.0, %v666
      %v668 = vpop.f32.mrb[0].mxu0
      %669 = vmatprep.mubr.f32.mxu0 0.0
      %670 = vmatmul.mubr.f32.gmra.mrb[0].mxu0 %v461
      %v671 = vpop.f32.mrb[0].mxu0
      %v672 = vadd.f32 0.0, %v671
      %v673 = vpop.f32.mrb[0].mxu0
      %674 = vmatprep.mubr.f32.mxu0 0.0
      %675 = vmatmul.mubr.f32.gmra.mrb[0].mxu0 %v462
      %v676 = vpop.f32.mrb[0].mxu0
      %v677 = vadd.f32 0.0, %v676
      %v678 = vpop.f32.mrb[0].mxu0
      %679 = vmatprep.mubr.f32.mxu0 0.0
      %680 = vmatmul.mubr.f32.gmra.mrb[0].mxu0 %v463
      %v681 = vpop.f32.mrb[0].mxu0
      %v682 = vadd.f32 0.0, %v681
      %v683 = vpop.f32.mrb[0].mxu0
      %684 = vmatprep.mubr.f32.mxu0 0.0
      %685 = vmatmul.mubr.f32.gmra.mrb[0].mxu0 %v464
      %v686 = vpop.f32.mrb[0].mxu0
      %v687 = vadd.f32 0.0, %v686
      %v688 = vpop.f32.mrb[0].mxu0
      %689 = vmatprep.mubr.f32.mxu0 0.0
      %690 = vmatmul.mubr.f32.gmra.mrb[0].mxu0 %v465
      %v691 = vpop.f32.mrb[0].mxu0
      %v692 = vadd.f32 0.0, %v691
      %v693 = vpop.f32.mrb[0].mxu0
      %694 = vmatprep.mubr.f32.mxu0 0.0
      %695 = vmatmul.mubr.f32.gmra.mrb[0].mxu0 %v466
      %v696 = vpop.f32.mrb[0].mxu0
      %v697 = vadd.f32 0.0, %v696
      %v698 = vpop.f32.mrb[0].mxu0
      %699 = vmatprep.mubr.f32.mxu0 0.0
      %700 = vmatmul.mubr.f32.gmra.mrb[0].mxu0 %v467
      %v701 = vpop.f32.mrb[0].mxu0
      %v702 = vadd.f32 0.0, %v701
      %v703 = vpop.f32.mrb[0].mxu0
      %704 = vmatprep.mubr.f32.mxu0 0.0
      %705 = vmatmul.mubr.f32.gmra.mrb[0].mxu0 %v468
      %v706 = vpop.f32.mrb[0].mxu0
      %v707 = vadd.f32 0.0, %v706
      %v708 = vpop.f32.mrb[0].mxu0
      %709 = vmatprep.mubr.f32.mxu0 0.0
      %710 = vmatmul.mubr.f32.gmra.mrb[0].mxu0 %v469
      %v711 = vpop.f32.mrb[0].mxu0
      %v712 = vadd.f32 0.0, %v711
      %v713 = vpop.f32.mrb[0].mxu0
      %714 = vmatprep.mubr.f32.mxu0 0.0
      %715 = vmatmul.mubr.f32.gmra.mrb[0].mxu0 %v470
      %v716 = vpop.f32.mrb[0].mxu0
      %v717 = vadd.f32 0.0, %v716
      %v718 = vpop.f32.mrb[0].mxu0
      %719 = vmatprep.mubr.f32.mxu0 0.0
      %720 = vmatmul.mubr.f32.gmra.mrb[0].mxu0 %v471
      %v721 = vpop.f32.mrb[0].mxu0
      %v722 = vadd.f32 0.0, %v721
      %v723 = vpop.f32.mrb[0].mxu0
      %724 = vmatprep.mubr.f32.mxu0 0.0
      %725 = vmatmul.mubr.f32.gmra.mrb[0].mxu0 %v472
      %v726 = vpop.f32.mrb[0].mxu0
      %v727 = vadd.f32 0.0, %v726
      %v728 = vpop.f32.mrb[0].mxu0
      %729 = vmatprep.mubr.f32.mxu0 0.0
      %730 = vmatmul.mubr.f32.gmra.mrb[0].mxu0 %v473
      %v731 = vpop.f32.mrb[0].mxu0
      %v732 = vadd.f32 0.0, %v731
      %v733 = vpop.f32.mrb[0].mxu0
      %734 = vmatprep.mubr.f32.mxu0 0.0
      %735 = vmatmul.mubr.f32.gmra.mrb[0].mxu0 %v474
      %v736 = vpop.f32.mrb[0].mxu0
      %v737 = vadd.f32 0.0, %v736
      %v738 = vpop.f32.mrb[0].mxu0
      %739 = vmatprep.mubr.f32.mxu0 0.0
      %740 = vmatmul.mubr.f32.gmra.mrb[0].mxu0 %v475
      %v741 = vpop.f32.mrb[0].mxu0
      %v742 = vadd.f32 0.0, %v741
      %v743 = vpop.f32.mrb[0].mxu0
      %744 = vmatprep.mubr.f32.mxu0 0.0
      %745 = vmatmul.mubr.f32.gmra.mrb[0].mxu0 %v476
      %v746 = vpop.f32.mrb[0].mxu0
      %v747 = vadd.f32 0.0, %v746
      %v748 = vpop.f32.mrb[0].mxu0
      %749 = vmatprep.mubr.f32.mxu0 0.0
      %750 = vmatmul.mubr.f32.gmra.mrb[0].mxu0 %v477
      %v751 = vpop.f32.mrb[0].mxu0
      %v752 = vadd.f32 0.0, %v751
      %v753 = vpop.f32.mrb[0].mxu0
      %754 = vmatprep.mubr.f32.mxu0 0.0
      %755 = vmatmul.mubr.f32.gmra.mrb[0].mxu0 %v478
      %v756 = vpop.f32.mrb[0].mxu0
      %v757 = vadd.f32 0.0, %v756
      %v758 = vpop.f32.mrb[0].mxu0
      %759 = vmatprep.mubr.f32.mxu0 0.0
      %760 = vmatmul.mubr.f32.gmra.mrb[0].mxu0 %v479
      %v761 = vpop.f32.mrb[0].mxu0
      %v762 = vadd.f32 0.0, %v761
      %v763 = vpop.f32.mrb[0].mxu0
      %764 = vmatprep.mubr.f32.mxu0 0.0
      %765 = vmatmul.mubr.f32.gmra.mrb[0].mxu0 %v480
      %v766 = vpop.f32.mrb[0].mxu0
      %v767 = vadd.f32 0.0, %v766
      %v768 = vpop.f32.mrb[0].mxu0
      %769 = vmatprep.mubr.f32.mxu0 0.0
      %770 = vmatmul.mubr.f32.gmra.mrb[0].mxu0 %v481
      %v771 = vpop.f32.mrb[0].mxu0
      %v772 = vadd.f32 0.0, %v771
      %v773 = vpop.f32.mrb[0].mxu0
      %774 = vmatprep.mubr.f32.mxu0 0.0
      %775 = vmatmul.mubr.f32.gmra.mrb[0].mxu0 %v482
      %v776 = vpop.f32.mrb[0].mxu0
      %v777 = vadd.f32 0.0, %v776
      %v778 = vpop.f32.mrb[0].mxu0
      %779 = vmatprep.mubr.f32.mxu0 0.0
      %780 = vmatmul.mubr.f32.gmra.mrb[0].mxu0 %v483
      %v781 = vpop.f32.mrb[0].mxu0
      %v782 = vadd.f32 0.0, %v781
      %v783 = vpop.f32.mrb[0].mxu0
      %784 = vmatprep.mubr.f32.mxu0 0.0
      %785 = vmatmul.mubr.f32.gmra.mrb[0].mxu0 %v484
      %v786 = vpop.f32.mrb[0].mxu0
      %v787 = vadd.f32 0.0, %v786
      %v788 = vpop.f32.mrb[0].mxu0
      %789 = vmatprep.mubr.f32.mxu0 0.0
      %790 = vmatmul.mubr.f32.gmra.mrb[0].mxu0 %v485
      %v791 = vpop.f32.mrb[0].mxu0
      %v792 = vadd.f32 0.0, %v791
      %v793 = vpop.f32.mrb[0].mxu0
      %794 = vmatprep.mubr.f32.mxu0 0.0
      %795 = vmatmul.mubr.f32.gmra.mrb[0].mxu0 %v486
      %v796 = vpop.f32.mrb[0].mxu0
      %v797 = vadd.f32 0.0, %v796
      %v798 = vpop.f32.mrb[0].mxu0
      %799 = vmatprep.mubr.f32.mxu0 0.0
      %800 = vmatmul.mubr.f32.gmra.mrb[0].mxu0 %v487
      %v801 = vpop.f32.mrb[0].mxu0
      %v802 = vadd.f32 0.0, %v801
      %v803 = vpop.f32.mrb[0].mxu0
      %804 = vmatprep.mubr.f32.mxu0 0.0
      %805 = vmatmul.mubr.f32.gmra.mrb[0].mxu0 %v488
      %v806 = vpop.f32.mrb[0].mxu0
      %v807 = vadd.f32 0.0, %v806
      %v808 = vpop.f32.mrb[0].mxu0
      %809 = vmatprep.mubr.f32.mxu0 0.0
      %810 = vmatmul.mubr.f32.gmra.mrb[0].mxu0 %v489
      %v811 = vpop.f32.mrb[0].mxu0
      %v812 = vadd.f32 0.0, %v811
      %v813 = vpop.f32.mrb[0].mxu0
      %814 = vmatprep.mubr.f32.mxu0 0.0
      %815 = vmatmul.mubr.f32.gmra.mrb[0].mxu0 %v490
      %v816 = vpop.f32.mrb[0].mxu0
      %v817 = vadd.f32 0.0, %v816
      %v818 = vpop.f32.mrb[0].mxu0
      %819 = vmatprep.mubr.f32.mxu0 0.0
      %820 = vmatmul.mubr.f32.gmra.mrb[0].mxu0 %v491
      %v821 = vpop.f32.mrb[0].mxu0
      %v822 = vadd.f32 0.0, %v821
      %v823 = vpop.f32.mrb[0].mxu0
      %824 = vmatprep.mubr.f32.mxu0 0.0
      %825 = vmatmul.mubr.f32.gmra.mrb[0].mxu0 %v492
      %v826 = vpop.f32.mrb[0].mxu0
      %v827 = vadd.f32 0.0, %v826
      %v828 = vpop.f32.mrb[0].mxu0
      %829 = vmatprep.mubr.f32.mxu0 0.0
      %830 = vmatmul.mubr.f32.gmra.mrb[0].mxu0 %v493
      %v831 = vpop.f32.mrb[0].mxu0
      %v832 = vadd.f32 0.0, %v831
      %v833 = vpop.f32.mrb[0].mxu0
      %834 = vmatprep.mubr.f32.mxu0 0.0
      %835 = vmatmul.mubr.f32.gmra.mrb[0].mxu0 %v494
      %v836 = vpop.f32.mrb[0].mxu0
      %v837 = vadd.f32 0.0, %v836
      %v838 = vpop.f32.mrb[0].mxu0
      %839 = vmatprep.mubr.f32.mxu0 0.0
      %840 = vmatmul.mubr.f32.gmra.mrb[0].mxu0 %v495
      %v841 = vpop.f32.mrb[0].mxu0
      %v842 = vadd.f32 0.0, %v841
      %v843 = vpop.f32.mrb[0].mxu0
      %844 = vmatprep.mubr.f32.mxu0 0.0
      %845 = vmatmul.mubr.f32.gmra.mrb[0].mxu0 %v496
      %v846 = vpop.f32.mrb[0].mxu0
      %v847 = vadd.f32 0.0, %v846
      %v848 = vpop.f32.mrb[0].mxu0
      %849 = vmatprep.mubr.f32.mxu0 0.0
      %850 = vmatmul.mubr.f32.gmra.mrb[0].mxu0 %v497
      %v851 = vpop.f32.mrb[0].mxu0
      %v852 = vadd.f32 0.0, %v851
      %v853 = vpop.f32.mrb[0].mxu0
      %854 = vmatprep.mubr.f32.mxu0 0.0
      %855 = vmatmul.mubr.f32.gmra.mrb[0].mxu0 %v498
      %v856 = vpop.f32.mrb[0].mxu0
      %v857 = vadd.f32 0.0, %v856
      %v858 = vpop.f32.mrb[0].mxu0
      %859 = vmatprep.mubr.f32.mxu0 0.0
      %860 = vmatmul.mubr.f32.gmra.mrb[0].mxu0 %v499
      %v861 = vpop.f32.mrb[0].mxu0
      %v862 = vadd.f32 0.0, %v861
      %v863 = vpop.f32.mrb[0].mxu0
      %864 = vmatprep.mubr.f32.mxu0 0.0
      %865 = vmatmul.mubr.f32.gmra.mrb[0].mxu0 %v500
      %v866 = vpop.f32.mrb[0].mxu0
      %v867 = vadd.f32 0.0, %v866
      %v868 = vpop.f32.mrb[0].mxu0
      %869 = vmatprep.mubr.f32.mxu0 0.0
      %870 = vmatmul.mubr.f32.gmra.mrb[0].mxu0 %v501
      %v871 = vpop.f32.mrb[0].mxu0
      %v872 = vadd.f32 0.0, %v871
      %v873 = vpop.f32.mrb[0].mxu0
      %874 = vmatprep.mubr.f32.mxu0 0.0
      %875 = vmatmul.mubr.f32.gmra.mrb[0].mxu0 %v502
      %v876 = vpop.f32.mrb[0].mxu0
      %v877 = vadd.f32 0.0, %v876
      %v878 = vpop.f32.mrb[0].mxu0
      %879 = vmatprep.mubr.f32.mxu0 0.0
      %880 = vmatmul.mubr.f32.gmra.mrb[0].mxu0 %v503
      %v881 = vpop.f32.mrb[0].mxu0
      %v882 = vadd.f32 0.0, %v881
      %v883 = vpop.f32.mrb[0].mxu0
      %884 = vmatprep.mubr.f32.mxu0 0.0
      %885 = vmatmul.mubr.f32.gmra.mrb[0].mxu0 %v504
      %v886 = vpop.f32.mrb[0].mxu0
      %v887 = vadd.f32 0.0, %v886
      %v888 = vpop.f32.mrb[0].mxu0
      %889 = vmatprep.mubr.f32.mxu0 0.0
      %890 = vmatmul.mubr.f32.gmra.mrb[0].mxu0 %v505
      %v891 = vpop.f32.mrb[0].mxu0
      %v892 = vadd.f32 0.0, %v891
      %v893 = vpop.f32.mrb[0].mxu0
      %894 = vmatprep.mubr.f32.mxu0 0.0
      %895 = vmatmul.mubr.f32.gmra.mrb[0].mxu0 %v506
      %v896 = vpop.f32.mrb[0].mxu0
      %v897 = vadd.f32 0.0, %v896
      %v898 = vpop.f32.mrb[0].mxu0
      %899 = vmatprep.mubr.f32.mxu0 0.0
      %900 = vmatmul.mubr.f32.gmra.mrb[0].mxu0 %v507
      %v901 = vpop.f32.mrb[0].mxu0
      %v902 = vadd.f32 0.0, %v901
      %v903 = vpop.f32.mrb[0].mxu0
      %904 = vmatprep.mubr.f32.mxu0 0.0
      %905 = vmatmul.mubr.f32.gmra.mrb[0].mxu0 %v508
      %v906 = vpop.f32.mrb[0].mxu0
      %v907 = vadd.f32 0.0, %v906
      %v908 = vpop.f32.mrb[0].mxu0
      %909 = vdwg.mxu0
      %910 = vst [vmem:[%s233] sm:$0xff] %v592
      %911 = vst [vmem:[%s233 + $0x8] sm:$0xff] %v597
      %912 = vst [vmem:[%s233 + $0x10] sm:$0xff] %v602
      %913 = vst [vmem:[%s233 + $0x18] sm:$0xff] %v607
      %914 = vst [vmem:[%s233 + $0x20] sm:$0xff] %v612
      %915 = vst [vmem:[%s233 + $0x28] sm:$0xff] %v617
      %916 = vst [vmem:[%s233 + $0x30] sm:$0xff] %v622
      %917 = vst [vmem:[%s233 + $0x38] sm:$0xff] %v627
      %918 = vst [vmem:[%s233 + $0x40] sm:$0xff] %v632
      %919 = vst [vmem:[%s233 + $0x48] sm:$0xff] %v637
      %920 = vst [vmem:[%s233 + $0x50] sm:$0xff] %v642
      %921 = vst [vmem:[%s233 + $0x58] sm:$0xff] %v647
      %922 = vst [vmem:[%s233 + $0x60] sm:$0xff] %v652
      %923 = vst [vmem:[%s233 + $0x68] sm:$0xff] %v657
      %924 = vst [vmem:[%s233 + $0x70] sm:$0xff] %v662
      %925 = vst [vmem:[%s233 + $0x78] sm:$0xff] %v667
      %926 = vst [vmem:[%s233 + $0x80] sm:$0xff] %v672
      %927 = vst [vmem:[%s233 + $0x88] sm:$0xff] %v677
      %928 = vst [vmem:[%s233 + $0x90] sm:$0xff] %v682
      %929 = vst [vmem:[%s233 + $0x98] sm:$0xff] %v687
      %930 = vst [vmem:[%s233 + $0xa0] sm:$0xff] %v692
      %931 = vst [vmem:[%s233 + $0xa8] sm:$0xff] %v697
      %932 = vst [vmem:[%s233 + $0xb0] sm:$0xff] %v702
      %933 = vst [vmem:[%s233 + $0xb8] sm:$0xff] %v707
      %934 = vst [vmem:[%s233 + $0xc0] sm:$0xff] %v712
      %935 = vst [vmem:[%s233 + $0xc8] sm:$0xff] %v717
      %936 = vst [vmem:[%s233 + $0xd0] sm:$0xff] %v722
      %937 = vst [vmem:[%s233 + $0xd8] sm:$0xff] %v727
      %938 = vst [vmem:[%s233 + $0xe0] sm:$0xff] %v732
      %939 = vst [vmem:[%s233 + $0xe8] sm:$0xff] %v737
      %940 = vst [vmem:[%s233 + $0xf0] sm:$0xff] %v742
      %941 = vst [vmem:[%s233 + $0xf8] sm:$0xff] %v747
      %942 = vst [vmem:[%s233 + $0x100] sm:$0xff] %v752
      %943 = vst [vmem:[%s233 + $0x108] sm:$0xff] %v757
      %944 = vst [vmem:[%s233 + $0x110] sm:$0xff] %v762
      %945 = vst [vmem:[%s233 + $0x118] sm:$0xff] %v767
      %946 = vst [vmem:[%s233 + $0x120] sm:$0xff] %v772
      %947 = vst [vmem:[%s233 + $0x128] sm:$0xff] %v777
      %948 = vst [vmem:[%s233 + $0x130] sm:$0xff] %v782
      %949 = vst [vmem:[%s233 + $0x138] sm:$0xff] %v787
      %950 = vst [vmem:[%s233 + $0x140] sm:$0xff] %v792
      %951 = vst [vmem:[%s233 + $0x148] sm:$0xff] %v797
      %952 = vst [vmem:[%s233 + $0x150] sm:$0xff] %v802
      %953 = vst [vmem:[%s233 + $0x158] sm:$0xff] %v807
      %954 = vst [vmem:[%s233 + $0x160] sm:$0xff] %v812
      %955 = vst [vmem:[%s233 + $0x168] sm:$0xff] %v817
      %956 = vst [vmem:[%s233 + $0x170] sm:$0xff] %v822
      %957 = vst [vmem:[%s233 + $0x178] sm:$0xff] %v827
      %958 = vst [vmem:[%s233 + $0x180] sm:$0xff] %v832
      %959 = vst [vmem:[%s233 + $0x188] sm:$0xff] %v837
      %960 = vst [vmem:[%s233 + $0x190] sm:$0xff] %v842
      %961 = vst [vmem:[%s233 + $0x198] sm:$0xff] %v847
      %962 = vst [vmem:[%s233 + $0x1a0] sm:$0xff] %v852
      %963 = vst [vmem:[%s233 + $0x1a8] sm:$0xff] %v857
      %964 = vst [vmem:[%s233 + $0x1b0] sm:$0xff] %v862
      %965 = vst [vmem:[%s233 + $0x1b8] sm:$0xff] %v867
      %966 = vst [vmem:[%s233 + $0x1c0] sm:$0xff] %v872
      %967 = vst [vmem:[%s233 + $0x1c8] sm:$0xff] %v877
      %968 = vst [vmem:[%s233 + $0x1d0] sm:$0xff] %v882
      %969 = vst [vmem:[%s233 + $0x1d8] sm:$0xff] %v887
      %970 = vst [vmem:[%s233 + $0x1e0] sm:$0xff] %v892
      %971 = vst [vmem:[%s233 + $0x1e8] sm:$0xff] %v897
      %972 = vst [vmem:[%s233 + $0x1f0] sm:$0xff] %v902
      %973 = vst [vmem:[%s233 + $0x1f8] sm:$0xff] %v907
      %v974 = vadd.f32 %v592, %v597
      %v975 = vadd.f32 %v974, %v602
      %v976 = vadd.f32 %v975, %v607
      %v977 = vadd.f32 %v976, %v612
      %v978 = vadd.f32 %v977, %v617
      %v979 = vadd.f32 %v978, %v622
      %v980 = vadd.f32 %v979, %v627
      %v981 = vadd.f32 %v980, %v632
      %v982 = vadd.f32 %v981, %v637
      %v983 = vadd.f32 %v982, %v642
      %v984 = vadd.f32 %v983, %v647
      %v985 = vadd.f32 %v984, %v652
      %v986 = vadd.f32 %v985, %v657
      %v987 = vadd.f32 %v986, %v662
      %v988 = vadd.f32 %v987, %v667
      %v989 = vadd.f32 %v988, %v672
      %v990 = vadd.f32 %v989, %v677
      %v991 = vadd.f32 %v990, %v682
      %v992 = vadd.f32 %v991, %v687
      %v993 = vadd.f32 %v992, %v692
      %v994 = vadd.f32 %v993, %v697
      %v995 = vadd.f32 %v994, %v702
      %v996 = vadd.f32 %v995, %v707
      %v997 = vadd.f32 %v996, %v712
      %v998 = vadd.f32 %v997, %v717
      %v999 = vadd.f32 %v998, %v722
      %v1000 = vadd.f32 %v999, %v727
      %v1001 = vadd.f32 %v1000, %v732
      %v1002 = vadd.f32 %v1001, %v737
      %v1003 = vadd.f32 %v1002, %v742
      %v1004 = vadd.f32 %v1003, %v747
      %v1005 = vadd.f32 %v1004, %v752
      %v1006 = vadd.f32 %v1005, %v757
      %v1007 = vadd.f32 %v1006, %v762
      %v1008 = vadd.f32 %v1007, %v767
      %v1009 = vadd.f32 %v1008, %v772
      %v1010 = vadd.f32 %v1009, %v777
      %v1011 = vadd.f32 %v1010, %v782
      %v1012 = vadd.f32 %v1011, %v787
      %v1013 = vadd.f32 %v1012, %v792
      %v1014 = vadd.f32 %v1013, %v797
      %v1015 = vadd.f32 %v1014, %v802
      %v1016 = vadd.f32 %v1015, %v807
      %v1017 = vadd.f32 %v1016, %v812
      %v1018 = vadd.f32 %v1017, %v817
      %v1019 = vadd.f32 %v1018, %v822
      %v1020 = vadd.f32 %v1019, %v827
      %v1021 = vadd.f32 %v1020, %v832
      %v1022 = vadd.f32 %v1021, %v837
      %v1023 = vadd.f32 %v1022, %v842
      %v1024 = vadd.f32 %v1023, %v847
      %v1025 = vadd.f32 %v1024, %v852
      %v1026 = vadd.f32 %v1025, %v857
      %v1027 = vadd.f32 %v1026, %v862
      %v1028 = vadd.f32 %v1027, %v867
      %v1029 = vadd.f32 %v1028, %v872
      %v1030 = vadd.f32 %v1029, %v877
      %v1031 = vadd.f32 %v1030, %v882
      %v1032 = vadd.f32 %v1031, %v887
      %v1033 = vadd.f32 %v1032, %v892
      %v1034 = vadd.f32 %v1033, %v897
      %v1035 = vadd.f32 %v1034, %v902
      %v1036 = vadd.f32 %v1035, %v907
      %v1037 = vrot.slane %v1036, 4
      %v1038 = vadd.f32 %v1036, %v1037
      %v1039 = vrot.slane %v1038, 2
      %v1040 = vadd.f32 %v1038, %v1039
      %v1041 = vrot.slane %v1040, 1
      %v1042 = vadd.f32 %v1040, %v1041
      %v1043 = vmul.f32 %v592, %v592
      %v1044 = vmul.f32 %v597, %v597
      %v1045 = vmul.f32 %v602, %v602
      %v1046 = vmul.f32 %v607, %v607
      %v1047 = vmul.f32 %v612, %v612
      %v1048 = vmul.f32 %v617, %v617
      %v1049 = vmul.f32 %v622, %v622
      %v1050 = vmul.f32 %v627, %v627
      %v1051 = vmul.f32 %v632, %v632
      %v1052 = vmul.f32 %v637, %v637
      %v1053 = vmul.f32 %v642, %v642
      %v1054 = vmul.f32 %v647, %v647
      %v1055 = vmul.f32 %v652, %v652
      %v1056 = vmul.f32 %v657, %v657
      %v1057 = vmul.f32 %v662, %v662
      %v1058 = vmul.f32 %v667, %v667
      %v1059 = vmul.f32 %v672, %v672
      %v1060 = vmul.f32 %v677, %v677
      %v1061 = vmul.f32 %v682, %v682
      %v1062 = vmul.f32 %v687, %v687
      %v1063 = vmul.f32 %v692, %v692
      %v1064 = vmul.f32 %v697, %v697
      %v1065 = vmul.f32 %v702, %v702
      %v1066 = vmul.f32 %v707, %v707
      %v1067 = vmul.f32 %v712, %v712
      %v1068 = vmul.f32 %v717, %v717
      %v1069 = vmul.f32 %v722, %v722
      %v1070 = vmul.f32 %v727, %v727
      %v1071 = vmul.f32 %v732, %v732
      %v1072 = vmul.f32 %v737, %v737
      %v1073 = vmul.f32 %v742, %v742
      %v1074 = vmul.f32 %v747, %v747
      %v1075 = vmul.f32 %v752, %v752
      %v1076 = vmul.f32 %v757, %v757
      %v1077 = vmul.f32 %v762, %v762
      %v1078 = vmul.f32 %v767, %v767
      %v1079 = vmul.f32 %v772, %v772
      %v1080 = vmul.f32 %v777, %v777
      %v1081 = vmul.f32 %v782, %v782
      %v1082 = vmul.f32 %v787, %v787
      %v1083 = vmul.f32 %v792, %v792
      %v1084 = vmul.f32 %v797, %v797
      %v1085 = vmul.f32 %v802, %v802
      %v1086 = vmul.f32 %v807, %v807
      %v1087 = vmul.f32 %v812, %v812
      %v1088 = vmul.f32 %v817, %v817
      %v1089 = vmul.f32 %v822, %v822
      %v1090 = vmul.f32 %v827, %v827
      %v1091 = vmul.f32 %v832, %v832
      %v1092 = vmul.f32 %v837, %v837
      %v1093 = vmul.f32 %v842, %v842
      %v1094 = vmul.f32 %v847, %v847
      %v1095 = vmul.f32 %v852, %v852
      %v1096 = vmul.f32 %v857, %v857
      %v1097 = vmul.f32 %v862, %v862
      %v1098 = vmul.f32 %v867, %v867
      %v1099 = vmul.f32 %v872, %v872
      %v1100 = vmul.f32 %v877, %v877
      %v1101 = vmul.f32 %v882, %v882
      %v1102 = vmul.f32 %v887, %v887
      %v1103 = vmul.f32 %v892, %v892
      %v1104 = vmul.f32 %v897, %v897
      %v1105 = vmul.f32 %v902, %v902
      %v1106 = vmul.f32 %v907, %v907
      %v1107 = vadd.f32 %v1043, %v1044
      %v1108 = vadd.f32 %v1107, %v1045
      %v1109 = vadd.f32 %v1108, %v1046
      %v1110 = vadd.f32 %v1109, %v1047
      %v1111 = vadd.f32 %v1110, %v1048
      %v1112 = vadd.f32 %v1111, %v1049
      %v1113 = vadd.f32 %v1112, %v1050
      %v1114 = vadd.f32 %v1113, %v1051
      %v1115 = vadd.f32 %v1114, %v1052
      %v1116 = vadd.f32 %v1115, %v1053
      %v1117 = vadd.f32 %v1116, %v1054
      %v1118 = vadd.f32 %v1117, %v1055
      %v1119 = vadd.f32 %v1118, %v1056
      %v1120 = vadd.f32 %v1119, %v1057
      %v1121 = vadd.f32 %v1120, %v1058
      %v1122 = vadd.f32 %v1121, %v1059
      %v1123 = vadd.f32 %v1122, %v1060
      %v1124 = vadd.f32 %v1123, %v1061
      %v1125 = vadd.f32 %v1124, %v1062
      %v1126 = vadd.f32 %v1125, %v1063
      %v1127 = vadd.f32 %v1126, %v1064
      %v1128 = vadd.f32 %v1127, %v1065
      %v1129 = vadd.f32 %v1128, %v1066
      %v1130 = vadd.f32 %v1129, %v1067
      %v1131 = vadd.f32 %v1130, %v1068
      %v1132 = vadd.f32 %v1131, %v1069
      %v1133 = vadd.f32 %v1132, %v1070
      %v1134 = vadd.f32 %v1133, %v1071
      %v1135 = vadd.f32 %v1134, %v1072
      %v1136 = vadd.f32 %v1135, %v1073
      %v1137 = vadd.f32 %v1136, %v1074
      %v1138 = vadd.f32 %v1137, %v1075
      %v1139 = vadd.f32 %v1138, %v1076
      %v1140 = vadd.f32 %v1139, %v1077
      %v1141 = vadd.f32 %v1140, %v1078
      %v1142 = vadd.f32 %v1141, %v1079
      %v1143 = vadd.f32 %v1142, %v1080
      %v1144 = vadd.f32 %v1143, %v1081
      %v1145 = vadd.f32 %v1144, %v1082
      %v1146 = vadd.f32 %v1145, %v1083
      %v1147 = vadd.f32 %v1146, %v1084
      %v1148 = vadd.f32 %v1147, %v1085
      %v1149 = vadd.f32 %v1148, %v1086
      %v1150 = vadd.f32 %v1149, %v1087
      %v1151 = vadd.f32 %v1150, %v1088
      %v1152 = vadd.f32 %v1151, %v1089
      %v1153 = vadd.f32 %v1152, %v1090
      %v1154 = vadd.f32 %v1153, %v1091
      %v1155 = vadd.f32 %v1154, %v1092
      %v1156 = vadd.f32 %v1155, %v1093
      %v1157 = vadd.f32 %v1156, %v1094
      %v1158 = vadd.f32 %v1157, %v1095
      %v1159 = vadd.f32 %v1158, %v1096
      %v1160 = vadd.f32 %v1159, %v1097
      %v1161 = vadd.f32 %v1160, %v1098
      %v1162 = vadd.f32 %v1161, %v1099
      %v1163 = vadd.f32 %v1162, %v1100
      %v1164 = vadd.f32 %v1163, %v1101
      %v1165 = vadd.f32 %v1164, %v1102
      %v1166 = vadd.f32 %v1165, %v1103
      %v1167 = vadd.f32 %v1166, %v1104
      %v1168 = vadd.f32 %v1167, %v1105
      %v1169 = vadd.f32 %v1168, %v1106
      %v1170 = vrot.slane %v1169, 4
      %v1171 = vadd.f32 %v1169, %v1170
      %v1172 = vrot.slane %v1171, 2
      %v1173 = vadd.f32 %v1171, %v1172
      %v1174 = vrot.slane %v1173, 1
      %v1175 = vadd.f32 %v1173, %v1174
      %vm1176 = vcmask 1040384
      %v1177 = vsel %vm1176, %v1042, %v1175
      %1178 = vst [vmem:[%s238] sm:$0x3] %v1177
      %s1179 = smul.u32 64, %s17
      %p1180 = scmp.lt.s32.totalorder %s1179, 127
      %s1181 = scalar_select %p1180, %s1179, 127
      %s1182 = smul.addr %s1181, 8
      %s1183 = scalar_lea.vmem %s4, %s1182
      %p1184 = scmp.lt.s32.totalorder %s17, 1
      %s1185 = scalar_select %p1184, %s17, 1
      %s1186 = smul.addr %s1185, 2
      %s1187 = scalar_lea.vmem %s5, %s1186
      // Predicated region
      $region37: #{bottleneck_forward.6} parent=35 // pred_check
        %p1188 = pneg %p124
      $region38: #{bottleneck_forward.6} parent=35 // pred_check_branch
        %1190 = sbr.rel (%p1188) target = $region40
      $region39: #{bottleneck_forward.6} parent=35 // pred_region
        %s1191 = smul.u32 64, %s17
      $region40: #{bottleneck_forward.6} parent=35 // pred_fallthru
        _
      // Predicated region
      $region41: #{bottleneck_forward.6} parent=35 // pred_check
        %p1192 = pneg %p150
      $region42: #{bottleneck_forward.6} parent=35 // pred_check_branch
        %1194 = sbr.rel (%p1192) target = $region44
      $region43: #{bottleneck_forward.6} parent=35 // pred_region
        _
      $region44: #{bottleneck_forward.6} parent=35 // pred_fallthru
        _
    $region36: #{bottleneck_forward.6} parent=5 // pred_fallthru
      _
    %p1195 = scmp.le.s32.totalorder 2, %s12
    // Predicated region
    $region45: #{bottleneck_forward.6} parent=5 // pred_check
      %p1196 = pneg %p1195
    $region46: #{bottleneck_forward.6} parent=5 // pred_check_branch
      %1198 = sbr.rel (%p1196) target = $region48
    $region47: #{bottleneck_forward.6} parent=5 // pred_region
      %s1199 = ssub.s32 %s12, 2
      // Predicated region
      $region49: #{bottleneck_forward.6} parent=47 // pred_check
        %p1200 = pneg %p130
      $region50: #{bottleneck_forward.6} parent=47 // pred_check_branch
        %1202 = sbr.rel (%p1200) target = $region52
      $region51: #{bottleneck_forward.6} parent=47 // pred_region
        %s1203 = smul.u32 64, %s18
        %p1204 = scmp.lt.s32.totalorder %s1203, 127
        %s1205 = scalar_select %p1204, %s1203, 127
        %s1206 = smul.addr %s1205, 8
        %s1207 = scalar_lea.vmem %s4, %s1206
      $region52: #{bottleneck_forward.6} parent=47 // pred_fallthru
        _
      // Predicated region
      $region53: #{bottleneck_forward.6} parent=47 // pred_check
        %p1208 = pneg %p156
      $region54: #{bottleneck_forward.6} parent=47 // pred_check_branch
        %1210 = sbr.rel (%p1208) target = $region56
      $region55: #{bottleneck_forward.6} parent=47 // pred_region
        %p1211 = scmp.lt.s32.totalorder %s18, 1
        %s1212 = scalar_select %p1211, %s18, 1
        %s1213 = smul.addr %s1212, 2
        %s1214 = scalar_lea.vmem %s5, %s1213
      $region56: #{bottleneck_forward.6} parent=47 // pred_fallthru
        _
    $region48: #{bottleneck_forward.6} parent=5 // pred_fallthru
      _
  $region6: #{bottleneck_forward.6} parent=0 // loop_footer
    %s16 = sadd.s32 1, %s12
  $region7: #{bottleneck_forward.6} parent=0 // loop_footer_branch
    %11 = sbr.rel target = $region3
  $region8: #{bottleneck_forward.6} parent=0 // loop_exit
    _

// kernel: bottleneck_forward.5
$region0: #{bottleneck_forward.5}
  #allocation0 [shape = 'u32[]', space=smem, size = 0x4, offset = 0x4, fixed_abs, tag = 'smem constant byte address 0x4 - core index']
  #allocation1 [shape = 'u32[144,128]{1,0:T(1,128)}', space=vmem, size = 0x12000, scoped, tag = 'internal scratch']
  %s0 = inlined_call_operand.vmem [shape: f32[1024,128], index: 0, kind: input, shape index: {}]
  %s1 = inlined_call_operand.vmem [shape: f32[1,128], index: 1, kind: input, shape index: {}]
  %s2 = inlined_call_operand.vmem [shape: f32[1,128], index: 2, kind: input, shape index: {}]
  %s3 = inlined_call_operand.vmem [shape: f32[9,128,128], index: 3, kind: input, shape index: {}]
  %s4 = inlined_call_operand.vmem [shape: f32[256,1], index: 4, kind: input, shape index: {}]
  %s5 = inlined_call_operand.vmem [shape: f32[256,1], index: 5, kind: input, shape index: {}]
  %s6 = inlined_call_operand.vmem [shape: f32[1024,128], index: 6, kind: output, shape index: {0}]
  %s7 = inlined_call_operand.vmem [shape: f32[4,2,128], index: 7, kind: output, shape index: {1}]
  %8 = xla_tuple %s6, %s7
  %s9 = sld [smem:[#allocation0]]
  $region65: #{bottleneck_forward.5} parent=0
    _
  %s11 = ssub.s32 1, %s9
  %s12 = scalar_select 0, %s11, %s9
  loop: start=0, step=1, limit=6
  $region2: #{bottleneck_forward.5} parent=0 // loop_pre_header
    _
  $region3: #{bottleneck_forward.5} parent=0 // loop_header
    %s14 = sphi 0, %s18
    %p15 = scmp.ge.s32.totalorder %s14, 6
    %s24 = sphi 0, %s26
    %s27 = sphi 0, %s24
    %s28 = sphi 0, %s27
    %s44 = sphi 0, %s28
    %s48 = sphi 0, %s48
    %s50 = sphi 0, %s48
    %s51 = sphi 0, %s50
    %s65 = sphi 0, %s51
    %s69 = sphi 0, %s69
    %s71 = sphi 0, %s69
    %s72 = sphi 0, %s71
    %s86 = sphi 0, %s72
    %s90 = sphi 0, %s90
    %s92 = sphi 0, %s90
    %s93 = sphi 0, %s92
    %s107 = sphi 0, %s93
    %s111 = sphi 0, %s111
    %s113 = sphi 0, %s111
    %s114 = sphi 0, %s113
    %s128 = sphi 0, %s114
    %s132 = sphi 0, %s132
    %s134 = sphi 0, %s132
    %s135 = sphi 0, %s134
    %s149 = sphi 0, %s135
    %s155 = sphi 0, %s157
    %s158 = sphi 0, %s155
    %s159 = sphi 0, %s158
    %s175 = sphi 0, %s159
    %s181 = sphi 0, %s183
    %s184 = sphi 0, %s181
    %s185 = sphi 0, %s184
    %s201 = sphi 0, %s185
  $region4: #{bottleneck_forward.5} parent=0 // loop_header_branch
    %17 = sbr.rel (%p15) target = $region8
  $region5: #{bottleneck_forward.5} parent=0 // loop_body
    %s19 = ssub.s32 %s14, 1
    %s20 = ssub.s32 %s14, 2
    %s21 = sadd.s32 %s14, 1
    %s22 = ssub.s32 %s14, %s21
    %p23 = scmp.eq.s32.totalorder %s22, 0
    %s25 = sadd.s32 %s24, 1
    %s26 = scalar_select %p23, %s24, %s25
    %p29 = pneg %p23
    %p30 = scmp.eq.s32.totalorder %s14, 3
    %p31 = por %p29, %p30
    %p32 = scmp.ne.s32.totalorder %s24, %s27
    %p33 = scmp.eq.s32.totalorder %s14, 0
    %p34 = por %p32, %p33
    %p35 = scmp.ne.s32.totalorder %s24, %s27
    %p36 = scmp.eq.s32.totalorder %s19, 3
    %p37 = por %p35, %p36
    %p38 = scmp.ne.s32.totalorder %s27, %s28
    %p39 = scmp.eq.s32.totalorder %s19, 0
    %p40 = por %p38, %p39
    %p41 = scmp.ne.s32.totalorder %s27, %s28
    %p42 = scmp.eq.s32.totalorder %s20, 3
    %p43 = por %p41, %p42
    %p45 = scmp.ne.s32.totalorder %s28, %s44
    %p46 = scmp.eq.s32.totalorder %s20, 0
    %p47 = por %p45, %p46
    %s49 = sadd.s32 %s48, 1
    %p52 = scmp.eq.s32.totalorder %s14, 3
    %p53 = scmp.ne.s32.totalorder %s48, %s50
    %p54 = scmp.eq.s32.totalorder %s14, 0
    %p55 = por %p53, %p54
    %p56 = scmp.ne.s32.totalorder %s48, %s50
    %p57 = scmp.eq.s32.totalorder %s19, 3
    %p58 = por %p56, %p57
    %p59 = scmp.ne.s32.totalorder %s50, %s51
    %p60 = scmp.eq.s32.totalorder %s19, 0
    %p61 = por %p59, %p60
    %p62 = scmp.ne.s32.totalorder %s50, %s51
    %p63 = scmp.eq.s32.totalorder %s20, 3
    %p64 = por %p62, %p63
    %p66 = scmp.ne.s32.totalorder %s51, %s65
    %p67 = scmp.eq.s32.totalorder %s20, 0
    %p68 = por %p66, %p67
    %s70 = sadd.s32 %s69, 1
    %p73 = scmp.eq.s32.totalorder %s14, 3
    %p74 = scmp.ne.s32.totalorder %s69, %s71
    %p75 = scmp.eq.s32.totalorder %s14, 0
    %p76 = por %p74, %p75
    %p77 = scmp.ne.s32.totalorder %s69, %s71
    %p78 = scmp.eq.s32.totalorder %s19, 3
    %p79 = por %p77, %p78
    %p80 = scmp.ne.s32.totalorder %s71, %s72
    %p81 = scmp.eq.s32.totalorder %s19, 0
    %p82 = por %p80, %p81
    %p83 = scmp.ne.s32.totalorder %s71, %s72
    %p84 = scmp.eq.s32.totalorder %s20, 3
    %p85 = por %p83, %p84
    %p87 = scmp.ne.s32.totalorder %s72, %s86
    %p88 = scmp.eq.s32.totalorder %s20, 0
    %p89 = por %p87, %p88
    %s91 = sadd.s32 %s90, 1
    %p94 = scmp.eq.s32.totalorder %s14, 3
    %p95 = scmp.ne.s32.totalorder %s90, %s92
    %p96 = scmp.eq.s32.totalorder %s14, 0
    %p97 = por %p95, %p96
    %p98 = scmp.ne.s32.totalorder %s90, %s92
    %p99 = scmp.eq.s32.totalorder %s19, 3
    %p100 = por %p98, %p99
    %p101 = scmp.ne.s32.totalorder %s92, %s93
    %p102 = scmp.eq.s32.totalorder %s19, 0
    %p103 = por %p101, %p102
    %p104 = scmp.ne.s32.totalorder %s92, %s93
    %p105 = scmp.eq.s32.totalorder %s20, 3
    %p106 = por %p104, %p105
    %p108 = scmp.ne.s32.totalorder %s93, %s107
    %p109 = scmp.eq.s32.totalorder %s20, 0
    %p110 = por %p108, %p109
    %s112 = sadd.s32 %s111, 1
    %p115 = scmp.eq.s32.totalorder %s14, 3
    %p116 = scmp.ne.s32.totalorder %s111, %s113
    %p117 = scmp.eq.s32.totalorder %s14, 0
    %p118 = por %p116, %p117
    %p119 = scmp.ne.s32.totalorder %s111, %s113
    %p120 = scmp.eq.s32.totalorder %s19, 3
    %p121 = por %p119, %p120
    %p122 = scmp.ne.s32.totalorder %s113, %s114
    %p123 = scmp.eq.s32.totalorder %s19, 0
    %p124 = por %p122, %p123
    %p125 = scmp.ne.s32.totalorder %s113, %s114
    %p126 = scmp.eq.s32.totalorder %s20, 3
    %p127 = por %p125, %p126
    %p129 = scmp.ne.s32.totalorder %s114, %s128
    %p130 = scmp.eq.s32.totalorder %s20, 0
    %p131 = por %p129, %p130
    %s133 = sadd.s32 %s132, 1
    %p136 = scmp.eq.s32.totalorder %s14, 3
    %p137 = scmp.ne.s32.totalorder %s132, %s134
    %p138 = scmp.eq.s32.totalorder %s14, 0
    %p139 = por %p137, %p138
    %p140 = scmp.ne.s32.totalorder %s132, %s134
    %p141 = scmp.eq.s32.totalorder %s19, 3
    %p142 = por %p140, %p141
    %p143 = scmp.ne.s32.totalorder %s134, %s135
    %p144 = scmp.eq.s32.totalorder %s19, 0
    %p145 = por %p143, %p144
    %p146 = scmp.ne.s32.totalorder %s134, %s135
    %p147 = scmp.eq.s32.totalorder %s20, 3
    %p148 = por %p146, %p147
    %p150 = scmp.ne.s32.totalorder %s135, %s149
    %p151 = scmp.eq.s32.totalorder %s20, 0
    %p152 = por %p150, %p151
    %s153 = ssub.s32 %s14, %s21
    %p154 = scmp.eq.s32.totalorder %s153, 0
    %s156 = sadd.s32 %s155, 1
    %s157 = scalar_select %p154, %s155, %s156
    %p160 = pneg %p154
    %p161 = scmp.eq.s32.totalorder %s14, 3
    %p162 = por %p160, %p161
    %p163 = scmp.ne.s32.totalorder %s155, %s158
    %p164 = scmp.eq.s32.totalorder %s14, 0
    %p165 = por %p163, %p164
    %p166 = scmp.ne.s32.totalorder %s155, %s158
    %p167 = scmp.eq.s32.totalorder %s19, 3
    %p168 = por %p166, %p167
    %p169 = scmp.ne.s32.totalorder %s158, %s159
    %p170 = scmp.eq.s32.totalorder %s19, 0
    %p171 = por %p169, %p170
    %p172 = scmp.ne.s32.totalorder %s158, %s159
    %p173 = scmp.eq.s32.totalorder %s20, 3
    %p174 = por %p172, %p173
    %p176 = scmp.ne.s32.totalorder %s159, %s175
    %p177 = scmp.eq.s32.totalorder %s20, 0
    %p178 = por %p176, %p177
    %s179 = ssub.s32 %s14, %s21
    %p180 = scmp.eq.s32.totalorder %s179, 0
    %s182 = sadd.s32 %s181, 1
    %s183 = scalar_select %p180, %s181, %s182
    %p186 = pneg %p180
    %p187 = scmp.eq.s32.totalorder %s14, 3
    %p188 = por %p186, %p187
    %p189 = scmp.ne.s32.totalorder %s181, %s184
    %p190 = scmp.eq.s32.totalorder %s14, 0
    %p191 = por %p189, %p190
    %p192 = scmp.ne.s32.totalorder %s181, %s184
    %p193 = scmp.eq.s32.totalorder %s19, 3
    %p194 = por %p192, %p193
    %p195 = scmp.ne.s32.totalorder %s184, %s185
    %p196 = scmp.eq.s32.totalorder %s19, 0
    %p197 = por %p195, %p196
    %p198 = scmp.ne.s32.totalorder %s184, %s185
    %p199 = scmp.eq.s32.totalorder %s20, 3
    %p200 = por %p198, %p199
    %p202 = scmp.ne.s32.totalorder %s185, %s201
    %p203 = scmp.eq.s32.totalorder %s20, 0
    %p204 = por %p202, %p203
    %p205 = scmp.le.s32.totalorder 1, %s14
    %p206 = scmp.lt.s32.totalorder %s14, 5
    %p207 = pnand %p205, %p206
    %p208 = pneg %p207
    // Predicated region
    $region9: #{bottleneck_forward.5} parent=5 // pred_check
      _
    $region10: #{bottleneck_forward.5} parent=5 // pred_check_branch
      %210 = sbr.rel (%p207) target = $region12
    $region11: #{bottleneck_forward.5} parent=5 // pred_region
      %s211 = ssub.s32 %s14, 1
      // Predicated region
      $region13: #{bottleneck_forward.5} parent=11 // pred_check
        %p212 = pneg %p61
      $region14: #{bottleneck_forward.5} parent=11 // pred_check_branch
        %214 = sbr.rel (%p212) target = $region16
      $region15: #{bottleneck_forward.5} parent=11 // pred_region
        _
      $region16: #{bottleneck_forward.5} parent=11 // pred_fallthru
        _
      // Predicated region
      $region17: #{bottleneck_forward.5} parent=11 // pred_check
        %p215 = pneg %p82
      $region18: #{bottleneck_forward.5} parent=11 // pred_check_branch
        %217 = sbr.rel (%p215) target = $region20
      $region19: #{bottleneck_forward.5} parent=11 // pred_region
        _
      $region20: #{bottleneck_forward.5} parent=11 // pred_fallthru
        _
      // Predicated region
      $region21: #{bottleneck_forward.5} parent=11 // pred_check
        %p218 = pneg %p103
      $region22: #{bottleneck_forward.5} parent=11 // pred_check_branch
        %220 = sbr.rel (%p218) target = $region24
      $region23: #{bottleneck_forward.5} parent=11 // pred_region
        _
      $region24: #{bottleneck_forward.5} parent=11 // pred_fallthru
        _
      // Predicated region
      $region25: #{bottleneck_forward.5} parent=11 // pred_check
        %p221 = pneg %p124
      $region26: #{bottleneck_forward.5} parent=11 // pred_check_branch
        %223 = sbr.rel (%p221) target = $region28
      $region27: #{bottleneck_forward.5} parent=11 // pred_region
        _
      $region28: #{bottleneck_forward.5} parent=11 // pred_fallthru
        _
      // Predicated region
      $region29: #{bottleneck_forward.5} parent=11 // pred_check
        %p224 = pneg %p145
      $region30: #{bottleneck_forward.5} parent=11 // pred_check_branch
        %226 = sbr.rel (%p224) target = $region32
      $region31: #{bottleneck_forward.5} parent=11 // pred_region
        _
      $region32: #{bottleneck_forward.5} parent=11 // pred_fallthru
        _
    $region12: #{bottleneck_forward.5} parent=5 // pred_fallthru
      _
    %p227 = scmp.lt.s32.totalorder %s14, 4
    // Predicated region
    $region33: #{bottleneck_forward.5} parent=5 // pred_check
      %p228 = pneg %p227
    $region34: #{bottleneck_forward.5} parent=5 // pred_check_branch
      %230 = sbr.rel (%p228) target = $region36
    $region35: #{bottleneck_forward.5} parent=5 // pred_region
      // Predicated region
      $region37: #{bottleneck_forward.5} parent=35 // pred_check
        %p231 = pneg %p34
      $region38: #{bottleneck_forward.5} parent=35 // pred_check_branch
        %233 = sbr.rel (%p231) target = $region40
      $region39: #{bottleneck_forward.5} parent=35 // pred_region
        %s234 = smul.u32 32, %s14
        %p235 = scmp.lt.s32.totalorder %s234, 127
        %s236 = scalar_select %p235, %s234, 127
        %s237 = smul.addr %s236, 8
        %s238 = scalar_lea.vmem %s0, %s237
        %s239 = smul.u32 32, %s14
      $region40: #{bottleneck_forward.5} parent=35 // pred_fallthru
        _
    $region36: #{bottleneck_forward.5} parent=5 // pred_fallthru
      _
    %p240 = scmp.le.s32.totalorder 1, %s14
    %p241 = scmp.lt.s32.totalorder %s14, 5
    %p242 = pnand %p240, %p241
    %p243 = pneg %p242
    // Predicated region
    $region41: #{bottleneck_forward.5} parent=5 // pred_check
      _
    $region42: #{bottleneck_forward.5} parent=5 // pred_check_branch
      %245 = sbr.rel (%p242) target = $region44
    $region43: #{bottleneck_forward.5} parent=5 // pred_region
      %s246 = ssub.s32 %s14, 1
      %s247 = smul.u32 32, %s19
      %p248 = scmp.lt.s32.totalorder %s247, 127
      %s249 = scalar_select %p248, %s247, 127
      %s250 = smul.addr %s249, 8
      %s251 = scalar_lea.vmem %s0, %s250
      %p252 = pneg %p40
      %p253 = pneg %p37
      %p254 = pneg %p61
      %p255 = pneg %p58
      %p256 = pneg %p82
      %p257 = pneg %p79
      %p258 = pneg %p103
      %p259 = pneg %p100
      %p260 = pneg %p124
      %p261 = pneg %p121
      %p262 = pneg %p145
      %p263 = pneg %p142
      %p264 = pneg %p171
      %p265 = pneg %p168
      %s266 = smul.u32 32, %s19
      %p267 = scmp.lt.s32.totalorder %s266, 127
      %s268 = scalar_select %p267, %s266, 127
      %s269 = smul.addr %s268, 8
      %s270 = scalar_lea.vmem %s6, %s269
      %p271 = pneg %p197
      %p272 = pneg %p194
      %p273 = scmp.lt.s32.totalorder %s19, 3
      %s274 = scalar_select %p273, %s19, 3
      %s275 = smul.addr %s274, 2
      %s276 = scalar_lea.vmem %s7, %s275
      %s277 = smul.u32 32, %s19
      %p278 = scmp.lt.s32.totalorder %s277, 127
      %s279 = scalar_select %p278, %s277, 127
      %s280 = smul.addr %s279, 8
      %s281 = scalar_lea.vmem %s0, %s280
      %s282 = smul.u32 32, %s19
      %s283 = smul.u32 32, %s19
      %p284 = scmp.lt.s32.totalorder %s283, 127
      %s285 = scalar_select %p284, %s283, 127
      %s286 = smul.addr %s285, 8
      %s287 = scalar_lea.vmem %s6, %s286
      %s288 = smul.u32 32, %s19
      %p289 = scmp.lt.s32.totalorder %s19, 3
      %s290 = scalar_select %p289, %s19, 3
      %s291 = smul.addr %s290, 2
      %s292 = scalar_lea.vmem %s7, %s291
      %v293 = vld [vmem:[%s281] sm:$0xff]
      %v294 = vld [vmem:[%s281 + $0x8] sm:$0xff]
      %v295 = vld [vmem:[%s281 + $0x10] sm:$0xff]
      %v296 = vld [vmem:[%s281 + $0x18] sm:$0xff]
      %v297 = vld [vmem:[%s281 + $0x20] sm:$0xff]
      %v298 = vld [vmem:[%s281 + $0x28] sm:$0xff]
      %v299 = vld [vmem:[%s281 + $0x30] sm:$0xff]
      %v300 = vld [vmem:[%s281 + $0x38] sm:$0xff]
      %v301 = vld [vmem:[%s281 + $0x40] sm:$0xff]
      %v302 = vld [vmem:[%s281 + $0x48] sm:$0xff]
      %v303 = vld [vmem:[%s281 + $0x50] sm:$0xff]
      %v304 = vld [vmem:[%s281 + $0x58] sm:$0xff]
      %v305 = vld [vmem:[%s281 + $0x60] sm:$0xff]
      %v306 = vld [vmem:[%s281 + $0x68] sm:$0xff]
      %v307 = vld [vmem:[%s281 + $0x70] sm:$0xff]
      %v308 = vld [vmem:[%s281 + $0x78] sm:$0xff]
      %v309 = vld [vmem:[%s281 + $0x80] sm:$0xff]
      %v310 = vld [vmem:[%s281 + $0x88] sm:$0xff]
      %v311 = vld [vmem:[%s281 + $0x90] sm:$0xff]
      %v312 = vld [vmem:[%s281 + $0x98] sm:$0xff]
      %v313 = vld [vmem:[%s281 + $0xa0] sm:$0xff]
      %v314 = vld [vmem:[%s281 + $0xa8] sm:$0xff]
      %v315 = vld [vmem:[%s281 + $0xb0] sm:$0xff]
      %v316 = vld [vmem:[%s281 + $0xb8] sm:$0xff]
      %v317 = vld [vmem:[%s281 + $0xc0] sm:$0xff]
      %v318 = vld [vmem:[%s281 + $0xc8] sm:$0xff]
      %v319 = vld [vmem:[%s281 + $0xd0] sm:$0xff]
      %v320 = vld [vmem:[%s281 + $0xd8] sm:$0xff]
      %v321 = vld [vmem:[%s281 + $0xe0] sm:$0xff]
      %v322 = vld [vmem:[%s281 + $0xe8] sm:$0xff]
      %v323 = vld [vmem:[%s281 + $0xf0] sm:$0xff]
      %v324 = vld [vmem:[%s281 + $0xf8] sm:$0xff]
      %v325 = vld [vmem:[%s1] sm:$0x1]
      %v327 = vlaneseq
      %v328 = vshrl.u32 %v327, 7
      %v329 = vsub.s32 0, %v328
      %v330 = vrot.slane %v325, %v329
      %v332 = vmul.f32 %v293, %v330
      %v333 = vmul.f32 %v294, %v330
      %v334 = vmul.f32 %v295, %v330
      %v335 = vmul.f32 %v296, %v330
      %v336 = vmul.f32 %v297, %v330
      %v337 = vmul.f32 %v298, %v330
      %v338 = vmul.f32 %v299, %v330
      %v339 = vmul.f32 %v300, %v330
      %v340 = vmul.f32 %v301, %v330
      %v341 = vmul.f32 %v302, %v330
      %v342 = vmul.f32 %v303, %v330
      %v343 = vmul.f32 %v304, %v330
      %v344 = vmul.f32 %v305, %v330
      %v345 = vmul.f32 %v306, %v330
      %v346 = vmul.f32 %v307, %v330
      %v347 = vmul.f32 %v308, %v330
      %v348 = vmul.f32 %v309, %v330
      %v349 = vmul.f32 %v310, %v330
      %v350 = vmul.f32 %v311, %v330
      %v351 = vmul.f32 %v312, %v330
      %v352 = vmul.f32 %v313, %v330
      %v353 = vmul.f32 %v314, %v330
      %v354 = vmul.f32 %v315, %v330
      %v355 = vmul.f32 %v316, %v330
      %v356 = vmul.f32 %v317, %v330
      %v357 = vmul.f32 %v318, %v330
      %v358 = vmul.f32 %v319, %v330
      %v359 = vmul.f32 %v320, %v330
      %v360 = vmul.f32 %v321, %v330
      %v361 = vmul.f32 %v322, %v330
      %v362 = vmul.f32 %v323, %v330
      %v363 = vmul.f32 %v324, %v330
      %v364 = vld [vmem:[%s2] sm:$0x1]
      %v366 = vlaneseq
      %v367 = vshrl.u32 %v366, 7
      %v368 = vsub.s32 0, %v367
      %v369 = vrot.slane %v364, %v368
      %v371 = vadd.f32 %v332, %v369
      %v372 = vadd.f32 %v333, %v369
      %v373 = vadd.f32 %v334, %v369
      %v374 = vadd.f32 %v335, %v369
      %v375 = vadd.f32 %v336, %v369
      %v376 = vadd.f32 %v337, %v369
      %v377 = vadd.f32 %v338, %v369
      %v378 = vadd.f32 %v339, %v369
      %v379 = vadd.f32 %v340, %v369
      %v380 = vadd.f32 %v341, %v369
      %v381 = vadd.f32 %v342, %v369
      %v382 = vadd.f32 %v343, %v369
      %v383 = vadd.f32 %v344, %v369
      %v384 = vadd.f32 %v345, %v369
      %v385 = vadd.f32 %v346, %v369
      %v386 = vadd.f32 %v347, %v369
      %v387 = vadd.f32 %v348, %v369
      %v388 = vadd.f32 %v349, %v369
      %v389 = vadd.f32 %v350, %v369
      %v390 = vadd.f32 %v351, %v369
      %v391 = vadd.f32 %v352, %v369
      %v392 = vadd.f32 %v353, %v369
      %v393 = vadd.f32 %v354, %v369
      %v394 = vadd.f32 %v355, %v369
      %v395 = vadd.f32 %v356, %v369
      %v396 = vadd.f32 %v357, %v369
      %v397 = vadd.f32 %v358, %v369
      %v398 = vadd.f32 %v359, %v369
      %v399 = vadd.f32 %v360, %v369
      %v400 = vadd.f32 %v361, %v369
      %v401 = vadd.f32 %v362, %v369
      %v402 = vadd.f32 %v363, %v369
      %v403 = vmax.f32 %v371, 0.0
      %v404 = vmax.f32 %v372, 0.0
      %v405 = vmax.f32 %v373, 0.0
      %v406 = vmax.f32 %v374, 0.0
      %v407 = vmax.f32 %v375, 0.0
      %v408 = vmax.f32 %v376, 0.0
      %v409 = vmax.f32 %v377, 0.0
      %v410 = vmax.f32 %v378, 0.0
      %v411 = vmax.f32 %v379, 0.0
      %v412 = vmax.f32 %v380, 0.0
      %v413 = vmax.f32 %v381, 0.0
      %v414 = vmax.f32 %v382, 0.0
      %v415 = vmax.f32 %v383, 0.0
      %v416 = vmax.f32 %v384, 0.0
      %v417 = vmax.f32 %v385, 0.0
      %v418 = vmax.f32 %v386, 0.0
      %v419 = vmax.f32 %v387, 0.0
      %v420 = vmax.f32 %v388, 0.0
      %v421 = vmax.f32 %v389, 0.0
      %v422 = vmax.f32 %v390, 0.0
      %v423 = vmax.f32 %v391, 0.0
      %v424 = vmax.f32 %v392, 0.0
      %v425 = vmax.f32 %v393, 0.0
      %v426 = vmax.f32 %v394, 0.0
      %v427 = vmax.f32 %v395, 0.0
      %v428 = vmax.f32 %v396, 0.0
      %v429 = vmax.f32 %v397, 0.0
      %v430 = vmax.f32 %v398, 0.0
      %v431 = vmax.f32 %v399, 0.0
      %v432 = vmax.f32 %v400, 0.0
      %v433 = vmax.f32 %v401, 0.0
      %v434 = vmax.f32 %v402, 0.0
      %vm465 = vcmask 1040384
      %v466 = vrot.slane %v403, 7
      %v467 = vrot.slane %v404, 7
      %v468 = vsel %vm465, %v466, %v467
      %v469 = vrot.slane %v405, 7
      %v470 = vsel %vm465, %v467, %v469
      %v471 = vrot.slane %v406, 7
      %v472 = vsel %vm465, %v469, %v471
      %v473 = vrot.slane %v407, 7
      %v474 = vsel %vm465, %v471, %v473
      %v475 = vrot.slane %v408, 7
      %v476 = vsel %vm465, %v473, %v475
      %v477 = vrot.slane %v409, 7
      %v478 = vsel %vm465, %v475, %v477
      %v479 = vrot.slane %v410, 7
      %v480 = vsel %vm465, %v477, %v479
      %v481 = vrot.slane %v411, 7
      %v482 = vsel %vm465, %v479, %v481
      %v483 = vrot.slane %v412, 7
      %v484 = vsel %vm465, %v481, %v483
      %v485 = vrot.slane %v413, 7
      %v486 = vsel %vm465, %v483, %v485
      %v487 = vrot.slane %v414, 7
      %v488 = vsel %vm465, %v485, %v487
      %v489 = vrot.slane %v415, 7
      %v490 = vsel %vm465, %v487, %v489
      %v491 = vrot.slane %v416, 7
      %v492 = vsel %vm465, %v489, %v491
      %v493 = vrot.slane %v417, 7
      %v494 = vsel %vm465, %v491, %v493
      %v495 = vrot.slane %v418, 7
      %v496 = vsel %vm465, %v493, %v495
      %v497 = vrot.slane %v419, 7
      %v498 = vsel %vm465, %v495, %v497
      %v499 = vrot.slane %v420, 7
      %v500 = vsel %vm465, %v497, %v499
      %v501 = vrot.slane %v421, 7
      %v502 = vsel %vm465, %v499, %v501
      %v503 = vrot.slane %v422, 7
      %v504 = vsel %vm465, %v501, %v503
      %v505 = vrot.slane %v423, 7
      %v506 = vsel %vm465, %v503, %v505
      %v507 = vrot.slane %v424, 7
      %v508 = vsel %vm465, %v505, %v507
      %v509 = vrot.slane %v425, 7
      %v510 = vsel %vm465, %v507, %v509
      %v511 = vrot.slane %v426, 7
      %v512 = vsel %vm465, %v509, %v511
      %v513 = vrot.slane %v427, 7
      %v514 = vsel %vm465, %v511, %v513
      %v515 = vrot.slane %v428, 7
      %v516 = vsel %vm465, %v513, %v515
      %v517 = vrot.slane %v429, 7
      %v518 = vsel %vm465, %v515, %v517
      %v519 = vrot.slane %v430, 7
      %v520 = vsel %vm465, %v517, %v519
      %v521 = vrot.slane %v431, 7
      %v522 = vsel %vm465, %v519, %v521
      %v523 = vrot.slane %v432, 7
      %v524 = vsel %vm465, %v521, %v523
      %v555 = vsel %vm465, 0.0, %v466
      %v556 = vld [vmem:[%s4] sm:$0xff]
      %v557 = vld [vmem:[%s4 + $0x8] sm:$0xff]
      %v558 = vld [vmem:[%s4 + $0x10] sm:$0xff]
      %v559 = vld [vmem:[%s4 + $0x18] sm:$0xff]
      %v560 = vld [vmem:[%s4 + $0x20] sm:$0xff]
      %v561 = vld [vmem:[%s4 + $0x28] sm:$0xff]
      %v562 = vld [vmem:[%s4 + $0x30] sm:$0xff]
      %v563 = vld [vmem:[%s4 + $0x38] sm:$0xff]
      %v564 = vld [vmem:[%s4 + $0x40] sm:$0xff]
      %v565 = vld [vmem:[%s4 + $0x48] sm:$0xff]
      %v566 = vld [vmem:[%s4 + $0x50] sm:$0xff]
      %v567 = vld [vmem:[%s4 + $0x58] sm:$0xff]
      %v568 = vld [vmem:[%s4 + $0x60] sm:$0xff]
      %v569 = vld [vmem:[%s4 + $0x68] sm:$0xff]
      %v570 = vld [vmem:[%s4 + $0x70] sm:$0xff]
      %v571 = vld [vmem:[%s4 + $0x78] sm:$0xff]
      %v572 = vld [vmem:[%s4 + $0x80] sm:$0xff]
      %v573 = vld [vmem:[%s4 + $0x88] sm:$0xff]
      %v574 = vld [vmem:[%s4 + $0x90] sm:$0xff]
      %v575 = vld [vmem:[%s4 + $0x98] sm:$0xff]
      %v576 = vld [vmem:[%s4 + $0xa0] sm:$0xff]
      %v577 = vld [vmem:[%s4 + $0xa8] sm:$0xff]
      %v578 = vld [vmem:[%s4 + $0xb0] sm:$0xff]
      %v579 = vld [vmem:[%s4 + $0xb8] sm:$0xff]
      %v580 = vld [vmem:[%s4 + $0xc0] sm:$0xff]
      %v581 = vld [vmem:[%s4 + $0xc8] sm:$0xff]
      %v582 = vld [vmem:[%s4 + $0xd0] sm:$0xff]
      %v583 = vld [vmem:[%s4 + $0xd8] sm:$0xff]
      %v584 = vld [vmem:[%s4 + $0xe0] sm:$0xff]
      %v585 = vld [vmem:[%s4 + $0xe8] sm:$0xff]
      %v586 = vld [vmem:[%s4 + $0xf0] sm:$0xff]
      %v587 = vld [vmem:[%s4 + $0xf8] sm:$0xff]
      %589 = vset.pattern.permute.xlu0 0
      %590 = vperm.xlu0 %589, %v556
      %v591 = vpop.permute.xlu0 %590
      %594 = vset.pattern.permute.xlu0 0
      %595 = vperm.xlu0 %594, %v557
      %v596 = vpop.permute.xlu0 %595
      %599 = vset.pattern.permute.xlu0 0
      %600 = vperm.xlu0 %599, %v558
      %v601 = vpop.permute.xlu0 %600
      %604 = vset.pattern.permute.xlu0 0
      %605 = vperm.xlu0 %604, %v559
      %v606 = vpop.permute.xlu0 %605
      %609 = vset.pattern.permute.xlu0 0
      %610 = vperm.xlu0 %609, %v560
      %v611 = vpop.permute.xlu0 %610
      %614 = vset.pattern.permute.xlu0 0
      %615 = vperm.xlu0 %614, %v561
      %v616 = vpop.permute.xlu0 %615
      %619 = vset.pattern.permute.xlu0 0
      %620 = vperm.xlu0 %619, %v562
      %v621 = vpop.permute.xlu0 %620
      %624 = vset.pattern.permute.xlu0 0
      %625 = vperm.xlu0 %624, %v563
      %v626 = vpop.permute.xlu0 %625
      %629 = vset.pattern.permute.xlu0 0
      %630 = vperm.xlu0 %629, %v564
      %v631 = vpop.permute.xlu0 %630
      %634 = vset.pattern.permute.xlu0 0
      %635 = vperm.xlu0 %634, %v565
      %v636 = vpop.permute.xlu0 %635
      %639 = vset.pattern.permute.xlu0 0
      %640 = vperm.xlu0 %639, %v566
      %v641 = vpop.permute.xlu0 %640
      %644 = vset.pattern.permute.xlu0 0
      %645 = vperm.xlu0 %644, %v567
      %v646 = vpop.permute.xlu0 %645
      %649 = vset.pattern.permute.xlu0 0
      %650 = vperm.xlu0 %649, %v568
      %v651 = vpop.permute.xlu0 %650
      %654 = vset.pattern.permute.xlu0 0
      %655 = vperm.xlu0 %654, %v569
      %v656 = vpop.permute.xlu0 %655
      %659 = vset.pattern.permute.xlu0 0
      %660 = vperm.xlu0 %659, %v570
      %v661 = vpop.permute.xlu0 %660
      %664 = vset.pattern.permute.xlu0 0
      %665 = vperm.xlu0 %664, %v571
      %v666 = vpop.permute.xlu0 %665
      %669 = vset.pattern.permute.xlu0 0
      %670 = vperm.xlu0 %669, %v572
      %v671 = vpop.permute.xlu0 %670
      %674 = vset.pattern.permute.xlu0 0
      %675 = vperm.xlu0 %674, %v573
      %v676 = vpop.permute.xlu0 %675
      %679 = vset.pattern.permute.xlu0 0
      %680 = vperm.xlu0 %679, %v574
      %v681 = vpop.permute.xlu0 %680
      %684 = vset.pattern.permute.xlu0 0
      %685 = vperm.xlu0 %684, %v575
      %v686 = vpop.permute.xlu0 %685
      %689 = vset.pattern.permute.xlu0 0
      %690 = vperm.xlu0 %689, %v576
      %v691 = vpop.permute.xlu0 %690
      %694 = vset.pattern.permute.xlu0 0
      %695 = vperm.xlu0 %694, %v577
      %v696 = vpop.permute.xlu0 %695
      %699 = vset.pattern.permute.xlu0 0
      %700 = vperm.xlu0 %699, %v578
      %v701 = vpop.permute.xlu0 %700
      %704 = vset.pattern.permute.xlu0 0
      %705 = vperm.xlu0 %704, %v579
      %v706 = vpop.permute.xlu0 %705
      %709 = vset.pattern.permute.xlu0 0
      %710 = vperm.xlu0 %709, %v580
      %v711 = vpop.permute.xlu0 %710
      %714 = vset.pattern.permute.xlu0 0
      %715 = vperm.xlu0 %714, %v581
      %v716 = vpop.permute.xlu0 %715
      %719 = vset.pattern.permute.xlu0 0
      %720 = vperm.xlu0 %719, %v582
      %v721 = vpop.permute.xlu0 %720
      %724 = vset.pattern.permute.xlu0 0
      %725 = vperm.xlu0 %724, %v583
      %v726 = vpop.permute.xlu0 %725
      %729 = vset.pattern.permute.xlu0 0
      %730 = vperm.xlu0 %729, %v584
      %v731 = vpop.permute.xlu0 %730
      %734 = vset.pattern.permute.xlu0 0
      %735 = vperm.xlu0 %734, %v585
      %v736 = vpop.permute.xlu0 %735
      %739 = vset.pattern.permute.xlu0 0
      %740 = vperm.xlu0 %739, %v586
      %v741 = vpop.permute.xlu0 %740
      %744 = vset.pattern.permute.xlu0 0
      %745 = vperm.xlu0 %744, %v587
      %v746 = vpop.permute.xlu0 %745
      %v748 = vmul.f32 %v591, 0.0
      %v749 = vmul.f32 %v596, 0.0
      %v750 = vmul.f32 %v555, %v601
      %v751 = vmul.f32 %v468, %v606
      %v752 = vmul.f32 %v470, %v611
      %v753 = vmul.f32 %v472, %v616
      %v754 = vmul.f32 %v474, %v621
      %v755 = vmul.f32 %v476, %v626
      %v756 = vmul.f32 %v478, %v631
      %v757 = vmul.f32 %v480, %v636
      %v758 = vmul.f32 %v482, %v641
      %v759 = vmul.f32 %v484, %v646
      %v760 = vmul.f32 %v486, %v651
      %v761 = vmul.f32 %v488, %v656
      %v762 = vmul.f32 %v490, %v661
      %v763 = vmul.f32 %v492, %v666
      %v764 = vmul.f32 %v494, %v671
      %v765 = vmul.f32 %v496, %v676
      %v766 = vmul.f32 %v498, %v681
      %v767 = vmul.f32 %v500, %v686
      %v768 = vmul.f32 %v502, %v691
      %v769 = vmul.f32 %v504, %v696
      %v770 = vmul.f32 %v506, %v701
      %v771 = vmul.f32 %v508, %v706
      %v772 = vmul.f32 %v510, %v711
      %v773 = vmul.f32 %v512, %v716
      %v774 = vmul.f32 %v514, %v721
      %v775 = vmul.f32 %v516, %v726
      %v776 = vmul.f32 %v518, %v731
      %v777 = vmul.f32 %v520, %v736
      %v778 = vmul.f32 %v522, %v741
      %v779 = vmul.f32 %v524, %v746
      %v780 = vld [vmem:[%s3] sm:$0xff]
      %v781 = vld [vmem:[%s3 + $0x8] sm:$0xff]
      %v782 = vld [vmem:[%s3 + $0x10] sm:$0xff]
      %v783 = vld [vmem:[%s3 + $0x18] sm:$0xff]
      %v784 = vld [vmem:[%s3 + $0x20] sm:$0xff]
      %v785 = vld [vmem:[%s3 + $0x28] sm:$0xff]
      %v786 = vld [vmem:[%s3 + $0x30] sm:$0xff]
      %v787 = vld [vmem:[%s3 + $0x38] sm:$0xff]
      %v788 = vld [vmem:[%s3 + $0x40] sm:$0xff]
      %v789 = vld [vmem:[%s3 + $0x48] sm:$0xff]
      %v790 = vld [vmem:[%s3 + $0x50] sm:$0xff]
      %v791 = vld [vmem:[%s3 + $0x58] sm:$0xff]
      %v792 = vld [vmem:[%s3 + $0x60] sm:$0xff]
      %v793 = vld [vmem:[%s3 + $0x68] sm:$0xff]
      %v794 = vld [vmem:[%s3 + $0x70] sm:$0xff]
      %v795 = vld [vmem:[%s3 + $0x78] sm:$0xff]
      %s796 = scalar_lea.vmem %s3, 128
      %v797 = vld [vmem:[%s796] sm:$0xff]
      %v798 = vld [vmem:[%s796 + $0x8] sm:$0xff]
      %v799 = vld [vmem:[%s796 + $0x10] sm:$0xff]
      %v800 = vld [vmem:[%s796 + $0x18] sm:$0xff]
      %v801 = vld [vmem:[%s796 + $0x20] sm:$0xff]
      %v802 = vld [vmem:[%s796 + $0x28] sm:$0xff]
      %v803 = vld [vmem:[%s796 + $0x30] sm:$0xff]
      %v804 = vld [vmem:[%s796 + $0x38] sm:$0xff]
      %v805 = vld [vmem:[%s796 + $0x40] sm:$0xff]
      %v806 = vld [vmem:[%s796 + $0x48] sm:$0xff]
      %v807 = vld [vmem:[%s796 + $0x50] sm:$0xff]
      %v808 = vld [vmem:[%s796 + $0x58] sm:$0xff]
      %v809 = vld [vmem:[%s796 + $0x60] sm:$0xff]
      %v810 = vld [vmem:[%s796 + $0x68] sm:$0xff]
      %v811 = vld [vmem:[%s796 + $0x70] sm:$0xff]
      %v812 = vld [vmem:[%s796 + $0x78] sm:$0xff]
      %813 = vmatprep.subr.mxu0 0.0
      %814 = vmatpush1.msra.mxu0 %v797
      %815 = vmatprep.subr.mxu0 0.0
      %816 = vmatpush1.msra.mxu0 %v798
      %817 = vmatprep.subr.mxu0 0.0
      %818 = vmatpush1.msra.mxu0 %v799
      %819 = vmatprep.subr.mxu0 0.0
      %820 = vmatpush1.msra.mxu0 %v800
      %821 = vmatprep.subr.mxu0 0.0
      %822 = vmatpush1.msra.mxu0 %v801
      %823 = vmatprep.subr.mxu0 0.0
      %824 = vmatpush1.msra.mxu0 %v802
      %825 = vmatprep.subr.mxu0 0.0
      %826 = vmatpush1.msra.mxu0 %v803
      %827 = vmatprep.subr.mxu0 0.0
      %828 = vmatpush1.msra.mxu0 %v804
      %829 = vmatprep.subr.mxu0 0.0
      %830 = vmatpush1.msra.mxu0 %v805
      %831 = vmatprep.subr.mxu0 0.0
      %832 = vmatpush1.msra.mxu0 %v806
      %833 = vmatprep.subr.mxu0 0.0
      %834 = vmatpush1.msra.mxu0 %v807
      %835 = vmatprep.subr.mxu0 0.0
      %836 = vmatpush1.msra.mxu0 %v808
      %837 = vmatprep.subr.mxu0 0.0
      %838 = vmatpush1.msra.mxu0 %v809
      %839 = vmatprep.subr.mxu0 0.0
      %840 = vmatpush1.msra.mxu0 %v810
      %841 = vmatprep.subr.mxu0 0.0
      %842 = vmatpush1.msra.mxu0 %v811
      %843 = vmatprep.subr.mxu0 0.0
      %844 = vmatpush1.msra.mxu0 %v812
      %845 = vmatprep.subr.mxu0 0.0
      %846 = vmatpush1.msra.mxu0 0.0
      %847 = vmatprep.subr.mxu0 0.0
      %848 = vmatpush1.msra.mxu0 0.0
      %849 = vmatprep.subr.mxu0 0.0
      %850 = vmatpush1.msra.mxu0 0.0
      %851 = vmatprep.subr.mxu0 0.0
      %852 = vmatpush1.msra.mxu0 0.0
      %853 = vmatprep.subr.mxu0 0.0
      %854 = vmatpush1.msra.mxu0 0.0
      %855 = vmatprep.subr.mxu0 0.0
      %856 = vmatpush1.msra.mxu0 0.0
      %857 = vmatprep.subr.mxu0 0.0
      %858 = vmatpush1.msra.mxu0 0.0
      %859 = vmatprep.subr.mxu0 0.0
      %860 = vmatpush1.msra.mxu0 0.0
      %861 = vmatprep.subr.mxu0 0.0
      %862 = vmatpush1.msra.mxu0 0.0
      %863 = vmatprep.subr.mxu0 0.0
      %864 = vmatpush1.msra.mxu0 0.0
      %865 = vmatprep.subr.mxu0 0.0
      %866 = vmatpush1.msra.mxu0 0.0
      %867 = vmatprep.subr.mxu0 0.0
      %868 = vmatpush1.msra.mxu0 0.0
      %869 = vmatprep.subr.mxu0 0.0
      %870 = vmatpush1.msra.mxu0 0.0
      %871 = vmatprep.subr.mxu0 0.0
      %872 = vmatpush1.msra.mxu0 0.0
      %873 = vmatprep.subr.mxu0 0.0
      %874 = vmatpush1.msra.mxu0 0.0
      %875 = vmatprep.subr.mxu0 0.0
      %876 = vmatpush1.msra.mxu0 0.0
      %877 = vmatprep.mubr.f32.mxu0 0.0
      %878 = vmatmul.mubr.f32.gmra.mrb[0].mxu0 0.0
      %v879 = vpop.f32.mrb[0].mxu0
      %v880 = vadd.f32 0.0, %v879
      %v881 = vpop.f32.mrb[0].mxu0
      %882 = vmatprep.mubr.f32.mxu0 0.0
      %883 = vmatmul.mubr.f32.gmra.mrb[0].mxu0 0.0
      %v884 = vpop.f32.mrb[0].mxu0
      %v885 = vadd.f32 0.0, %v884
      %v886 = vpop.f32.mrb[0].mxu0
      %887 = vmatprep.mubr.f32.mxu0 0.0
      %888 = vmatmul.mubr.f32.gmra.mrb[0].mxu0 %v403
      %v889 = vpop.f32.mrb[0].mxu0
      %v890 = vadd.f32 0.0, %v889
      %v891 = vpop.f32.mrb[0].mxu0
      %892 = vmatprep.mubr.f32.mxu0 0.0
      %893 = vmatmul.mubr.f32.gmra.mrb[0].mxu0 %v404
      %v894 = vpop.f32.mrb[0].mxu0
      %v895 = vadd.f32 0.0, %v894
      %v896 = vpop.f32.mrb[0].mxu0
      %897 = vmatprep.mubr.f32.mxu0 0.0
      %898 = vmatmul.mubr.f32.gmra.mrb[0].mxu0 %v405
      %v899 = vpop.f32.mrb[0].mxu0
      %v900 = vadd.f32 0.0, %v899
      %v901 = vpop.f32.mrb[0].mxu0
      %902 = vmatprep.mubr.f32.mxu0 0.0
      %903 = vmatmul.mubr.f32.gmra.mrb[0].mxu0 %v406
      %v904 = vpop.f32.mrb[0].mxu0
      %v905 = vadd.f32 0.0, %v904
      %v906 = vpop.f32.mrb[0].mxu0
      %907 = vmatprep.mubr.f32.mxu0 0.0
      %908 = vmatmul.mubr.f32.gmra.mrb[0].mxu0 %v407
      %v909 = vpop.f32.mrb[0].mxu0
      %v910 = vadd.f32 0.0, %v909
      %v911 = vpop.f32.mrb[0].mxu0
      %912 = vmatprep.mubr.f32.mxu0 0.0
      %913 = vmatmul.mubr.f32.gmra.mrb[0].mxu0 %v408
      %v914 = vpop.f32.mrb[0].mxu0
      %v915 = vadd.f32 0.0, %v914
      %v916 = vpop.f32.mrb[0].mxu0
      %917 = vmatprep.mubr.f32.mxu0 0.0
      %918 = vmatmul.mubr.f32.gmra.mrb[0].mxu0 %v409
      %v919 = vpop.f32.mrb[0].mxu0
      %v920 = vadd.f32 0.0, %v919
      %v921 = vpop.f32.mrb[0].mxu0
      %922 = vmatprep.mubr.f32.mxu0 0.0
      %923 = vmatmul.mubr.f32.gmra.mrb[0].mxu0 %v410
      %v924 = vpop.f32.mrb[0].mxu0
      %v925 = vadd.f32 0.0, %v924
      %v926 = vpop.f32.mrb[0].mxu0
      %927 = vmatprep.mubr.f32.mxu0 0.0
      %928 = vmatmul.mubr.f32.gmra.mrb[0].mxu0 %v411
      %v929 = vpop.f32.mrb[0].mxu0
      %v930 = vadd.f32 0.0, %v929
      %v931 = vpop.f32.mrb[0].mxu0
      %932 = vmatprep.mubr.f32.mxu0 0.0
      %933 = vmatmul.mubr.f32.gmra.mrb[0].mxu0 %v412
      %v934 = vpop.f32.mrb[0].mxu0
      %v935 = vadd.f32 0.0, %v934
      %v936 = vpop.f32.mrb[0].mxu0
      %937 = vmatprep.mubr.f32.mxu0 0.0
      %938 = vmatmul.mubr.f32.gmra.mrb[0].mxu0 %v413
      %v939 = vpop.f32.mrb[0].mxu0
      %v940 = vadd.f32 0.0, %v939
      %v941 = vpop.f32.mrb[0].mxu0
      %942 = vmatprep.mubr.f32.mxu0 0.0
      %943 = vmatmul.mubr.f32.gmra.mrb[0].mxu0 %v414
      %v944 = vpop.f32.mrb[0].mxu0
      %v945 = vadd.f32 0.0, %v944
      %v946 = vpop.f32.mrb[0].mxu0
      %947 = vmatprep.mubr.f32.mxu0 0.0
      %948 = vmatmul.mubr.f32.gmra.mrb[0].mxu0 %v415
      %v949 = vpop.f32.mrb[0].mxu0
      %v950 = vadd.f32 0.0, %v949
      %v951 = vpop.f32.mrb[0].mxu0
      %952 = vmatprep.mubr.f32.mxu0 0.0
      %953 = vmatmul.mubr.f32.gmra.mrb[0].mxu0 %v416
      %v954 = vpop.f32.mrb[0].mxu0
      %v955 = vadd.f32 0.0, %v954
      %v956 = vpop.f32.mrb[0].mxu0
      %957 = vmatprep.mubr.f32.mxu0 0.0
      %958 = vmatmul.mubr.f32.gmra.mrb[0].mxu0 %v417
      %v959 = vpop.f32.mrb[0].mxu0
      %v960 = vadd.f32 0.0, %v959
      %v961 = vpop.f32.mrb[0].mxu0
      %962 = vmatprep.mubr.f32.mxu0 0.0
      %963 = vmatmul.mubr.f32.gmra.mrb[0].mxu0 %v418
      %v964 = vpop.f32.mrb[0].mxu0
      %v965 = vadd.f32 0.0, %v964
      %v966 = vpop.f32.mrb[0].mxu0
      %967 = vmatprep.mubr.f32.mxu0 0.0
      %968 = vmatmul.mubr.f32.gmra.mrb[0].mxu0 %v419
      %v969 = vpop.f32.mrb[0].mxu0
      %v970 = vadd.f32 0.0, %v969
      %v971 = vpop.f32.mrb[0].mxu0
      %972 = vmatprep.mubr.f32.mxu0 0.0
      %973 = vmatmul.mubr.f32.gmra.mrb[0].mxu0 %v420
      %v974 = vpop.f32.mrb[0].mxu0
      %v975 = vadd.f32 0.0, %v974
      %v976 = vpop.f32.mrb[0].mxu0
      %977 = vmatprep.mubr.f32.mxu0 0.0
      %978 = vmatmul.mubr.f32.gmra.mrb[0].mxu0 %v421
      %v979 = vpop.f32.mrb[0].mxu0
      %v980 = vadd.f32 0.0, %v979
      %v981 = vpop.f32.mrb[0].mxu0
      %982 = vmatprep.mubr.f32.mxu0 0.0
      %983 = vmatmul.mubr.f32.gmra.mrb[0].mxu0 %v422
      %v984 = vpop.f32.mrb[0].mxu0
      %v985 = vadd.f32 0.0, %v984
      %v986 = vpop.f32.mrb[0].mxu0
      %987 = vmatprep.mubr.f32.mxu0 0.0
      %988 = vmatmul.mubr.f32.gmra.mrb[0].mxu0 %v423
      %v989 = vpop.f32.mrb[0].mxu0
      %v990 = vadd.f32 0.0, %v989
      %v991 = vpop.f32.mrb[0].mxu0
      %992 = vmatprep.mubr.f32.mxu0 0.0
      %993 = vmatmul.mubr.f32.gmra.mrb[0].mxu0 %v424
      %v994 = vpop.f32.mrb[0].mxu0
      %v995 = vadd.f32 0.0, %v994
      %v996 = vpop.f32.mrb[0].mxu0
      %997 = vmatprep.mubr.f32.mxu0 0.0
      %998 = vmatmul.mubr.f32.gmra.mrb[0].mxu0 %v425
      %v999 = vpop.f32.mrb[0].mxu0
      %v1000 = vadd.f32 0.0, %v999
      %v1001 = vpop.f32.mrb[0].mxu0
      %1002 = vmatprep.mubr.f32.mxu0 0.0
      %1003 = vmatmul.mubr.f32.gmra.mrb[0].mxu0 %v426
      %v1004 = vpop.f32.mrb[0].mxu0
      %v1005 = vadd.f32 0.0, %v1004
      %v1006 = vpop.f32.mrb[0].mxu0
      %1007 = vmatprep.mubr.f32.mxu0 0.0
      %1008 = vmatmul.mubr.f32.gmra.mrb[0].mxu0 %v427
      %v1009 = vpop.f32.mrb[0].mxu0
      %v1010 = vadd.f32 0.0, %v1009
      %v1011 = vpop.f32.mrb[0].mxu0
      %1012 = vmatprep.mubr.f32.mxu0 0.0
      %1013 = vmatmul.mubr.f32.gmra.mrb[0].mxu0 %v428
      %v1014 = vpop.f32.mrb[0].mxu0
      %v1015 = vadd.f32 0.0, %v1014
      %v1016 = vpop.f32.mrb[0].mxu0
      %1017 = vmatprep.mubr.f32.mxu0 0.0
      %1018 = vmatmul.mubr.f32.gmra.mrb[0].mxu0 %v429
      %v1019 = vpop.f32.mrb[0].mxu0
      %v1020 = vadd.f32 0.0, %v1019
      %v1021 = vpop.f32.mrb[0].mxu0
      %1022 = vmatprep.mubr.f32.mxu0 0.0
      %1023 = vmatmul.mubr.f32.gmra.mrb[0].mxu0 %v430
      %v1024 = vpop.f32.mrb[0].mxu0
      %v1025 = vadd.f32 0.0, %v1024
      %v1026 = vpop.f32.mrb[0].mxu0
      %1027 = vmatprep.mubr.f32.mxu0 0.0
      %1028 = vmatmul.mubr.f32.gmra.mrb[0].mxu0 %v431
      %v1029 = vpop.f32.mrb[0].mxu0
      %v1030 = vadd.f32 0.0, %v1029
      %v1031 = vpop.f32.mrb[0].mxu0
      %1032 = vmatprep.mubr.f32.mxu0 0.0
      %1033 = vmatmul.mubr.f32.gmra.mrb[0].mxu0 %v432
      %v1034 = vpop.f32.mrb[0].mxu0
      %v1035 = vadd.f32 0.0, %v1034
      %v1036 = vpop.f32.mrb[0].mxu0
      %1037 = vdwg.mxu0
      %1038 = vmatprep.subr.mxu0 0.0
      %1039 = vmatpush1.msra.mxu0 %v780
      %1040 = vmatprep.subr.mxu0 0.0
      %1041 = vmatpush1.msra.mxu0 %v781
      %1042 = vmatprep.subr.mxu0 0.0
      %1043 = vmatpush1.msra.mxu0 %v782
      %1044 = vmatprep.subr.mxu0 0.0
      %1045 = vmatpush1.msra.mxu0 %v783
      %1046 = vmatprep.subr.mxu0 0.0
      %1047 = vmatpush1.msra.mxu0 %v784
      %1048 = vmatprep.subr.mxu0 0.0
      %1049 = vmatpush1.msra.mxu0 %v785
      %1050 = vmatprep.subr.mxu0 0.0
      %1051 = vmatpush1.msra.mxu0 %v786
      %1052 = vmatprep.subr.mxu0 0.0
      %1053 = vmatpush1.msra.mxu0 %v787
      %1054 = vmatprep.subr.mxu0 0.0
      %1055 = vmatpush1.msra.mxu0 %v788
      %1056 = vmatprep.subr.mxu0 0.0
      %1057 = vmatpush1.msra.mxu0 %v789
      %1058 = vmatprep.subr.mxu0 0.0
      %1059 = vmatpush1.msra.mxu0 %v790
      %1060 = vmatprep.subr.mxu0 0.0
      %1061 = vmatpush1.msra.mxu0 %v791
      %1062 = vmatprep.subr.mxu0 0.0
      %1063 = vmatpush1.msra.mxu0 %v792
      %1064 = vmatprep.subr.mxu0 0.0
      %1065 = vmatpush1.msra.mxu0 %v793
      %1066 = vmatprep.subr.mxu0 0.0
      %1067 = vmatpush1.msra.mxu0 %v794
      %1068 = vmatprep.subr.mxu0 0.0
      %1069 = vmatpush1.msra.mxu0 %v795
      %1070 = vmatprep.subr.mxu0 0.0
      %1071 = vmatpush1.msra.mxu0 0.0
      %1072 = vmatprep.subr.mxu0 0.0
      %1073 = vmatpush1.msra.mxu0 0.0
      %1074 = vmatprep.subr.mxu0 0.0
      %1075 = vmatpush1.msra.mxu0 0.0
      %1076 = vmatprep.subr.mxu0 0.0
      %1077 = vmatpush1.msra.mxu0 0.0
      %1078 = vmatprep.subr.mxu0 0.0
      %1079 = vmatpush1.msra.mxu0 0.0
      %1080 = vmatprep.subr.mxu0 0.0
      %1081 = vmatpush1.msra.mxu0 0.0
      %1082 = vmatprep.subr.mxu0 0.0
      %1083 = vmatpush1.msra.mxu0 0.0
      %1084 = vmatprep.subr.mxu0 0.0
      %1085 = vmatpush1.msra.mxu0 0.0
      %1086 = vmatprep.subr.mxu0 0.0
      %1087 = vmatpush1.msra.mxu0 0.0
      %1088 = vmatprep.subr.mxu0 0.0
      %1089 = vmatpush1.msra.mxu0 0.0
      %1090 = vmatprep.subr.mxu0 0.0
      %1091 = vmatpush1.msra.mxu0 0.0
      %1092 = vmatprep.subr.mxu0 0.0
      %1093 = vmatpush1.msra.mxu0 0.0
      %1094 = vmatprep.subr.mxu0 0.0
      %1095 = vmatpush1.msra.mxu0 0.0
      %1096 = vmatprep.subr.mxu0 0.0
      %1097 = vmatpush1.msra.mxu0 0.0
      %1098 = vmatprep.subr.mxu0 0.0
      %1099 = vmatpush1.msra.mxu0 0.0
      %1100 = vmatprep.subr.mxu0 0.0
      %1101 = vmatpush1.msra.mxu0 0.0
      %1102 = vmatprep.mubr.f32.mxu0 0.0
      %1103 = vmatmul.mubr.f32.gmra.mrb[0].mxu0 %v748
      %v1104 = vpop.f32.mrb[0].mxu0
      %v1105 = vadd.f32 %v880, %v1104
      %v1106 = vpop.f32.mrb[0].mxu0
      %1107 = vmatprep.mubr.f32.mxu0 0.0
      %1108 = vmatmul.mubr.f32.gmra.mrb[0].mxu0 %v749
      %v1109 = vpop.f32.mrb[0].mxu0
      %v1110 = vadd.f32 %v885, %v1109
      %v1111 = vpop.f32.mrb[0].mxu0
      %1112 = vmatprep.mubr.f32.mxu0 0.0
      %1113 = vmatmul.mubr.f32.gmra.mrb[0].mxu0 %v750
      %v1114 = vpop.f32.mrb[0].mxu0
      %v1115 = vadd.f32 %v890, %v1114
      %v1116 = vpop.f32.mrb[0].mxu0
      %1117 = vmatprep.mubr.f32.mxu0 0.0
      %1118 = vmatmul.mubr.f32.gmra.mrb[0].mxu0 %v751
      %v1119 = vpop.f32.mrb[0].mxu0
      %v1120 = vadd.f32 %v895, %v1119
      %v1121 = vpop.f32.mrb[0].mxu0
      %1122 = vmatprep.mubr.f32.mxu0 0.0
      %1123 = vmatmul.mubr.f32.gmra.mrb[0].mxu0 %v752
      %v1124 = vpop.f32.mrb[0].mxu0
      %v1125 = vadd.f32 %v900, %v1124
      %v1126 = vpop.f32.mrb[0].mxu0
      %1127 = vmatprep.mubr.f32.mxu0 0.0
      %1128 = vmatmul.mubr.f32.gmra.mrb[0].mxu0 %v753
      %v1129 = vpop.f32.mrb[0].mxu0
      %v1130 = vadd.f32 %v905, %v1129
      %v1131 = vpop.f32.mrb[0].mxu0
      %1132 = vmatprep.mubr.f32.mxu0 0.0
      %1133 = vmatmul.mubr.f32.gmra.mrb[0].mxu0 %v754
      %v1134 = vpop.f32.mrb[0].mxu0
      %v1135 = vadd.f32 %v910, %v1134
      %v1136 = vpop.f32.mrb[0].mxu0
      %1137 = vmatprep.mubr.f32.mxu0 0.0
      %1138 = vmatmul.mubr.f32.gmra.mrb[0].mxu0 %v755
      %v1139 = vpop.f32.mrb[0].mxu0
      %v1140 = vadd.f32 %v915, %v1139
      %v1141 = vpop.f32.mrb[0].mxu0
      %1142 = vmatprep.mubr.f32.mxu0 0.0
      %1143 = vmatmul.mubr.f32.gmra.mrb[0].mxu0 %v756
      %v1144 = vpop.f32.mrb[0].mxu0
      %v1145 = vadd.f32 %v920, %v1144
      %v1146 = vpop.f32.mrb[0].mxu0
      %1147 = vmatprep.mubr.f32.mxu0 0.0
      %1148 = vmatmul.mubr.f32.gmra.mrb[0].mxu0 %v757
      %v1149 = vpop.f32.mrb[0].mxu0
      %v1150 = vadd.f32 %v925, %v1149
      %v1151 = vpop.f32.mrb[0].mxu0
      %1152 = vmatprep.mubr.f32.mxu0 0.0
      %1153 = vmatmul.mubr.f32.gmra.mrb[0].mxu0 %v758
      %v1154 = vpop.f32.mrb[0].mxu0
      %v1155 = vadd.f32 %v930, %v1154
      %v1156 = vpop.f32.mrb[0].mxu0
      %1157 = vmatprep.mubr.f32.mxu0 0.0
      %1158 = vmatmul.mubr.f32.gmra.mrb[0].mxu0 %v759
      %v1159 = vpop.f32.mrb[0].mxu0
      %v1160 = vadd.f32 %v935, %v1159
      %v1161 = vpop.f32.mrb[0].mxu0
      %1162 = vmatprep.mubr.f32.mxu0 0.0
      %1163 = vmatmul.mubr.f32.gmra.mrb[0].mxu0 %v760
      %v1164 = vpop.f32.mrb[0].mxu0
      %v1165 = vadd.f32 %v940, %v1164
      %v1166 = vpop.f32.mrb[0].mxu0
      %1167 = vmatprep.mubr.f32.mxu0 0.0
      %1168 = vmatmul.mubr.f32.gmra.mrb[0].mxu0 %v761
      %v1169 = vpop.f32.mrb[0].mxu0
      %v1170 = vadd.f32 %v945, %v1169
      %v1171 = vpop.f32.mrb[0].mxu0
      %1172 = vmatprep.mubr.f32.mxu0 0.0
      %1173 = vmatmul.mubr.f32.gmra.mrb[0].mxu0 %v762
      %v1174 = vpop.f32.mrb[0].mxu0
      %v1175 = vadd.f32 %v950, %v1174
      %v1176 = vpop.f32.mrb[0].mxu0
      %1177 = vmatprep.mubr.f32.mxu0 0.0
      %1178 = vmatmul.mubr.f32.gmra.mrb[0].mxu0 %v763
      %v1179 = vpop.f32.mrb[0].mxu0
      %v1180 = vadd.f32 %v955, %v1179
      %v1181 = vpop.f32.mrb[0].mxu0
      %1182 = vmatprep.mubr.f32.mxu0 0.0
      %1183 = vmatmul.mubr.f32.gmra.mrb[0].mxu0 %v764
      %v1184 = vpop.f32.mrb[0].mxu0
      %v1185 = vadd.f32 %v960, %v1184
      %v1186 = vpop.f32.mrb[0].mxu0
      %1187 = vmatprep.mubr.f32.mxu0 0.0
      %1188 = vmatmul.mubr.f32.gmra.mrb[0].mxu0 %v765
      %v1189 = vpop.f32.mrb[0].mxu0
      %v1190 = vadd.f32 %v965, %v1189
      %v1191 = vpop.f32.mrb[0].mxu0
      %1192 = vmatprep.mubr.f32.mxu0 0.0
      %1193 = vmatmul.mubr.f32.gmra.mrb[0].mxu0 %v766
      %v1194 = vpop.f32.mrb[0].mxu0
      %v1195 = vadd.f32 %v970, %v1194
      %v1196 = vpop.f32.mrb[0].mxu0
      %1197 = vmatprep.mubr.f32.mxu0 0.0
      %1198 = vmatmul.mubr.f32.gmra.mrb[0].mxu0 %v767
      %v1199 = vpop.f32.mrb[0].mxu0
      %v1200 = vadd.f32 %v975, %v1199
      %v1201 = vpop.f32.mrb[0].mxu0
      %1202 = vmatprep.mubr.f32.mxu0 0.0
      %1203 = vmatmul.mubr.f32.gmra.mrb[0].mxu0 %v768
      %v1204 = vpop.f32.mrb[0].mxu0
      %v1205 = vadd.f32 %v980, %v1204
      %v1206 = vpop.f32.mrb[0].mxu0
      %1207 = vmatprep.mubr.f32.mxu0 0.0
      %1208 = vmatmul.mubr.f32.gmra.mrb[0].mxu0 %v769
      %v1209 = vpop.f32.mrb[0].mxu0
      %v1210 = vadd.f32 %v985, %v1209
      %v1211 = vpop.f32.mrb[0].mxu0
      %1212 = vmatprep.mubr.f32.mxu0 0.0
      %1213 = vmatmul.mubr.f32.gmra.mrb[0].mxu0 %v770
      %v1214 = vpop.f32.mrb[0].mxu0
      %v1215 = vadd.f32 %v990, %v1214
      %v1216 = vpop.f32.mrb[0].mxu0
      %1217 = vmatprep.mubr.f32.mxu0 0.0
      %1218 = vmatmul.mubr.f32.gmra.mrb[0].mxu0 %v771
      %v1219 = vpop.f32.mrb[0].mxu0
      %v1220 = vadd.f32 %v995, %v1219
      %v1221 = vpop.f32.mrb[0].mxu0
      %1222 = vmatprep.mubr.f32.mxu0 0.0
      %1223 = vmatmul.mubr.f32.gmra.mrb[0].mxu0 %v772
      %v1224 = vpop.f32.mrb[0].mxu0
      %v1225 = vadd.f32 %v1000, %v1224
      %v1226 = vpop.f32.mrb[0].mxu0
      %1227 = vmatprep.mubr.f32.mxu0 0.0
      %1228 = vmatmul.mubr.f32.gmra.mrb[0].mxu0 %v773
      %v1229 = vpop.f32.mrb[0].mxu0
      %v1230 = vadd.f32 %v1005, %v1229
      %v1231 = vpop.f32.mrb[0].mxu0
      %1232 = vmatprep.mubr.f32.mxu0 0.0
      %1233 = vmatmul.mubr.f32.gmra.mrb[0].mxu0 %v774
      %v1234 = vpop.f32.mrb[0].mxu0
      %v1235 = vadd.f32 %v1010, %v1234
      %v1236 = vpop.f32.mrb[0].mxu0
      %1237 = vmatprep.mubr.f32.mxu0 0.0
      %1238 = vmatmul.mubr.f32.gmra.mrb[0].mxu0 %v775
      %v1239 = vpop.f32.mrb[0].mxu0
      %v1240 = vadd.f32 %v1015, %v1239
      %v1241 = vpop.f32.mrb[0].mxu0
      %1242 = vmatprep.mubr.f32.mxu0 0.0
      %1243 = vmatmul.mubr.f32.gmra.mrb[0].mxu0 %v776
      %v1244 = vpop.f32.mrb[0].mxu0
      %v1245 = vadd.f32 %v1020, %v1244
      %v1246 = vpop.f32.mrb[0].mxu0
      %1247 = vmatprep.mubr.f32.mxu0 0.0
      %1248 = vmatmul.mubr.f32.gmra.mrb[0].mxu0 %v777
      %v1249 = vpop.f32.mrb[0].mxu0
      %v1250 = vadd.f32 %v1025, %v1249
      %v1251 = vpop.f32.mrb[0].mxu0
      %1252 = vmatprep.mubr.f32.mxu0 0.0
      %1253 = vmatmul.mubr.f32.gmra.mrb[0].mxu0 %v778
      %v1254 = vpop.f32.mrb[0].mxu0
      %v1255 = vadd.f32 %v1030, %v1254
      %v1256 = vpop.f32.mrb[0].mxu0
      %1257 = vmatprep.mubr.f32.mxu0 0.0
      %1258 = vmatmul.mubr.f32.gmra.mrb[0].mxu0 %v779
      %v1259 = vpop.f32.mrb[0].mxu0
      %v1260 = vadd.f32 %v1035, %v1259
      %v1261 = vpop.f32.mrb[0].mxu0
      %1262 = vdwg.mxu0
      %vm1264 = vcmask 1046528
      %v1265 = vrot.slane %v403, 1
      %v1266 = vrot.slane %v404, 1
      %v1267 = vsel %vm1264, %v1265, %v1266
      %v1268 = vrot.slane %v405, 1
      %v1269 = vsel %vm1264, %v1266, %v1268
      %v1270 = vrot.slane %v406, 1
      %v1271 = vsel %vm1264, %v1268, %v1270
      %v1272 = vrot.slane %v407, 1
      %v1273 = vsel %vm1264, %v1270, %v1272
      %v1274 = vrot.slane %v408, 1
      %v1275 = vsel %vm1264, %v1272, %v1274
      %v1276 = vrot.slane %v409, 1
      %v1277 = vsel %vm1264, %v1274, %v1276
      %v1278 = vrot.slane %v410, 1
      %v1279 = vsel %vm1264, %v1276, %v1278
      %v1280 = vrot.slane %v411, 1
      %v1281 = vsel %vm1264, %v1278, %v1280
      %v1282 = vrot.slane %v412, 1
      %v1283 = vsel %vm1264, %v1280, %v1282
      %v1284 = vrot.slane %v413, 1
      %v1285 = vsel %vm1264, %v1282, %v1284
      %v1286 = vrot.slane %v414, 1
      %v1287 = vsel %vm1264, %v1284, %v1286
      %v1288 = vrot.slane %v415, 1
      %v1289 = vsel %vm1264, %v1286, %v1288
      %v1290 = vrot.slane %v416, 1
      %v1291 = vsel %vm1264, %v1288, %v1290
      %v1292 = vrot.slane %v417, 1
      %v1293 = vsel %vm1264, %v1290, %v1292
      %v1294 = vrot.slane %v418, 1
      %v1295 = vsel %vm1264, %v1292, %v1294
      %v1296 = vrot.slane %v419, 1
      %v1297 = vsel %vm1264, %v1294, %v1296
      %v1298 = vrot.slane %v420, 1
      %v1299 = vsel %vm1264, %v1296, %v1298
      %v1300 = vrot.slane %v421, 1
      %v1301 = vsel %vm1264, %v1298, %v1300
      %v1302 = vrot.slane %v422, 1
      %v1303 = vsel %vm1264, %v1300, %v1302
      %v1304 = vrot.slane %v423, 1
      %v1305 = vsel %vm1264, %v1302, %v1304
      %v1306 = vrot.slane %v424, 1
      %v1307 = vsel %vm1264, %v1304, %v1306
      %v1308 = vrot.slane %v425, 1
      %v1309 = vsel %vm1264, %v1306, %v1308
      %v1310 = vrot.slane %v426, 1
      %v1311 = vsel %vm1264, %v1308, %v1310
      %v1312 = vrot.slane %v427, 1
      %v1313 = vsel %vm1264, %v1310, %v1312
      %v1314 = vrot.slane %v428, 1
      %v1315 = vsel %vm1264, %v1312, %v1314
      %v1316 = vrot.slane %v429, 1
      %v1317 = vsel %vm1264, %v1314, %v1316
      %v1318 = vrot.slane %v430, 1
      %v1319 = vsel %vm1264, %v1316, %v1318
      %v1320 = vrot.slane %v431, 1
      %v1321 = vsel %vm1264, %v1318, %v1320
      %v1322 = vrot.slane %v432, 1
      %v1323 = vsel %vm1264, %v1320, %v1322
      %v1324 = vrot.slane %v433, 1
      %v1325 = vsel %vm1264, %v1322, %v1324
      %v1357 = vsel %vm1264, 0.0, %v1265
      %v1358 = vld [vmem:[%s5] sm:$0xff]
      %v1359 = vld [vmem:[%s5 + $0x8] sm:$0xff]
      %v1360 = vld [vmem:[%s5 + $0x10] sm:$0xff]
      %v1361 = vld [vmem:[%s5 + $0x18] sm:$0xff]
      %v1362 = vld [vmem:[%s5 + $0x20] sm:$0xff]
      %v1363 = vld [vmem:[%s5 + $0x28] sm:$0xff]
      %v1364 = vld [vmem:[%s5 + $0x30] sm:$0xff]
      %v1365 = vld [vmem:[%s5 + $0x38] sm:$0xff]
      %v1366 = vld [vmem:[%s5 + $0x40] sm:$0xff]
      %v1367 = vld [vmem:[%s5 + $0x48] sm:$0xff]
      %v1368 = vld [vmem:[%s5 + $0x50] sm:$0xff]
      %v1369 = vld [vmem:[%s5 + $0x58] sm:$0xff]
      %v1370 = vld [vmem:[%s5 + $0x60] sm:$0xff]
      %v1371 = vld [vmem:[%s5 + $0x68] sm:$0xff]
      %v1372 = vld [vmem:[%s5 + $0x70] sm:$0xff]
      %v1373 = vld [vmem:[%s5 + $0x78] sm:$0xff]
      %v1374 = vld [vmem:[%s5 + $0x80] sm:$0xff]
      %v1375 = vld [vmem:[%s5 + $0x88] sm:$0xff]
      %v1376 = vld [vmem:[%s5 + $0x90] sm:$0xff]
      %v1377 = vld [vmem:[%s5 + $0x98] sm:$0xff]
      %v1378 = vld [vmem:[%s5 + $0xa0] sm:$0xff]
      %v1379 = vld [vmem:[%s5 + $0xa8] sm:$0xff]
      %v1380 = vld [vmem:[%s5 + $0xb0] sm:$0xff]
      %v1381 = vld [vmem:[%s5 + $0xb8] sm:$0xff]
      %v1382 = vld [vmem:[%s5 + $0xc0] sm:$0xff]
      %v1383 = vld [vmem:[%s5 + $0xc8] sm:$0xff]
      %v1384 = vld [vmem:[%s5 + $0xd0] sm:$0xff]
      %v1385 = vld [vmem:[%s5 + $0xd8] sm:$0xff]
      %v1386 = vld [vmem:[%s5 + $0xe0] sm:$0xff]
      %v1387 = vld [vmem:[%s5 + $0xe8] sm:$0xff]
      %v1388 = vld [vmem:[%s5 + $0xf0] sm:$0xff]
      %v1389 = vld [vmem:[%s5 + $0xf8] sm:$0xff]
      %1391 = vset.pattern.permute.xlu0 0
      %1392 = vperm.xlu0 %1391, %v1358
      %v1393 = vpop.permute.xlu0 %1392
      %1396 = vset.pattern.permute.xlu0 0
      %1397 = vperm.xlu0 %1396, %v1359
      %v1398 = vpop.permute.xlu0 %1397
      %1401 = vset.pattern.permute.xlu0 0
      %1402 = vperm.xlu0 %1401, %v1360
      %v1403 = vpop.permute.xlu0 %1402
      %1406 = vset.pattern.permute.xlu0 0
      %1407 = vperm.xlu0 %1406, %v1361
      %v1408 = vpop.permute.xlu0 %1407
      %1411 = vset.pattern.permute.xlu0 0
      %1412 = vperm.xlu0 %1411, %v1362
      %v1413 = vpop.permute.xlu0 %1412
      %1416 = vset.pattern.permute.xlu0 0
      %1417 = vperm.xlu0 %1416, %v1363
      %v1418 = vpop.permute.xlu0 %1417
      %1421 = vset.pattern.permute.xlu0 0
      %1422 = vperm.xlu0 %1421, %v1364
      %v1423 = vpop.permute.xlu0 %1422
      %1426 = vset.pattern.permute.xlu0 0
      %1427 = vperm.xlu0 %1426, %v1365
      %v1428 = vpop.permute.xlu0 %1427
      %1431 = vset.pattern.permute.xlu0 0
      %1432 = vperm.xlu0 %1431, %v1366
      %v1433 = vpop.permute.xlu0 %1432
      %1436 = vset.pattern.permute.xlu0 0
      %1437 = vperm.xlu0 %1436, %v1367
      %v1438 = vpop.permute.xlu0 %1437
      %1441 = vset.pattern.permute.xlu0 0
      %1442 = vperm.xlu0 %1441, %v1368
      %v1443 = vpop.permute.xlu0 %1442
      %1446 = vset.pattern.permute.xlu0 0
      %1447 = vperm.xlu0 %1446, %v1369
      %v1448 = vpop.permute.xlu0 %1447
      %1451 = vset.pattern.permute.xlu0 0
      %1452 = vperm.xlu0 %1451, %v1370
      %v1453 = vpop.permute.xlu0 %1452
      %1456 = vset.pattern.permute.xlu0 0
      %1457 = vperm.xlu0 %1456, %v1371
      %v1458 = vpop.permute.xlu0 %1457
      %1461 = vset.pattern.permute.xlu0 0
      %1462 = vperm.xlu0 %1461, %v1372
      %v1463 = vpop.permute.xlu0 %1462
      %1466 = vset.pattern.permute.xlu0 0
      %1467 = vperm.xlu0 %1466, %v1373
      %v1468 = vpop.permute.xlu0 %1467
      %1471 = vset.pattern.permute.xlu0 0
      %1472 = vperm.xlu0 %1471, %v1374
      %v1473 = vpop.permute.xlu0 %1472
      %1476 = vset.pattern.permute.xlu0 0
      %1477 = vperm.xlu0 %1476, %v1375
      %v1478 = vpop.permute.xlu0 %1477
      %1481 = vset.pattern.permute.xlu0 0
      %1482 = vperm.xlu0 %1481, %v1376
      %v1483 = vpop.permute.xlu0 %1482
      %1486 = vset.pattern.permute.xlu0 0
      %1487 = vperm.xlu0 %1486, %v1377
      %v1488 = vpop.permute.xlu0 %1487
      %1491 = vset.pattern.permute.xlu0 0
      %1492 = vperm.xlu0 %1491, %v1378
      %v1493 = vpop.permute.xlu0 %1492
      %1496 = vset.pattern.permute.xlu0 0
      %1497 = vperm.xlu0 %1496, %v1379
      %v1498 = vpop.permute.xlu0 %1497
      %1501 = vset.pattern.permute.xlu0 0
      %1502 = vperm.xlu0 %1501, %v1380
      %v1503 = vpop.permute.xlu0 %1502
      %1506 = vset.pattern.permute.xlu0 0
      %1507 = vperm.xlu0 %1506, %v1381
      %v1508 = vpop.permute.xlu0 %1507
      %1511 = vset.pattern.permute.xlu0 0
      %1512 = vperm.xlu0 %1511, %v1382
      %v1513 = vpop.permute.xlu0 %1512
      %1516 = vset.pattern.permute.xlu0 0
      %1517 = vperm.xlu0 %1516, %v1383
      %v1518 = vpop.permute.xlu0 %1517
      %1521 = vset.pattern.permute.xlu0 0
      %1522 = vperm.xlu0 %1521, %v1384
      %v1523 = vpop.permute.xlu0 %1522
      %1526 = vset.pattern.permute.xlu0 0
      %1527 = vperm.xlu0 %1526, %v1385
      %v1528 = vpop.permute.xlu0 %1527
      %1531 = vset.pattern.permute.xlu0 0
      %1532 = vperm.xlu0 %1531, %v1386
      %v1533 = vpop.permute.xlu0 %1532
      %1536 = vset.pattern.permute.xlu0 0
      %1537 = vperm.xlu0 %1536, %v1387
      %v1538 = vpop.permute.xlu0 %1537
      %1541 = vset.pattern.permute.xlu0 0
      %1542 = vperm.xlu0 %1541, %v1388
      %v1543 = vpop.permute.xlu0 %1542
      %1546 = vset.pattern.permute.xlu0 0
      %1547 = vperm.xlu0 %1546, %v1389
      %v1548 = vpop.permute.xlu0 %1547
      %v1550 = vmul.f32 %v1393, 0.0
      %v1551 = vmul.f32 %v1357, %v1398
      %v1552 = vmul.f32 %v1267, %v1403
      %v1553 = vmul.f32 %v1269, %v1408
      %v1554 = vmul.f32 %v1271, %v1413
      %v1555 = vmul.f32 %v1273, %v1418
      %v1556 = vmul.f32 %v1275, %v1423
      %v1557 = vmul.f32 %v1277, %v1428
      %v1558 = vmul.f32 %v1279, %v1433
      %v1559 = vmul.f32 %v1281, %v1438
      %v1560 = vmul.f32 %v1283, %v1443
      %v1561 = vmul.f32 %v1285, %v1448
      %v1562 = vmul.f32 %v1287, %v1453
      %v1563 = vmul.f32 %v1289, %v1458
      %v1564 = vmul.f32 %v1291, %v1463
      %v1565 = vmul.f32 %v1293, %v1468
      %v1566 = vmul.f32 %v1295, %v1473
      %v1567 = vmul.f32 %v1297, %v1478
      %v1568 = vmul.f32 %v1299, %v1483
      %v1569 = vmul.f32 %v1301, %v1488
      %v1570 = vmul.f32 %v1303, %v1493
      %v1571 = vmul.f32 %v1305, %v1498
      %v1572 = vmul.f32 %v1307, %v1503
      %v1573 = vmul.f32 %v1309, %v1508
      %v1574 = vmul.f32 %v1311, %v1513
      %v1575 = vmul.f32 %v1313, %v1518
      %v1576 = vmul.f32 %v1315, %v1523
      %v1577 = vmul.f32 %v1317, %v1528
      %v1578 = vmul.f32 %v1319, %v1533
      %v1579 = vmul.f32 %v1321, %v1538
      %v1580 = vmul.f32 %v1323, %v1543
      %v1581 = vmul.f32 %v1325, %v1548
      %s1582 = scalar_lea.vmem %s3, 256
      %v1583 = vld [vmem:[%s1582] sm:$0xff]
      %v1584 = vld [vmem:[%s1582 + $0x8] sm:$0xff]
      %v1585 = vld [vmem:[%s1582 + $0x10] sm:$0xff]
      %v1586 = vld [vmem:[%s1582 + $0x18] sm:$0xff]
      %v1587 = vld [vmem:[%s1582 + $0x20] sm:$0xff]
      %v1588 = vld [vmem:[%s1582 + $0x28] sm:$0xff]
      %v1589 = vld [vmem:[%s1582 + $0x30] sm:$0xff]
      %v1590 = vld [vmem:[%s1582 + $0x38] sm:$0xff]
      %v1591 = vld [vmem:[%s1582 + $0x40] sm:$0xff]
      %v1592 = vld [vmem:[%s1582 + $0x48] sm:$0xff]
      %v1593 = vld [vmem:[%s1582 + $0x50] sm:$0xff]
      %v1594 = vld [vmem:[%s1582 + $0x58] sm:$0xff]
      %v1595 = vld [vmem:[%s1582 + $0x60] sm:$0xff]
      %v1596 = vld [vmem:[%s1582 + $0x68] sm:$0xff]
      %v1597 = vld [vmem:[%s1582 + $0x70] sm:$0xff]
      %v1598 = vld [vmem:[%s1582 + $0x78] sm:$0xff]
      %1599 = vmatprep.subr.mxu0 0.0
      %1600 = vmatpush1.msra.mxu0 %v1583
      %1601 = vmatprep.subr.mxu0 0.0
      %1602 = vmatpush1.msra.mxu0 %v1584
      %1603 = vmatprep.subr.mxu0 0.0
      %1604 = vmatpush1.msra.mxu0 %v1585
      %1605 = vmatprep.subr.mxu0 0.0
      %1606 = vmatpush1.msra.mxu0 %v1586
      %1607 = vmatprep.subr.mxu0 0.0
      %1608 = vmatpush1.msra.mxu0 %v1587
      %1609 = vmatprep.subr.mxu0 0.0
      %1610 = vmatpush1.msra.mxu0 %v1588
      %1611 = vmatprep.subr.mxu0 0.0
      %1612 = vmatpush1.msra.mxu0 %v1589
      %1613 = vmatprep.subr.mxu0 0.0
      %1614 = vmatpush1.msra.mxu0 %v1590
      %1615 = vmatprep.subr.mxu0 0.0
      %1616 = vmatpush1.msra.mxu0 %v1591
      %1617 = vmatprep.subr.mxu0 0.0
      %1618 = vmatpush1.msra.mxu0 %v1592
      %1619 = vmatprep.subr.mxu0 0.0
      %1620 = vmatpush1.msra.mxu0 %v1593
      %1621 = vmatprep.subr.mxu0 0.0
      %1622 = vmatpush1.msra.mxu0 %v1594
      %1623 = vmatprep.subr.mxu0 0.0
      %1624 = vmatpush1.msra.mxu0 %v1595
      %1625 = vmatprep.subr.mxu0 0.0
      %1626 = vmatpush1.msra.mxu0 %v1596
      %1627 = vmatprep.subr.mxu0 0.0
      %1628 = vmatpush1.msra.mxu0 %v1597
      %1629 = vmatprep.subr.mxu0 0.0
      %1630 = vmatpush1.msra.mxu0 %v1598
      %1631 = vmatprep.subr.mxu0 0.0
      %1632 = vmatpush1.msra.mxu0 0.0
      %1633 = vmatprep.subr.mxu0 0.0
      %1634 = vmatpush1.msra.mxu0 0.0
      %1635 = vmatprep.subr.mxu0 0.0
      %1636 = vmatpush1.msra.mxu0 0.0
      %1637 = vmatprep.subr.mxu0 0.0
      %1638 = vmatpush1.msra.mxu0 0.0
      %1639 = vmatprep.subr.mxu0 0.0
      %1640 = vmatpush1.msra.mxu0 0.0
      %1641 = vmatprep.subr.mxu0 0.0
      %1642 = vmatpush1.msra.mxu0 0.0
      %1643 = vmatprep.subr.mxu0 0.0
      %1644 = vmatpush1.msra.mxu0 0.0
      %1645 = vmatprep.subr.mxu0 0.0
      %1646 = vmatpush1.msra.mxu0 0.0
      %1647 = vmatprep.subr.mxu0 0.0
      %1648 = vmatpush1.msra.mxu0 0.0
      %1649 = vmatprep.subr.mxu0 0.0
      %1650 = vmatpush1.msra.mxu0 0.0
      %1651 = vmatprep.subr.mxu0 0.0
      %1652 = vmatpush1.msra.mxu0 0.0
      %1653 = vmatprep.subr.mxu0 0.0
      %1654 = vmatpush1.msra.mxu0 0.0
      %1655 = vmatprep.subr.mxu0 0.0
      %1656 = vmatpush1.msra.mxu0 0.0
      %1657 = vmatprep.subr.mxu0 0.0
      %1658 = vmatpush1.msra.mxu0 0.0
      %1659 = vmatprep.subr.mxu0 0.0
      %1660 = vmatpush1.msra.mxu0 0.0
      %1661 = vmatprep.subr.mxu0 0.0
      %1662 = vmatpush1.msra.mxu0 0.0
      %1663 = vmatprep.mubr.f32.mxu0 0.0
      %1664 = vmatmul.mubr.f32.gmra.mrb[0].mxu0 %v1550
      %v1665 = vpop.f32.mrb[0].mxu0
      %v1666 = vadd.f32 0.0, %v1665
      %v1667 = vpop.f32.mrb[0].mxu0
      %1668 = vmatprep.mubr.f32.mxu0 0.0
      %1669 = vmatmul.mubr.f32.gmra.mrb[0].mxu0 %v1551
      %v1670 = vpop.f32.mrb[0].mxu0
      %v1671 = vadd.f32 0.0, %v1670
      %v1672 = vpop.f32.mrb[0].mxu0
      %1673 = vmatprep.mubr.f32.mxu0 0.0
      %1674 = vmatmul.mubr.f32.gmra.mrb[0].mxu0 %v1552
      %v1675 = vpop.f32.mrb[0].mxu0
      %v1676 = vadd.f32 0.0, %v1675
      %v1677 = vpop.f32.mrb[0].mxu0
      %1678 = vmatprep.mubr.f32.mxu0 0.0
      %1679 = vmatmul.mubr.f32.gmra.mrb[0].mxu0 %v1553
      %v1680 = vpop.f32.mrb[0].mxu0
      %v1681 = vadd.f32 0.0, %v1680
      %v1682 = vpop.f32.mrb[0].mxu0
      %1683 = vmatprep.mubr.f32.mxu0 0.0
      %1684 = vmatmul.mubr.f32.gmra.mrb[0].mxu0 %v1554
      %v1685 = vpop.f32.mrb[0].mxu0
      %v1686 = vadd.f32 0.0, %v1685
      %v1687 = vpop.f32.mrb[0].mxu0
      %1688 = vmatprep.mubr.f32.mxu0 0.0
      %1689 = vmatmul.mubr.f32.gmra.mrb[0].mxu0 %v1555
      %v1690 = vpop.f32.mrb[0].mxu0
      %v1691 = vadd.f32 0.0, %v1690
      %v1692 = vpop.f32.mrb[0].mxu0
      %1693 = vmatprep.mubr.f32.mxu0 0.0
      %1694 = vmatmul.mubr.f32.gmra.mrb[0].mxu0 %v1556
      %v1695 = vpop.f32.mrb[0].mxu0
      %v1696 = vadd.f32 0.0, %v1695
      %v1697 = vpop.f32.mrb[0].mxu0
      %1698 = vmatprep.mubr.f32.mxu0 0.0
      %1699 = vmatmul.mubr.f32.gmra.mrb[0].mxu0 %v1557
      %v1700 = vpop.f32.mrb[0].mxu0
      %v1701 = vadd.f32 0.0, %v1700
      %v1702 = vpop.f32.mrb[0].mxu0
      %1703 = vmatprep.mubr.f32.mxu0 0.0
      %1704 = vmatmul.mubr.f32.gmra.mrb[0].mxu0 %v1558
      %v1705 = vpop.f32.mrb[0].mxu0
      %v1706 = vadd.f32 0.0, %v1705
      %v1707 = vpop.f32.mrb[0].mxu0
      %1708 = vmatprep.mubr.f32.mxu0 0.0
      %1709 = vmatmul.mubr.f32.gmra.mrb[0].mxu0 %v1559
      %v1710 = vpop.f32.mrb[0].mxu0
      %v1711 = vadd.f32 0.0, %v1710
      %v1712 = vpop.f32.mrb[0].mxu0
      %1713 = vmatprep.mubr.f32.mxu0 0.0
      %1714 = vmatmul.mubr.f32.gmra.mrb[0].mxu0 %v1560
      %v1715 = vpop.f32.mrb[0].mxu0
      %v1716 = vadd.f32 0.0, %v1715
      %v1717 = vpop.f32.mrb[0].mxu0
      %1718 = vmatprep.mubr.f32.mxu0 0.0
      %1719 = vmatmul.mubr.f32.gmra.mrb[0].mxu0 %v1561
      %v1720 = vpop.f32.mrb[0].mxu0
      %v1721 = vadd.f32 0.0, %v1720
      %v1722 = vpop.f32.mrb[0].mxu0
      %1723 = vmatprep.mubr.f32.mxu0 0.0
      %1724 = vmatmul.mubr.f32.gmra.mrb[0].mxu0 %v1562
      %v1725 = vpop.f32.mrb[0].mxu0
      %v1726 = vadd.f32 0.0, %v1725
      %v1727 = vpop.f32.mrb[0].mxu0
      %1728 = vmatprep.mubr.f32.mxu0 0.0
      %1729 = vmatmul.mubr.f32.gmra.mrb[0].mxu0 %v1563
      %v1730 = vpop.f32.mrb[0].mxu0
      %v1731 = vadd.f32 0.0, %v1730
      %v1732 = vpop.f32.mrb[0].mxu0
      %1733 = vmatprep.mubr.f32.mxu0 0.0
      %1734 = vmatmul.mubr.f32.gmra.mrb[0].mxu0 %v1564
      %v1735 = vpop.f32.mrb[0].mxu0
      %v1736 = vadd.f32 0.0, %v1735
      %v1737 = vpop.f32.mrb[0].mxu0
      %1738 = vmatprep.mubr.f32.mxu0 0.0
      %1739 = vmatmul.mubr.f32.gmra.mrb[0].mxu0 %v1565
      %v1740 = vpop.f32.mrb[0].mxu0
      %v1741 = vadd.f32 0.0, %v1740
      %v1742 = vpop.f32.mrb[0].mxu0
      %1743 = vmatprep.mubr.f32.mxu0 0.0
      %1744 = vmatmul.mubr.f32.gmra.mrb[0].mxu0 %v1566
      %v1745 = vpop.f32.mrb[0].mxu0
      %v1746 = vadd.f32 0.0, %v1745
      %v1747 = vpop.f32.mrb[0].mxu0
      %1748 = vmatprep.mubr.f32.mxu0 0.0
      %1749 = vmatmul.mubr.f32.gmra.mrb[0].mxu0 %v1567
      %v1750 = vpop.f32.mrb[0].mxu0
      %v1751 = vadd.f32 0.0, %v1750
      %v1752 = vpop.f32.mrb[0].mxu0
      %1753 = vmatprep.mubr.f32.mxu0 0.0
      %1754 = vmatmul.mubr.f32.gmra.mrb[0].mxu0 %v1568
      %v1755 = vpop.f32.mrb[0].mxu0
      %v1756 = vadd.f32 0.0, %v1755
      %v1757 = vpop.f32.mrb[0].mxu0
      %1758 = vmatprep.mubr.f32.mxu0 0.0
      %1759 = vmatmul.mubr.f32.gmra.mrb[0].mxu0 %v1569
      %v1760 = vpop.f32.mrb[0].mxu0
      %v1761 = vadd.f32 0.0, %v1760
      %v1762 = vpop.f32.mrb[0].mxu0
      %1763 = vmatprep.mubr.f32.mxu0 0.0
      %1764 = vmatmul.mubr.f32.gmra.mrb[0].mxu0 %v1570
      %v1765 = vpop.f32.mrb[0].mxu0
      %v1766 = vadd.f32 0.0, %v1765
      %v1767 = vpop.f32.mrb[0].mxu0
      %1768 = vmatprep.mubr.f32.mxu0 0.0
      %1769 = vmatmul.mubr.f32.gmra.mrb[0].mxu0 %v1571
      %v1770 = vpop.f32.mrb[0].mxu0
      %v1771 = vadd.f32 0.0, %v1770
      %v1772 = vpop.f32.mrb[0].mxu0
      %1773 = vmatprep.mubr.f32.mxu0 0.0
      %1774 = vmatmul.mubr.f32.gmra.mrb[0].mxu0 %v1572
      %v1775 = vpop.f32.mrb[0].mxu0
      %v1776 = vadd.f32 0.0, %v1775
      %v1777 = vpop.f32.mrb[0].mxu0
      %1778 = vmatprep.mubr.f32.mxu0 0.0
      %1779 = vmatmul.mubr.f32.gmra.mrb[0].mxu0 %v1573
      %v1780 = vpop.f32.mrb[0].mxu0
      %v1781 = vadd.f32 0.0, %v1780
      %v1782 = vpop.f32.mrb[0].mxu0
      %1783 = vmatprep.mubr.f32.mxu0 0.0
      %1784 = vmatmul.mubr.f32.gmra.mrb[0].mxu0 %v1574
      %v1785 = vpop.f32.mrb[0].mxu0
      %v1786 = vadd.f32 0.0, %v1785
      %v1787 = vpop.f32.mrb[0].mxu0
      %1788 = vmatprep.mubr.f32.mxu0 0.0
      %1789 = vmatmul.mubr.f32.gmra.mrb[0].mxu0 %v1575
      %v1790 = vpop.f32.mrb[0].mxu0
      %v1791 = vadd.f32 0.0, %v1790
      %v1792 = vpop.f32.mrb[0].mxu0
      %1793 = vmatprep.mubr.f32.mxu0 0.0
      %1794 = vmatmul.mubr.f32.gmra.mrb[0].mxu0 %v1576
      %v1795 = vpop.f32.mrb[0].mxu0
      %v1796 = vadd.f32 0.0, %v1795
      %v1797 = vpop.f32.mrb[0].mxu0
      %1798 = vmatprep.mubr.f32.mxu0 0.0
      %1799 = vmatmul.mubr.f32.gmra.mrb[0].mxu0 %v1577
      %v1800 = vpop.f32.mrb[0].mxu0
      %v1801 = vadd.f32 0.0, %v1800
      %v1802 = vpop.f32.mrb[0].mxu0
      %1803 = vmatprep.mubr.f32.mxu0 0.0
      %1804 = vmatmul.mubr.f32.gmra.mrb[0].mxu0 %v1578
      %v1805 = vpop.f32.mrb[0].mxu0
      %v1806 = vadd.f32 0.0, %v1805
      %v1807 = vpop.f32.mrb[0].mxu0
      %1808 = vmatprep.mubr.f32.mxu0 0.0
      %1809 = vmatmul.mubr.f32.gmra.mrb[0].mxu0 %v1579
      %v1810 = vpop.f32.mrb[0].mxu0
      %v1811 = vadd.f32 0.0, %v1810
      %v1812 = vpop.f32.mrb[0].mxu0
      %1813 = vmatprep.mubr.f32.mxu0 0.0
      %1814 = vmatmul.mubr.f32.gmra.mrb[0].mxu0 %v1580
      %v1815 = vpop.f32.mrb[0].mxu0
      %v1816 = vadd.f32 0.0, %v1815
      %v1817 = vpop.f32.mrb[0].mxu0
      %1818 = vmatprep.mubr.f32.mxu0 0.0
      %1819 = vmatmul.mubr.f32.gmra.mrb[0].mxu0 %v1581
      %v1820 = vpop.f32.mrb[0].mxu0
      %v1821 = vadd.f32 0.0, %v1820
      %v1822 = vpop.f32.mrb[0].mxu0
      %1823 = vdwg.mxu0
      %v1824 = vadd.f32 %v1105, %v1666
      %v1825 = vadd.f32 %v1110, %v1671
      %v1826 = vadd.f32 %v1115, %v1676
      %v1827 = vadd.f32 %v1120, %v1681
      %v1828 = vadd.f32 %v1125, %v1686
      %v1829 = vadd.f32 %v1130, %v1691
      %v1830 = vadd.f32 %v1135, %v1696
      %v1831 = vadd.f32 %v1140, %v1701
      %v1832 = vadd.f32 %v1145, %v1706
      %v1833 = vadd.f32 %v1150, %v1711
      %v1834 = vadd.f32 %v1155, %v1716
      %v1835 = vadd.f32 %v1160, %v1721
      %v1836 = vadd.f32 %v1165, %v1726
      %v1837 = vadd.f32 %v1170, %v1731
      %v1838 = vadd.f32 %v1175, %v1736
      %v1839 = vadd.f32 %v1180, %v1741
      %v1840 = vadd.f32 %v1185, %v1746
      %v1841 = vadd.f32 %v1190, %v1751
      %v1842 = vadd.f32 %v1195, %v1756
      %v1843 = vadd.f32 %v1200, %v1761
      %v1844 = vadd.f32 %v1205, %v1766
      %v1845 = vadd.f32 %v1210, %v1771
      %v1846 = vadd.f32 %v1215, %v1776
      %v1847 = vadd.f32 %v1220, %v1781
      %v1848 = vadd.f32 %v1225, %v1786
      %v1849 = vadd.f32 %v1230, %v1791
      %v1850 = vadd.f32 %v1235, %v1796
      %v1851 = vadd.f32 %v1240, %v1801
      %v1852 = vadd.f32 %v1245, %v1806
      %v1853 = vadd.f32 %v1250, %v1811
      %v1854 = vadd.f32 %v1255, %v1816
      %v1855 = vadd.f32 %v1260, %v1821
      %v1857 = vrot.slane %v433, 7
      %v1858 = vsel %vm465, %v523, %v1857
      %v1859 = vrot.slane %v434, 7
      %v1860 = vsel %vm465, %v1857, %v1859
      %v1863 = vmul.f32 %v555, %v591
      %v1864 = vmul.f32 %v468, %v596
      %v1865 = vmul.f32 %v470, %v601
      %v1866 = vmul.f32 %v472, %v606
      %v1867 = vmul.f32 %v474, %v611
      %v1868 = vmul.f32 %v476, %v616
      %v1869 = vmul.f32 %v478, %v621
      %v1870 = vmul.f32 %v480, %v626
      %v1871 = vmul.f32 %v482, %v631
      %v1872 = vmul.f32 %v484, %v636
      %v1873 = vmul.f32 %v486, %v641
      %v1874 = vmul.f32 %v488, %v646
      %v1875 = vmul.f32 %v490, %v651
      %v1876 = vmul.f32 %v492, %v656
      %v1877 = vmul.f32 %v494, %v661
      %v1878 = vmul.f32 %v496, %v666
      %v1879 = vmul.f32 %v498, %v671
      %v1880 = vmul.f32 %v500, %v676
      %v1881 = vmul.f32 %v502, %v681
      %v1882 = vmul.f32 %v504, %v686
      %v1883 = vmul.f32 %v506, %v691
      %v1884 = vmul.f32 %v508, %v696
      %v1885 = vmul.f32 %v510, %v701
      %v1886 = vmul.f32 %v512, %v706
      %v1887 = vmul.f32 %v514, %v711
      %v1888 = vmul.f32 %v516, %v716
      %v1889 = vmul.f32 %v518, %v721
      %v1890 = vmul.f32 %v520, %v726
      %v1891 = vmul.f32 %v522, %v731
      %v1892 = vmul.f32 %v524, %v736
      %v1893 = vmul.f32 %v1858, %v741
      %v1894 = vmul.f32 %v1860, %v746
      %s1895 = scalar_lea.vmem %s3, 384
      %v1896 = vld [vmem:[%s1895] sm:$0xff]
      %v1897 = vld [vmem:[%s1895 + $0x8] sm:$0xff]
      %v1898 = vld [vmem:[%s1895 + $0x10] sm:$0xff]
      %v1899 = vld [vmem:[%s1895 + $0x18] sm:$0xff]
      %v1900 = vld [vmem:[%s1895 + $0x20] sm:$0xff]
      %v1901 = vld [vmem:[%s1895 + $0x28] sm:$0xff]
      %v1902 = vld [vmem:[%s1895 + $0x30] sm:$0xff]
      %v1903 = vld [vmem:[%s1895 + $0x38] sm:$0xff]
      %v1904 = vld [vmem:[%s1895 + $0x40] sm:$0xff]
      %v1905 = vld [vmem:[%s1895 + $0x48] sm:$0xff]
      %v1906 = vld [vmem:[%s1895 + $0x50] sm:$0xff]
      %v1907 = vld [vmem:[%s1895 + $0x58] sm:$0xff]
      %v1908 = vld [vmem:[%s1895 + $0x60] sm:$0xff]
      %v1909 = vld [vmem:[%s1895 + $0x68] sm:$0xff]
      %v1910 = vld [vmem:[%s1895 + $0x70] sm:$0xff]
      %v1911 = vld [vmem:[%s1895 + $0x78] sm:$0xff]
      %1912 = vmatprep.subr.mxu0 0.0
      %1913 = vmatpush1.msra.mxu0 %v1896
      %1914 = vmatprep.subr.mxu0 0.0
      %1915 = vmatpush1.msra.mxu0 %v1897
      %1916 = vmatprep.subr.mxu0 0.0
      %1917 = vmatpush1.msra.mxu0 %v1898
      %1918 = vmatprep.subr.mxu0 0.0
      %1919 = vmatpush1.msra.mxu0 %v1899
      %1920 = vmatprep.subr.mxu0 0.0
      %1921 = vmatpush1.msra.mxu0 %v1900
      %1922 = vmatprep.subr.mxu0 0.0
      %1923 = vmatpush1.msra.mxu0 %v1901
      %1924 = vmatprep.subr.mxu0 0.0
      %1925 = vmatpush1.msra.mxu0 %v1902
      %1926 = vmatprep.subr.mxu0 0.0
      %1927 = vmatpush1.msra.mxu0 %v1903
      %1928 = vmatprep.subr.mxu0 0.0
      %1929 = vmatpush1.msra.mxu0 %v1904
      %1930 = vmatprep.subr.mxu0 0.0
      %1931 = vmatpush1.msra.mxu0 %v1905
      %1932 = vmatprep.subr.mxu0 0.0
      %1933 = vmatpush1.msra.mxu0 %v1906
      %1934 = vmatprep.subr.mxu0 0.0
      %1935 = vmatpush1.msra.mxu0 %v1907
      %1936 = vmatprep.subr.mxu0 0.0
      %1937 = vmatpush1.msra.mxu0 %v1908
      %1938 = vmatprep.subr.mxu0 0.0
      %1939 = vmatpush1.msra.mxu0 %v1909
      %1940 = vmatprep.subr.mxu0 0.0
      %1941 = vmatpush1.msra.mxu0 %v1910
      %1942 = vmatprep.subr.mxu0 0.0
      %1943 = vmatpush1.msra.mxu0 %v1911
      %1944 = vmatprep.subr.mxu0 0.0
      %1945 = vmatpush1.msra.mxu0 0.0
      %1946 = vmatprep.subr.mxu0 0.0
      %1947 = vmatpush1.msra.mxu0 0.0
      %1948 = vmatprep.subr.mxu0 0.0
      %1949 = vmatpush1.msra.mxu0 0.0
      %1950 = vmatprep.subr.mxu0 0.0
      %1951 = vmatpush1.msra.mxu0 0.0
      %1952 = vmatprep.subr.mxu0 0.0
      %1953 = vmatpush1.msra.mxu0 0.0
      %1954 = vmatprep.subr.mxu0 0.0
      %1955 = vmatpush1.msra.mxu0 0.0
      %1956 = vmatprep.subr.mxu0 0.0
      %1957 = vmatpush1.msra.mxu0 0.0
      %1958 = vmatprep.subr.mxu0 0.0
      %1959 = vmatpush1.msra.mxu0 0.0
      %1960 = vmatprep.subr.mxu0 0.0
      %1961 = vmatpush1.msra.mxu0 0.0
      %1962 = vmatprep.subr.mxu0 0.0
      %1963 = vmatpush1.msra.mxu0 0.0
      %1964 = vmatprep.subr.mxu0 0.0
      %1965 = vmatpush1.msra.mxu0 0.0
      %1966 = vmatprep.subr.mxu0 0.0
      %1967 = vmatpush1.msra.mxu0 0.0
      %1968 = vmatprep.subr.mxu0 0.0
      %1969 = vmatpush1.msra.mxu0 0.0
      %1970 = vmatprep.subr.mxu0 0.0
      %1971 = vmatpush1.msra.mxu0 0.0
      %1972 = vmatprep.subr.mxu0 0.0
      %1973 = vmatpush1.msra.mxu0 0.0
      %1974 = vmatprep.subr.mxu0 0.0
      %1975 = vmatpush1.msra.mxu0 0.0
      %1976 = vmatprep.mubr.f32.mxu0 0.0
      %1977 = vmatmul.mubr.f32.gmra.mrb[0].mxu0 %v1863
      %v1978 = vpop.f32.mrb[0].mxu0
      %v1979 = vadd.f32 0.0, %v1978
      %v1980 = vpop.f32.mrb[0].mxu0
      %1981 = vmatprep.mubr.f32.mxu0 0.0
      %1982 = vmatmul.mubr.f32.gmra.mrb[0].mxu0 %v1864
      %v1983 = vpop.f32.mrb[0].mxu0
      %v1984 = vadd.f32 0.0, %v1983
      %v1985 = vpop.f32.mrb[0].mxu0
      %1986 = vmatprep.mubr.f32.mxu0 0.0
      %1987 = vmatmul.mubr.f32.gmra.mrb[0].mxu0 %v1865
      %v1988 = vpop.f32.mrb[0].mxu0
      %v1989 = vadd.f32 0.0, %v1988
      %v1990 = vpop.f32.mrb[0].mxu0
      %1991 = vmatprep.mubr.f32.mxu0 0.0
      %1992 = vmatmul.mubr.f32.gmra.mrb[0].mxu0 %v1866
      %v1993 = vpop.f32.mrb[0].mxu0
      %v1994 = vadd.f32 0.0, %v1993
      %v1995 = vpop.f32.mrb[0].mxu0
      %1996 = vmatprep.mubr.f32.mxu0 0.0
      %1997 = vmatmul.mubr.f32.gmra.mrb[0].mxu0 %v1867
      %v1998 = vpop.f32.mrb[0].mxu0
      %v1999 = vadd.f32 0.0, %v1998
      %v2000 = vpop.f32.mrb[0].mxu0
      %2001 = vmatprep.mubr.f32.mxu0 0.0
      %2002 = vmatmul.mubr.f32.gmra.mrb[0].mxu0 %v1868
      %v2003 = vpop.f32.mrb[0].mxu0
      %v2004 = vadd.f32 0.0, %v2003
      %v2005 = vpop.f32.mrb[0].mxu0
      %2006 = vmatprep.mubr.f32.mxu0 0.0
      %2007 = vmatmul.mubr.f32.gmra.mrb[0].mxu0 %v1869
      %v2008 = vpop.f32.mrb[0].mxu0
      %v2009 = vadd.f32 0.0, %v2008
      %v2010 = vpop.f32.mrb[0].mxu0
      %2011 = vmatprep.mubr.f32.mxu0 0.0
      %2012 = vmatmul.mubr.f32.gmra.mrb[0].mxu0 %v1870
      %v2013 = vpop.f32.mrb[0].mxu0
      %v2014 = vadd.f32 0.0, %v2013
      %v2015 = vpop.f32.mrb[0].mxu0
      %2016 = vmatprep.mubr.f32.mxu0 0.0
      %2017 = vmatmul.mubr.f32.gmra.mrb[0].mxu0 %v1871
      %v2018 = vpop.f32.mrb[0].mxu0
      %v2019 = vadd.f32 0.0, %v2018
      %v2020 = vpop.f32.mrb[0].mxu0
      %2021 = vmatprep.mubr.f32.mxu0 0.0
      %2022 = vmatmul.mubr.f32.gmra.mrb[0].mxu0 %v1872
      %v2023 = vpop.f32.mrb[0].mxu0
      %v2024 = vadd.f32 0.0, %v2023
      %v2025 = vpop.f32.mrb[0].mxu0
      %2026 = vmatprep.mubr.f32.mxu0 0.0
      %2027 = vmatmul.mubr.f32.gmra.mrb[0].mxu0 %v1873
      %v2028 = vpop.f32.mrb[0].mxu0
      %v2029 = vadd.f32 0.0, %v2028
      %v2030 = vpop.f32.mrb[0].mxu0
      %2031 = vmatprep.mubr.f32.mxu0 0.0
      %2032 = vmatmul.mubr.f32.gmra.mrb[0].mxu0 %v1874
      %v2033 = vpop.f32.mrb[0].mxu0
      %v2034 = vadd.f32 0.0, %v2033
      %v2035 = vpop.f32.mrb[0].mxu0
      %2036 = vmatprep.mubr.f32.mxu0 0.0
      %2037 = vmatmul.mubr.f32.gmra.mrb[0].mxu0 %v1875
      %v2038 = vpop.f32.mrb[0].mxu0
      %v2039 = vadd.f32 0.0, %v2038
      %v2040 = vpop.f32.mrb[0].mxu0
      %2041 = vmatprep.mubr.f32.mxu0 0.0
      %2042 = vmatmul.mubr.f32.gmra.mrb[0].mxu0 %v1876
      %v2043 = vpop.f32.mrb[0].mxu0
      %v2044 = vadd.f32 0.0, %v2043
      %v2045 = vpop.f32.mrb[0].mxu0
      %2046 = vmatprep.mubr.f32.mxu0 0.0
      %2047 = vmatmul.mubr.f32.gmra.mrb[0].mxu0 %v1877
      %v2048 = vpop.f32.mrb[0].mxu0
      %v2049 = vadd.f32 0.0, %v2048
      %v2050 = vpop.f32.mrb[0].mxu0
      %2051 = vmatprep.mubr.f32.mxu0 0.0
      %2052 = vmatmul.mubr.f32.gmra.mrb[0].mxu0 %v1878
      %v2053 = vpop.f32.mrb[0].mxu0
      %v2054 = vadd.f32 0.0, %v2053
      %v2055 = vpop.f32.mrb[0].mxu0
      %2056 = vmatprep.mubr.f32.mxu0 0.0
      %2057 = vmatmul.mubr.f32.gmra.mrb[0].mxu0 %v1879
      %v2058 = vpop.f32.mrb[0].mxu0
      %v2059 = vadd.f32 0.0, %v2058
      %v2060 = vpop.f32.mrb[0].mxu0
      %2061 = vmatprep.mubr.f32.mxu0 0.0
      %2062 = vmatmul.mubr.f32.gmra.mrb[0].mxu0 %v1880
      %v2063 = vpop.f32.mrb[0].mxu0
      %v2064 = vadd.f32 0.0, %v2063
      %v2065 = vpop.f32.mrb[0].mxu0
      %2066 = vmatprep.mubr.f32.mxu0 0.0
      %2067 = vmatmul.mubr.f32.gmra.mrb[0].mxu0 %v1881
      %v2068 = vpop.f32.mrb[0].mxu0
      %v2069 = vadd.f32 0.0, %v2068
      %v2070 = vpop.f32.mrb[0].mxu0
      %2071 = vmatprep.mubr.f32.mxu0 0.0
      %2072 = vmatmul.mubr.f32.gmra.mrb[0].mxu0 %v1882
      %v2073 = vpop.f32.mrb[0].mxu0
      %v2074 = vadd.f32 0.0, %v2073
      %v2075 = vpop.f32.mrb[0].mxu0
      %2076 = vmatprep.mubr.f32.mxu0 0.0
      %2077 = vmatmul.mubr.f32.gmra.mrb[0].mxu0 %v1883
      %v2078 = vpop.f32.mrb[0].mxu0
      %v2079 = vadd.f32 0.0, %v2078
      %v2080 = vpop.f32.mrb[0].mxu0
      %2081 = vmatprep.mubr.f32.mxu0 0.0
      %2082 = vmatmul.mubr.f32.gmra.mrb[0].mxu0 %v1884
      %v2083 = vpop.f32.mrb[0].mxu0
      %v2084 = vadd.f32 0.0, %v2083
      %v2085 = vpop.f32.mrb[0].mxu0
      %2086 = vmatprep.mubr.f32.mxu0 0.0
      %2087 = vmatmul.mubr.f32.gmra.mrb[0].mxu0 %v1885
      %v2088 = vpop.f32.mrb[0].mxu0
      %v2089 = vadd.f32 0.0, %v2088
      %v2090 = vpop.f32.mrb[0].mxu0
      %2091 = vmatprep.mubr.f32.mxu0 0.0
      %2092 = vmatmul.mubr.f32.gmra.mrb[0].mxu0 %v1886
      %v2093 = vpop.f32.mrb[0].mxu0
      %v2094 = vadd.f32 0.0, %v2093
      %v2095 = vpop.f32.mrb[0].mxu0
      %2096 = vmatprep.mubr.f32.mxu0 0.0
      %2097 = vmatmul.mubr.f32.gmra.mrb[0].mxu0 %v1887
      %v2098 = vpop.f32.mrb[0].mxu0
      %v2099 = vadd.f32 0.0, %v2098
      %v2100 = vpop.f32.mrb[0].mxu0
      %2101 = vmatprep.mubr.f32.mxu0 0.0
      %2102 = vmatmul.mubr.f32.gmra.mrb[0].mxu0 %v1888
      %v2103 = vpop.f32.mrb[0].mxu0
      %v2104 = vadd.f32 0.0, %v2103
      %v2105 = vpop.f32.mrb[0].mxu0
      %2106 = vmatprep.mubr.f32.mxu0 0.0
      %2107 = vmatmul.mubr.f32.gmra.mrb[0].mxu0 %v1889
      %v2108 = vpop.f32.mrb[0].mxu0
      %v2109 = vadd.f32 0.0, %v2108
      %v2110 = vpop.f32.mrb[0].mxu0
      %2111 = vmatprep.mubr.f32.mxu0 0.0
      %2112 = vmatmul.mubr.f32.gmra.mrb[0].mxu0 %v1890
      %v2113 = vpop.f32.mrb[0].mxu0
      %v2114 = vadd.f32 0.0, %v2113
      %v2115 = vpop.f32.mrb[0].mxu0
      %2116 = vmatprep.mubr.f32.mxu0 0.0
      %2117 = vmatmul.mubr.f32.gmra.mrb[0].mxu0 %v1891
      %v2118 = vpop.f32.mrb[0].mxu0
      %v2119 = vadd.f32 0.0, %v2118
      %v2120 = vpop.f32.mrb[0].mxu0
      %2121 = vmatprep.mubr.f32.mxu0 0.0
      %2122 = vmatmul.mubr.f32.gmra.mrb[0].mxu0 %v1892
      %v2123 = vpop.f32.mrb[0].mxu0
      %v2124 = vadd.f32 0.0, %v2123
      %v2125 = vpop.f32.mrb[0].mxu0
      %2126 = vmatprep.mubr.f32.mxu0 0.0
      %2127 = vmatmul.mubr.f32.gmra.mrb[0].mxu0 %v1893
      %v2128 = vpop.f32.mrb[0].mxu0
      %v2129 = vadd.f32 0.0, %v2128
      %v2130 = vpop.f32.mrb[0].mxu0
      %2131 = vmatprep.mubr.f32.mxu0 0.0
      %2132 = vmatmul.mubr.f32.gmra.mrb[0].mxu0 %v1894
      %v2133 = vpop.f32.mrb[0].mxu0
      %v2134 = vadd.f32 0.0, %v2133
      %v2135 = vpop.f32.mrb[0].mxu0
      %2136 = vdwg.mxu0
      %v2137 = vadd.f32 %v1824, %v1979
      %v2138 = vadd.f32 %v1825, %v1984
      %v2139 = vadd.f32 %v1826, %v1989
      %v2140 = vadd.f32 %v1827, %v1994
      %v2141 = vadd.f32 %v1828, %v1999
      %v2142 = vadd.f32 %v1829, %v2004
      %v2143 = vadd.f32 %v1830, %v2009
      %v2144 = vadd.f32 %v1831, %v2014
      %v2145 = vadd.f32 %v1832, %v2019
      %v2146 = vadd.f32 %v1833, %v2024
      %v2147 = vadd.f32 %v1834, %v2029
      %v2148 = vadd.f32 %v1835, %v2034
      %v2149 = vadd.f32 %v1836, %v2039
      %v2150 = vadd.f32 %v1837, %v2044
      %v2151 = vadd.f32 %v1838, %v2049
      %v2152 = vadd.f32 %v1839, %v2054
      %v2153 = vadd.f32 %v1840, %v2059
      %v2154 = vadd.f32 %v1841, %v2064
      %v2155 = vadd.f32 %v1842, %v2069
      %v2156 = vadd.f32 %v1843, %v2074
      %v2157 = vadd.f32 %v1844, %v2079
      %v2158 = vadd.f32 %v1845, %v2084
      %v2159 = vadd.f32 %v1846, %v2089
      %v2160 = vadd.f32 %v1847, %v2094
      %v2161 = vadd.f32 %v1848, %v2099
      %v2162 = vadd.f32 %v1849, %v2104
      %v2163 = vadd.f32 %v1850, %v2109
      %v2164 = vadd.f32 %v1851, %v2114
      %v2165 = vadd.f32 %v1852, %v2119
      %v2166 = vadd.f32 %v1853, %v2124
      %v2167 = vadd.f32 %v1854, %v2129
      %v2168 = vadd.f32 %v1855, %v2134
      %s2169 = scalar_lea.vmem %s3, 512
      %v2170 = vld [vmem:[%s2169] sm:$0xff]
      %v2171 = vld [vmem:[%s2169 + $0x8] sm:$0xff]
      %v2172 = vld [vmem:[%s2169 + $0x10] sm:$0xff]
      %v2173 = vld [vmem:[%s2169 + $0x18] sm:$0xff]
      %v2174 = vld [vmem:[%s2169 + $0x20] sm:$0xff]
      %v2175 = vld [vmem:[%s2169 + $0x28] sm:$0xff]
      %v2176 = vld [vmem:[%s2169 + $0x30] sm:$0xff]
      %v2177 = vld [vmem:[%s2169 + $0x38] sm:$0xff]
      %v2178 = vld [vmem:[%s2169 + $0x40] sm:$0xff]
      %v2179 = vld [vmem:[%s2169 + $0x48] sm:$0xff]
      %v2180 = vld [vmem:[%s2169 + $0x50] sm:$0xff]
      %v2181 = vld [vmem:[%s2169 + $0x58] sm:$0xff]
      %v2182 = vld [vmem:[%s2169 + $0x60] sm:$0xff]
      %v2183 = vld [vmem:[%s2169 + $0x68] sm:$0xff]
      %v2184 = vld [vmem:[%s2169 + $0x70] sm:$0xff]
      %v2185 = vld [vmem:[%s2169 + $0x78] sm:$0xff]
      %2186 = vmatprep.subr.mxu0 0.0
      %2187 = vmatpush1.msra.mxu0 %v2170
      %2188 = vmatprep.subr.mxu0 0.0
      %2189 = vmatpush1.msra.mxu0 %v2171
      %2190 = vmatprep.subr.mxu0 0.0
      %2191 = vmatpush1.msra.mxu0 %v2172
      %2192 = vmatprep.subr.mxu0 0.0
      %2193 = vmatpush1.msra.mxu0 %v2173
      %2194 = vmatprep.subr.mxu0 0.0
      %2195 = vmatpush1.msra.mxu0 %v2174
      %2196 = vmatprep.subr.mxu0 0.0
      %2197 = vmatpush1.msra.mxu0 %v2175
      %2198 = vmatprep.subr.mxu0 0.0
      %2199 = vmatpush1.msra.mxu0 %v2176
      %2200 = vmatprep.subr.mxu0 0.0
      %2201 = vmatpush1.msra.mxu0 %v2177
      %2202 = vmatprep.subr.mxu0 0.0
      %2203 = vmatpush1.msra.mxu0 %v2178
      %2204 = vmatprep.subr.mxu0 0.0
      %2205 = vmatpush1.msra.mxu0 %v2179
      %2206 = vmatprep.subr.mxu0 0.0
      %2207 = vmatpush1.msra.mxu0 %v2180
      %2208 = vmatprep.subr.mxu0 0.0
      %2209 = vmatpush1.msra.mxu0 %v2181
      %2210 = vmatprep.subr.mxu0 0.0
      %2211 = vmatpush1.msra.mxu0 %v2182
      %2212 = vmatprep.subr.mxu0 0.0
      %2213 = vmatpush1.msra.mxu0 %v2183
      %2214 = vmatprep.subr.mxu0 0.0
      %2215 = vmatpush1.msra.mxu0 %v2184
      %2216 = vmatprep.subr.mxu0 0.0
      %2217 = vmatpush1.msra.mxu0 %v2185
      %2218 = vmatprep.subr.mxu0 0.0
      %2219 = vmatpush1.msra.mxu0 0.0
      %2220 = vmatprep.subr.mxu0 0.0
      %2221 = vmatpush1.msra.mxu0 0.0
      %2222 = vmatprep.subr.mxu0 0.0
      %2223 = vmatpush1.msra.mxu0 0.0
      %2224 = vmatprep.subr.mxu0 0.0
      %2225 = vmatpush1.msra.mxu0 0.0
      %2226 = vmatprep.subr.mxu0 0.0
      %2227 = vmatpush1.msra.mxu0 0.0
      %2228 = vmatprep.subr.mxu0 0.0
      %2229 = vmatpush1.msra.mxu0 0.0
      %2230 = vmatprep.subr.mxu0 0.0
      %2231 = vmatpush1.msra.mxu0 0.0
      %2232 = vmatprep.subr.mxu0 0.0
      %2233 = vmatpush1.msra.mxu0 0.0
      %2234 = vmatprep.subr.mxu0 0.0
      %2235 = vmatpush1.msra.mxu0 0.0
      %2236 = vmatprep.subr.mxu0 0.0
      %2237 = vmatpush1.msra.mxu0 0.0
      %2238 = vmatprep.subr.mxu0 0.0
      %2239 = vmatpush1.msra.mxu0 0.0
      %2240 = vmatprep.subr.mxu0 0.0
      %2241 = vmatpush1.msra.mxu0 0.0
      %2242 = vmatprep.subr.mxu0 0.0
      %2243 = vmatpush1.msra.mxu0 0.0
      %2244 = vmatprep.subr.mxu0 0.0
      %2245 = vmatpush1.msra.mxu0 0.0
      %2246 = vmatprep.subr.mxu0 0.0
      %2247 = vmatpush1.msra.mxu0 0.0
      %2248 = vmatprep.subr.mxu0 0.0
      %2249 = vmatpush1.msra.mxu0 0.0
      %2250 = vmatprep.mubr.f32.mxu0 0.0
      %2251 = vmatmul.mubr.f32.gmra.mrb[0].mxu0 %v403
      %v2252 = vpop.f32.mrb[0].mxu0
      %v2253 = vadd.f32 0.0, %v2252
      %v2254 = vpop.f32.mrb[0].mxu0
      %2255 = vmatprep.mubr.f32.mxu0 0.0
      %2256 = vmatmul.mubr.f32.gmra.mrb[0].mxu0 %v404
      %v2257 = vpop.f32.mrb[0].mxu0
      %v2258 = vadd.f32 0.0, %v2257
      %v2259 = vpop.f32.mrb[0].mxu0
      %2260 = vmatprep.mubr.f32.mxu0 0.0
      %2261 = vmatmul.mubr.f32.gmra.mrb[0].mxu0 %v405
      %v2262 = vpop.f32.mrb[0].mxu0
      %v2263 = vadd.f32 0.0, %v2262
      %v2264 = vpop.f32.mrb[0].mxu0
      %2265 = vmatprep.mubr.f32.mxu0 0.0
      %2266 = vmatmul.mubr.f32.gmra.mrb[0].mxu0 %v406
      %v2267 = vpop.f32.mrb[0].mxu0
      %v2268 = vadd.f32 0.0, %v2267
      %v2269 = vpop.f32.mrb[0].mxu0
      %2270 = vmatprep.mubr.f32.mxu0 0.0
      %2271 = vmatmul.mubr.f32.gmra.mrb[0].mxu0 %v407
      %v2272 = vpop.f32.mrb[0].mxu0
      %v2273 = vadd.f32 0.0, %v2272
      %v2274 = vpop.f32.mrb[0].mxu0
      %2275 = vmatprep.mubr.f32.mxu0 0.0
      %2276 = vmatmul.mubr.f32.gmra.mrb[0].mxu0 %v408
      %v2277 = vpop.f32.mrb[0].mxu0
      %v2278 = vadd.f32 0.0, %v2277
      %v2279 = vpop.f32.mrb[0].mxu0
      %2280 = vmatprep.mubr.f32.mxu0 0.0
      %2281 = vmatmul.mubr.f32.gmra.mrb[0].mxu0 %v409
      %v2282 = vpop.f32.mrb[0].mxu0
      %v2283 = vadd.f32 0.0, %v2282
      %v2284 = vpop.f32.mrb[0].mxu0
      %2285 = vmatprep.mubr.f32.mxu0 0.0
      %2286 = vmatmul.mubr.f32.gmra.mrb[0].mxu0 %v410
      %v2287 = vpop.f32.mrb[0].mxu0
      %v2288 = vadd.f32 0.0, %v2287
      %v2289 = vpop.f32.mrb[0].mxu0
      %2290 = vmatprep.mubr.f32.mxu0 0.0
      %2291 = vmatmul.mubr.f32.gmra.mrb[0].mxu0 %v411
      %v2292 = vpop.f32.mrb[0].mxu0
      %v2293 = vadd.f32 0.0, %v2292
      %v2294 = vpop.f32.mrb[0].mxu0
      %2295 = vmatprep.mubr.f32.mxu0 0.0
      %2296 = vmatmul.mubr.f32.gmra.mrb[0].mxu0 %v412
      %v2297 = vpop.f32.mrb[0].mxu0
      %v2298 = vadd.f32 0.0, %v2297
      %v2299 = vpop.f32.mrb[0].mxu0
      %2300 = vmatprep.mubr.f32.mxu0 0.0
      %2301 = vmatmul.mubr.f32.gmra.mrb[0].mxu0 %v413
      %v2302 = vpop.f32.mrb[0].mxu0
      %v2303 = vadd.f32 0.0, %v2302
      %v2304 = vpop.f32.mrb[0].mxu0
      %2305 = vmatprep.mubr.f32.mxu0 0.0
      %2306 = vmatmul.mubr.f32.gmra.mrb[0].mxu0 %v414
      %v2307 = vpop.f32.mrb[0].mxu0
      %v2308 = vadd.f32 0.0, %v2307
      %v2309 = vpop.f32.mrb[0].mxu0
      %2310 = vmatprep.mubr.f32.mxu0 0.0
      %2311 = vmatmul.mubr.f32.gmra.mrb[0].mxu0 %v415
      %v2312 = vpop.f32.mrb[0].mxu0
      %v2313 = vadd.f32 0.0, %v2312
      %v2314 = vpop.f32.mrb[0].mxu0
      %2315 = vmatprep.mubr.f32.mxu0 0.0
      %2316 = vmatmul.mubr.f32.gmra.mrb[0].mxu0 %v416
      %v2317 = vpop.f32.mrb[0].mxu0
      %v2318 = vadd.f32 0.0, %v2317
      %v2319 = vpop.f32.mrb[0].mxu0
      %2320 = vmatprep.mubr.f32.mxu0 0.0
      %2321 = vmatmul.mubr.f32.gmra.mrb[0].mxu0 %v417
      %v2322 = vpop.f32.mrb[0].mxu0
      %v2323 = vadd.f32 0.0, %v2322
      %v2324 = vpop.f32.mrb[0].mxu0
      %2325 = vmatprep.mubr.f32.mxu0 0.0
      %2326 = vmatmul.mubr.f32.gmra.mrb[0].mxu0 %v418
      %v2327 = vpop.f32.mrb[0].mxu0
      %v2328 = vadd.f32 0.0, %v2327
      %v2329 = vpop.f32.mrb[0].mxu0
      %2330 = vmatprep.mubr.f32.mxu0 0.0
      %2331 = vmatmul.mubr.f32.gmra.mrb[0].mxu0 %v419
      %v2332 = vpop.f32.mrb[0].mxu0
      %v2333 = vadd.f32 0.0, %v2332
      %v2334 = vpop.f32.mrb[0].mxu0
      %2335 = vmatprep.mubr.f32.mxu0 0.0
      %2336 = vmatmul.mubr.f32.gmra.mrb[0].mxu0 %v420
      %v2337 = vpop.f32.mrb[0].mxu0
      %v2338 = vadd.f32 0.0, %v2337
      %v2339 = vpop.f32.mrb[0].mxu0
      %2340 = vmatprep.mubr.f32.mxu0 0.0
      %2341 = vmatmul.mubr.f32.gmra.mrb[0].mxu0 %v421
      %v2342 = vpop.f32.mrb[0].mxu0
      %v2343 = vadd.f32 0.0, %v2342
      %v2344 = vpop.f32.mrb[0].mxu0
      %2345 = vmatprep.mubr.f32.mxu0 0.0
      %2346 = vmatmul.mubr.f32.gmra.mrb[0].mxu0 %v422
      %v2347 = vpop.f32.mrb[0].mxu0
      %v2348 = vadd.f32 0.0, %v2347
      %v2349 = vpop.f32.mrb[0].mxu0
      %2350 = vmatprep.mubr.f32.mxu0 0.0
      %2351 = vmatmul.mubr.f32.gmra.mrb[0].mxu0 %v423
      %v2352 = vpop.f32.mrb[0].mxu0
      %v2353 = vadd.f32 0.0, %v2352
      %v2354 = vpop.f32.mrb[0].mxu0
      %2355 = vmatprep.mubr.f32.mxu0 0.0
      %2356 = vmatmul.mubr.f32.gmra.mrb[0].mxu0 %v424
      %v2357 = vpop.f32.mrb[0].mxu0
      %v2358 = vadd.f32 0.0, %v2357
      %v2359 = vpop.f32.mrb[0].mxu0
      %2360 = vmatprep.mubr.f32.mxu0 0.0
      %2361 = vmatmul.mubr.f32.gmra.mrb[0].mxu0 %v425
      %v2362 = vpop.f32.mrb[0].mxu0
      %v2363 = vadd.f32 0.0, %v2362
      %v2364 = vpop.f32.mrb[0].mxu0
      %2365 = vmatprep.mubr.f32.mxu0 0.0
      %2366 = vmatmul.mubr.f32.gmra.mrb[0].mxu0 %v426
      %v2367 = vpop.f32.mrb[0].mxu0
      %v2368 = vadd.f32 0.0, %v2367
      %v2369 = vpop.f32.mrb[0].mxu0
      %2370 = vmatprep.mubr.f32.mxu0 0.0
      %2371 = vmatmul.mubr.f32.gmra.mrb[0].mxu0 %v427
      %v2372 = vpop.f32.mrb[0].mxu0
      %v2373 = vadd.f32 0.0, %v2372
      %v2374 = vpop.f32.mrb[0].mxu0
      %2375 = vmatprep.mubr.f32.mxu0 0.0
      %2376 = vmatmul.mubr.f32.gmra.mrb[0].mxu0 %v428
      %v2377 = vpop.f32.mrb[0].mxu0
      %v2378 = vadd.f32 0.0, %v2377
      %v2379 = vpop.f32.mrb[0].mxu0
      %2380 = vmatprep.mubr.f32.mxu0 0.0
      %2381 = vmatmul.mubr.f32.gmra.mrb[0].mxu0 %v429
      %v2382 = vpop.f32.mrb[0].mxu0
      %v2383 = vadd.f32 0.0, %v2382
      %v2384 = vpop.f32.mrb[0].mxu0
      %2385 = vmatprep.mubr.f32.mxu0 0.0
      %2386 = vmatmul.mubr.f32.gmra.mrb[0].mxu0 %v430
      %v2387 = vpop.f32.mrb[0].mxu0
      %v2388 = vadd.f32 0.0, %v2387
      %v2389 = vpop.f32.mrb[0].mxu0
      %2390 = vmatprep.mubr.f32.mxu0 0.0
      %2391 = vmatmul.mubr.f32.gmra.mrb[0].mxu0 %v431
      %v2392 = vpop.f32.mrb[0].mxu0
      %v2393 = vadd.f32 0.0, %v2392
      %v2394 = vpop.f32.mrb[0].mxu0
      %2395 = vmatprep.mubr.f32.mxu0 0.0
      %2396 = vmatmul.mubr.f32.gmra.mrb[0].mxu0 %v432
      %v2397 = vpop.f32.mrb[0].mxu0
      %v2398 = vadd.f32 0.0, %v2397
      %v2399 = vpop.f32.mrb[0].mxu0
      %2400 = vmatprep.mubr.f32.mxu0 0.0
      %2401 = vmatmul.mubr.f32.gmra.mrb[0].mxu0 %v433
      %v2402 = vpop.f32.mrb[0].mxu0
      %v2403 = vadd.f32 0.0, %v2402
      %v2404 = vpop.f32.mrb[0].mxu0
      %2405 = vmatprep.mubr.f32.mxu0 0.0
      %2406 = vmatmul.mubr.f32.gmra.mrb[0].mxu0 %v434
      %v2407 = vpop.f32.mrb[0].mxu0
      %v2408 = vadd.f32 0.0, %v2407
      %v2409 = vpop.f32.mrb[0].mxu0
      %2410 = vdwg.mxu0
      %v2411 = vadd.f32 %v2137, %v2253
      %v2412 = vadd.f32 %v2138, %v2258
      %v2413 = vadd.f32 %v2139, %v2263
      %v2414 = vadd.f32 %v2140, %v2268
      %v2415 = vadd.f32 %v2141, %v2273
      %v2416 = vadd.f32 %v2142, %v2278
      %v2417 = vadd.f32 %v2143, %v2283
      %v2418 = vadd.f32 %v2144, %v2288
      %v2419 = vadd.f32 %v2145, %v2293
      %v2420 = vadd.f32 %v2146, %v2298
      %v2421 = vadd.f32 %v2147, %v2303
      %v2422 = vadd.f32 %v2148, %v2308
      %v2423 = vadd.f32 %v2149, %v2313
      %v2424 = vadd.f32 %v2150, %v2318
      %v2425 = vadd.f32 %v2151, %v2323
      %v2426 = vadd.f32 %v2152, %v2328
      %v2427 = vadd.f32 %v2153, %v2333
      %v2428 = vadd.f32 %v2154, %v2338
      %v2429 = vadd.f32 %v2155, %v2343
      %v2430 = vadd.f32 %v2156, %v2348
      %v2431 = vadd.f32 %v2157, %v2353
      %v2432 = vadd.f32 %v2158, %v2358
      %v2433 = vadd.f32 %v2159, %v2363
      %v2434 = vadd.f32 %v2160, %v2368
      %v2435 = vadd.f32 %v2161, %v2373
      %v2436 = vadd.f32 %v2162, %v2378
      %v2437 = vadd.f32 %v2163, %v2383
      %v2438 = vadd.f32 %v2164, %v2388
      %v2439 = vadd.f32 %v2165, %v2393
      %v2440 = vadd.f32 %v2166, %v2398
      %v2441 = vadd.f32 %v2167, %v2403
      %v2442 = vadd.f32 %v2168, %v2408
      %v2443 = vrot.slane %v434, 1
      %v2444 = vsel %vm1264, %v1324, %v2443
      %v2447 = vsel %vm1264, %v2443, 0.0
      %v2448 = vmul.f32 %v1267, %v1393
      %v2449 = vmul.f32 %v1269, %v1398
      %v2450 = vmul.f32 %v1271, %v1403
      %v2451 = vmul.f32 %v1273, %v1408
      %v2452 = vmul.f32 %v1275, %v1413
      %v2453 = vmul.f32 %v1277, %v1418
      %v2454 = vmul.f32 %v1279, %v1423
      %v2455 = vmul.f32 %v1281, %v1428
      %v2456 = vmul.f32 %v1283, %v1433
      %v2457 = vmul.f32 %v1285, %v1438
      %v2458 = vmul.f32 %v1287, %v1443
      %v2459 = vmul.f32 %v1289, %v1448
      %v2460 = vmul.f32 %v1291, %v1453
      %v2461 = vmul.f32 %v1293, %v1458
      %v2462 = vmul.f32 %v1295, %v1463
      %v2463 = vmul.f32 %v1297, %v1468
      %v2464 = vmul.f32 %v1299, %v1473
      %v2465 = vmul.f32 %v1301, %v1478
      %v2466 = vmul.f32 %v1303, %v1483
      %v2467 = vmul.f32 %v1305, %v1488
      %v2468 = vmul.f32 %v1307, %v1493
      %v2469 = vmul.f32 %v1309, %v1498
      %v2470 = vmul.f32 %v1311, %v1503
      %v2471 = vmul.f32 %v1313, %v1508
      %v2472 = vmul.f32 %v1315, %v1513
      %v2473 = vmul.f32 %v1317, %v1518
      %v2474 = vmul.f32 %v1319, %v1523
      %v2475 = vmul.f32 %v1321, %v1528
      %v2476 = vmul.f32 %v1323, %v1533
      %v2477 = vmul.f32 %v1325, %v1538
      %v2478 = vmul.f32 %v2444, %v1543
      %v2479 = vmul.f32 %v2447, %v1548
      %s2480 = scalar_lea.vmem %s3, 640
      %v2481 = vld [vmem:[%s2480] sm:$0xff]
      %v2482 = vld [vmem:[%s2480 + $0x8] sm:$0xff]
      %v2483 = vld [vmem:[%s2480 + $0x10] sm:$0xff]
      %v2484 = vld [vmem:[%s2480 + $0x18] sm:$0xff]
      %v2485 = vld [vmem:[%s2480 + $0x20] sm:$0xff]
      %v2486 = vld [vmem:[%s2480 + $0x28] sm:$0xff]
      %v2487 = vld [vmem:[%s2480 + $0x30] sm:$0xff]
      %v2488 = vld [vmem:[%s2480 + $0x38] sm:$0xff]
      %v2489 = vld [vmem:[%s2480 + $0x40] sm:$0xff]
      %v2490 = vld [vmem:[%s2480 + $0x48] sm:$0xff]
      %v2491 = vld [vmem:[%s2480 + $0x50] sm:$0xff]
      %v2492 = vld [vmem:[%s2480 + $0x58] sm:$0xff]
      %v2493 = vld [vmem:[%s2480 + $0x60] sm:$0xff]
      %v2494 = vld [vmem:[%s2480 + $0x68] sm:$0xff]
      %v2495 = vld [vmem:[%s2480 + $0x70] sm:$0xff]
      %v2496 = vld [vmem:[%s2480 + $0x78] sm:$0xff]
      %2497 = vmatprep.subr.mxu0 0.0
      %2498 = vmatpush1.msra.mxu0 %v2481
      %2499 = vmatprep.subr.mxu0 0.0
      %2500 = vmatpush1.msra.mxu0 %v2482
      %2501 = vmatprep.subr.mxu0 0.0
      %2502 = vmatpush1.msra.mxu0 %v2483
      %2503 = vmatprep.subr.mxu0 0.0
      %2504 = vmatpush1.msra.mxu0 %v2484
      %2505 = vmatprep.subr.mxu0 0.0
      %2506 = vmatpush1.msra.mxu0 %v2485
      %2507 = vmatprep.subr.mxu0 0.0
      %2508 = vmatpush1.msra.mxu0 %v2486
      %2509 = vmatprep.subr.mxu0 0.0
      %2510 = vmatpush1.msra.mxu0 %v2487
      %2511 = vmatprep.subr.mxu0 0.0
      %2512 = vmatpush1.msra.mxu0 %v2488
      %2513 = vmatprep.subr.mxu0 0.0
      %2514 = vmatpush1.msra.mxu0 %v2489
      %2515 = vmatprep.subr.mxu0 0.0
      %2516 = vmatpush1.msra.mxu0 %v2490
      %2517 = vmatprep.subr.mxu0 0.0
      %2518 = vmatpush1.msra.mxu0 %v2491
      %2519 = vmatprep.subr.mxu0 0.0
      %2520 = vmatpush1.msra.mxu0 %v2492
      %2521 = vmatprep.subr.mxu0 0.0
      %2522 = vmatpush1.msra.mxu0 %v2493
      %2523 = vmatprep.subr.mxu0 0.0
      %2524 = vmatpush1.msra.mxu0 %v2494
      %2525 = vmatprep.subr.mxu0 0.0
      %2526 = vmatpush1.msra.mxu0 %v2495
      %2527 = vmatprep.subr.mxu0 0.0
      %2528 = vmatpush1.msra.mxu0 %v2496
      %2529 = vmatprep.subr.mxu0 0.0
      %2530 = vmatpush1.msra.mxu0 0.0
      %2531 = vmatprep.subr.mxu0 0.0
      %2532 = vmatpush1.msra.mxu0 0.0
      %2533 = vmatprep.subr.mxu0 0.0
      %2534 = vmatpush1.msra.mxu0 0.0
      %2535 = vmatprep.subr.mxu0 0.0
      %2536 = vmatpush1.msra.mxu0 0.0
      %2537 = vmatprep.subr.mxu0 0.0
      %2538 = vmatpush1.msra.mxu0 0.0
      %2539 = vmatprep.subr.mxu0 0.0
      %2540 = vmatpush1.msra.mxu0 0.0
      %2541 = vmatprep.subr.mxu0 0.0
      %2542 = vmatpush1.msra.mxu0 0.0
      %2543 = vmatprep.subr.mxu0 0.0
      %2544 = vmatpush1.msra.mxu0 0.0
      %2545 = vmatprep.subr.mxu0 0.0
      %2546 = vmatpush1.msra.mxu0 0.0
      %2547 = vmatprep.subr.mxu0 0.0
      %2548 = vmatpush1.msra.mxu0 0.0
      %2549 = vmatprep.subr.mxu0 0.0
      %2550 = vmatpush1.msra.mxu0 0.0
      %2551 = vmatprep.subr.mxu0 0.0
      %2552 = vmatpush1.msra.mxu0 0.0
      %2553 = vmatprep.subr.mxu0 0.0
      %2554 = vmatpush1.msra.mxu0 0.0
      %2555 = vmatprep.subr.mxu0 0.0
      %2556 = vmatpush1.msra.mxu0 0.0
      %2557 = vmatprep.subr.mxu0 0.0
      %2558 = vmatpush1.msra.mxu0 0.0
      %2559 = vmatprep.subr.mxu0 0.0
      %2560 = vmatpush1.msra.mxu0 0.0
      %2561 = vmatprep.mubr.f32.mxu0 0.0
      %2562 = vmatmul.mubr.f32.gmra.mrb[0].mxu0 %v2448
      %v2563 = vpop.f32.mrb[0].mxu0
      %v2564 = vadd.f32 0.0, %v2563
      %v2565 = vpop.f32.mrb[0].mxu0
      %2566 = vmatprep.mubr.f32.mxu0 0.0
      %2567 = vmatmul.mubr.f32.gmra.mrb[0].mxu0 %v2449
      %v2568 = vpop.f32.mrb[0].mxu0
      %v2569 = vadd.f32 0.0, %v2568
      %v2570 = vpop.f32.mrb[0].mxu0
      %2571 = vmatprep.mubr.f32.mxu0 0.0
      %2572 = vmatmul.mubr.f32.gmra.mrb[0].mxu0 %v2450
      %v2573 = vpop.f32.mrb[0].mxu0
      %v2574 = vadd.f32 0.0, %v2573
      %v2575 = vpop.f32.mrb[0].mxu0
      %2576 = vmatprep.mubr.f32.mxu0 0.0
      %2577 = vmatmul.mubr.f32.gmra.mrb[0].mxu0 %v2451
      %v2578 = vpop.f32.mrb[0].mxu0
      %v2579 = vadd.f32 0.0, %v2578
      %v2580 = vpop.f32.mrb[0].mxu0
      %2581 = vmatprep.mubr.f32.mxu0 0.0
      %2582 = vmatmul.mubr.f32.gmra.mrb[0].mxu0 %v2452
      %v2583 = vpop.f32.mrb[0].mxu0
      %v2584 = vadd.f32 0.0, %v2583
      %v2585 = vpop.f32.mrb[0].mxu0
      %2586 = vmatprep.mubr.f32.mxu0 0.0
      %2587 = vmatmul.mubr.f32.gmra.mrb[0].mxu0 %v2453
      %v2588 = vpop.f32.mrb[0].mxu0
      %v2589 = vadd.f32 0.0, %v2588
      %v2590 = vpop.f32.mrb[0].mxu0
      %2591 = vmatprep.mubr.f32.mxu0 0.0
      %2592 = vmatmul.mubr.f32.gmra.mrb[0].mxu0 %v2454
      %v2593 = vpop.f32.mrb[0].mxu0
      %v2594 = vadd.f32 0.0, %v2593
      %v2595 = vpop.f32.mrb[0].mxu0
      %2596 = vmatprep.mubr.f32.mxu0 0.0
      %2597 = vmatmul.mubr.f32.gmra.mrb[0].mxu0 %v2455
      %v2598 = vpop.f32.mrb[0].mxu0
      %v2599 = vadd.f32 0.0, %v2598
      %v2600 = vpop.f32.mrb[0].mxu0
      %2601 = vmatprep.mubr.f32.mxu0 0.0
      %2602 = vmatmul.mubr.f32.gmra.mrb[0].mxu0 %v2456
      %v2603 = vpop.f32.mrb[0].mxu0
      %v2604 = vadd.f32 0.0, %v2603
      %v2605 = vpop.f32.mrb[0].mxu0
      %2606 = vmatprep.mubr.f32.mxu0 0.0
      %2607 = vmatmul.mubr.f32.gmra.mrb[0].mxu0 %v2457
      %v2608 = vpop.f32.mrb[0].mxu0
      %v2609 = vadd.f32 0.0, %v2608
      %v2610 = vpop.f32.mrb[0].mxu0
      %2611 = vmatprep.mubr.f32.mxu0 0.0
      %2612 = vmatmul.mubr.f32.gmra.mrb[0].mxu0 %v2458
      %v2613 = vpop.f32.mrb[0].mxu0
      %v2614 = vadd.f32 0.0, %v2613
      %v2615 = vpop.f32.mrb[0].mxu0
      %2616 = vmatprep.mubr.f32.mxu0 0.0
      %2617 = vmatmul.mubr.f32.gmra.mrb[0].mxu0 %v2459
      %v2618 = vpop.f32.mrb[0].mxu0
      %v2619 = vadd.f32 0.0, %v2618
      %v2620 = vpop.f32.mrb[0].mxu0
      %2621 = vmatprep.mubr.f32.mxu0 0.0
      %2622 = vmatmul.mubr.f32.gmra.mrb[0].mxu0 %v2460
      %v2623 = vpop.f32.mrb[0].mxu0
      %v2624 = vadd.f32 0.0, %v2623
      %v2625 = vpop.f32.mrb[0].mxu0
      %2626 = vmatprep.mubr.f32.mxu0 0.0
      %2627 = vmatmul.mubr.f32.gmra.mrb[0].mxu0 %v2461
      %v2628 = vpop.f32.mrb[0].mxu0
      %v2629 = vadd.f32 0.0, %v2628
      %v2630 = vpop.f32.mrb[0].mxu0
      %2631 = vmatprep.mubr.f32.mxu0 0.0
      %2632 = vmatmul.mubr.f32.gmra.mrb[0].mxu0 %v2462
      %v2633 = vpop.f32.mrb[0].mxu0
      %v2634 = vadd.f32 0.0, %v2633
      %v2635 = vpop.f32.mrb[0].mxu0
      %2636 = vmatprep.mubr.f32.mxu0 0.0
      %2637 = vmatmul.mubr.f32.gmra.mrb[0].mxu0 %v2463
      %v2638 = vpop.f32.mrb[0].mxu0
      %v2639 = vadd.f32 0.0, %v2638
      %v2640 = vpop.f32.mrb[0].mxu0
      %2641 = vmatprep.mubr.f32.mxu0 0.0
      %2642 = vmatmul.mubr.f32.gmra.mrb[0].mxu0 %v2464
      %v2643 = vpop.f32.mrb[0].mxu0
      %v2644 = vadd.f32 0.0, %v2643
      %v2645 = vpop.f32.mrb[0].mxu0
      %2646 = vmatprep.mubr.f32.mxu0 0.0
      %2647 = vmatmul.mubr.f32.gmra.mrb[0].mxu0 %v2465
      %v2648 = vpop.f32.mrb[0].mxu0
      %v2649 = vadd.f32 0.0, %v2648
      %v2650 = vpop.f32.mrb[0].mxu0
      %2651 = vmatprep.mubr.f32.mxu0 0.0
      %2652 = vmatmul.mubr.f32.gmra.mrb[0].mxu0 %v2466
      %v2653 = vpop.f32.mrb[0].mxu0
      %v2654 = vadd.f32 0.0, %v2653
      %v2655 = vpop.f32.mrb[0].mxu0
      %2656 = vmatprep.mubr.f32.mxu0 0.0
      %2657 = vmatmul.mubr.f32.gmra.mrb[0].mxu0 %v2467
      %v2658 = vpop.f32.mrb[0].mxu0
      %v2659 = vadd.f32 0.0, %v2658
      %v2660 = vpop.f32.mrb[0].mxu0
      %2661 = vmatprep.mubr.f32.mxu0 0.0
      %2662 = vmatmul.mubr.f32.gmra.mrb[0].mxu0 %v2468
      %v2663 = vpop.f32.mrb[0].mxu0
      %v2664 = vadd.f32 0.0, %v2663
      %v2665 = vpop.f32.mrb[0].mxu0
      %2666 = vmatprep.mubr.f32.mxu0 0.0
      %2667 = vmatmul.mubr.f32.gmra.mrb[0].mxu0 %v2469
      %v2668 = vpop.f32.mrb[0].mxu0
      %v2669 = vadd.f32 0.0, %v2668
      %v2670 = vpop.f32.mrb[0].mxu0
      %2671 = vmatprep.mubr.f32.mxu0 0.0
      %2672 = vmatmul.mubr.f32.gmra.mrb[0].mxu0 %v2470
      %v2673 = vpop.f32.mrb[0].mxu0
      %v2674 = vadd.f32 0.0, %v2673
      %v2675 = vpop.f32.mrb[0].mxu0
      %2676 = vmatprep.mubr.f32.mxu0 0.0
      %2677 = vmatmul.mubr.f32.gmra.mrb[0].mxu0 %v2471
      %v2678 = vpop.f32.mrb[0].mxu0
      %v2679 = vadd.f32 0.0, %v2678
      %v2680 = vpop.f32.mrb[0].mxu0
      %2681 = vmatprep.mubr.f32.mxu0 0.0
      %2682 = vmatmul.mubr.f32.gmra.mrb[0].mxu0 %v2472
      %v2683 = vpop.f32.mrb[0].mxu0
      %v2684 = vadd.f32 0.0, %v2683
      %v2685 = vpop.f32.mrb[0].mxu0
      %2686 = vmatprep.mubr.f32.mxu0 0.0
      %2687 = vmatmul.mubr.f32.gmra.mrb[0].mxu0 %v2473
      %v2688 = vpop.f32.mrb[0].mxu0
      %v2689 = vadd.f32 0.0, %v2688
      %v2690 = vpop.f32.mrb[0].mxu0
      %2691 = vmatprep.mubr.f32.mxu0 0.0
      %2692 = vmatmul.mubr.f32.gmra.mrb[0].mxu0 %v2474
      %v2693 = vpop.f32.mrb[0].mxu0
      %v2694 = vadd.f32 0.0, %v2693
      %v2695 = vpop.f32.mrb[0].mxu0
      %2696 = vmatprep.mubr.f32.mxu0 0.0
      %2697 = vmatmul.mubr.f32.gmra.mrb[0].mxu0 %v2475
      %v2698 = vpop.f32.mrb[0].mxu0
      %v2699 = vadd.f32 0.0, %v2698
      %v2700 = vpop.f32.mrb[0].mxu0
      %2701 = vmatprep.mubr.f32.mxu0 0.0
      %2702 = vmatmul.mubr.f32.gmra.mrb[0].mxu0 %v2476
      %v2703 = vpop.f32.mrb[0].mxu0
      %v2704 = vadd.f32 0.0, %v2703
      %v2705 = vpop.f32.mrb[0].mxu0
      %2706 = vmatprep.mubr.f32.mxu0 0.0
      %2707 = vmatmul.mubr.f32.gmra.mrb[0].mxu0 %v2477
      %v2708 = vpop.f32.mrb[0].mxu0
      %v2709 = vadd.f32 0.0, %v2708
      %v2710 = vpop.f32.mrb[0].mxu0
      %2711 = vmatprep.mubr.f32.mxu0 0.0
      %2712 = vmatmul.mubr.f32.gmra.mrb[0].mxu0 %v2478
      %v2713 = vpop.f32.mrb[0].mxu0
      %v2714 = vadd.f32 0.0, %v2713
      %v2715 = vpop.f32.mrb[0].mxu0
      %2716 = vmatprep.mubr.f32.mxu0 0.0
      %2717 = vmatmul.mubr.f32.gmra.mrb[0].mxu0 %v2479
      %v2718 = vpop.f32.mrb[0].mxu0
      %v2719 = vadd.f32 0.0, %v2718
      %v2720 = vpop.f32.mrb[0].mxu0
      %2721 = vdwg.mxu0
      %v2722 = vadd.f32 %v2411, %v2564
      %v2723 = vadd.f32 %v2412, %v2569
      %v2724 = vadd.f32 %v2413, %v2574
      %v2725 = vadd.f32 %v2414, %v2579
      %v2726 = vadd.f32 %v2415, %v2584
      %v2727 = vadd.f32 %v2416, %v2589
      %v2728 = vadd.f32 %v2417, %v2594
      %v2729 = vadd.f32 %v2418, %v2599
      %v2730 = vadd.f32 %v2419, %v2604
      %v2731 = vadd.f32 %v2420, %v2609
      %v2732 = vadd.f32 %v2421, %v2614
      %v2733 = vadd.f32 %v2422, %v2619
      %v2734 = vadd.f32 %v2423, %v2624
      %v2735 = vadd.f32 %v2424, %v2629
      %v2736 = vadd.f32 %v2425, %v2634
      %v2737 = vadd.f32 %v2426, %v2639
      %v2738 = vadd.f32 %v2427, %v2644
      %v2739 = vadd.f32 %v2428, %v2649
      %v2740 = vadd.f32 %v2429, %v2654
      %v2741 = vadd.f32 %v2430, %v2659
      %v2742 = vadd.f32 %v2431, %v2664
      %v2743 = vadd.f32 %v2432, %v2669
      %v2744 = vadd.f32 %v2433, %v2674
      %v2745 = vadd.f32 %v2434, %v2679
      %v2746 = vadd.f32 %v2435, %v2684
      %v2747 = vadd.f32 %v2436, %v2689
      %v2748 = vadd.f32 %v2437, %v2694
      %v2749 = vadd.f32 %v2438, %v2699
      %v2750 = vadd.f32 %v2439, %v2704
      %v2751 = vadd.f32 %v2440, %v2709
      %v2752 = vadd.f32 %v2441, %v2714
      %v2753 = vadd.f32 %v2442, %v2719
      %v2755 = vsel %vm465, %v1859, 0.0
      %v2756 = vmul.f32 %v470, %v591
      %v2757 = vmul.f32 %v472, %v596
      %v2758 = vmul.f32 %v474, %v601
      %v2759 = vmul.f32 %v476, %v606
      %v2760 = vmul.f32 %v478, %v611
      %v2761 = vmul.f32 %v480, %v616
      %v2762 = vmul.f32 %v482, %v621
      %v2763 = vmul.f32 %v484, %v626
      %v2764 = vmul.f32 %v486, %v631
      %v2765 = vmul.f32 %v488, %v636
      %v2766 = vmul.f32 %v490, %v641
      %v2767 = vmul.f32 %v492, %v646
      %v2768 = vmul.f32 %v494, %v651
      %v2769 = vmul.f32 %v496, %v656
      %v2770 = vmul.f32 %v498, %v661
      %v2771 = vmul.f32 %v500, %v666
      %v2772 = vmul.f32 %v502, %v671
      %v2773 = vmul.f32 %v504, %v676
      %v2774 = vmul.f32 %v506, %v681
      %v2775 = vmul.f32 %v508, %v686
      %v2776 = vmul.f32 %v510, %v691
      %v2777 = vmul.f32 %v512, %v696
      %v2778 = vmul.f32 %v514, %v701
      %v2779 = vmul.f32 %v516, %v706
      %v2780 = vmul.f32 %v518, %v711
      %v2781 = vmul.f32 %v520, %v716
      %v2782 = vmul.f32 %v522, %v721
      %v2783 = vmul.f32 %v524, %v726
      %v2784 = vmul.f32 %v1858, %v731
      %v2785 = vmul.f32 %v1860, %v736
      %v2786 = vmul.f32 %v2755, %v741
      %v2787 = vmul.f32 %v746, 0.0
      %s2788 = scalar_lea.vmem %s3, 768
      %v2789 = vld [vmem:[%s2788] sm:$0xff]
      %v2790 = vld [vmem:[%s2788 + $0x8] sm:$0xff]
      %v2791 = vld [vmem:[%s2788 + $0x10] sm:$0xff]
      %v2792 = vld [vmem:[%s2788 + $0x18] sm:$0xff]
      %v2793 = vld [vmem:[%s2788 + $0x20] sm:$0xff]
      %v2794 = vld [vmem:[%s2788 + $0x28] sm:$0xff]
      %v2795 = vld [vmem:[%s2788 + $0x30] sm:$0xff]
      %v2796 = vld [vmem:[%s2788 + $0x38] sm:$0xff]
      %v2797 = vld [vmem:[%s2788 + $0x40] sm:$0xff]
      %v2798 = vld [vmem:[%s2788 + $0x48] sm:$0xff]
      %v2799 = vld [vmem:[%s2788 + $0x50] sm:$0xff]
      %v2800 = vld [vmem:[%s2788 + $0x58] sm:$0xff]
      %v2801 = vld [vmem:[%s2788 + $0x60] sm:$0xff]
      %v2802 = vld [vmem:[%s2788 + $0x68] sm:$0xff]
      %v2803 = vld [vmem:[%s2788 + $0x70] sm:$0xff]
      %v2804 = vld [vmem:[%s2788 + $0x78] sm:$0xff]
      %2805 = vmatprep.subr.mxu0 0.0
      %2806 = vmatpush1.msra.mxu0 %v2789
      %2807 = vmatprep.subr.mxu0 0.0
      %2808 = vmatpush1.msra.mxu0 %v2790
      %2809 = vmatprep.subr.mxu0 0.0
      %2810 = vmatpush1.msra.mxu0 %v2791
      %2811 = vmatprep.subr.mxu0 0.0
      %2812 = vmatpush1.msra.mxu0 %v2792
      %2813 = vmatprep.subr.mxu0 0.0
      %2814 = vmatpush1.msra.mxu0 %v2793
      %2815 = vmatprep.subr.mxu0 0.0
      %2816 = vmatpush1.msra.mxu0 %v2794
      %2817 = vmatprep.subr.mxu0 0.0
      %2818 = vmatpush1.msra.mxu0 %v2795
      %2819 = vmatprep.subr.mxu0 0.0
      %2820 = vmatpush1.msra.mxu0 %v2796
      %2821 = vmatprep.subr.mxu0 0.0
      %2822 = vmatpush1.msra.mxu0 %v2797
      %2823 = vmatprep.subr.mxu0 0.0
      %2824 = vmatpush1.msra.mxu0 %v2798
      %2825 = vmatprep.subr.mxu0 0.0
      %2826 = vmatpush1.msra.mxu0 %v2799
      %2827 = vmatprep.subr.mxu0 0.0
      %2828 = vmatpush1.msra.mxu0 %v2800
      %2829 = vmatprep.subr.mxu0 0.0
      %2830 = vmatpush1.msra.mxu0 %v2801
      %2831 = vmatprep.subr.mxu0 0.0
      %2832 = vmatpush1.msra.mxu0 %v2802
      %2833 = vmatprep.subr.mxu0 0.0
      %2834 = vmatpush1.msra.mxu0 %v2803
      %2835 = vmatprep.subr.mxu0 0.0
      %2836 = vmatpush1.msra.mxu0 %v2804
      %2837 = vmatprep.subr.mxu0 0.0
      %2838 = vmatpush1.msra.mxu0 0.0
      %2839 = vmatprep.subr.mxu0 0.0
      %2840 = vmatpush1.msra.mxu0 0.0
      %2841 = vmatprep.subr.mxu0 0.0
      %2842 = vmatpush1.msra.mxu0 0.0
      %2843 = vmatprep.subr.mxu0 0.0
      %2844 = vmatpush1.msra.mxu0 0.0
      %2845 = vmatprep.subr.mxu0 0.0
      %2846 = vmatpush1.msra.mxu0 0.0
      %2847 = vmatprep.subr.mxu0 0.0
      %2848 = vmatpush1.msra.mxu0 0.0
      %2849 = vmatprep.subr.mxu0 0.0
      %2850 = vmatpush1.msra.mxu0 0.0
      %2851 = vmatprep.subr.mxu0 0.0
      %2852 = vmatpush1.msra.mxu0 0.0
      %2853 = vmatprep.subr.mxu0 0.0
      %2854 = vmatpush1.msra.mxu0 0.0
      %2855 = vmatprep.subr.mxu0 0.0
      %2856 = vmatpush1.msra.mxu0 0.0
      %2857 = vmatprep.subr.mxu0 0.0
      %2858 = vmatpush1.msra.mxu0 0.0
      %2859 = vmatprep.subr.mxu0 0.0
      %2860 = vmatpush1.msra.mxu0 0.0
      %2861 = vmatprep.subr.mxu0 0.0
      %2862 = vmatpush1.msra.mxu0 0.0
      %2863 = vmatprep.subr.mxu0 0.0
      %2864 = vmatpush1.msra.mxu0 0.0
      %2865 = vmatprep.subr.mxu0 0.0
      %2866 = vmatpush1.msra.mxu0 0.0
      %2867 = vmatprep.subr.mxu0 0.0
      %2868 = vmatpush1.msra.mxu0 0.0
      %2869 = vmatprep.mubr.f32.mxu0 0.0
      %2870 = vmatmul.mubr.f32.gmra.mrb[0].mxu0 %v2756
      %v2871 = vpop.f32.mrb[0].mxu0
      %v2872 = vadd.f32 0.0, %v2871
      %v2873 = vpop.f32.mrb[0].mxu0
      %2874 = vmatprep.mubr.f32.mxu0 0.0
      %2875 = vmatmul.mubr.f32.gmra.mrb[0].mxu0 %v2757
      %v2876 = vpop.f32.mrb[0].mxu0
      %v2877 = vadd.f32 0.0, %v2876
      %v2878 = vpop.f32.mrb[0].mxu0
      %2879 = vmatprep.mubr.f32.mxu0 0.0
      %2880 = vmatmul.mubr.f32.gmra.mrb[0].mxu0 %v2758
      %v2881 = vpop.f32.mrb[0].mxu0
      %v2882 = vadd.f32 0.0, %v2881
      %v2883 = vpop.f32.mrb[0].mxu0
      %2884 = vmatprep.mubr.f32.mxu0 0.0
      %2885 = vmatmul.mubr.f32.gmra.mrb[0].mxu0 %v2759
      %v2886 = vpop.f32.mrb[0].mxu0
      %v2887 = vadd.f32 0.0, %v2886
      %v2888 = vpop.f32.mrb[0].mxu0
      %2889 = vmatprep.mubr.f32.mxu0 0.0
      %2890 = vmatmul.mubr.f32.gmra.mrb[0].mxu0 %v2760
      %v2891 = vpop.f32.mrb[0].mxu0
      %v2892 = vadd.f32 0.0, %v2891
      %v2893 = vpop.f32.mrb[0].mxu0
      %2894 = vmatprep.mubr.f32.mxu0 0.0
      %2895 = vmatmul.mubr.f32.gmra.mrb[0].mxu0 %v2761
      %v2896 = vpop.f32.mrb[0].mxu0
      %v2897 = vadd.f32 0.0, %v2896
      %v2898 = vpop.f32.mrb[0].mxu0
      %2899 = vmatprep.mubr.f32.mxu0 0.0
      %2900 = vmatmul.mubr.f32.gmra.mrb[0].mxu0 %v2762
      %v2901 = vpop.f32.mrb[0].mxu0
      %v2902 = vadd.f32 0.0, %v2901
      %v2903 = vpop.f32.mrb[0].mxu0
      %2904 = vmatprep.mubr.f32.mxu0 0.0
      %2905 = vmatmul.mubr.f32.gmra.mrb[0].mxu0 %v2763
      %v2906 = vpop.f32.mrb[0].mxu0
      %v2907 = vadd.f32 0.0, %v2906
      %v2908 = vpop.f32.mrb[0].mxu0
      %2909 = vmatprep.mubr.f32.mxu0 0.0
      %2910 = vmatmul.mubr.f32.gmra.mrb[0].mxu0 %v2764
      %v2911 = vpop.f32.mrb[0].mxu0
      %v2912 = vadd.f32 0.0, %v2911
      %v2913 = vpop.f32.mrb[0].mxu0
      %2914 = vmatprep.mubr.f32.mxu0 0.0
      %2915 = vmatmul.mubr.f32.gmra.mrb[0].mxu0 %v2765
      %v2916 = vpop.f32.mrb[0].mxu0
      %v2917 = vadd.f32 0.0, %v2916
      %v2918 = vpop.f32.mrb[0].mxu0
      %2919 = vmatprep.mubr.f32.mxu0 0.0
      %2920 = vmatmul.mubr.f32.gmra.mrb[0].mxu0 %v2766
      %v2921 = vpop.f32.mrb[0].mxu0
      %v2922 = vadd.f32 0.0, %v2921
      %v2923 = vpop.f32.mrb[0].mxu0
      %2924 = vmatprep.mubr.f32.mxu0 0.0
      %2925 = vmatmul.mubr.f32.gmra.mrb[0].mxu0 %v2767
      %v2926 = vpop.f32.mrb[0].mxu0
      %v2927 = vadd.f32 0.0, %v2926
      %v2928 = vpop.f32.mrb[0].mxu0
      %2929 = vmatprep.mubr.f32.mxu0 0.0
      %2930 = vmatmul.mubr.f32.gmra.mrb[0].mxu0 %v2768
      %v2931 = vpop.f32.mrb[0].mxu0
      %v2932 = vadd.f32 0.0, %v2931
      %v2933 = vpop.f32.mrb[0].mxu0
      %2934 = vmatprep.mubr.f32.mxu0 0.0
      %2935 = vmatmul.mubr.f32.gmra.mrb[0].mxu0 %v2769
      %v2936 = vpop.f32.mrb[0].mxu0
      %v2937 = vadd.f32 0.0, %v2936
      %v2938 = vpop.f32.mrb[0].mxu0
      %2939 = vmatprep.mubr.f32.mxu0 0.0
      %2940 = vmatmul.mubr.f32.gmra.mrb[0].mxu0 %v2770
      %v2941 = vpop.f32.mrb[0].mxu0
      %v2942 = vadd.f32 0.0, %v2941
      %v2943 = vpop.f32.mrb[0].mxu0
      %2944 = vmatprep.mubr.f32.mxu0 0.0
      %2945 = vmatmul.mubr.f32.gmra.mrb[0].mxu0 %v2771
      %v2946 = vpop.f32.mrb[0].mxu0
      %v2947 = vadd.f32 0.0, %v2946
      %v2948 = vpop.f32.mrb[0].mxu0
      %2949 = vmatprep.mubr.f32.mxu0 0.0
      %2950 = vmatmul.mubr.f32.gmra.mrb[0].mxu0 %v2772
      %v2951 = vpop.f32.mrb[0].mxu0
      %v2952 = vadd.f32 0.0, %v2951
      %v2953 = vpop.f32.mrb[0].mxu0
      %2954 = vmatprep.mubr.f32.mxu0 0.0
      %2955 = vmatmul.mubr.f32.gmra.mrb[0].mxu0 %v2773
      %v2956 = vpop.f32.mrb[0].mxu0
      %v2957 = vadd.f32 0.0, %v2956
      %v2958 = vpop.f32.mrb[0].mxu0
      %2959 = vmatprep.mubr.f32.mxu0 0.0
      %2960 = vmatmul.mubr.f32.gmra.mrb[0].mxu0 %v2774
      %v2961 = vpop.f32.mrb[0].mxu0
      %v2962 = vadd.f32 0.0, %v2961
      %v2963 = vpop.f32.mrb[0].mxu0
      %2964 = vmatprep.mubr.f32.mxu0 0.0
      %2965 = vmatmul.mubr.f32.gmra.mrb[0].mxu0 %v2775
      %v2966 = vpop.f32.mrb[0].mxu0
      %v2967 = vadd.f32 0.0, %v2966
      %v2968 = vpop.f32.mrb[0].mxu0
      %2969 = vmatprep.mubr.f32.mxu0 0.0
      %2970 = vmatmul.mubr.f32.gmra.mrb[0].mxu0 %v2776
      %v2971 = vpop.f32.mrb[0].mxu0
      %v2972 = vadd.f32 0.0, %v2971
      %v2973 = vpop.f32.mrb[0].mxu0
      %2974 = vmatprep.mubr.f32.mxu0 0.0
      %2975 = vmatmul.mubr.f32.gmra.mrb[0].mxu0 %v2777
      %v2976 = vpop.f32.mrb[0].mxu0
      %v2977 = vadd.f32 0.0, %v2976
      %v2978 = vpop.f32.mrb[0].mxu0
      %2979 = vmatprep.mubr.f32.mxu0 0.0
      %2980 = vmatmul.mubr.f32.gmra.mrb[0].mxu0 %v2778
      %v2981 = vpop.f32.mrb[0].mxu0
      %v2982 = vadd.f32 0.0, %v2981
      %v2983 = vpop.f32.mrb[0].mxu0
      %2984 = vmatprep.mubr.f32.mxu0 0.0
      %2985 = vmatmul.mubr.f32.gmra.mrb[0].mxu0 %v2779
      %v2986 = vpop.f32.mrb[0].mxu0
      %v2987 = vadd.f32 0.0, %v2986
      %v2988 = vpop.f32.mrb[0].mxu0
      %2989 = vmatprep.mubr.f32.mxu0 0.0
      %2990 = vmatmul.mubr.f32.gmra.mrb[0].mxu0 %v2780
      %v2991 = vpop.f32.mrb[0].mxu0
      %v2992 = vadd.f32 0.0, %v2991
      %v2993 = vpop.f32.mrb[0].mxu0
      %2994 = vmatprep.mubr.f32.mxu0 0.0
      %2995 = vmatmul.mubr.f32.gmra.mrb[0].mxu0 %v2781
      %v2996 = vpop.f32.mrb[0].mxu0
      %v2997 = vadd.f32 0.0, %v2996
      %v2998 = vpop.f32.mrb[0].mxu0
      %2999 = vmatprep.mubr.f32.mxu0 0.0
      %3000 = vmatmul.mubr.f32.gmra.mrb[0].mxu0 %v2782
      %v3001 = vpop.f32.mrb[0].mxu0
      %v3002 = vadd.f32 0.0, %v3001
      %v3003 = vpop.f32.mrb[0].mxu0
      %3004 = vmatprep.mubr.f32.mxu0 0.0
      %3005 = vmatmul.mubr.f32.gmra.mrb[0].mxu0 %v2783
      %v3006 = vpop.f32.mrb[0].mxu0
      %v3007 = vadd.f32 0.0, %v3006
      %v3008 = vpop.f32.mrb[0].mxu0
      %3009 = vmatprep.mubr.f32.mxu0 0.0
      %3010 = vmatmul.mubr.f32.gmra.mrb[0].mxu0 %v2784
      %v3011 = vpop.f32.mrb[0].mxu0
      %v3012 = vadd.f32 0.0, %v3011
      %v3013 = vpop.f32.mrb[0].mxu0
      %3014 = vmatprep.mubr.f32.mxu0 0.0
      %3015 = vmatmul.mubr.f32.gmra.mrb[0].mxu0 %v2785
      %v3016 = vpop.f32.mrb[0].mxu0
      %v3017 = vadd.f32 0.0, %v3016
      %v3018 = vpop.f32.mrb[0].mxu0
      %3019 = vmatprep.mubr.f32.mxu0 0.0
      %3020 = vmatmul.mubr.f32.gmra.mrb[0].mxu0 %v2786
      %v3021 = vpop.f32.mrb[0].mxu0
      %v3022 = vadd.f32 0.0, %v3021
      %v3023 = vpop.f32.mrb[0].mxu0
      %3024 = vmatprep.mubr.f32.mxu0 0.0
      %3025 = vmatmul.mubr.f32.gmra.mrb[0].mxu0 %v2787
      %v3026 = vpop.f32.mrb[0].mxu0
      %v3027 = vadd.f32 0.0, %v3026
      %v3028 = vpop.f32.mrb[0].mxu0
      %3029 = vdwg.mxu0
      %v3030 = vadd.f32 %v2722, %v2872
      %v3031 = vadd.f32 %v2723, %v2877
      %v3032 = vadd.f32 %v2724, %v2882
      %v3033 = vadd.f32 %v2725, %v2887
      %v3034 = vadd.f32 %v2726, %v2892
      %v3035 = vadd.f32 %v2727, %v2897
      %v3036 = vadd.f32 %v2728, %v2902
      %v3037 = vadd.f32 %v2729, %v2907
      %v3038 = vadd.f32 %v2730, %v2912
      %v3039 = vadd.f32 %v2731, %v2917
      %v3040 = vadd.f32 %v2732, %v2922
      %v3041 = vadd.f32 %v2733, %v2927
      %v3042 = vadd.f32 %v2734, %v2932
      %v3043 = vadd.f32 %v2735, %v2937
      %v3044 = vadd.f32 %v2736, %v2942
      %v3045 = vadd.f32 %v2737, %v2947
      %v3046 = vadd.f32 %v2738, %v2952
      %v3047 = vadd.f32 %v2739, %v2957
      %v3048 = vadd.f32 %v2740, %v2962
      %v3049 = vadd.f32 %v2741, %v2967
      %v3050 = vadd.f32 %v2742, %v2972
      %v3051 = vadd.f32 %v2743, %v2977
      %v3052 = vadd.f32 %v2744, %v2982
      %v3053 = vadd.f32 %v2745, %v2987
      %v3054 = vadd.f32 %v2746, %v2992
      %v3055 = vadd.f32 %v2747, %v2997
      %v3056 = vadd.f32 %v2748, %v3002
      %v3057 = vadd.f32 %v2749, %v3007
      %v3058 = vadd.f32 %v2750, %v3012
      %v3059 = vadd.f32 %v2751, %v3017
      %v3060 = vadd.f32 %v2752, %v3022
      %v3061 = vadd.f32 %v2753, %v3027
      %s3062 = scalar_lea.vmem %s3, 896
      %v3063 = vld [vmem:[%s3062] sm:$0xff]
      %v3064 = vld [vmem:[%s3062 + $0x8] sm:$0xff]
      %v3065 = vld [vmem:[%s3062 + $0x10] sm:$0xff]
      %v3066 = vld [vmem:[%s3062 + $0x18] sm:$0xff]
      %v3067 = vld [vmem:[%s3062 + $0x20] sm:$0xff]
      %v3068 = vld [vmem:[%s3062 + $0x28] sm:$0xff]
      %v3069 = vld [vmem:[%s3062 + $0x30] sm:$0xff]
      %v3070 = vld [vmem:[%s3062 + $0x38] sm:$0xff]
      %v3071 = vld [vmem:[%s3062 + $0x40] sm:$0xff]
      %v3072 = vld [vmem:[%s3062 + $0x48] sm:$0xff]
      %v3073 = vld [vmem:[%s3062 + $0x50] sm:$0xff]
      %v3074 = vld [vmem:[%s3062 + $0x58] sm:$0xff]
      %v3075 = vld [vmem:[%s3062 + $0x60] sm:$0xff]
      %v3076 = vld [vmem:[%s3062 + $0x68] sm:$0xff]
      %v3077 = vld [vmem:[%s3062 + $0x70] sm:$0xff]
      %v3078 = vld [vmem:[%s3062 + $0x78] sm:$0xff]
      %3079 = vmatprep.subr.mxu0 0.0
      %3080 = vmatpush1.msra.mxu0 %v3063
      %3081 = vmatprep.subr.mxu0 0.0
      %3082 = vmatpush1.msra.mxu0 %v3064
      %3083 = vmatprep.subr.mxu0 0.0
      %3084 = vmatpush1.msra.mxu0 %v3065
      %3085 = vmatprep.subr.mxu0 0.0
      %3086 = vmatpush1.msra.mxu0 %v3066
      %3087 = vmatprep.subr.mxu0 0.0
      %3088 = vmatpush1.msra.mxu0 %v3067
      %3089 = vmatprep.subr.mxu0 0.0
      %3090 = vmatpush1.msra.mxu0 %v3068
      %3091 = vmatprep.subr.mxu0 0.0
      %3092 = vmatpush1.msra.mxu0 %v3069
      %3093 = vmatprep.subr.mxu0 0.0
      %3094 = vmatpush1.msra.mxu0 %v3070
      %3095 = vmatprep.subr.mxu0 0.0
      %3096 = vmatpush1.msra.mxu0 %v3071
      %3097 = vmatprep.subr.mxu0 0.0
      %3098 = vmatpush1.msra.mxu0 %v3072
      %3099 = vmatprep.subr.mxu0 0.0
      %3100 = vmatpush1.msra.mxu0 %v3073
      %3101 = vmatprep.subr.mxu0 0.0
      %3102 = vmatpush1.msra.mxu0 %v3074
      %3103 = vmatprep.subr.mxu0 0.0
      %3104 = vmatpush1.msra.mxu0 %v3075
      %3105 = vmatprep.subr.mxu0 0.0
      %3106 = vmatpush1.msra.mxu0 %v3076
      %3107 = vmatprep.subr.mxu0 0.0
      %3108 = vmatpush1.msra.mxu0 %v3077
      %3109 = vmatprep.subr.mxu0 0.0
      %3110 = vmatpush1.msra.mxu0 %v3078
      %3111 = vmatprep.subr.mxu0 0.0
      %3112 = vmatpush1.msra.mxu0 0.0
      %3113 = vmatprep.subr.mxu0 0.0
      %3114 = vmatpush1.msra.mxu0 0.0
      %3115 = vmatprep.subr.mxu0 0.0
      %3116 = vmatpush1.msra.mxu0 0.0
      %3117 = vmatprep.subr.mxu0 0.0
      %3118 = vmatpush1.msra.mxu0 0.0
      %3119 = vmatprep.subr.mxu0 0.0
      %3120 = vmatpush1.msra.mxu0 0.0
      %3121 = vmatprep.subr.mxu0 0.0
      %3122 = vmatpush1.msra.mxu0 0.0
      %3123 = vmatprep.subr.mxu0 0.0
      %3124 = vmatpush1.msra.mxu0 0.0
      %3125 = vmatprep.subr.mxu0 0.0
      %3126 = vmatpush1.msra.mxu0 0.0
      %3127 = vmatprep.subr.mxu0 0.0
      %3128 = vmatpush1.msra.mxu0 0.0
      %3129 = vmatprep.subr.mxu0 0.0
      %3130 = vmatpush1.msra.mxu0 0.0
      %3131 = vmatprep.subr.mxu0 0.0
      %3132 = vmatpush1.msra.mxu0 0.0
      %3133 = vmatprep.subr.mxu0 0.0
      %3134 = vmatpush1.msra.mxu0 0.0
      %3135 = vmatprep.subr.mxu0 0.0
      %3136 = vmatpush1.msra.mxu0 0.0
      %3137 = vmatprep.subr.mxu0 0.0
      %3138 = vmatpush1.msra.mxu0 0.0
      %3139 = vmatprep.subr.mxu0 0.0
      %3140 = vmatpush1.msra.mxu0 0.0
      %3141 = vmatprep.subr.mxu0 0.0
      %3142 = vmatpush1.msra.mxu0 0.0
      %3143 = vmatprep.mubr.f32.mxu0 0.0
      %3144 = vmatmul.mubr.f32.gmra.mrb[0].mxu0 %v405
      %v3145 = vpop.f32.mrb[0].mxu0
      %v3146 = vadd.f32 0.0, %v3145
      %v3147 = vpop.f32.mrb[0].mxu0
      %3148 = vmatprep.mubr.f32.mxu0 0.0
      %3149 = vmatmul.mubr.f32.gmra.mrb[0].mxu0 %v406
      %v3150 = vpop.f32.mrb[0].mxu0
      %v3151 = vadd.f32 0.0, %v3150
      %v3152 = vpop.f32.mrb[0].mxu0
      %3153 = vmatprep.mubr.f32.mxu0 0.0
      %3154 = vmatmul.mubr.f32.gmra.mrb[0].mxu0 %v407
      %v3155 = vpop.f32.mrb[0].mxu0
      %v3156 = vadd.f32 0.0, %v3155
      %v3157 = vpop.f32.mrb[0].mxu0
      %3158 = vmatprep.mubr.f32.mxu0 0.0
      %3159 = vmatmul.mubr.f32.gmra.mrb[0].mxu0 %v408
      %v3160 = vpop.f32.mrb[0].mxu0
      %v3161 = vadd.f32 0.0, %v3160
      %v3162 = vpop.f32.mrb[0].mxu0
      %3163 = vmatprep.mubr.f32.mxu0 0.0
      %3164 = vmatmul.mubr.f32.gmra.mrb[0].mxu0 %v409
      %v3165 = vpop.f32.mrb[0].mxu0
      %v3166 = vadd.f32 0.0, %v3165
      %v3167 = vpop.f32.mrb[0].mxu0
      %3168 = vmatprep.mubr.f32.mxu0 0.0
      %3169 = vmatmul.mubr.f32.gmra.mrb[0].mxu0 %v410
      %v3170 = vpop.f32.mrb[0].mxu0
      %v3171 = vadd.f32 0.0, %v3170
      %v3172 = vpop.f32.mrb[0].mxu0
      %3173 = vmatprep.mubr.f32.mxu0 0.0
      %3174 = vmatmul.mubr.f32.gmra.mrb[0].mxu0 %v411
      %v3175 = vpop.f32.mrb[0].mxu0
      %v3176 = vadd.f32 0.0, %v3175
      %v3177 = vpop.f32.mrb[0].mxu0
      %3178 = vmatprep.mubr.f32.mxu0 0.0
      %3179 = vmatmul.mubr.f32.gmra.mrb[0].mxu0 %v412
      %v3180 = vpop.f32.mrb[0].mxu0
      %v3181 = vadd.f32 0.0, %v3180
      %v3182 = vpop.f32.mrb[0].mxu0
      %3183 = vmatprep.mubr.f32.mxu0 0.0
      %3184 = vmatmul.mubr.f32.gmra.mrb[0].mxu0 %v413
      %v3185 = vpop.f32.mrb[0].mxu0
      %v3186 = vadd.f32 0.0, %v3185
      %v3187 = vpop.f32.mrb[0].mxu0
      %3188 = vmatprep.mubr.f32.mxu0 0.0
      %3189 = vmatmul.mubr.f32.gmra.mrb[0].mxu0 %v414
      %v3190 = vpop.f32.mrb[0].mxu0
      %v3191 = vadd.f32 0.0, %v3190
      %v3192 = vpop.f32.mrb[0].mxu0
      %3193 = vmatprep.mubr.f32.mxu0 0.0
      %3194 = vmatmul.mubr.f32.gmra.mrb[0].mxu0 %v415
      %v3195 = vpop.f32.mrb[0].mxu0
      %v3196 = vadd.f32 0.0, %v3195
      %v3197 = vpop.f32.mrb[0].mxu0
      %3198 = vmatprep.mubr.f32.mxu0 0.0
      %3199 = vmatmul.mubr.f32.gmra.mrb[0].mxu0 %v416
      %v3200 = vpop.f32.mrb[0].mxu0
      %v3201 = vadd.f32 0.0, %v3200
      %v3202 = vpop.f32.mrb[0].mxu0
      %3203 = vmatprep.mubr.f32.mxu0 0.0
      %3204 = vmatmul.mubr.f32.gmra.mrb[0].mxu0 %v417
      %v3205 = vpop.f32.mrb[0].mxu0
      %v3206 = vadd.f32 0.0, %v3205
      %v3207 = vpop.f32.mrb[0].mxu0
      %3208 = vmatprep.mubr.f32.mxu0 0.0
      %3209 = vmatmul.mubr.f32.gmra.mrb[0].mxu0 %v418
      %v3210 = vpop.f32.mrb[0].mxu0
      %v3211 = vadd.f32 0.0, %v3210
      %v3212 = vpop.f32.mrb[0].mxu0
      %3213 = vmatprep.mubr.f32.mxu0 0.0
      %3214 = vmatmul.mubr.f32.gmra.mrb[0].mxu0 %v419
      %v3215 = vpop.f32.mrb[0].mxu0
      %v3216 = vadd.f32 0.0, %v3215
      %v3217 = vpop.f32.mrb[0].mxu0
      %3218 = vmatprep.mubr.f32.mxu0 0.0
      %3219 = vmatmul.mubr.f32.gmra.mrb[0].mxu0 %v420
      %v3220 = vpop.f32.mrb[0].mxu0
      %v3221 = vadd.f32 0.0, %v3220
      %v3222 = vpop.f32.mrb[0].mxu0
      %3223 = vmatprep.mubr.f32.mxu0 0.0
      %3224 = vmatmul.mubr.f32.gmra.mrb[0].mxu0 %v421
      %v3225 = vpop.f32.mrb[0].mxu0
      %v3226 = vadd.f32 0.0, %v3225
      %v3227 = vpop.f32.mrb[0].mxu0
      %3228 = vmatprep.mubr.f32.mxu0 0.0
      %3229 = vmatmul.mubr.f32.gmra.mrb[0].mxu0 %v422
      %v3230 = vpop.f32.mrb[0].mxu0
      %v3231 = vadd.f32 0.0, %v3230
      %v3232 = vpop.f32.mrb[0].mxu0
      %3233 = vmatprep.mubr.f32.mxu0 0.0
      %3234 = vmatmul.mubr.f32.gmra.mrb[0].mxu0 %v423
      %v3235 = vpop.f32.mrb[0].mxu0
      %v3236 = vadd.f32 0.0, %v3235
      %v3237 = vpop.f32.mrb[0].mxu0
      %3238 = vmatprep.mubr.f32.mxu0 0.0
      %3239 = vmatmul.mubr.f32.gmra.mrb[0].mxu0 %v424
      %v3240 = vpop.f32.mrb[0].mxu0
      %v3241 = vadd.f32 0.0, %v3240
      %v3242 = vpop.f32.mrb[0].mxu0
      %3243 = vmatprep.mubr.f32.mxu0 0.0
      %3244 = vmatmul.mubr.f32.gmra.mrb[0].mxu0 %v425
      %v3245 = vpop.f32.mrb[0].mxu0
      %v3246 = vadd.f32 0.0, %v3245
      %v3247 = vpop.f32.mrb[0].mxu0
      %3248 = vmatprep.mubr.f32.mxu0 0.0
      %3249 = vmatmul.mubr.f32.gmra.mrb[0].mxu0 %v426
      %v3250 = vpop.f32.mrb[0].mxu0
      %v3251 = vadd.f32 0.0, %v3250
      %v3252 = vpop.f32.mrb[0].mxu0
      %3253 = vmatprep.mubr.f32.mxu0 0.0
      %3254 = vmatmul.mubr.f32.gmra.mrb[0].mxu0 %v427
      %v3255 = vpop.f32.mrb[0].mxu0
      %v3256 = vadd.f32 0.0, %v3255
      %v3257 = vpop.f32.mrb[0].mxu0
      %3258 = vmatprep.mubr.f32.mxu0 0.0
      %3259 = vmatmul.mubr.f32.gmra.mrb[0].mxu0 %v428
      %v3260 = vpop.f32.mrb[0].mxu0
      %v3261 = vadd.f32 0.0, %v3260
      %v3262 = vpop.f32.mrb[0].mxu0
      %3263 = vmatprep.mubr.f32.mxu0 0.0
      %3264 = vmatmul.mubr.f32.gmra.mrb[0].mxu0 %v429
      %v3265 = vpop.f32.mrb[0].mxu0
      %v3266 = vadd.f32 0.0, %v3265
      %v3267 = vpop.f32.mrb[0].mxu0
      %3268 = vmatprep.mubr.f32.mxu0 0.0
      %3269 = vmatmul.mubr.f32.gmra.mrb[0].mxu0 %v430
      %v3270 = vpop.f32.mrb[0].mxu0
      %v3271 = vadd.f32 0.0, %v3270
      %v3272 = vpop.f32.mrb[0].mxu0
      %3273 = vmatprep.mubr.f32.mxu0 0.0
      %3274 = vmatmul.mubr.f32.gmra.mrb[0].mxu0 %v431
      %v3275 = vpop.f32.mrb[0].mxu0
      %v3276 = vadd.f32 0.0, %v3275
      %v3277 = vpop.f32.mrb[0].mxu0
      %3278 = vmatprep.mubr.f32.mxu0 0.0
      %3279 = vmatmul.mubr.f32.gmra.mrb[0].mxu0 %v432
      %v3280 = vpop.f32.mrb[0].mxu0
      %v3281 = vadd.f32 0.0, %v3280
      %v3282 = vpop.f32.mrb[0].mxu0
      %3283 = vmatprep.mubr.f32.mxu0 0.0
      %3284 = vmatmul.mubr.f32.gmra.mrb[0].mxu0 %v433
      %v3285 = vpop.f32.mrb[0].mxu0
      %v3286 = vadd.f32 0.0, %v3285
      %v3287 = vpop.f32.mrb[0].mxu0
      %3288 = vmatprep.mubr.f32.mxu0 0.0
      %3289 = vmatmul.mubr.f32.gmra.mrb[0].mxu0 %v434
      %v3290 = vpop.f32.mrb[0].mxu0
      %v3291 = vadd.f32 0.0, %v3290
      %v3292 = vpop.f32.mrb[0].mxu0
      %3293 = vmatprep.mubr.f32.mxu0 0.0
      %3294 = vmatmul.mubr.f32.gmra.mrb[0].mxu0 0.0
      %v3295 = vpop.f32.mrb[0].mxu0
      %v3296 = vadd.f32 0.0, %v3295
      %v3297 = vpop.f32.mrb[0].mxu0
      %3298 = vmatprep.mubr.f32.mxu0 0.0
      %3299 = vmatmul.mubr.f32.gmra.mrb[0].mxu0 0.0
      %v3300 = vpop.f32.mrb[0].mxu0
      %v3301 = vadd.f32 0.0, %v3300
      %v3302 = vpop.f32.mrb[0].mxu0
      %3303 = vdwg.mxu0
      %v3304 = vadd.f32 %v3030, %v3146
      %v3305 = vadd.f32 %v3031, %v3151
      %v3306 = vadd.f32 %v3032, %v3156
      %v3307 = vadd.f32 %v3033, %v3161
      %v3308 = vadd.f32 %v3034, %v3166
      %v3309 = vadd.f32 %v3035, %v3171
      %v3310 = vadd.f32 %v3036, %v3176
      %v3311 = vadd.f32 %v3037, %v3181
      %v3312 = vadd.f32 %v3038, %v3186
      %v3313 = vadd.f32 %v3039, %v3191
      %v3314 = vadd.f32 %v3040, %v3196
      %v3315 = vadd.f32 %v3041, %v3201
      %v3316 = vadd.f32 %v3042, %v3206
      %v3317 = vadd.f32 %v3043, %v3211
      %v3318 = vadd.f32 %v3044, %v3216
      %v3319 = vadd.f32 %v3045, %v3221
      %v3320 = vadd.f32 %v3046, %v3226
      %v3321 = vadd.f32 %v3047, %v3231
      %v3322 = vadd.f32 %v3048, %v3236
      %v3323 = vadd.f32 %v3049, %v3241
      %v3324 = vadd.f32 %v3050, %v3246
      %v3325 = vadd.f32 %v3051, %v3251
      %v3326 = vadd.f32 %v3052, %v3256
      %v3327 = vadd.f32 %v3053, %v3261
      %v3328 = vadd.f32 %v3054, %v3266
      %v3329 = vadd.f32 %v3055, %v3271
      %v3330 = vadd.f32 %v3056, %v3276
      %v3331 = vadd.f32 %v3057, %v3281
      %v3332 = vadd.f32 %v3058, %v3286
      %v3333 = vadd.f32 %v3059, %v3291
      %v3334 = vadd.f32 %v3060, %v3296
      %v3335 = vadd.f32 %v3061, %v3301
      %v3336 = vmul.f32 %v1271, %v1393
      %v3337 = vmul.f32 %v1273, %v1398
      %v3338 = vmul.f32 %v1275, %v1403
      %v3339 = vmul.f32 %v1277, %v1408
      %v3340 = vmul.f32 %v1279, %v1413
      %v3341 = vmul.f32 %v1281, %v1418
      %v3342 = vmul.f32 %v1283, %v1423
      %v3343 = vmul.f32 %v1285, %v1428
      %v3344 = vmul.f32 %v1287, %v1433
      %v3345 = vmul.f32 %v1289, %v1438
      %v3346 = vmul.f32 %v1291, %v1443
      %v3347 = vmul.f32 %v1293, %v1448
      %v3348 = vmul.f32 %v1295, %v1453
      %v3349 = vmul.f32 %v1297, %v1458
      %v3350 = vmul.f32 %v1299, %v1463
      %v3351 = vmul.f32 %v1301, %v1468
      %v3352 = vmul.f32 %v1303, %v1473
      %v3353 = vmul.f32 %v1305, %v1478
      %v3354 = vmul.f32 %v1307, %v1483
      %v3355 = vmul.f32 %v1309, %v1488
      %v3356 = vmul.f32 %v1311, %v1493
      %v3357 = vmul.f32 %v1313, %v1498
      %v3358 = vmul.f32 %v1315, %v1503
      %v3359 = vmul.f32 %v1317, %v1508
      %v3360 = vmul.f32 %v1319, %v1513
      %v3361 = vmul.f32 %v1321, %v1518
      %v3362 = vmul.f32 %v1323, %v1523
      %v3363 = vmul.f32 %v1325, %v1528
      %v3364 = vmul.f32 %v2444, %v1533
      %v3365 = vmul.f32 %v2447, %v1538
      %v3366 = vmul.f32 %v1543, 0.0
      %v3367 = vmul.f32 %v1548, 0.0
      %s3368 = scalar_lea.vmem %s3, 1024
      %v3369 = vld [vmem:[%s3368] sm:$0xff]
      %v3370 = vld [vmem:[%s3368 + $0x8] sm:$0xff]
      %v3371 = vld [vmem:[%s3368 + $0x10] sm:$0xff]
      %v3372 = vld [vmem:[%s3368 + $0x18] sm:$0xff]
      %v3373 = vld [vmem:[%s3368 + $0x20] sm:$0xff]
      %v3374 = vld [vmem:[%s3368 + $0x28] sm:$0xff]
      %v3375 = vld [vmem:[%s3368 + $0x30] sm:$0xff]
      %v3376 = vld [vmem:[%s3368 + $0x38] sm:$0xff]
      %v3377 = vld [vmem:[%s3368 + $0x40] sm:$0xff]
      %v3378 = vld [vmem:[%s3368 + $0x48] sm:$0xff]
      %v3379 = vld [vmem:[%s3368 + $0x50] sm:$0xff]
      %v3380 = vld [vmem:[%s3368 + $0x58] sm:$0xff]
      %v3381 = vld [vmem:[%s3368 + $0x60] sm:$0xff]
      %v3382 = vld [vmem:[%s3368 + $0x68] sm:$0xff]
      %v3383 = vld [vmem:[%s3368 + $0x70] sm:$0xff]
      %v3384 = vld [vmem:[%s3368 + $0x78] sm:$0xff]
      %3385 = vmatprep.subr.mxu0 0.0
      %3386 = vmatpush1.msra.mxu0 %v3369
      %3387 = vmatprep.subr.mxu0 0.0
      %3388 = vmatpush1.msra.mxu0 %v3370
      %3389 = vmatprep.subr.mxu0 0.0
      %3390 = vmatpush1.msra.mxu0 %v3371
      %3391 = vmatprep.subr.mxu0 0.0
      %3392 = vmatpush1.msra.mxu0 %v3372
      %3393 = vmatprep.subr.mxu0 0.0
      %3394 = vmatpush1.msra.mxu0 %v3373
      %3395 = vmatprep.subr.mxu0 0.0
      %3396 = vmatpush1.msra.mxu0 %v3374
      %3397 = vmatprep.subr.mxu0 0.0
      %3398 = vmatpush1.msra.mxu0 %v3375
      %3399 = vmatprep.subr.mxu0 0.0
      %3400 = vmatpush1.msra.mxu0 %v3376
      %3401 = vmatprep.subr.mxu0 0.0
      %3402 = vmatpush1.msra.mxu0 %v3377
      %3403 = vmatprep.subr.mxu0 0.0
      %3404 = vmatpush1.msra.mxu0 %v3378
      %3405 = vmatprep.subr.mxu0 0.0
      %3406 = vmatpush1.msra.mxu0 %v3379
      %3407 = vmatprep.subr.mxu0 0.0
      %3408 = vmatpush1.msra.mxu0 %v3380
      %3409 = vmatprep.subr.mxu0 0.0
      %3410 = vmatpush1.msra.mxu0 %v3381
      %3411 = vmatprep.subr.mxu0 0.0
      %3412 = vmatpush1.msra.mxu0 %v3382
      %3413 = vmatprep.subr.mxu0 0.0
      %3414 = vmatpush1.msra.mxu0 %v3383
      %3415 = vmatprep.subr.mxu0 0.0
      %3416 = vmatpush1.msra.mxu0 %v3384
      %3417 = vmatprep.subr.mxu0 0.0
      %3418 = vmatpush1.msra.mxu0 0.0
      %3419 = vmatprep.subr.mxu0 0.0
      %3420 = vmatpush1.msra.mxu0 0.0
      %3421 = vmatprep.subr.mxu0 0.0
      %3422 = vmatpush1.msra.mxu0 0.0
      %3423 = vmatprep.subr.mxu0 0.0
      %3424 = vmatpush1.msra.mxu0 0.0
      %3425 = vmatprep.subr.mxu0 0.0
      %3426 = vmatpush1.msra.mxu0 0.0
      %3427 = vmatprep.subr.mxu0 0.0
      %3428 = vmatpush1.msra.mxu0 0.0
      %3429 = vmatprep.subr.mxu0 0.0
      %3430 = vmatpush1.msra.mxu0 0.0
      %3431 = vmatprep.subr.mxu0 0.0
      %3432 = vmatpush1.msra.mxu0 0.0
      %3433 = vmatprep.subr.mxu0 0.0
      %3434 = vmatpush1.msra.mxu0 0.0
      %3435 = vmatprep.subr.mxu0 0.0
      %3436 = vmatpush1.msra.mxu0 0.0
      %3437 = vmatprep.subr.mxu0 0.0
      %3438 = vmatpush1.msra.mxu0 0.0
      %3439 = vmatprep.subr.mxu0 0.0
      %3440 = vmatpush1.msra.mxu0 0.0
      %3441 = vmatprep.subr.mxu0 0.0
      %3442 = vmatpush1.msra.mxu0 0.0
      %3443 = vmatprep.subr.mxu0 0.0
      %3444 = vmatpush1.msra.mxu0 0.0
      %3445 = vmatprep.subr.mxu0 0.0
      %3446 = vmatpush1.msra.mxu0 0.0
      %3447 = vmatprep.subr.mxu0 0.0
      %3448 = vmatpush1.msra.mxu0 0.0
      %3449 = vmatprep.mubr.f32.mxu0 0.0
      %3450 = vmatmul.mubr.f32.gmra.mrb[0].mxu0 %v3336
      %v3451 = vpop.f32.mrb[0].mxu0
      %v3452 = vadd.f32 0.0, %v3451
      %v3453 = vpop.f32.mrb[0].mxu0
      %3454 = vmatprep.mubr.f32.mxu0 0.0
      %3455 = vmatmul.mubr.f32.gmra.mrb[0].mxu0 %v3337
      %v3456 = vpop.f32.mrb[0].mxu0
      %v3457 = vadd.f32 0.0, %v3456
      %v3458 = vpop.f32.mrb[0].mxu0
      %3459 = vmatprep.mubr.f32.mxu0 0.0
      %3460 = vmatmul.mubr.f32.gmra.mrb[0].mxu0 %v3338
      %v3461 = vpop.f32.mrb[0].mxu0
      %v3462 = vadd.f32 0.0, %v3461
      %v3463 = vpop.f32.mrb[0].mxu0
      %3464 = vmatprep.mubr.f32.mxu0 0.0
      %3465 = vmatmul.mubr.f32.gmra.mrb[0].mxu0 %v3339
      %v3466 = vpop.f32.mrb[0].mxu0
      %v3467 = vadd.f32 0.0, %v3466
      %v3468 = vpop.f32.mrb[0].mxu0
      %3469 = vmatprep.mubr.f32.mxu0 0.0
      %3470 = vmatmul.mubr.f32.gmra.mrb[0].mxu0 %v3340
      %v3471 = vpop.f32.mrb[0].mxu0
      %v3472 = vadd.f32 0.0, %v3471
      %v3473 = vpop.f32.mrb[0].mxu0
      %3474 = vmatprep.mubr.f32.mxu0 0.0
      %3475 = vmatmul.mubr.f32.gmra.mrb[0].mxu0 %v3341
      %v3476 = vpop.f32.mrb[0].mxu0
      %v3477 = vadd.f32 0.0, %v3476
      %v3478 = vpop.f32.mrb[0].mxu0
      %3479 = vmatprep.mubr.f32.mxu0 0.0
      %3480 = vmatmul.mubr.f32.gmra.mrb[0].mxu0 %v3342
      %v3481 = vpop.f32.mrb[0].mxu0
      %v3482 = vadd.f32 0.0, %v3481
      %v3483 = vpop.f32.mrb[0].mxu0
      %3484 = vmatprep.mubr.f32.mxu0 0.0
      %3485 = vmatmul.mubr.f32.gmra.mrb[0].mxu0 %v3343
      %v3486 = vpop.f32.mrb[0].mxu0
      %v3487 = vadd.f32 0.0, %v3486
      %v3488 = vpop.f32.mrb[0].mxu0
      %3489 = vmatprep.mubr.f32.mxu0 0.0
      %3490 = vmatmul.mubr.f32.gmra.mrb[0].mxu0 %v3344
      %v3491 = vpop.f32.mrb[0].mxu0
      %v3492 = vadd.f32 0.0, %v3491
      %v3493 = vpop.f32.mrb[0].mxu0
      %3494 = vmatprep.mubr.f32.mxu0 0.0
      %3495 = vmatmul.mubr.f32.gmra.mrb[0].mxu0 %v3345
      %v3496 = vpop.f32.mrb[0].mxu0
      %v3497 = vadd.f32 0.0, %v3496
      %v3498 = vpop.f32.mrb[0].mxu0
      %3499 = vmatprep.mubr.f32.mxu0 0.0
      %3500 = vmatmul.mubr.f32.gmra.mrb[0].mxu0 %v3346
      %v3501 = vpop.f32.mrb[0].mxu0
      %v3502 = vadd.f32 0.0, %v3501
      %v3503 = vpop.f32.mrb[0].mxu0
      %3504 = vmatprep.mubr.f32.mxu0 0.0
      %3505 = vmatmul.mubr.f32.gmra.mrb[0].mxu0 %v3347
      %v3506 = vpop.f32.mrb[0].mxu0
      %v3507 = vadd.f32 0.0, %v3506
      %v3508 = vpop.f32.mrb[0].mxu0
      %3509 = vmatprep.mubr.f32.mxu0 0.0
      %3510 = vmatmul.mubr.f32.gmra.mrb[0].mxu0 %v3348
      %v3511 = vpop.f32.mrb[0].mxu0
      %v3512 = vadd.f32 0.0, %v3511
      %v3513 = vpop.f32.mrb[0].mxu0
      %3514 = vmatprep.mubr.f32.mxu0 0.0
      %3515 = vmatmul.mubr.f32.gmra.mrb[0].mxu0 %v3349
      %v3516 = vpop.f32.mrb[0].mxu0
      %v3517 = vadd.f32 0.0, %v3516
      %v3518 = vpop.f32.mrb[0].mxu0
      %3519 = vmatprep.mubr.f32.mxu0 0.0
      %3520 = vmatmul.mubr.f32.gmra.mrb[0].mxu0 %v3350
      %v3521 = vpop.f32.mrb[0].mxu0
      %v3522 = vadd.f32 0.0, %v3521
      %v3523 = vpop.f32.mrb[0].mxu0
      %3524 = vmatprep.mubr.f32.mxu0 0.0
      %3525 = vmatmul.mubr.f32.gmra.mrb[0].mxu0 %v3351
      %v3526 = vpop.f32.mrb[0].mxu0
      %v3527 = vadd.f32 0.0, %v3526
      %v3528 = vpop.f32.mrb[0].mxu0
      %3529 = vmatprep.mubr.f32.mxu0 0.0
      %3530 = vmatmul.mubr.f32.gmra.mrb[0].mxu0 %v3352
      %v3531 = vpop.f32.mrb[0].mxu0
      %v3532 = vadd.f32 0.0, %v3531
      %v3533 = vpop.f32.mrb[0].mxu0
      %3534 = vmatprep.mubr.f32.mxu0 0.0
      %3535 = vmatmul.mubr.f32.gmra.mrb[0].mxu0 %v3353
      %v3536 = vpop.f32.mrb[0].mxu0
      %v3537 = vadd.f32 0.0, %v3536
      %v3538 = vpop.f32.mrb[0].mxu0
      %3539 = vmatprep.mubr.f32.mxu0 0.0
      %3540 = vmatmul.mubr.f32.gmra.mrb[0].mxu0 %v3354
      %v3541 = vpop.f32.mrb[0].mxu0
      %v3542 = vadd.f32 0.0, %v3541
      %v3543 = vpop.f32.mrb[0].mxu0
      %3544 = vmatprep.mubr.f32.mxu0 0.0
      %3545 = vmatmul.mubr.f32.gmra.mrb[0].mxu0 %v3355
      %v3546 = vpop.f32.mrb[0].mxu0
      %v3547 = vadd.f32 0.0, %v3546
      %v3548 = vpop.f32.mrb[0].mxu0
      %3549 = vmatprep.mubr.f32.mxu0 0.0
      %3550 = vmatmul.mubr.f32.gmra.mrb[0].mxu0 %v3356
      %v3551 = vpop.f32.mrb[0].mxu0
      %v3552 = vadd.f32 0.0, %v3551
      %v3553 = vpop.f32.mrb[0].mxu0
      %3554 = vmatprep.mubr.f32.mxu0 0.0
      %3555 = vmatmul.mubr.f32.gmra.mrb[0].mxu0 %v3357
      %v3556 = vpop.f32.mrb[0].mxu0
      %v3557 = vadd.f32 0.0, %v3556
      %v3558 = vpop.f32.mrb[0].mxu0
      %3559 = vmatprep.mubr.f32.mxu0 0.0
      %3560 = vmatmul.mubr.f32.gmra.mrb[0].mxu0 %v3358
      %v3561 = vpop.f32.mrb[0].mxu0
      %v3562 = vadd.f32 0.0, %v3561
      %v3563 = vpop.f32.mrb[0].mxu0
      %3564 = vmatprep.mubr.f32.mxu0 0.0
      %3565 = vmatmul.mubr.f32.gmra.mrb[0].mxu0 %v3359
      %v3566 = vpop.f32.mrb[0].mxu0
      %v3567 = vadd.f32 0.0, %v3566
      %v3568 = vpop.f32.mrb[0].mxu0
      %3569 = vmatprep.mubr.f32.mxu0 0.0
      %3570 = vmatmul.mubr.f32.gmra.mrb[0].mxu0 %v3360
      %v3571 = vpop.f32.mrb[0].mxu0
      %v3572 = vadd.f32 0.0, %v3571
      %v3573 = vpop.f32.mrb[0].mxu0
      %3574 = vmatprep.mubr.f32.mxu0 0.0
      %3575 = vmatmul.mubr.f32.gmra.mrb[0].mxu0 %v3361
      %v3576 = vpop.f32.mrb[0].mxu0
      %v3577 = vadd.f32 0.0, %v3576
      %v3578 = vpop.f32.mrb[0].mxu0
      %3579 = vmatprep.mubr.f32.mxu0 0.0
      %3580 = vmatmul.mubr.f32.gmra.mrb[0].mxu0 %v3362
      %v3581 = vpop.f32.mrb[0].mxu0
      %v3582 = vadd.f32 0.0, %v3581
      %v3583 = vpop.f32.mrb[0].mxu0
      %3584 = vmatprep.mubr.f32.mxu0 0.0
      %3585 = vmatmul.mubr.f32.gmra.mrb[0].mxu0 %v3363
      %v3586 = vpop.f32.mrb[0].mxu0
      %v3587 = vadd.f32 0.0, %v3586
      %v3588 = vpop.f32.mrb[0].mxu0
      %3589 = vmatprep.mubr.f32.mxu0 0.0
      %3590 = vmatmul.mubr.f32.gmra.mrb[0].mxu0 %v3364
      %v3591 = vpop.f32.mrb[0].mxu0
      %v3592 = vadd.f32 0.0, %v3591
      %v3593 = vpop.f32.mrb[0].mxu0
      %3594 = vmatprep.mubr.f32.mxu0 0.0
      %3595 = vmatmul.mubr.f32.gmra.mrb[0].mxu0 %v3365
      %v3596 = vpop.f32.mrb[0].mxu0
      %v3597 = vadd.f32 0.0, %v3596
      %v3598 = vpop.f32.mrb[0].mxu0
      %3599 = vmatprep.mubr.f32.mxu0 0.0
      %3600 = vmatmul.mubr.f32.gmra.mrb[0].mxu0 %v3366
      %v3601 = vpop.f32.mrb[0].mxu0
      %v3602 = vadd.f32 0.0, %v3601
      %v3603 = vpop.f32.mrb[0].mxu0
      %3604 = vmatprep.mubr.f32.mxu0 0.0
      %3605 = vmatmul.mubr.f32.gmra.mrb[0].mxu0 %v3367
      %v3606 = vpop.f32.mrb[0].mxu0
      %v3607 = vadd.f32 0.0, %v3606
      %v3608 = vpop.f32.mrb[0].mxu0
      %3609 = vdwg.mxu0
      %v3610 = vadd.f32 %v3304, %v3452
      %v3611 = vadd.f32 %v3305, %v3457
      %v3612 = vadd.f32 %v3306, %v3462
      %v3613 = vadd.f32 %v3307, %v3467
      %v3614 = vadd.f32 %v3308, %v3472
      %v3615 = vadd.f32 %v3309, %v3477
      %v3616 = vadd.f32 %v3310, %v3482
      %v3617 = vadd.f32 %v3311, %v3487
      %v3618 = vadd.f32 %v3312, %v3492
      %v3619 = vadd.f32 %v3313, %v3497
      %v3620 = vadd.f32 %v3314, %v3502
      %v3621 = vadd.f32 %v3315, %v3507
      %v3622 = vadd.f32 %v3316, %v3512
      %v3623 = vadd.f32 %v3317, %v3517
      %v3624 = vadd.f32 %v3318, %v3522
      %v3625 = vadd.f32 %v3319, %v3527
      %v3626 = vadd.f32 %v3320, %v3532
      %v3627 = vadd.f32 %v3321, %v3537
      %v3628 = vadd.f32 %v3322, %v3542
      %v3629 = vadd.f32 %v3323, %v3547
      %v3630 = vadd.f32 %v3324, %v3552
      %v3631 = vadd.f32 %v3325, %v3557
      %v3632 = vadd.f32 %v3326, %v3562
      %v3633 = vadd.f32 %v3327, %v3567
      %v3634 = vadd.f32 %v3328, %v3572
      %v3635 = vadd.f32 %v3329, %v3577
      %v3636 = vadd.f32 %v3330, %v3582
      %v3637 = vadd.f32 %v3331, %v3587
      %v3638 = vadd.f32 %v3332, %v3592
      %v3639 = vadd.f32 %v3333, %v3597
      %v3640 = vadd.f32 %v3334, %v3602
      %v3641 = vadd.f32 %v3335, %v3607
      %3642 = vst [vmem:[%s287] sm:$0xff] %v3610
      %3643 = vst [vmem:[%s287 + $0x8] sm:$0xff] %v3611
      %3644 = vst [vmem:[%s287 + $0x10] sm:$0xff] %v3612
      %3645 = vst [vmem:[%s287 + $0x18] sm:$0xff] %v3613
      %3646 = vst [vmem:[%s287 + $0x20] sm:$0xff] %v3614
      %3647 = vst [vmem:[%s287 + $0x28] sm:$0xff] %v3615
      %3648 = vst [vmem:[%s287 + $0x30] sm:$0xff] %v3616
      %3649 = vst [vmem:[%s287 + $0x38] sm:$0xff] %v3617
      %3650 = vst [vmem:[%s287 + $0x40] sm:$0xff] %v3618
      %3651 = vst [vmem:[%s287 + $0x48] sm:$0xff] %v3619
      %3652 = vst [vmem:[%s287 + $0x50] sm:$0xff] %v3620
      %3653 = vst [vmem:[%s287 + $0x58] sm:$0xff] %v3621
      %3654 = vst [vmem:[%s287 + $0x60] sm:$0xff] %v3622
      %3655 = vst [vmem:[%s287 + $0x68] sm:$0xff] %v3623
      %3656 = vst [vmem:[%s287 + $0x70] sm:$0xff] %v3624
      %3657 = vst [vmem:[%s287 + $0x78] sm:$0xff] %v3625
      %3658 = vst [vmem:[%s287 + $0x80] sm:$0xff] %v3626
      %3659 = vst [vmem:[%s287 + $0x88] sm:$0xff] %v3627
      %3660 = vst [vmem:[%s287 + $0x90] sm:$0xff] %v3628
      %3661 = vst [vmem:[%s287 + $0x98] sm:$0xff] %v3629
      %3662 = vst [vmem:[%s287 + $0xa0] sm:$0xff] %v3630
      %3663 = vst [vmem:[%s287 + $0xa8] sm:$0xff] %v3631
      %3664 = vst [vmem:[%s287 + $0xb0] sm:$0xff] %v3632
      %3665 = vst [vmem:[%s287 + $0xb8] sm:$0xff] %v3633
      %3666 = vst [vmem:[%s287 + $0xc0] sm:$0xff] %v3634
      %3667 = vst [vmem:[%s287 + $0xc8] sm:$0xff] %v3635
      %3668 = vst [vmem:[%s287 + $0xd0] sm:$0xff] %v3636
      %3669 = vst [vmem:[%s287 + $0xd8] sm:$0xff] %v3637
      %3670 = vst [vmem:[%s287 + $0xe0] sm:$0xff] %v3638
      %3671 = vst [vmem:[%s287 + $0xe8] sm:$0xff] %v3639
      %3672 = vst [vmem:[%s287 + $0xf0] sm:$0xff] %v3640
      %3673 = vst [vmem:[%s287 + $0xf8] sm:$0xff] %v3641
      %v3674 = vadd.f32 %v3610, %v3611
      %v3675 = vadd.f32 %v3674, %v3612
      %v3676 = vadd.f32 %v3675, %v3613
      %v3677 = vadd.f32 %v3676, %v3614
      %v3678 = vadd.f32 %v3677, %v3615
      %v3679 = vadd.f32 %v3678, %v3616
      %v3680 = vadd.f32 %v3679, %v3617
      %v3681 = vadd.f32 %v3680, %v3618
      %v3682 = vadd.f32 %v3681, %v3619
      %v3683 = vadd.f32 %v3682, %v3620
      %v3684 = vadd.f32 %v3683, %v3621
      %v3685 = vadd.f32 %v3684, %v3622
      %v3686 = vadd.f32 %v3685, %v3623
      %v3687 = vadd.f32 %v3686, %v3624
      %v3688 = vadd.f32 %v3687, %v3625
      %v3689 = vadd.f32 %v3688, %v3626
      %v3690 = vadd.f32 %v3689, %v3627
      %v3691 = vadd.f32 %v3690, %v3628
      %v3692 = vadd.f32 %v3691, %v3629
      %v3693 = vadd.f32 %v3692, %v3630
      %v3694 = vadd.f32 %v3693, %v3631
      %v3695 = vadd.f32 %v3694, %v3632
      %v3696 = vadd.f32 %v3695, %v3633
      %v3697 = vadd.f32 %v3696, %v3634
      %v3698 = vadd.f32 %v3697, %v3635
      %v3699 = vadd.f32 %v3698, %v3636
      %v3700 = vadd.f32 %v3699, %v3637
      %v3701 = vadd.f32 %v3700, %v3638
      %v3702 = vadd.f32 %v3701, %v3639
      %v3703 = vadd.f32 %v3702, %v3640
      %v3704 = vadd.f32 %v3703, %v3641
      %v3705 = vrot.slane %v3704, 4
      %v3706 = vadd.f32 %v3704, %v3705
      %v3707 = vrot.slane %v3706, 2
      %v3708 = vadd.f32 %v3706, %v3707
      %v3709 = vrot.slane %v3708, 1
      %v3710 = vadd.f32 %v3708, %v3709
      %v3711 = vmul.f32 %v3610, %v3610
      %v3712 = vmul.f32 %v3611, %v3611
      %v3713 = vmul.f32 %v3612, %v3612
      %v3714 = vmul.f32 %v3613, %v3613
      %v3715 = vmul.f32 %v3614, %v3614
      %v3716 = vmul.f32 %v3615, %v3615
      %v3717 = vmul.f32 %v3616, %v3616
      %v3718 = vmul.f32 %v3617, %v3617
      %v3719 = vmul.f32 %v3618, %v3618
      %v3720 = vmul.f32 %v3619, %v3619
      %v3721 = vmul.f32 %v3620, %v3620
      %v3722 = vmul.f32 %v3621, %v3621
      %v3723 = vmul.f32 %v3622, %v3622
      %v3724 = vmul.f32 %v3623, %v3623
      %v3725 = vmul.f32 %v3624, %v3624
      %v3726 = vmul.f32 %v3625, %v3625
      %v3727 = vmul.f32 %v3626, %v3626
      %v3728 = vmul.f32 %v3627, %v3627
      %v3729 = vmul.f32 %v3628, %v3628
      %v3730 = vmul.f32 %v3629, %v3629
      %v3731 = vmul.f32 %v3630, %v3630
      %v3732 = vmul.f32 %v3631, %v3631
      %v3733 = vmul.f32 %v3632, %v3632
      %v3734 = vmul.f32 %v3633, %v3633
      %v3735 = vmul.f32 %v3634, %v3634
      %v3736 = vmul.f32 %v3635, %v3635
      %v3737 = vmul.f32 %v3636, %v3636
      %v3738 = vmul.f32 %v3637, %v3637
      %v3739 = vmul.f32 %v3638, %v3638
      %v3740 = vmul.f32 %v3639, %v3639
      %v3741 = vmul.f32 %v3640, %v3640
      %v3742 = vmul.f32 %v3641, %v3641
      %v3743 = vadd.f32 %v3711, %v3712
      %v3744 = vadd.f32 %v3743, %v3713
      %v3745 = vadd.f32 %v3744, %v3714
      %v3746 = vadd.f32 %v3745, %v3715
      %v3747 = vadd.f32 %v3746, %v3716
      %v3748 = vadd.f32 %v3747, %v3717
      %v3749 = vadd.f32 %v3748, %v3718
      %v3750 = vadd.f32 %v3749, %v3719
      %v3751 = vadd.f32 %v3750, %v3720
      %v3752 = vadd.f32 %v3751, %v3721
      %v3753 = vadd.f32 %v3752, %v3722
      %v3754 = vadd.f32 %v3753, %v3723
      %v3755 = vadd.f32 %v3754, %v3724
      %v3756 = vadd.f32 %v3755, %v3725
      %v3757 = vadd.f32 %v3756, %v3726
      %v3758 = vadd.f32 %v3757, %v3727
      %v3759 = vadd.f32 %v3758, %v3728
      %v3760 = vadd.f32 %v3759, %v3729
      %v3761 = vadd.f32 %v3760, %v3730
      %v3762 = vadd.f32 %v3761, %v3731
      %v3763 = vadd.f32 %v3762, %v3732
      %v3764 = vadd.f32 %v3763, %v3733
      %v3765 = vadd.f32 %v3764, %v3734
      %v3766 = vadd.f32 %v3765, %v3735
      %v3767 = vadd.f32 %v3766, %v3736
      %v3768 = vadd.f32 %v3767, %v3737
      %v3769 = vadd.f32 %v3768, %v3738
      %v3770 = vadd.f32 %v3769, %v3739
      %v3771 = vadd.f32 %v3770, %v3740
      %v3772 = vadd.f32 %v3771, %v3741
      %v3773 = vadd.f32 %v3772, %v3742
      %v3774 = vrot.slane %v3773, 4
      %v3775 = vadd.f32 %v3773, %v3774
      %v3776 = vrot.slane %v3775, 2
      %v3777 = vadd.f32 %v3775, %v3776
      %v3778 = vrot.slane %v3777, 1
      %v3779 = vadd.f32 %v3777, %v3778
      %v3780 = vsel %vm465, %v3710, %v3779
      %3781 = vst [vmem:[%s292] sm:$0x3] %v3780
      %s3782 = smul.u32 32, %s19
      %p3783 = scmp.lt.s32.totalorder %s3782, 127
      %s3784 = scalar_select %p3783, %s3782, 127
      %s3785 = smul.addr %s3784, 8
      %s3786 = scalar_lea.vmem %s6, %s3785
      %p3787 = scmp.lt.s32.totalorder %s19, 3
      %s3788 = scalar_select %p3787, %s19, 3
      %s3789 = smul.addr %s3788, 2
      %s3790 = scalar_lea.vmem %s7, %s3789
      // Predicated region
      $region45: #{bottleneck_forward.5} parent=43 // pred_check
        %p3791 = pneg %p168
      $region46: #{bottleneck_forward.5} parent=43 // pred_check_branch
        %3793 = sbr.rel (%p3791) target = $region48
      $region47: #{bottleneck_forward.5} parent=43 // pred_region
        %s3794 = smul.u32 32, %s19
      $region48: #{bottleneck_forward.5} parent=43 // pred_fallthru
        _
      // Predicated region
      $region49: #{bottleneck_forward.5} parent=43 // pred_check
        %p3795 = pneg %p194
      $region50: #{bottleneck_forward.5} parent=43 // pred_check_branch
        %3797 = sbr.rel (%p3795) target = $region52
      $region51: #{bottleneck_forward.5} parent=43 // pred_region
        _
      $region52: #{bottleneck_forward.5} parent=43 // pred_fallthru
        _
    $region44: #{bottleneck_forward.5} parent=5 // pred_fallthru
      _
    %p3798 = scmp.le.s32.totalorder 2, %s14
    // Predicated region
    $region53: #{bottleneck_forward.5} parent=5 // pred_check
      %p3799 = pneg %p3798
    $region54: #{bottleneck_forward.5} parent=5 // pred_check_branch
      %3801 = sbr.rel (%p3799) target = $region56
    $region55: #{bottleneck_forward.5} parent=5 // pred_region
      %s3802 = ssub.s32 %s14, 2
      // Predicated region
      $region57: #{bottleneck_forward.5} parent=55 // pred_check
        %p3803 = pneg %p174
      $region58: #{bottleneck_forward.5} parent=55 // pred_check_branch
        %3805 = sbr.rel (%p3803) target = $region60
      $region59: #{bottleneck_forward.5} parent=55 // pred_region
        %s3806 = smul.u32 32, %s20
        %p3807 = scmp.lt.s32.totalorder %s3806, 127
        %s3808 = scalar_select %p3807, %s3806, 127
        %s3809 = smul.addr %s3808, 8
        %s3810 = scalar_lea.vmem %s6, %s3809
      $region60: #{bottleneck_forward.5} parent=55 // pred_fallthru
        _
      // Predicated region
      $region61: #{bottleneck_forward.5} parent=55 // pred_check
        %p3811 = pneg %p200
      $region62: #{bottleneck_forward.5} parent=55 // pred_check_branch
        %3813 = sbr.rel (%p3811) target = $region64
      $region63: #{bottleneck_forward.5} parent=55 // pred_region
        %p3814 = scmp.lt.s32.totalorder %s20, 3
        %s3815 = scalar_select %p3814, %s20, 3
        %s3816 = smul.addr %s3815, 2
        %s3817 = scalar_lea.vmem %s7, %s3816
      $region64: #{bottleneck_forward.5} parent=55 // pred_fallthru
        _
    $region56: #{bottleneck_forward.5} parent=5 // pred_fallthru
      _
  $region6: #{bottleneck_forward.5} parent=0 // loop_footer
    %s18 = sadd.s32 1, %s14
  $region7: #{bottleneck_forward.5} parent=0 // loop_footer_branch
    %13 = sbr.rel target = $region3
  $region8: #{bottleneck_forward.5} parent=0 // loop_exit
    _

</llo_original>
